<compile_context>
chip_gen: v7x
topology: tpu7x:2x2x1
jax: 0.10.0
libtpu: 0.0.40
codegen_flags: <defaults>
</compile_context>

<pallas_src>
import jax
import jax.numpy as jnp
from jax.experimental import pallas as pl
from jax.experimental.pallas import tpu as pltpu


def _round_up(x, m):
    return ((x + m - 1) // m) * m


# ----------------------------------------------------------------------------
# Fused kernel: multi-layer LSTM recurrence + fc + sigmoid for one
# (batch_block, time_chunk) tile.
# ----------------------------------------------------------------------------
def make_dkt_kernel(num_layers, hidden_pad, time_chunk, out_pad, matmul_dtype):
    L, Hp, TC, OP = num_layers, hidden_pad, time_chunk, out_pad

    def cell(gates, c_prev):
        # PyTorch gate order: i, f, g, o.  Hp is a multiple of 128, so each
        # slice is a lane-aligned whole-vreg slab.
        i_g = jax.nn.sigmoid(gates[:, 0 * Hp:1 * Hp])
        f_g = jax.nn.sigmoid(gates[:, 1 * Hp:2 * Hp])
        g_g = jnp.tanh(gates[:, 2 * Hp:3 * Hp])
        o_g = jax.nn.sigmoid(gates[:, 3 * Hp:4 * Hp])
        c_new = f_g * c_prev + i_g * g_g
        h_new = o_g * jnp.tanh(c_new)
        return h_new, c_new

    def kernel(*refs):
        # refs: x, (W_ih0_T, W_hh0_T, b0), [(W_cat_l, b_l)]*, W_fc_T, b_fc,
        #       out, h_scr, c_scr, hs_scr
        x_ref = refs[0]
        idx = 1
        w_ih0, w_hh0, b0 = refs[idx], refs[idx + 1], refs[idx + 2]
        idx += 3
        deep = []
        for _ in range(L - 1):
            deep.append((refs[idx], refs[idx + 1]))
            idx += 2
        w_fc, b_fc = refs[idx], refs[idx + 1]
        idx += 2
        out_ref = refs[idx]
        h_scr, c_scr, hs_scr = refs[idx + 1], refs[idx + 2], refs[idx + 3]

        B_blk = x_ref.shape[0]
        chunk = pl.program_id(1)

        @pl.when(chunk == 0)
        def _init():
            # nn.LSTM default zero initial hidden / cell state.
            h_scr[...] = jnp.zeros_like(h_scr)
            c_scr[...] = jnp.zeros_like(c_scr)

        # h/c live in registers across the unrolled timestep loop; the carry
        # scratch is only touched once per chunk on each side.
        h = [h_scr[l] for l in range(L)]
        c = [c_scr[l] for l in range(L)]

        for t in range(TC):                           # static unroll
            x_t = x_ref[:, t, :]                      # (B_blk, D_in)
            # ---- layer 0: D_in generally not lane-aligned -> two matmuls ----
            gates = (
                jnp.dot(x_t.astype(matmul_dtype), w_ih0[...],
                        preferred_element_type=jnp.float32)
                + jnp.dot(h[0].astype(matmul_dtype), w_hh0[...],
                          preferred_element_type=jnp.float32)
                + b0[...]                             # (1, 4Hp) sublane-bcast add
            )
            h[0], c[0] = cell(gates, c[0])
            x_l = h[0]
            # ---- layers > 0: fused [x_t, h] @ [W_ih; W_hh], K = 2*Hp --------
            for li in range(1, L):
                w_cat, b_l = deep[li - 1]
                inp = jnp.concatenate([x_l, h[li]], axis=1)   # (B_blk, 2Hp)
                gates = jnp.dot(inp.astype(matmul_dtype), w_cat[...],
                                preferred_element_type=jnp.float32) + b_l[...]
                h[li], c[li] = cell(gates, c[li])
                x_l = h[li]
            # dense, sublane-aligned slab store of the top-layer hidden state
            hs_scr[t * B_blk:(t + 1) * B_blk, :] = x_l

        # carry state to the next time chunk
        for l in range(L):
            h_scr[l] = h[l]
            c_scr[l] = c[l]

        # ---- fused fc + sigmoid: one big lane-dense matmul over the chunk ---
        h_all = hs_scr[...]                           # (TC*B_blk, Hp)
        probs = jax.nn.sigmoid(
            jnp.dot(h_all.astype(matmul_dtype), w_fc[...],
                    preferred_element_type=jnp.float32)
            + b_fc[...]
        )                                             # (TC*B_blk, OP)
        # dense full-tile stores per timestep into the time-major output block
        for t in range(TC):
            out_ref[t] = probs[t * B_blk:(t + 1) * B_blk, :]

    return kernel


# ----------------------------------------------------------------------------
# Weight repacking: transpose, pad H -> Hp (lanes) and out -> OP, stack
# W_ih/W_hh for layers > 0, fold b_ih + b_hh.
# ----------------------------------------------------------------------------
def _pack_params(params, input_size, hidden_size, hidden_pad, num_layers,
                 output_size, out_pad, matmul_dtype):
    H, Hp, OP = hidden_size, hidden_pad, out_pad
    arrays = []
    for l in range(num_layers):
        W_ih, W_hh, b_ih, b_hh = params["lstm"][l]   # (4H,D),(4H,H),(4H,),(4H,)
        b_sum = b_ih + b_hh
        bias = jnp.zeros((1, 4 * Hp), jnp.float32)
        for g in range(4):
            bias = bias.at[0, g * Hp:g * Hp + H].set(b_sum[g * H:(g + 1) * H])
        if l == 0:
            W_ih_T = jnp.zeros((input_size, 4 * Hp), jnp.float32)
            W_hh_T = jnp.zeros((Hp, 4 * Hp), jnp.float32)
            for g in range(4):
                W_ih_T = W_ih_T.at[:, g * Hp:g * Hp + H].set(
                    W_ih[g * H:(g + 1) * H, :].T)
                W_hh_T = W_hh_T.at[:H, g * Hp:g * Hp + H].set(
                    W_hh[g * H:(g + 1) * H, :].T)
            arrays += [W_ih_T.astype(matmul_dtype),
                       W_hh_T.astype(matmul_dtype),
                       bias]                          # bias stays f32
        else:
            # stacked [W_ih_T; W_hh_T] -> (2*Hp, 4*Hp): single K=2*Hp matmul
            W_cat = jnp.zeros((2 * Hp, 4 * Hp), jnp.float32)
            for g in range(4):
                W_cat = W_cat.at[:H, g * Hp:g * Hp + H].set(
                    W_ih[g * H:(g + 1) * H, :].T)
                W_cat = W_cat.at[Hp:Hp + H, g * Hp:g * Hp + H].set(
                    W_hh[g * H:(g + 1) * H, :].T)
            arrays += [W_cat.astype(matmul_dtype), bias]
    W_fc, b_fc = params["fc"]                         # (out, H), (out,)
    W_fc_T = jnp.zeros((Hp, OP), jnp.float32).at[:H, :output_size].set(W_fc.T)
    b_fc_p = jnp.zeros((1, OP), jnp.float32).at[0, :output_size].set(b_fc)
    arrays += [W_fc_T.astype(matmul_dtype), b_fc_p]
    return arrays


# ----------------------------------------------------------------------------
# Wrapper
# ----------------------------------------------------------------------------
def dkt_forward(X, params, *, num_layers, hidden_size, output_size,
                matmul_dtype=jnp.float32, time_chunk=32, batch_block=None):
    """X: (B, T, input_size) float32.  Returns (B, T, output_size) float32."""
    B, T, D_in = X.shape
    H = hidden_size
    Hp = _round_up(H, 128)                            # lane-pad hidden dim
    OP = _round_up(output_size, 128)                  # lane-pad output dim

    # --- time chunking: pick TC (multiple of 8, <= time_chunk) minimizing
    # padded timesteps, with a small penalty per extra grid step.
    T8 = _round_up(T, 8)
    target = max(8, _round_up(min(time_chunk, T8), 8))
    best = None
    tc = 8
    while tc <= target:
        tpad = _round_up(T8, tc)
        score = tpad + 8 * (tpad // tc)
        if best is None or score <= best[0]:
            best = (score, tc, tpad)
        tc += 8
    _, TC, T_pad = best

    # --- batch blocking (grid axis 0, "parallel").
    B_pad = _round_up(B, 8)
    if batch_block is not None:
        B_blk = _round_up(batch_block, 8)
        B_pad = _round_up(B_pad, B_blk)
    elif B_pad > 256:
        B_blk = 128
        B_pad = _round_up(B_pad, B_blk)
    elif B_pad >= 16:
        # at least 2 blocks so both v7x TensorCores get work on the
        # "parallel" axis
        B_blk = _round_up((B_pad + 1) // 2, 8)
        B_pad = _round_up(B_pad, B_blk)
    else:
        B_blk = B_pad

    X_p = jnp.zeros((B_pad, T_pad, D_in), jnp.float32).at[:B, :T, :].set(
        X.astype(jnp.float32))

    weights = _pack_params(params, D_in, H, Hp, num_layers, output_size, OP,
                           matmul_dtype)

    in_specs = [pl.BlockSpec((B_blk, TC, D_in), lambda b, c: (b, c, 0)),
                pl.BlockSpec((D_in, 4 * Hp), lambda b, c: (0, 0)),
                pl.BlockSpec((Hp, 4 * Hp), lambda b, c: (0, 0)),
                pl.BlockSpec((1, 4 * Hp), lambda b, c: (0, 0))]
    for _ in range(num_layers - 1):
        in_specs += [pl.BlockSpec((2 * Hp, 4 * Hp), lambda b, c: (0, 0)),
                     pl.BlockSpec((1, 4 * Hp), lambda b, c: (0, 0))]
    in_specs += [pl.BlockSpec((Hp, OP), lambda b, c: (0, 0)),
                 pl.BlockSpec((1, OP), lambda b, c: (0, 0))]

    # time-major output so every in-kernel store is a dense full-tile store
    out_specs = pl.BlockSpec((TC, B_blk, OP), lambda b, c: (c, b, 0))

    out_tm = pl.pallas_call(
        make_dkt_kernel(num_layers, Hp, TC, OP, matmul_dtype),
        out_shape=jax.ShapeDtypeStruct((T_pad, B_pad, OP), jnp.float32),
        grid_spec=pltpu.PrefetchScalarGridSpec(
            num_scalar_prefetch=0,
            grid=(B_pad // B_blk, T_pad // TC),
            in_specs=in_specs,
            out_specs=out_specs,
            scratch_shapes=[
                pltpu.VMEM((num_layers, B_blk, Hp), jnp.float32),  # h carry
                pltpu.VMEM((num_layers, B_blk, Hp), jnp.float32),  # c carry
                pltpu.VMEM((TC * B_blk, Hp), jnp.float32),         # chunk h
            ],
        ),
        compiler_params=pltpu.CompilerParams(
            # batch blocks are independent; the time recurrence is sequential
            # and MUST stay the innermost ("arbitrary") axis for the carry.
            dimension_semantics=("parallel", "arbitrary"),
        ),
    )(X_p, *weights)

    # layout plumbing only: slice off padding, restore batch-first order
    return jnp.transpose(out_tm[:T, :B, :output_size], (1, 0, 2))


# ----------------------------------------------------------------------------
# Pure-JAX reference (mirrors torch.nn.LSTM + Linear + Sigmoid semantics)
# ----------------------------------------------------------------------------
def dkt_reference(X, params, *, num_layers, hidden_size):
    B, T, _ = X.shape
    H = hidden_size
    h = jnp.zeros((num_layers, B, H), jnp.float32)
    c = jnp.zeros((num_layers, B, H), jnp.float32)
    outs = []
    for t in range(T):
        x = X[:, t, :]
        new_h, new_c = [], []
        for l in range(num_layers):
            W_ih, W_hh, b_ih, b_hh = params["lstm"][l]
            gates = x @ W_ih.T + h[l] @ W_hh.T + b_ih + b_hh
            i_g = jax.nn.sigmoid(gates[:, 0 * H:1 * H])
            f_g = jax.nn.sigmoid(gates[:, 1 * H:2 * H])
            g_g = jnp.tanh(gates[:, 2 * H:3 * H])
            o_g = jax.nn.sigmoid(gates[:, 3 * H:4 * H])
            cc = f_g * c[l] + i_g * g_g
            hh = o_g * jnp.tanh(cc)
            new_h.append(hh)
            new_c.append(cc)
            x = hh
        h = jnp.stack(new_h)
        c = jnp.stack(new_c)
        outs.append(x)
    out = jnp.stack(outs, axis=1)  # (B, T, H)
    W_fc, b_fc = params["fc"]
    return jax.nn.sigmoid(out @ W_fc.T + b_fc)


# ----------------------------------------------------------------------------
# Deterministic parameter init (PyTorch-style uniform(-1/sqrt(H), 1/sqrt(H)))
# ----------------------------------------------------------------------------
def init_params(key, input_size, hidden_size, num_layers, output_size):
    H = hidden_size
    k = 1.0 / jnp.sqrt(jnp.float32(H))
    params = {"lstm": [], "fc": None}
    for l in range(num_layers):
        d = input_size if l == 0 else H
        key, k1, k2, k3, k4 = jax.random.split(key, 5)
        W_ih = jax.random.uniform(k1, (4 * H, d), jnp.float32, -k, k)
        W_hh = jax.random.uniform(k2, (4 * H, H), jnp.float32, -k, k)
        b_ih = jax.random.uniform(k3, (4 * H,), jnp.float32, -k, k)
        b_hh = jax.random.uniform(k4, (4 * H,), jnp.float32, -k, k)
        params["lstm"].append((W_ih, W_hh, b_ih, b_hh))
    key, k1, k2 = jax.random.split(key, 3)
    W_fc = jax.random.uniform(k1, (output_size, H), jnp.float32, -k, k)
    b_fc = jax.random.uniform(k2, (output_size,), jnp.float32, -k, k)
    params["fc"] = (W_fc, b_fc)
    return params


if __name__ == "__main__":
    # Small shapes consistent with DKT: (batch, seq_len, num_skills*2)-style input.
    B, T = 2, 8
    input_size, hidden_size, num_layers, output_size = 16, 32, 2, 16

    key = jax.random.PRNGKey(0)
    key, xkey = jax.random.split(key)
    X = jax.random.normal(xkey, (B, T, input_size), jnp.float32)

    params = init_params(key, input_size, hidden_size, num_layers, output_size)

    # f32 matmul path (near-exactness check vs the pure-JAX reference).
    out = dkt_forward(
        X, params,
        num_layers=num_layers, hidden_size=hidden_size, output_size=output_size,
    )
    out = jax.block_until_ready(out)

    ref = dkt_reference(X, params, num_layers=num_layers, hidden_size=hidden_size)
    ref = jax.block_until_ready(ref)

    assert out.shape == (B, T, output_size)
    assert jnp.allclose(out, ref, atol=2e-5, rtol=2e-5), (
        f"max abs err = {jnp.max(jnp.abs(out - ref))}"
    )

    # bf16 matmul-operand path (v6e / v7x MXU native); f32 accumulation and
    # f32 elementwise gate math, so only a loose tolerance is expected.
    out_bf16 = dkt_forward(
        X, params,
        num_layers=num_layers, hidden_size=hidden_size, output_size=output_size,
        matmul_dtype=jnp.bfloat16,
    )
    out_bf16 = jax.block_until_ready(out_bf16)
    assert out_bf16.shape == (B, T, output_size)
    assert float(jnp.max(jnp.abs(out_bf16 - ref))) < 5e-2, (
        f"bf16 max abs err = {jnp.max(jnp.abs(out_bf16 - ref))}"
    )

    print("KERNEL_OK")
</pallas_src>

<mosaic_0001>
module attributes {stable_mosaic.version = 11 : i64} {
  func.func @kernel(%arg0: i32, %arg1: i32, %arg2: memref<8x8x16xf32, #tpu.memory_space<vmem>>, %arg3: memref<16x512xf32, #tpu.memory_space<vmem>>, %arg4: memref<128x512xf32, #tpu.memory_space<vmem>>, %arg5: memref<1x512xf32, #tpu.memory_space<vmem>>, %arg6: memref<256x512xf32, #tpu.memory_space<vmem>>, %arg7: memref<1x512xf32, #tpu.memory_space<vmem>>, %arg8: memref<128x128xf32, #tpu.memory_space<vmem>>, %arg9: memref<1x128xf32, #tpu.memory_space<vmem>>, %arg10: memref<8x8x128xf32, #tpu.memory_space<vmem>>, %arg11: memref<2x8x128xf32, #tpu.memory_space<vmem>>, %arg12: memref<2x8x128xf32, #tpu.memory_space<vmem>>, %arg13: memref<64x128xf32, #tpu.memory_space<vmem>>) attributes {dimension_semantics = [#tpu.dimension_semantics<parallel>, #tpu.dimension_semantics<arbitrary>], iteration_bounds = array<i64: 1, 1>, scalar_prefetch = 0 : i64, scratch_operands = 3 : i64, tpu.core_type = #tpu.core_type<tc>, window_params = [{transform_indices = @transform_0, window_bounds = array<i64: 8, 8, 16>}, {pipeline_mode = #tpu.pipeline_mode<synchronous>, transform_indices = @transform_1, window_bounds = array<i64: 16, 512>}, {pipeline_mode = #tpu.pipeline_mode<synchronous>, transform_indices = @transform_2, window_bounds = array<i64: 128, 512>}, {pipeline_mode = #tpu.pipeline_mode<synchronous>, transform_indices = @transform_3, window_bounds = array<i64: 1, 512>}, {pipeline_mode = #tpu.pipeline_mode<synchronous>, transform_indices = @transform_4, window_bounds = array<i64: 256, 512>}, {pipeline_mode = #tpu.pipeline_mode<synchronous>, transform_indices = @transform_5, window_bounds = array<i64: 1, 512>}, {pipeline_mode = #tpu.pipeline_mode<synchronous>, transform_indices = @transform_6, window_bounds = array<i64: 128, 128>}, {pipeline_mode = #tpu.pipeline_mode<synchronous>, transform_indices = @transform_7, window_bounds = array<i64: 1, 128>}, {transform_indices = @transform_8, window_bounds = array<i64: 8, 8, 128>}]} {
    %c0_i32 = arith.constant 0 : i32
    %0 = arith.cmpi eq, %arg1, %c0_i32 : i32
    %1 = arith.extui %0 : i1 to i32
    %c0_i32_0 = arith.constant 0 : i32
    %2 = arith.cmpi ne, %1, %c0_i32_0 : i32
    scf.if %2 {
      %cst_233 = arith.constant 0.000000e+00 : f32
      %602 = vector.broadcast %cst_233 : f32 to vector<2x8x128xf32>
      %c0_234 = arith.constant 0 : index
      %c0_235 = arith.constant 0 : index
      %c0_236 = arith.constant 0 : index
      %603 = vector.load %arg11[%c0_234, %c0_235, %c0_236] : memref<2x8x128xf32, #tpu.memory_space<vmem>>, vector<2x8x128xf32>
      tpu.vector_store %arg11[%c0_234, %c0_235, %c0_236], %602 {strides = array<i32>} : memref<2x8x128xf32, #tpu.memory_space<vmem>>, vector<2x8x128xf32>,
      %cst_237 = arith.constant 0.000000e+00 : f32
      %604 = vector.broadcast %cst_237 : f32 to vector<2x8x128xf32>
      %c0_238 = arith.constant 0 : index
      %c0_239 = arith.constant 0 : index
      %c0_240 = arith.constant 0 : index
      %605 = vector.load %arg12[%c0_238, %c0_239, %c0_240] : memref<2x8x128xf32, #tpu.memory_space<vmem>>, vector<2x8x128xf32>
      tpu.vector_store %arg12[%c0_238, %c0_239, %c0_240], %604 {strides = array<i32>} : memref<2x8x128xf32, #tpu.memory_space<vmem>>, vector<2x8x128xf32>,
    } else {
    }
    %c0 = arith.constant 0 : index
    %c0_1 = arith.constant 0 : index
    %c0_2 = arith.constant 0 : index
    %3 = vector.load %arg11[%c0, %c0_1, %c0_2] : memref<2x8x128xf32, #tpu.memory_space<vmem>>, vector<1x8x128xf32>
    %4 = vector.shape_cast %3 : vector<1x8x128xf32> to vector<8x128xf32>
    %c1 = arith.constant 1 : index
    %c0_3 = arith.constant 0 : index
    %c0_4 = arith.constant 0 : index
    %5 = vector.load %arg11[%c1, %c0_3, %c0_4] : memref<2x8x128xf32, #tpu.memory_space<vmem>>, vector<1x8x128xf32>
    %6 = vector.shape_cast %5 : vector<1x8x128xf32> to vector<8x128xf32>
    %c0_5 = arith.constant 0 : index
    %c0_6 = arith.constant 0 : index
    %c0_7 = arith.constant 0 : index
    %7 = vector.load %arg12[%c0_5, %c0_6, %c0_7] : memref<2x8x128xf32, #tpu.memory_space<vmem>>, vector<1x8x128xf32>
    %8 = vector.shape_cast %7 : vector<1x8x128xf32> to vector<8x128xf32>
    %c1_8 = arith.constant 1 : index
    %c0_9 = arith.constant 0 : index
    %c0_10 = arith.constant 0 : index
    %9 = vector.load %arg12[%c1_8, %c0_9, %c0_10] : memref<2x8x128xf32, #tpu.memory_space<vmem>>, vector<1x8x128xf32>
    %10 = vector.shape_cast %9 : vector<1x8x128xf32> to vector<8x128xf32>
    %c0_11 = arith.constant 0 : index
    %c0_12 = arith.constant 0 : index
    %c0_13 = arith.constant 0 : index
    %11 = vector.load %arg2[%c0_11, %c0_12, %c0_13] : memref<8x8x16xf32, #tpu.memory_space<vmem>>, vector<8x1x16xf32>
    %12 = vector.shape_cast %11 : vector<8x1x16xf32> to vector<8x16xf32>
    %c0_14 = arith.constant 0 : index
    %c0_15 = arith.constant 0 : index
    %13 = vector.load %arg3[%c0_14, %c0_15] : memref<16x512xf32, #tpu.memory_space<vmem>>, vector<16x512xf32>
    %cst = arith.constant dense<0.000000e+00> : vector<8x512xf32>
    %14 = tpu.matmul %12, %13, %cst {dimension_numbers = #tpu.dot_dimension_numbers<[1], [0], [0], [1], [0, 0, 1, 1], [], []>} : vector<8x16xf32>, vector<16x512xf32>, vector<8x512xf32> -> vector<8x512xf32>
    %c0_16 = arith.constant 0 : index
    %c0_17 = arith.constant 0 : index
    %15 = vector.load %arg4[%c0_16, %c0_17] : memref<128x512xf32, #tpu.memory_space<vmem>>, vector<128x512xf32>
    %cst_18 = arith.constant dense<0.000000e+00> : vector<8x512xf32>
    %16 = tpu.matmul %4, %15, %cst_18 {dimension_numbers = #tpu.dot_dimension_numbers<[1], [0], [0], [1], [0, 0, 1, 1], [], []>} : vector<8x128xf32>, vector<128x512xf32>, vector<8x512xf32> -> vector<8x512xf32>
    %17 = arith.addf %14, %16 : vector<8x512xf32>
    %c0_19 = arith.constant 0 : index
    %c0_20 = arith.constant 0 : index
    %18 = vector.load %arg5[%c0_19, %c0_20] : memref<1x512xf32, #tpu.memory_space<vmem>>, vector<1x512xf32>
    %19 = vector.broadcast %18 : vector<1x512xf32> to vector<8x512xf32>
    %20 = arith.addf %17, %19 : vector<8x512xf32>
    %21 = vector.extract_strided_slice %20 {offsets = [0, 0], sizes = [8, 128], strides = [1, 1]} : vector<8x512xf32> to vector<8x128xf32>
    %22 = arith.negf %21 : vector<8x128xf32>
    %23 = math.exp %22 : vector<8x128xf32>
    %cst_21 = arith.constant 1.000000e+00 : f32
    %24 = vector.broadcast %cst_21 : f32 to vector<8x128xf32>
    %25 = arith.addf %24, %23 : vector<8x128xf32>
    %26 = arith.divf %24, %25 : vector<8x128xf32>
    %27 = vector.extract_strided_slice %20 {offsets = [0, 128], sizes = [8, 128], strides = [1, 1]} : vector<8x512xf32> to vector<8x128xf32>
    %28 = arith.negf %27 : vector<8x128xf32>
    %29 = math.exp %28 : vector<8x128xf32>
    %cst_22 = arith.constant 1.000000e+00 : f32
    %30 = vector.broadcast %cst_22 : f32 to vector<8x128xf32>
    %31 = arith.addf %30, %29 : vector<8x128xf32>
    %32 = arith.divf %30, %31 : vector<8x128xf32>
    %33 = vector.extract_strided_slice %20 {offsets = [0, 256], sizes = [8, 128], strides = [1, 1]} : vector<8x512xf32> to vector<8x128xf32>
    %34 = math.tanh %33 : vector<8x128xf32>
    %35 = vector.extract_strided_slice %20 {offsets = [0, 384], sizes = [8, 128], strides = [1, 1]} : vector<8x512xf32> to vector<8x128xf32>
    %36 = arith.negf %35 : vector<8x128xf32>
    %37 = math.exp %36 : vector<8x128xf32>
    %cst_23 = arith.constant 1.000000e+00 : f32
    %38 = vector.broadcast %cst_23 : f32 to vector<8x128xf32>
    %39 = arith.addf %38, %37 : vector<8x128xf32>
    %40 = arith.divf %38, %39 : vector<8x128xf32>
    %41 = arith.mulf %32, %8 : vector<8x128xf32>
    %42 = arith.mulf %26, %34 : vector<8x128xf32>
    %43 = arith.addf %41, %42 : vector<8x128xf32>
    %44 = math.tanh %43 : vector<8x128xf32>
    %45 = arith.mulf %40, %44 : vector<8x128xf32>
    %46 = tpu.concatenate %45, %6 in 1 : vector<8x128xf32>, vector<8x128xf32> -> vector<8x256xf32>
    %c0_24 = arith.constant 0 : index
    %c0_25 = arith.constant 0 : index
    %47 = vector.load %arg6[%c0_24, %c0_25] : memref<256x512xf32, #tpu.memory_space<vmem>>, vector<256x512xf32>
    %cst_26 = arith.constant dense<0.000000e+00> : vector<8x512xf32>
    %48 = tpu.matmul %46, %47, %cst_26 {dimension_numbers = #tpu.dot_dimension_numbers<[1], [0], [0], [1], [0, 0, 1, 1], [], []>} : vector<8x256xf32>, vector<256x512xf32>, vector<8x512xf32> -> vector<8x512xf32>
    %c0_27 = arith.constant 0 : index
    %c0_28 = arith.constant 0 : index
    %49 = vector.load %arg7[%c0_27, %c0_28] : memref<1x512xf32, #tpu.memory_space<vmem>>, vector<1x512xf32>
    %50 = vector.broadcast %49 : vector<1x512xf32> to vector<8x512xf32>
    %51 = arith.addf %48, %50 : vector<8x512xf32>
    %52 = vector.extract_strided_slice %51 {offsets = [0, 0], sizes = [8, 128], strides = [1, 1]} : vector<8x512xf32> to vector<8x128xf32>
    %53 = arith.negf %52 : vector<8x128xf32>
    %54 = math.exp %53 : vector<8x128xf32>
    %cst_29 = arith.constant 1.000000e+00 : f32
    %55 = vector.broadcast %cst_29 : f32 to vector<8x128xf32>
    %56 = arith.addf %55, %54 : vector<8x128xf32>
    %57 = arith.divf %55, %56 : vector<8x128xf32>
    %58 = vector.extract_strided_slice %51 {offsets = [0, 128], sizes = [8, 128], strides = [1, 1]} : vector<8x512xf32> to vector<8x128xf32>
    %59 = arith.negf %58 : vector<8x128xf32>
    %60 = math.exp %59 : vector<8x128xf32>
    %cst_30 = arith.constant 1.000000e+00 : f32
    %61 = vector.broadcast %cst_30 : f32 to vector<8x128xf32>
    %62 = arith.addf %61, %60 : vector<8x128xf32>
    %63 = arith.divf %61, %62 : vector<8x128xf32>
    %64 = vector.extract_strided_slice %51 {offsets = [0, 256], sizes = [8, 128], strides = [1, 1]} : vector<8x512xf32> to vector<8x128xf32>
    %65 = math.tanh %64 : vector<8x128xf32>
    %66 = vector.extract_strided_slice %51 {offsets = [0, 384], sizes = [8, 128], strides = [1, 1]} : vector<8x512xf32> to vector<8x128xf32>
    %67 = arith.negf %66 : vector<8x128xf32>
    %68 = math.exp %67 : vector<8x128xf32>
    %cst_31 = arith.constant 1.000000e+00 : f32
    %69 = vector.broadcast %cst_31 : f32 to vector<8x128xf32>
    %70 = arith.addf %69, %68 : vector<8x128xf32>
    %71 = arith.divf %69, %70 : vector<8x128xf32>
    %72 = arith.mulf %63, %10 : vector<8x128xf32>
    %73 = arith.mulf %57, %65 : vector<8x128xf32>
    %74 = arith.addf %72, %73 : vector<8x128xf32>
    %75 = math.tanh %74 : vector<8x128xf32>
    %76 = arith.mulf %71, %75 : vector<8x128xf32>
    %c0_32 = arith.constant 0 : index
    %c0_33 = arith.constant 0 : index
    %77 = vector.load %arg13[%c0_32, %c0_33] : memref<64x128xf32, #tpu.memory_space<vmem>>, vector<8x128xf32>
    tpu.vector_store %arg13[%c0_32, %c0_33], %76 {strides = array<i32>} : memref<64x128xf32, #tpu.memory_space<vmem>>, vector<8x128xf32>,
    %c0_34 = arith.constant 0 : index
    %c1_35 = arith.constant 1 : index
    %c0_36 = arith.constant 0 : index
    %78 = vector.load %arg2[%c0_34, %c1_35, %c0_36] : memref<8x8x16xf32, #tpu.memory_space<vmem>>, vector<8x1x16xf32>
    %79 = vector.shape_cast %78 : vector<8x1x16xf32> to vector<8x16xf32>
    %c0_37 = arith.constant 0 : index
    %c0_38 = arith.constant 0 : index
    %80 = vector.load %arg3[%c0_37, %c0_38] : memref<16x512xf32, #tpu.memory_space<vmem>>, vector<16x512xf32>
    %cst_39 = arith.constant dense<0.000000e+00> : vector<8x512xf32>
    %81 = tpu.matmul %79, %80, %cst_39 {dimension_numbers = #tpu.dot_dimension_numbers<[1], [0], [0], [1], [0, 0, 1, 1], [], []>} : vector<8x16xf32>, vector<16x512xf32>, vector<8x512xf32> -> vector<8x512xf32>
    %c0_40 = arith.constant 0 : index
    %c0_41 = arith.constant 0 : index
    %82 = vector.load %arg4[%c0_40, %c0_41] : memref<128x512xf32, #tpu.memory_space<vmem>>, vector<128x512xf32>
    %cst_42 = arith.constant dense<0.000000e+00> : vector<8x512xf32>
    %83 = tpu.matmul %45, %82, %cst_42 {dimension_numbers = #tpu.dot_dimension_numbers<[1], [0], [0], [1], [0, 0, 1, 1], [], []>} : vector<8x128xf32>, vector<128x512xf32>, vector<8x512xf32> -> vector<8x512xf32>
    %84 = arith.addf %81, %83 : vector<8x512xf32>
    %c0_43 = arith.constant 0 : index
    %c0_44 = arith.constant 0 : index
    %85 = vector.load %arg5[%c0_43, %c0_44] : memref<1x512xf32, #tpu.memory_space<vmem>>, vector<1x512xf32>
    %86 = vector.broadcast %85 : vector<1x512xf32> to vector<8x512xf32>
    %87 = arith.addf %84, %86 : vector<8x512xf32>
    %88 = vector.extract_strided_slice %87 {offsets = [0, 0], sizes = [8, 128], strides = [1, 1]} : vector<8x512xf32> to vector<8x128xf32>
    %89 = arith.negf %88 : vector<8x128xf32>
    %90 = math.exp %89 : vector<8x128xf32>
    %cst_45 = arith.constant 1.000000e+00 : f32
    %91 = vector.broadcast %cst_45 : f32 to vector<8x128xf32>
    %92 = arith.addf %91, %90 : vector<8x128xf32>
    %93 = arith.divf %91, %92 : vector<8x128xf32>
    %94 = vector.extract_strided_slice %87 {offsets = [0, 128], sizes = [8, 128], strides = [1, 1]} : vector<8x512xf32> to vector<8x128xf32>
    %95 = arith.negf %94 : vector<8x128xf32>
    %96 = math.exp %95 : vector<8x128xf32>
    %cst_46 = arith.constant 1.000000e+00 : f32
    %97 = vector.broadcast %cst_46 : f32 to vector<8x128xf32>
    %98 = arith.addf %97, %96 : vector<8x128xf32>
    %99 = arith.divf %97, %98 : vector<8x128xf32>
    %100 = vector.extract_strided_slice %87 {offsets = [0, 256], sizes = [8, 128], strides = [1, 1]} : vector<8x512xf32> to vector<8x128xf32>
    %101 = math.tanh %100 : vector<8x128xf32>
    %102 = vector.extract_strided_slice %87 {offsets = [0, 384], sizes = [8, 128], strides = [1, 1]} : vector<8x512xf32> to vector<8x128xf32>
    %103 = arith.negf %102 : vector<8x128xf32>
    %104 = math.exp %103 : vector<8x128xf32>
    %cst_47 = arith.constant 1.000000e+00 : f32
    %105 = vector.broadcast %cst_47 : f32 to vector<8x128xf32>
    %106 = arith.addf %105, %104 : vector<8x128xf32>
    %107 = arith.divf %105, %106 : vector<8x128xf32>
    %108 = arith.mulf %99, %43 : vector<8x128xf32>
    %109 = arith.mulf %93, %101 : vector<8x128xf32>
    %110 = arith.addf %108, %109 : vector<8x128xf32>
    %111 = math.tanh %110 : vector<8x128xf32>
    %112 = arith.mulf %107, %111 : vector<8x128xf32>
    %113 = tpu.concatenate %112, %76 in 1 : vector<8x128xf32>, vector<8x128xf32> -> vector<8x256xf32>
    %c0_48 = arith.constant 0 : index
    %c0_49 = arith.constant 0 : index
    %114 = vector.load %arg6[%c0_48, %c0_49] : memref<256x512xf32, #tpu.memory_space<vmem>>, vector<256x512xf32>
    %cst_50 = arith.constant dense<0.000000e+00> : vector<8x512xf32>
    %115 = tpu.matmul %113, %114, %cst_50 {dimension_numbers = #tpu.dot_dimension_numbers<[1], [0], [0], [1], [0, 0, 1, 1], [], []>} : vector<8x256xf32>, vector<256x512xf32>, vector<8x512xf32> -> vector<8x512xf32>
    %c0_51 = arith.constant 0 : index
    %c0_52 = arith.constant 0 : index
    %116 = vector.load %arg7[%c0_51, %c0_52] : memref<1x512xf32, #tpu.memory_space<vmem>>, vector<1x512xf32>
    %117 = vector.broadcast %116 : vector<1x512xf32> to vector<8x512xf32>
    %118 = arith.addf %115, %117 : vector<8x512xf32>
    %119 = vector.extract_strided_slice %118 {offsets = [0, 0], sizes = [8, 128], strides = [1, 1]} : vector<8x512xf32> to vector<8x128xf32>
    %120 = arith.negf %119 : vector<8x128xf32>
    %121 = math.exp %120 : vector<8x128xf32>
    %cst_53 = arith.constant 1.000000e+00 : f32
    %122 = vector.broadcast %cst_53 : f32 to vector<8x128xf32>
    %123 = arith.addf %122, %121 : vector<8x128xf32>
    %124 = arith.divf %122, %123 : vector<8x128xf32>
    %125 = vector.extract_strided_slice %118 {offsets = [0, 128], sizes = [8, 128], strides = [1, 1]} : vector<8x512xf32> to vector<8x128xf32>
    %126 = arith.negf %125 : vector<8x128xf32>
    %127 = math.exp %126 : vector<8x128xf32>
    %cst_54 = arith.constant 1.000000e+00 : f32
    %128 = vector.broadcast %cst_54 : f32 to vector<8x128xf32>
    %129 = arith.addf %128, %127 : vector<8x128xf32>
    %130 = arith.divf %128, %129 : vector<8x128xf32>
    %131 = vector.extract_strided_slice %118 {offsets = [0, 256], sizes = [8, 128], strides = [1, 1]} : vector<8x512xf32> to vector<8x128xf32>
    %132 = math.tanh %131 : vector<8x128xf32>
    %133 = vector.extract_strided_slice %118 {offsets = [0, 384], sizes = [8, 128], strides = [1, 1]} : vector<8x512xf32> to vector<8x128xf32>
    %134 = arith.negf %133 : vector<8x128xf32>
    %135 = math.exp %134 : vector<8x128xf32>
    %cst_55 = arith.constant 1.000000e+00 : f32
    %136 = vector.broadcast %cst_55 : f32 to vector<8x128xf32>
    %137 = arith.addf %136, %135 : vector<8x128xf32>
    %138 = arith.divf %136, %137 : vector<8x128xf32>
    %139 = arith.mulf %130, %74 : vector<8x128xf32>
    %140 = arith.mulf %124, %132 : vector<8x128xf32>
    %141 = arith.addf %139, %140 : vector<8x128xf32>
    %142 = math.tanh %141 : vector<8x128xf32>
    %143 = arith.mulf %138, %142 : vector<8x128xf32>
    %c8 = arith.constant 8 : index
    %c0_56 = arith.constant 0 : index
    %144 = vector.load %arg13[%c8, %c0_56] : memref<64x128xf32, #tpu.memory_space<vmem>>, vector<8x128xf32>
    tpu.vector_store %arg13[%c8, %c0_56], %143 {strides = array<i32>} : memref<64x128xf32, #tpu.memory_space<vmem>>, vector<8x128xf32>,
    %c0_57 = arith.constant 0 : index
    %c2 = arith.constant 2 : index
    %c0_58 = arith.constant 0 : index
    %145 = vector.load %arg2[%c0_57, %c2, %c0_58] : memref<8x8x16xf32, #tpu.memory_space<vmem>>, vector<8x1x16xf32>
    %146 = vector.shape_cast %145 : vector<8x1x16xf32> to vector<8x16xf32>
    %c0_59 = arith.constant 0 : index
    %c0_60 = arith.constant 0 : index
    %147 = vector.load %arg3[%c0_59, %c0_60] : memref<16x512xf32, #tpu.memory_space<vmem>>, vector<16x512xf32>
    %cst_61 = arith.constant dense<0.000000e+00> : vector<8x512xf32>
    %148 = tpu.matmul %146, %147, %cst_61 {dimension_numbers = #tpu.dot_dimension_numbers<[1], [0], [0], [1], [0, 0, 1, 1], [], []>} : vector<8x16xf32>, vector<16x512xf32>, vector<8x512xf32> -> vector<8x512xf32>
    %c0_62 = arith.constant 0 : index
    %c0_63 = arith.constant 0 : index
    %149 = vector.load %arg4[%c0_62, %c0_63] : memref<128x512xf32, #tpu.memory_space<vmem>>, vector<128x512xf32>
    %cst_64 = arith.constant dense<0.000000e+00> : vector<8x512xf32>
    %150 = tpu.matmul %112, %149, %cst_64 {dimension_numbers = #tpu.dot_dimension_numbers<[1], [0], [0], [1], [0, 0, 1, 1], [], []>} : vector<8x128xf32>, vector<128x512xf32>, vector<8x512xf32> -> vector<8x512xf32>
    %151 = arith.addf %148, %150 : vector<8x512xf32>
    %c0_65 = arith.constant 0 : index
    %c0_66 = arith.constant 0 : index
    %152 = vector.load %arg5[%c0_65, %c0_66] : memref<1x512xf32, #tpu.memory_space<vmem>>, vector<1x512xf32>
    %153 = vector.broadcast %152 : vector<1x512xf32> to vector<8x512xf32>
    %154 = arith.addf %151, %153 : vector<8x512xf32>
    %155 = vector.extract_strided_slice %154 {offsets = [0, 0], sizes = [8, 128], strides = [1, 1]} : vector<8x512xf32> to vector<8x128xf32>
    %156 = arith.negf %155 : vector<8x128xf32>
    %157 = math.exp %156 : vector<8x128xf32>
    %cst_67 = arith.constant 1.000000e+00 : f32
    %158 = vector.broadcast %cst_67 : f32 to vector<8x128xf32>
    %159 = arith.addf %158, %157 : vector<8x128xf32>
    %160 = arith.divf %158, %159 : vector<8x128xf32>
    %161 = vector.extract_strided_slice %154 {offsets = [0, 128], sizes = [8, 128], strides = [1, 1]} : vector<8x512xf32> to vector<8x128xf32>
    %162 = arith.negf %161 : vector<8x128xf32>
    %163 = math.exp %162 : vector<8x128xf32>
    %cst_68 = arith.constant 1.000000e+00 : f32
    %164 = vector.broadcast %cst_68 : f32 to vector<8x128xf32>
    %165 = arith.addf %164, %163 : vector<8x128xf32>
    %166 = arith.divf %164, %165 : vector<8x128xf32>
    %167 = vector.extract_strided_slice %154 {offsets = [0, 256], sizes = [8, 128], strides = [1, 1]} : vector<8x512xf32> to vector<8x128xf32>
    %168 = math.tanh %167 : vector<8x128xf32>
    %169 = vector.extract_strided_slice %154 {offsets = [0, 384], sizes = [8, 128], strides = [1, 1]} : vector<8x512xf32> to vector<8x128xf32>
    %170 = arith.negf %169 : vector<8x128xf32>
    %171 = math.exp %170 : vector<8x128xf32>
    %cst_69 = arith.constant 1.000000e+00 : f32
    %172 = vector.broadcast %cst_69 : f32 to vector<8x128xf32>
    %173 = arith.addf %172, %171 : vector<8x128xf32>
    %174 = arith.divf %172, %173 : vector<8x128xf32>
    %175 = arith.mulf %166, %110 : vector<8x128xf32>
    %176 = arith.mulf %160, %168 : vector<8x128xf32>
    %177 = arith.addf %175, %176 : vector<8x128xf32>
    %178 = math.tanh %177 : vector<8x128xf32>
    %179 = arith.mulf %174, %178 : vector<8x128xf32>
    %180 = tpu.concatenate %179, %143 in 1 : vector<8x128xf32>, vector<8x128xf32> -> vector<8x256xf32>
    %c0_70 = arith.constant 0 : index
    %c0_71 = arith.constant 0 : index
    %181 = vector.load %arg6[%c0_70, %c0_71] : memref<256x512xf32, #tpu.memory_space<vmem>>, vector<256x512xf32>
    %cst_72 = arith.constant dense<0.000000e+00> : vector<8x512xf32>
    %182 = tpu.matmul %180, %181, %cst_72 {dimension_numbers = #tpu.dot_dimension_numbers<[1], [0], [0], [1], [0, 0, 1, 1], [], []>} : vector<8x256xf32>, vector<256x512xf32>, vector<8x512xf32> -> vector<8x512xf32>
    %c0_73 = arith.constant 0 : index
    %c0_74 = arith.constant 0 : index
    %183 = vector.load %arg7[%c0_73, %c0_74] : memref<1x512xf32, #tpu.memory_space<vmem>>, vector<1x512xf32>
    %184 = vector.broadcast %183 : vector<1x512xf32> to vector<8x512xf32>
    %185 = arith.addf %182, %184 : vector<8x512xf32>
    %186 = vector.extract_strided_slice %185 {offsets = [0, 0], sizes = [8, 128], strides = [1, 1]} : vector<8x512xf32> to vector<8x128xf32>
    %187 = arith.negf %186 : vector<8x128xf32>
    %188 = math.exp %187 : vector<8x128xf32>
    %cst_75 = arith.constant 1.000000e+00 : f32
    %189 = vector.broadcast %cst_75 : f32 to vector<8x128xf32>
    %190 = arith.addf %189, %188 : vector<8x128xf32>
    %191 = arith.divf %189, %190 : vector<8x128xf32>
    %192 = vector.extract_strided_slice %185 {offsets = [0, 128], sizes = [8, 128], strides = [1, 1]} : vector<8x512xf32> to vector<8x128xf32>
    %193 = arith.negf %192 : vector<8x128xf32>
    %194 = math.exp %193 : vector<8x128xf32>
    %cst_76 = arith.constant 1.000000e+00 : f32
    %195 = vector.broadcast %cst_76 : f32 to vector<8x128xf32>
    %196 = arith.addf %195, %194 : vector<8x128xf32>
    %197 = arith.divf %195, %196 : vector<8x128xf32>
    %198 = vector.extract_strided_slice %185 {offsets = [0, 256], sizes = [8, 128], strides = [1, 1]} : vector<8x512xf32> to vector<8x128xf32>
    %199 = math.tanh %198 : vector<8x128xf32>
    %200 = vector.extract_strided_slice %185 {offsets = [0, 384], sizes = [8, 128], strides = [1, 1]} : vector<8x512xf32> to vector<8x128xf32>
    %201 = arith.negf %200 : vector<8x128xf32>
    %202 = math.exp %201 : vector<8x128xf32>
    %cst_77 = arith.constant 1.000000e+00 : f32
    %203 = vector.broadcast %cst_77 : f32 to vector<8x128xf32>
    %204 = arith.addf %203, %202 : vector<8x128xf32>
    %205 = arith.divf %203, %204 : vector<8x128xf32>
    %206 = arith.mulf %197, %141 : vector<8x128xf32>
    %207 = arith.mulf %191, %199 : vector<8x128xf32>
    %208 = arith.addf %206, %207 : vector<8x128xf32>
    %209 = math.tanh %208 : vector<8x128xf32>
    %210 = arith.mulf %205, %209 : vector<8x128xf32>
    %c16 = arith.constant 16 : index
    %c0_78 = arith.constant 0 : index
    %211 = vector.load %arg13[%c16, %c0_78] : memref<64x128xf32, #tpu.memory_space<vmem>>, vector<8x128xf32>
    tpu.vector_store %arg13[%c16, %c0_78], %210 {strides = array<i32>} : memref<64x128xf32, #tpu.memory_space<vmem>>, vector<8x128xf32>,
    %c0_79 = arith.constant 0 : index
    %c3 = arith.constant 3 : index
    %c0_80 = arith.constant 0 : index
    %212 = vector.load %arg2[%c0_79, %c3, %c0_80] : memref<8x8x16xf32, #tpu.memory_space<vmem>>, vector<8x1x16xf32>
    %213 = vector.shape_cast %212 : vector<8x1x16xf32> to vector<8x16xf32>
    %c0_81 = arith.constant 0 : index
    %c0_82 = arith.constant 0 : index
    %214 = vector.load %arg3[%c0_81, %c0_82] : memref<16x512xf32, #tpu.memory_space<vmem>>, vector<16x512xf32>
    %cst_83 = arith.constant dense<0.000000e+00> : vector<8x512xf32>
    %215 = tpu.matmul %213, %214, %cst_83 {dimension_numbers = #tpu.dot_dimension_numbers<[1], [0], [0], [1], [0, 0, 1, 1], [], []>} : vector<8x16xf32>, vector<16x512xf32>, vector<8x512xf32> -> vector<8x512xf32>
    %c0_84 = arith.constant 0 : index
    %c0_85 = arith.constant 0 : index
    %216 = vector.load %arg4[%c0_84, %c0_85] : memref<128x512xf32, #tpu.memory_space<vmem>>, vector<128x512xf32>
    %cst_86 = arith.constant dense<0.000000e+00> : vector<8x512xf32>
    %217 = tpu.matmul %179, %216, %cst_86 {dimension_numbers = #tpu.dot_dimension_numbers<[1], [0], [0], [1], [0, 0, 1, 1], [], []>} : vector<8x128xf32>, vector<128x512xf32>, vector<8x512xf32> -> vector<8x512xf32>
    %218 = arith.addf %215, %217 : vector<8x512xf32>
    %c0_87 = arith.constant 0 : index
    %c0_88 = arith.constant 0 : index
    %219 = vector.load %arg5[%c0_87, %c0_88] : memref<1x512xf32, #tpu.memory_space<vmem>>, vector<1x512xf32>
    %220 = vector.broadcast %219 : vector<1x512xf32> to vector<8x512xf32>
    %221 = arith.addf %218, %220 : vector<8x512xf32>
    %222 = vector.extract_strided_slice %221 {offsets = [0, 0], sizes = [8, 128], strides = [1, 1]} : vector<8x512xf32> to vector<8x128xf32>
    %223 = arith.negf %222 : vector<8x128xf32>
    %224 = math.exp %223 : vector<8x128xf32>
    %cst_89 = arith.constant 1.000000e+00 : f32
    %225 = vector.broadcast %cst_89 : f32 to vector<8x128xf32>
    %226 = arith.addf %225, %224 : vector<8x128xf32>
    %227 = arith.divf %225, %226 : vector<8x128xf32>
    %228 = vector.extract_strided_slice %221 {offsets = [0, 128], sizes = [8, 128], strides = [1, 1]} : vector<8x512xf32> to vector<8x128xf32>
    %229 = arith.negf %228 : vector<8x128xf32>
    %230 = math.exp %229 : vector<8x128xf32>
    %cst_90 = arith.constant 1.000000e+00 : f32
    %231 = vector.broadcast %cst_90 : f32 to vector<8x128xf32>
    %232 = arith.addf %231, %230 : vector<8x128xf32>
    %233 = arith.divf %231, %232 : vector<8x128xf32>
    %234 = vector.extract_strided_slice %221 {offsets = [0, 256], sizes = [8, 128], strides = [1, 1]} : vector<8x512xf32> to vector<8x128xf32>
    %235 = math.tanh %234 : vector<8x128xf32>
    %236 = vector.extract_strided_slice %221 {offsets = [0, 384], sizes = [8, 128], strides = [1, 1]} : vector<8x512xf32> to vector<8x128xf32>
    %237 = arith.negf %236 : vector<8x128xf32>
    %238 = math.exp %237 : vector<8x128xf32>
    %cst_91 = arith.constant 1.000000e+00 : f32
    %239 = vector.broadcast %cst_91 : f32 to vector<8x128xf32>
    %240 = arith.addf %239, %238 : vector<8x128xf32>
    %241 = arith.divf %239, %240 : vector<8x128xf32>
    %242 = arith.mulf %233, %177 : vector<8x128xf32>
    %243 = arith.mulf %227, %235 : vector<8x128xf32>
    %244 = arith.addf %242, %243 : vector<8x128xf32>
    %245 = math.tanh %244 : vector<8x128xf32>
    %246 = arith.mulf %241, %245 : vector<8x128xf32>
    %247 = tpu.concatenate %246, %210 in 1 : vector<8x128xf32>, vector<8x128xf32> -> vector<8x256xf32>
    %c0_92 = arith.constant 0 : index
    %c0_93 = arith.constant 0 : index
    %248 = vector.load %arg6[%c0_92, %c0_93] : memref<256x512xf32, #tpu.memory_space<vmem>>, vector<256x512xf32>
    %cst_94 = arith.constant dense<0.000000e+00> : vector<8x512xf32>
    %249 = tpu.matmul %247, %248, %cst_94 {dimension_numbers = #tpu.dot_dimension_numbers<[1], [0], [0], [1], [0, 0, 1, 1], [], []>} : vector<8x256xf32>, vector<256x512xf32>, vector<8x512xf32> -> vector<8x512xf32>
    %c0_95 = arith.constant 0 : index
    %c0_96 = arith.constant 0 : index
    %250 = vector.load %arg7[%c0_95, %c0_96] : memref<1x512xf32, #tpu.memory_space<vmem>>, vector<1x512xf32>
    %251 = vector.broadcast %250 : vector<1x512xf32> to vector<8x512xf32>
    %252 = arith.addf %249, %251 : vector<8x512xf32>
    %253 = vector.extract_strided_slice %252 {offsets = [0, 0], sizes = [8, 128], strides = [1, 1]} : vector<8x512xf32> to vector<8x128xf32>
    %254 = arith.negf %253 : vector<8x128xf32>
    %255 = math.exp %254 : vector<8x128xf32>
    %cst_97 = arith.constant 1.000000e+00 : f32
    %256 = vector.broadcast %cst_97 : f32 to vector<8x128xf32>
    %257 = arith.addf %256, %255 : vector<8x128xf32>
    %258 = arith.divf %256, %257 : vector<8x128xf32>
    %259 = vector.extract_strided_slice %252 {offsets = [0, 128], sizes = [8, 128], strides = [1, 1]} : vector<8x512xf32> to vector<8x128xf32>
    %260 = arith.negf %259 : vector<8x128xf32>
    %261 = math.exp %260 : vector<8x128xf32>
    %cst_98 = arith.constant 1.000000e+00 : f32
    %262 = vector.broadcast %cst_98 : f32 to vector<8x128xf32>
    %263 = arith.addf %262, %261 : vector<8x128xf32>
    %264 = arith.divf %262, %263 : vector<8x128xf32>
    %265 = vector.extract_strided_slice %252 {offsets = [0, 256], sizes = [8, 128], strides = [1, 1]} : vector<8x512xf32> to vector<8x128xf32>
    %266 = math.tanh %265 : vector<8x128xf32>
    %267 = vector.extract_strided_slice %252 {offsets = [0, 384], sizes = [8, 128], strides = [1, 1]} : vector<8x512xf32> to vector<8x128xf32>
    %268 = arith.negf %267 : vector<8x128xf32>
    %269 = math.exp %268 : vector<8x128xf32>
    %cst_99 = arith.constant 1.000000e+00 : f32
    %270 = vector.broadcast %cst_99 : f32 to vector<8x128xf32>
    %271 = arith.addf %270, %269 : vector<8x128xf32>
    %272 = arith.divf %270, %271 : vector<8x128xf32>
    %273 = arith.mulf %264, %208 : vector<8x128xf32>
    %274 = arith.mulf %258, %266 : vector<8x128xf32>
    %275 = arith.addf %273, %274 : vector<8x128xf32>
    %276 = math.tanh %275 : vector<8x128xf32>
    %277 = arith.mulf %272, %276 : vector<8x128xf32>
    %c24 = arith.constant 24 : index
    %c0_100 = arith.constant 0 : index
    %278 = vector.load %arg13[%c24, %c0_100] : memref<64x128xf32, #tpu.memory_space<vmem>>, vector<8x128xf32>
    tpu.vector_store %arg13[%c24, %c0_100], %277 {strides = array<i32>} : memref<64x128xf32, #tpu.memory_space<vmem>>, vector<8x128xf32>,
    %c0_101 = arith.constant 0 : index
    %c4 = arith.constant 4 : index
    %c0_102 = arith.constant 0 : index
    %279 = vector.load %arg2[%c0_101, %c4, %c0_102] : memref<8x8x16xf32, #tpu.memory_space<vmem>>, vector<8x1x16xf32>
    %280 = vector.shape_cast %279 : vector<8x1x16xf32> to vector<8x16xf32>
    %c0_103 = arith.constant 0 : index
    %c0_104 = arith.constant 0 : index
    %281 = vector.load %arg3[%c0_103, %c0_104] : memref<16x512xf32, #tpu.memory_space<vmem>>, vector<16x512xf32>
    %cst_105 = arith.constant dense<0.000000e+00> : vector<8x512xf32>
    %282 = tpu.matmul %280, %281, %cst_105 {dimension_numbers = #tpu.dot_dimension_numbers<[1], [0], [0], [1], [0, 0, 1, 1], [], []>} : vector<8x16xf32>, vector<16x512xf32>, vector<8x512xf32> -> vector<8x512xf32>
    %c0_106 = arith.constant 0 : index
    %c0_107 = arith.constant 0 : index
    %283 = vector.load %arg4[%c0_106, %c0_107] : memref<128x512xf32, #tpu.memory_space<vmem>>, vector<128x512xf32>
    %cst_108 = arith.constant dense<0.000000e+00> : vector<8x512xf32>
    %284 = tpu.matmul %246, %283, %cst_108 {dimension_numbers = #tpu.dot_dimension_numbers<[1], [0], [0], [1], [0, 0, 1, 1], [], []>} : vector<8x128xf32>, vector<128x512xf32>, vector<8x512xf32> -> vector<8x512xf32>
    %285 = arith.addf %282, %284 : vector<8x512xf32>
    %c0_109 = arith.constant 0 : index
    %c0_110 = arith.constant 0 : index
    %286 = vector.load %arg5[%c0_109, %c0_110] : memref<1x512xf32, #tpu.memory_space<vmem>>, vector<1x512xf32>
    %287 = vector.broadcast %286 : vector<1x512xf32> to vector<8x512xf32>
    %288 = arith.addf %285, %287 : vector<8x512xf32>
    %289 = vector.extract_strided_slice %288 {offsets = [0, 0], sizes = [8, 128], strides = [1, 1]} : vector<8x512xf32> to vector<8x128xf32>
    %290 = arith.negf %289 : vector<8x128xf32>
    %291 = math.exp %290 : vector<8x128xf32>
    %cst_111 = arith.constant 1.000000e+00 : f32
    %292 = vector.broadcast %cst_111 : f32 to vector<8x128xf32>
    %293 = arith.addf %292, %291 : vector<8x128xf32>
    %294 = arith.divf %292, %293 : vector<8x128xf32>
    %295 = vector.extract_strided_slice %288 {offsets = [0, 128], sizes = [8, 128], strides = [1, 1]} : vector<8x512xf32> to vector<8x128xf32>
    %296 = arith.negf %295 : vector<8x128xf32>
    %297 = math.exp %296 : vector<8x128xf32>
    %cst_112 = arith.constant 1.000000e+00 : f32
    %298 = vector.broadcast %cst_112 : f32 to vector<8x128xf32>
    %299 = arith.addf %298, %297 : vector<8x128xf32>
    %300 = arith.divf %298, %299 : vector<8x128xf32>
    %301 = vector.extract_strided_slice %288 {offsets = [0, 256], sizes = [8, 128], strides = [1, 1]} : vector<8x512xf32> to vector<8x128xf32>
    %302 = math.tanh %301 : vector<8x128xf32>
    %303 = vector.extract_strided_slice %288 {offsets = [0, 384], sizes = [8, 128], strides = [1, 1]} : vector<8x512xf32> to vector<8x128xf32>
    %304 = arith.negf %303 : vector<8x128xf32>
    %305 = math.exp %304 : vector<8x128xf32>
    %cst_113 = arith.constant 1.000000e+00 : f32
    %306 = vector.broadcast %cst_113 : f32 to vector<8x128xf32>
    %307 = arith.addf %306, %305 : vector<8x128xf32>
    %308 = arith.divf %306, %307 : vector<8x128xf32>
    %309 = arith.mulf %300, %244 : vector<8x128xf32>
    %310 = arith.mulf %294, %302 : vector<8x128xf32>
    %311 = arith.addf %309, %310 : vector<8x128xf32>
    %312 = math.tanh %311 : vector<8x128xf32>
    %313 = arith.mulf %308, %312 : vector<8x128xf32>
    %314 = tpu.concatenate %313, %277 in 1 : vector<8x128xf32>, vector<8x128xf32> -> vector<8x256xf32>
    %c0_114 = arith.constant 0 : index
    %c0_115 = arith.constant 0 : index
    %315 = vector.load %arg6[%c0_114, %c0_115] : memref<256x512xf32, #tpu.memory_space<vmem>>, vector<256x512xf32>
    %cst_116 = arith.constant dense<0.000000e+00> : vector<8x512xf32>
    %316 = tpu.matmul %314, %315, %cst_116 {dimension_numbers = #tpu.dot_dimension_numbers<[1], [0], [0], [1], [0, 0, 1, 1], [], []>} : vector<8x256xf32>, vector<256x512xf32>, vector<8x512xf32> -> vector<8x512xf32>
    %c0_117 = arith.constant 0 : index
    %c0_118 = arith.constant 0 : index
    %317 = vector.load %arg7[%c0_117, %c0_118] : memref<1x512xf32, #tpu.memory_space<vmem>>, vector<1x512xf32>
    %318 = vector.broadcast %317 : vector<1x512xf32> to vector<8x512xf32>
    %319 = arith.addf %316, %318 : vector<8x512xf32>
    %320 = vector.extract_strided_slice %319 {offsets = [0, 0], sizes = [8, 128], strides = [1, 1]} : vector<8x512xf32> to vector<8x128xf32>
    %321 = arith.negf %320 : vector<8x128xf32>
    %322 = math.exp %321 : vector<8x128xf32>
    %cst_119 = arith.constant 1.000000e+00 : f32
    %323 = vector.broadcast %cst_119 : f32 to vector<8x128xf32>
    %324 = arith.addf %323, %322 : vector<8x128xf32>
    %325 = arith.divf %323, %324 : vector<8x128xf32>
    %326 = vector.extract_strided_slice %319 {offsets = [0, 128], sizes = [8, 128], strides = [1, 1]} : vector<8x512xf32> to vector<8x128xf32>
    %327 = arith.negf %326 : vector<8x128xf32>
    %328 = math.exp %327 : vector<8x128xf32>
    %cst_120 = arith.constant 1.000000e+00 : f32
    %329 = vector.broadcast %cst_120 : f32 to vector<8x128xf32>
    %330 = arith.addf %329, %328 : vector<8x128xf32>
    %331 = arith.divf %329, %330 : vector<8x128xf32>
    %332 = vector.extract_strided_slice %319 {offsets = [0, 256], sizes = [8, 128], strides = [1, 1]} : vector<8x512xf32> to vector<8x128xf32>
    %333 = math.tanh %332 : vector<8x128xf32>
    %334 = vector.extract_strided_slice %319 {offsets = [0, 384], sizes = [8, 128], strides = [1, 1]} : vector<8x512xf32> to vector<8x128xf32>
    %335 = arith.negf %334 : vector<8x128xf32>
    %336 = math.exp %335 : vector<8x128xf32>
    %cst_121 = arith.constant 1.000000e+00 : f32
    %337 = vector.broadcast %cst_121 : f32 to vector<8x128xf32>
    %338 = arith.addf %337, %336 : vector<8x128xf32>
    %339 = arith.divf %337, %338 : vector<8x128xf32>
    %340 = arith.mulf %331, %275 : vector<8x128xf32>
    %341 = arith.mulf %325, %333 : vector<8x128xf32>
    %342 = arith.addf %340, %341 : vector<8x128xf32>
    %343 = math.tanh %342 : vector<8x128xf32>
    %344 = arith.mulf %339, %343 : vector<8x128xf32>
    %c32 = arith.constant 32 : index
    %c0_122 = arith.constant 0 : index
    %345 = vector.load %arg13[%c32, %c0_122] : memref<64x128xf32, #tpu.memory_space<vmem>>, vector<8x128xf32>
    tpu.vector_store %arg13[%c32, %c0_122], %344 {strides = array<i32>} : memref<64x128xf32, #tpu.memory_space<vmem>>, vector<8x128xf32>,
    %c0_123 = arith.constant 0 : index
    %c5 = arith.constant 5 : index
    %c0_124 = arith.constant 0 : index
    %346 = vector.load %arg2[%c0_123, %c5, %c0_124] : memref<8x8x16xf32, #tpu.memory_space<vmem>>, vector<8x1x16xf32>
    %347 = vector.shape_cast %346 : vector<8x1x16xf32> to vector<8x16xf32>
    %c0_125 = arith.constant 0 : index
    %c0_126 = arith.constant 0 : index
    %348 = vector.load %arg3[%c0_125, %c0_126] : memref<16x512xf32, #tpu.memory_space<vmem>>, vector<16x512xf32>
    %cst_127 = arith.constant dense<0.000000e+00> : vector<8x512xf32>
    %349 = tpu.matmul %347, %348, %cst_127 {dimension_numbers = #tpu.dot_dimension_numbers<[1], [0], [0], [1], [0, 0, 1, 1], [], []>} : vector<8x16xf32>, vector<16x512xf32>, vector<8x512xf32> -> vector<8x512xf32>
    %c0_128 = arith.constant 0 : index
    %c0_129 = arith.constant 0 : index
    %350 = vector.load %arg4[%c0_128, %c0_129] : memref<128x512xf32, #tpu.memory_space<vmem>>, vector<128x512xf32>
    %cst_130 = arith.constant dense<0.000000e+00> : vector<8x512xf32>
    %351 = tpu.matmul %313, %350, %cst_130 {dimension_numbers = #tpu.dot_dimension_numbers<[1], [0], [0], [1], [0, 0, 1, 1], [], []>} : vector<8x128xf32>, vector<128x512xf32>, vector<8x512xf32> -> vector<8x512xf32>
    %352 = arith.addf %349, %351 : vector<8x512xf32>
    %c0_131 = arith.constant 0 : index
    %c0_132 = arith.constant 0 : index
    %353 = vector.load %arg5[%c0_131, %c0_132] : memref<1x512xf32, #tpu.memory_space<vmem>>, vector<1x512xf32>
    %354 = vector.broadcast %353 : vector<1x512xf32> to vector<8x512xf32>
    %355 = arith.addf %352, %354 : vector<8x512xf32>
    %356 = vector.extract_strided_slice %355 {offsets = [0, 0], sizes = [8, 128], strides = [1, 1]} : vector<8x512xf32> to vector<8x128xf32>
    %357 = arith.negf %356 : vector<8x128xf32>
    %358 = math.exp %357 : vector<8x128xf32>
    %cst_133 = arith.constant 1.000000e+00 : f32
    %359 = vector.broadcast %cst_133 : f32 to vector<8x128xf32>
    %360 = arith.addf %359, %358 : vector<8x128xf32>
    %361 = arith.divf %359, %360 : vector<8x128xf32>
    %362 = vector.extract_strided_slice %355 {offsets = [0, 128], sizes = [8, 128], strides = [1, 1]} : vector<8x512xf32> to vector<8x128xf32>
    %363 = arith.negf %362 : vector<8x128xf32>
    %364 = math.exp %363 : vector<8x128xf32>
    %cst_134 = arith.constant 1.000000e+00 : f32
    %365 = vector.broadcast %cst_134 : f32 to vector<8x128xf32>
    %366 = arith.addf %365, %364 : vector<8x128xf32>
    %367 = arith.divf %365, %366 : vector<8x128xf32>
    %368 = vector.extract_strided_slice %355 {offsets = [0, 256], sizes = [8, 128], strides = [1, 1]} : vector<8x512xf32> to vector<8x128xf32>
    %369 = math.tanh %368 : vector<8x128xf32>
    %370 = vector.extract_strided_slice %355 {offsets = [0, 384], sizes = [8, 128], strides = [1, 1]} : vector<8x512xf32> to vector<8x128xf32>
    %371 = arith.negf %370 : vector<8x128xf32>
    %372 = math.exp %371 : vector<8x128xf32>
    %cst_135 = arith.constant 1.000000e+00 : f32
    %373 = vector.broadcast %cst_135 : f32 to vector<8x128xf32>
    %374 = arith.addf %373, %372 : vector<8x128xf32>
    %375 = arith.divf %373, %374 : vector<8x128xf32>
    %376 = arith.mulf %367, %311 : vector<8x128xf32>
    %377 = arith.mulf %361, %369 : vector<8x128xf32>
    %378 = arith.addf %376, %377 : vector<8x128xf32>
    %379 = math.tanh %378 : vector<8x128xf32>
    %380 = arith.mulf %375, %379 : vector<8x128xf32>
    %381 = tpu.concatenate %380, %344 in 1 : vector<8x128xf32>, vector<8x128xf32> -> vector<8x256xf32>
    %c0_136 = arith.constant 0 : index
    %c0_137 = arith.constant 0 : index
    %382 = vector.load %arg6[%c0_136, %c0_137] : memref<256x512xf32, #tpu.memory_space<vmem>>, vector<256x512xf32>
    %cst_138 = arith.constant dense<0.000000e+00> : vector<8x512xf32>
    %383 = tpu.matmul %381, %382, %cst_138 {dimension_numbers = #tpu.dot_dimension_numbers<[1], [0], [0], [1], [0, 0, 1, 1], [], []>} : vector<8x256xf32>, vector<256x512xf32>, vector<8x512xf32> -> vector<8x512xf32>
    %c0_139 = arith.constant 0 : index
    %c0_140 = arith.constant 0 : index
    %384 = vector.load %arg7[%c0_139, %c0_140] : memref<1x512xf32, #tpu.memory_space<vmem>>, vector<1x512xf32>
    %385 = vector.broadcast %384 : vector<1x512xf32> to vector<8x512xf32>
    %386 = arith.addf %383, %385 : vector<8x512xf32>
    %387 = vector.extract_strided_slice %386 {offsets = [0, 0], sizes = [8, 128], strides = [1, 1]} : vector<8x512xf32> to vector<8x128xf32>
    %388 = arith.negf %387 : vector<8x128xf32>
    %389 = math.exp %388 : vector<8x128xf32>
    %cst_141 = arith.constant 1.000000e+00 : f32
    %390 = vector.broadcast %cst_141 : f32 to vector<8x128xf32>
    %391 = arith.addf %390, %389 : vector<8x128xf32>
    %392 = arith.divf %390, %391 : vector<8x128xf32>
    %393 = vector.extract_strided_slice %386 {offsets = [0, 128], sizes = [8, 128], strides = [1, 1]} : vector<8x512xf32> to vector<8x128xf32>
    %394 = arith.negf %393 : vector<8x128xf32>
    %395 = math.exp %394 : vector<8x128xf32>
    %cst_142 = arith.constant 1.000000e+00 : f32
    %396 = vector.broadcast %cst_142 : f32 to vector<8x128xf32>
    %397 = arith.addf %396, %395 : vector<8x128xf32>
    %398 = arith.divf %396, %397 : vector<8x128xf32>
    %399 = vector.extract_strided_slice %386 {offsets = [0, 256], sizes = [8, 128], strides = [1, 1]} : vector<8x512xf32> to vector<8x128xf32>
    %400 = math.tanh %399 : vector<8x128xf32>
    %401 = vector.extract_strided_slice %386 {offsets = [0, 384], sizes = [8, 128], strides = [1, 1]} : vector<8x512xf32> to vector<8x128xf32>
    %402 = arith.negf %401 : vector<8x128xf32>
    %403 = math.exp %402 : vector<8x128xf32>
    %cst_143 = arith.constant 1.000000e+00 : f32
    %404 = vector.broadcast %cst_143 : f32 to vector<8x128xf32>
    %405 = arith.addf %404, %403 : vector<8x128xf32>
    %406 = arith.divf %404, %405 : vector<8x128xf32>
    %407 = arith.mulf %398, %342 : vector<8x128xf32>
    %408 = arith.mulf %392, %400 : vector<8x128xf32>
    %409 = arith.addf %407, %408 : vector<8x128xf32>
    %410 = math.tanh %409 : vector<8x128xf32>
    %411 = arith.mulf %406, %410 : vector<8x128xf32>
    %c40 = arith.constant 40 : index
    %c0_144 = arith.constant 0 : index
    %412 = vector.load %arg13[%c40, %c0_144] : memref<64x128xf32, #tpu.memory_space<vmem>>, vector<8x128xf32>
    tpu.vector_store %arg13[%c40, %c0_144], %411 {strides = array<i32>} : memref<64x128xf32, #tpu.memory_space<vmem>>, vector<8x128xf32>,
    %c0_145 = arith.constant 0 : index
    %c6 = arith.constant 6 : index
    %c0_146 = arith.constant 0 : index
    %413 = vector.load %arg2[%c0_145, %c6, %c0_146] : memref<8x8x16xf32, #tpu.memory_space<vmem>>, vector<8x1x16xf32>
    %414 = vector.shape_cast %413 : vector<8x1x16xf32> to vector<8x16xf32>
    %c0_147 = arith.constant 0 : index
    %c0_148 = arith.constant 0 : index
    %415 = vector.load %arg3[%c0_147, %c0_148] : memref<16x512xf32, #tpu.memory_space<vmem>>, vector<16x512xf32>
    %cst_149 = arith.constant dense<0.000000e+00> : vector<8x512xf32>
    %416 = tpu.matmul %414, %415, %cst_149 {dimension_numbers = #tpu.dot_dimension_numbers<[1], [0], [0], [1], [0, 0, 1, 1], [], []>} : vector<8x16xf32>, vector<16x512xf32>, vector<8x512xf32> -> vector<8x512xf32>
    %c0_150 = arith.constant 0 : index
    %c0_151 = arith.constant 0 : index
    %417 = vector.load %arg4[%c0_150, %c0_151] : memref<128x512xf32, #tpu.memory_space<vmem>>, vector<128x512xf32>
    %cst_152 = arith.constant dense<0.000000e+00> : vector<8x512xf32>
    %418 = tpu.matmul %380, %417, %cst_152 {dimension_numbers = #tpu.dot_dimension_numbers<[1], [0], [0], [1], [0, 0, 1, 1], [], []>} : vector<8x128xf32>, vector<128x512xf32>, vector<8x512xf32> -> vector<8x512xf32>
    %419 = arith.addf %416, %418 : vector<8x512xf32>
    %c0_153 = arith.constant 0 : index
    %c0_154 = arith.constant 0 : index
    %420 = vector.load %arg5[%c0_153, %c0_154] : memref<1x512xf32, #tpu.memory_space<vmem>>, vector<1x512xf32>
    %421 = vector.broadcast %420 : vector<1x512xf32> to vector<8x512xf32>
    %422 = arith.addf %419, %421 : vector<8x512xf32>
    %423 = vector.extract_strided_slice %422 {offsets = [0, 0], sizes = [8, 128], strides = [1, 1]} : vector<8x512xf32> to vector<8x128xf32>
    %424 = arith.negf %423 : vector<8x128xf32>
    %425 = math.exp %424 : vector<8x128xf32>
    %cst_155 = arith.constant 1.000000e+00 : f32
    %426 = vector.broadcast %cst_155 : f32 to vector<8x128xf32>
    %427 = arith.addf %426, %425 : vector<8x128xf32>
    %428 = arith.divf %426, %427 : vector<8x128xf32>
    %429 = vector.extract_strided_slice %422 {offsets = [0, 128], sizes = [8, 128], strides = [1, 1]} : vector<8x512xf32> to vector<8x128xf32>
    %430 = arith.negf %429 : vector<8x128xf32>
    %431 = math.exp %430 : vector<8x128xf32>
    %cst_156 = arith.constant 1.000000e+00 : f32
    %432 = vector.broadcast %cst_156 : f32 to vector<8x128xf32>
    %433 = arith.addf %432, %431 : vector<8x128xf32>
    %434 = arith.divf %432, %433 : vector<8x128xf32>
    %435 = vector.extract_strided_slice %422 {offsets = [0, 256], sizes = [8, 128], strides = [1, 1]} : vector<8x512xf32> to vector<8x128xf32>
    %436 = math.tanh %435 : vector<8x128xf32>
    %437 = vector.extract_strided_slice %422 {offsets = [0, 384], sizes = [8, 128], strides = [1, 1]} : vector<8x512xf32> to vector<8x128xf32>
    %438 = arith.negf %437 : vector<8x128xf32>
    %439 = math.exp %438 : vector<8x128xf32>
    %cst_157 = arith.constant 1.000000e+00 : f32
    %440 = vector.broadcast %cst_157 : f32 to vector<8x128xf32>
    %441 = arith.addf %440, %439 : vector<8x128xf32>
    %442 = arith.divf %440, %441 : vector<8x128xf32>
    %443 = arith.mulf %434, %378 : vector<8x128xf32>
    %444 = arith.mulf %428, %436 : vector<8x128xf32>
    %445 = arith.addf %443, %444 : vector<8x128xf32>
    %446 = math.tanh %445 : vector<8x128xf32>
    %447 = arith.mulf %442, %446 : vector<8x128xf32>
    %448 = tpu.concatenate %447, %411 in 1 : vector<8x128xf32>, vector<8x128xf32> -> vector<8x256xf32>
    %c0_158 = arith.constant 0 : index
    %c0_159 = arith.constant 0 : index
    %449 = vector.load %arg6[%c0_158, %c0_159] : memref<256x512xf32, #tpu.memory_space<vmem>>, vector<256x512xf32>
    %cst_160 = arith.constant dense<0.000000e+00> : vector<8x512xf32>
    %450 = tpu.matmul %448, %449, %cst_160 {dimension_numbers = #tpu.dot_dimension_numbers<[1], [0], [0], [1], [0, 0, 1, 1], [], []>} : vector<8x256xf32>, vector<256x512xf32>, vector<8x512xf32> -> vector<8x512xf32>
    %c0_161 = arith.constant 0 : index
    %c0_162 = arith.constant 0 : index
    %451 = vector.load %arg7[%c0_161, %c0_162] : memref<1x512xf32, #tpu.memory_space<vmem>>, vector<1x512xf32>
    %452 = vector.broadcast %451 : vector<1x512xf32> to vector<8x512xf32>
    %453 = arith.addf %450, %452 : vector<8x512xf32>
    %454 = vector.extract_strided_slice %453 {offsets = [0, 0], sizes = [8, 128], strides = [1, 1]} : vector<8x512xf32> to vector<8x128xf32>
    %455 = arith.negf %454 : vector<8x128xf32>
    %456 = math.exp %455 : vector<8x128xf32>
    %cst_163 = arith.constant 1.000000e+00 : f32
    %457 = vector.broadcast %cst_163 : f32 to vector<8x128xf32>
    %458 = arith.addf %457, %456 : vector<8x128xf32>
    %459 = arith.divf %457, %458 : vector<8x128xf32>
    %460 = vector.extract_strided_slice %453 {offsets = [0, 128], sizes = [8, 128], strides = [1, 1]} : vector<8x512xf32> to vector<8x128xf32>
    %461 = arith.negf %460 : vector<8x128xf32>
    %462 = math.exp %461 : vector<8x128xf32>
    %cst_164 = arith.constant 1.000000e+00 : f32
    %463 = vector.broadcast %cst_164 : f32 to vector<8x128xf32>
    %464 = arith.addf %463, %462 : vector<8x128xf32>
    %465 = arith.divf %463, %464 : vector<8x128xf32>
    %466 = vector.extract_strided_slice %453 {offsets = [0, 256], sizes = [8, 128], strides = [1, 1]} : vector<8x512xf32> to vector<8x128xf32>
    %467 = math.tanh %466 : vector<8x128xf32>
    %468 = vector.extract_strided_slice %453 {offsets = [0, 384], sizes = [8, 128], strides = [1, 1]} : vector<8x512xf32> to vector<8x128xf32>
    %469 = arith.negf %468 : vector<8x128xf32>
    %470 = math.exp %469 : vector<8x128xf32>
    %cst_165 = arith.constant 1.000000e+00 : f32
    %471 = vector.broadcast %cst_165 : f32 to vector<8x128xf32>
    %472 = arith.addf %471, %470 : vector<8x128xf32>
    %473 = arith.divf %471, %472 : vector<8x128xf32>
    %474 = arith.mulf %465, %409 : vector<8x128xf32>
    %475 = arith.mulf %459, %467 : vector<8x128xf32>
    %476 = arith.addf %474, %475 : vector<8x128xf32>
    %477 = math.tanh %476 : vector<8x128xf32>
    %478 = arith.mulf %473, %477 : vector<8x128xf32>
    %c48 = arith.constant 48 : index
    %c0_166 = arith.constant 0 : index
    %479 = vector.load %arg13[%c48, %c0_166] : memref<64x128xf32, #tpu.memory_space<vmem>>, vector<8x128xf32>
    tpu.vector_store %arg13[%c48, %c0_166], %478 {strides = array<i32>} : memref<64x128xf32, #tpu.memory_space<vmem>>, vector<8x128xf32>,
    %c0_167 = arith.constant 0 : index
    %c7 = arith.constant 7 : index
    %c0_168 = arith.constant 0 : index
    %480 = vector.load %arg2[%c0_167, %c7, %c0_168] : memref<8x8x16xf32, #tpu.memory_space<vmem>>, vector<8x1x16xf32>
    %481 = vector.shape_cast %480 : vector<8x1x16xf32> to vector<8x16xf32>
    %c0_169 = arith.constant 0 : index
    %c0_170 = arith.constant 0 : index
    %482 = vector.load %arg3[%c0_169, %c0_170] : memref<16x512xf32, #tpu.memory_space<vmem>>, vector<16x512xf32>
    %cst_171 = arith.constant dense<0.000000e+00> : vector<8x512xf32>
    %483 = tpu.matmul %481, %482, %cst_171 {dimension_numbers = #tpu.dot_dimension_numbers<[1], [0], [0], [1], [0, 0, 1, 1], [], []>} : vector<8x16xf32>, vector<16x512xf32>, vector<8x512xf32> -> vector<8x512xf32>
    %c0_172 = arith.constant 0 : index
    %c0_173 = arith.constant 0 : index
    %484 = vector.load %arg4[%c0_172, %c0_173] : memref<128x512xf32, #tpu.memory_space<vmem>>, vector<128x512xf32>
    %cst_174 = arith.constant dense<0.000000e+00> : vector<8x512xf32>
    %485 = tpu.matmul %447, %484, %cst_174 {dimension_numbers = #tpu.dot_dimension_numbers<[1], [0], [0], [1], [0, 0, 1, 1], [], []>} : vector<8x128xf32>, vector<128x512xf32>, vector<8x512xf32> -> vector<8x512xf32>
    %486 = arith.addf %483, %485 : vector<8x512xf32>
    %c0_175 = arith.constant 0 : index
    %c0_176 = arith.constant 0 : index
    %487 = vector.load %arg5[%c0_175, %c0_176] : memref<1x512xf32, #tpu.memory_space<vmem>>, vector<1x512xf32>
    %488 = vector.broadcast %487 : vector<1x512xf32> to vector<8x512xf32>
    %489 = arith.addf %486, %488 : vector<8x512xf32>
    %490 = vector.extract_strided_slice %489 {offsets = [0, 0], sizes = [8, 128], strides = [1, 1]} : vector<8x512xf32> to vector<8x128xf32>
    %491 = arith.negf %490 : vector<8x128xf32>
    %492 = math.exp %491 : vector<8x128xf32>
    %cst_177 = arith.constant 1.000000e+00 : f32
    %493 = vector.broadcast %cst_177 : f32 to vector<8x128xf32>
    %494 = arith.addf %493, %492 : vector<8x128xf32>
    %495 = arith.divf %493, %494 : vector<8x128xf32>
    %496 = vector.extract_strided_slice %489 {offsets = [0, 128], sizes = [8, 128], strides = [1, 1]} : vector<8x512xf32> to vector<8x128xf32>
    %497 = arith.negf %496 : vector<8x128xf32>
    %498 = math.exp %497 : vector<8x128xf32>
    %cst_178 = arith.constant 1.000000e+00 : f32
    %499 = vector.broadcast %cst_178 : f32 to vector<8x128xf32>
    %500 = arith.addf %499, %498 : vector<8x128xf32>
    %501 = arith.divf %499, %500 : vector<8x128xf32>
    %502 = vector.extract_strided_slice %489 {offsets = [0, 256], sizes = [8, 128], strides = [1, 1]} : vector<8x512xf32> to vector<8x128xf32>
    %503 = math.tanh %502 : vector<8x128xf32>
    %504 = vector.extract_strided_slice %489 {offsets = [0, 384], sizes = [8, 128], strides = [1, 1]} : vector<8x512xf32> to vector<8x128xf32>
    %505 = arith.negf %504 : vector<8x128xf32>
    %506 = math.exp %505 : vector<8x128xf32>
    %cst_179 = arith.constant 1.000000e+00 : f32
    %507 = vector.broadcast %cst_179 : f32 to vector<8x128xf32>
    %508 = arith.addf %507, %506 : vector<8x128xf32>
    %509 = arith.divf %507, %508 : vector<8x128xf32>
    %510 = arith.mulf %501, %445 : vector<8x128xf32>
    %511 = arith.mulf %495, %503 : vector<8x128xf32>
    %512 = arith.addf %510, %511 : vector<8x128xf32>
    %513 = math.tanh %512 : vector<8x128xf32>
    %514 = arith.mulf %509, %513 : vector<8x128xf32>
    %515 = tpu.concatenate %514, %478 in 1 : vector<8x128xf32>, vector<8x128xf32> -> vector<8x256xf32>
    %c0_180 = arith.constant 0 : index
    %c0_181 = arith.constant 0 : index
    %516 = vector.load %arg6[%c0_180, %c0_181] : memref<256x512xf32, #tpu.memory_space<vmem>>, vector<256x512xf32>
    %cst_182 = arith.constant dense<0.000000e+00> : vector<8x512xf32>
    %517 = tpu.matmul %515, %516, %cst_182 {dimension_numbers = #tpu.dot_dimension_numbers<[1], [0], [0], [1], [0, 0, 1, 1], [], []>} : vector<8x256xf32>, vector<256x512xf32>, vector<8x512xf32> -> vector<8x512xf32>
    %c0_183 = arith.constant 0 : index
    %c0_184 = arith.constant 0 : index
    %518 = vector.load %arg7[%c0_183, %c0_184] : memref<1x512xf32, #tpu.memory_space<vmem>>, vector<1x512xf32>
    %519 = vector.broadcast %518 : vector<1x512xf32> to vector<8x512xf32>
    %520 = arith.addf %517, %519 : vector<8x512xf32>
    %521 = vector.extract_strided_slice %520 {offsets = [0, 0], sizes = [8, 128], strides = [1, 1]} : vector<8x512xf32> to vector<8x128xf32>
    %522 = arith.negf %521 : vector<8x128xf32>
    %523 = math.exp %522 : vector<8x128xf32>
    %cst_185 = arith.constant 1.000000e+00 : f32
    %524 = vector.broadcast %cst_185 : f32 to vector<8x128xf32>
    %525 = arith.addf %524, %523 : vector<8x128xf32>
    %526 = arith.divf %524, %525 : vector<8x128xf32>
    %527 = vector.extract_strided_slice %520 {offsets = [0, 128], sizes = [8, 128], strides = [1, 1]} : vector<8x512xf32> to vector<8x128xf32>
    %528 = arith.negf %527 : vector<8x128xf32>
    %529 = math.exp %528 : vector<8x128xf32>
    %cst_186 = arith.constant 1.000000e+00 : f32
    %530 = vector.broadcast %cst_186 : f32 to vector<8x128xf32>
    %531 = arith.addf %530, %529 : vector<8x128xf32>
    %532 = arith.divf %530, %531 : vector<8x128xf32>
    %533 = vector.extract_strided_slice %520 {offsets = [0, 256], sizes = [8, 128], strides = [1, 1]} : vector<8x512xf32> to vector<8x128xf32>
    %534 = math.tanh %533 : vector<8x128xf32>
    %535 = vector.extract_strided_slice %520 {offsets = [0, 384], sizes = [8, 128], strides = [1, 1]} : vector<8x512xf32> to vector<8x128xf32>
    %536 = arith.negf %535 : vector<8x128xf32>
    %537 = math.exp %536 : vector<8x128xf32>
    %cst_187 = arith.constant 1.000000e+00 : f32
    %538 = vector.broadcast %cst_187 : f32 to vector<8x128xf32>
    %539 = arith.addf %538, %537 : vector<8x128xf32>
    %540 = arith.divf %538, %539 : vector<8x128xf32>
    %541 = arith.mulf %532, %476 : vector<8x128xf32>
    %542 = arith.mulf %526, %534 : vector<8x128xf32>
    %543 = arith.addf %541, %542 : vector<8x128xf32>
    %544 = math.tanh %543 : vector<8x128xf32>
    %545 = arith.mulf %540, %544 : vector<8x128xf32>
    %c56 = arith.constant 56 : index
    %c0_188 = arith.constant 0 : index
    %546 = vector.load %arg13[%c56, %c0_188] : memref<64x128xf32, #tpu.memory_space<vmem>>, vector<8x128xf32>
    tpu.vector_store %arg13[%c56, %c0_188], %545 {strides = array<i32>} : memref<64x128xf32, #tpu.memory_space<vmem>>, vector<8x128xf32>,
    %c0_189 = arith.constant 0 : index
    %c0_190 = arith.constant 0 : index
    %c0_191 = arith.constant 0 : index
    %547 = vector.load %arg11[%c0_189, %c0_190, %c0_191] : memref<2x8x128xf32, #tpu.memory_space<vmem>>, vector<1x8x128xf32>
    %548 = vector.shape_cast %547 : vector<1x8x128xf32> to vector<8x128xf32>
    %549 = vector.shape_cast %514 : vector<8x128xf32> to vector<1x8x128xf32>
    tpu.vector_store %arg11[%c0_189, %c0_190, %c0_191], %549 {strides = array<i32>} : memref<2x8x128xf32, #tpu.memory_space<vmem>>, vector<1x8x128xf32>,
    %c0_192 = arith.constant 0 : index
    %c0_193 = arith.constant 0 : index
    %c0_194 = arith.constant 0 : index
    %550 = vector.load %arg12[%c0_192, %c0_193, %c0_194] : memref<2x8x128xf32, #tpu.memory_space<vmem>>, vector<1x8x128xf32>
    %551 = vector.shape_cast %550 : vector<1x8x128xf32> to vector<8x128xf32>
    %552 = vector.shape_cast %512 : vector<8x128xf32> to vector<1x8x128xf32>
    tpu.vector_store %arg12[%c0_192, %c0_193, %c0_194], %552 {strides = array<i32>} : memref<2x8x128xf32, #tpu.memory_space<vmem>>, vector<1x8x128xf32>,
    %c1_195 = arith.constant 1 : index
    %c0_196 = arith.constant 0 : index
    %c0_197 = arith.constant 0 : index
    %553 = vector.load %arg11[%c1_195, %c0_196, %c0_197] : memref<2x8x128xf32, #tpu.memory_space<vmem>>, vector<1x8x128xf32>
    %554 = vector.shape_cast %553 : vector<1x8x128xf32> to vector<8x128xf32>
    %555 = vector.shape_cast %545 : vector<8x128xf32> to vector<1x8x128xf32>
    tpu.vector_store %arg11[%c1_195, %c0_196, %c0_197], %555 {strides = array<i32>} : memref<2x8x128xf32, #tpu.memory_space<vmem>>, vector<1x8x128xf32>,
    %c1_198 = arith.constant 1 : index
    %c0_199 = arith.constant 0 : index
    %c0_200 = arith.constant 0 : index
    %556 = vector.load %arg12[%c1_198, %c0_199, %c0_200] : memref<2x8x128xf32, #tpu.memory_space<vmem>>, vector<1x8x128xf32>
    %557 = vector.shape_cast %556 : vector<1x8x128xf32> to vector<8x128xf32>
    %558 = vector.shape_cast %543 : vector<8x128xf32> to vector<1x8x128xf32>
    tpu.vector_store %arg12[%c1_198, %c0_199, %c0_200], %558 {strides = array<i32>} : memref<2x8x128xf32, #tpu.memory_space<vmem>>, vector<1x8x128xf32>,
    %c0_201 = arith.constant 0 : index
    %c0_202 = arith.constant 0 : index
    %559 = vector.load %arg13[%c0_201, %c0_202] : memref<64x128xf32, #tpu.memory_space<vmem>>, vector<64x128xf32>
    %c0_203 = arith.constant 0 : index
    %c0_204 = arith.constant 0 : index
    %560 = vector.load %arg8[%c0_203, %c0_204] : memref<128x128xf32, #tpu.memory_space<vmem>>, vector<128x128xf32>
    %cst_205 = arith.constant dense<0.000000e+00> : vector<64x128xf32>
    %561 = tpu.matmul %559, %560, %cst_205 {dimension_numbers = #tpu.dot_dimension_numbers<[1], [0], [0], [1], [0, 0, 1, 1], [], []>} : vector<64x128xf32>, vector<128x128xf32>, vector<64x128xf32> -> vector<64x128xf32>
    %c0_206 = arith.constant 0 : index
    %c0_207 = arith.constant 0 : index
    %562 = vector.load %arg9[%c0_206, %c0_207] : memref<1x128xf32, #tpu.memory_space<vmem>>, vector<1x128xf32>
    %563 = vector.broadcast %562 : vector<1x128xf32> to vector<64x128xf32>
    %564 = arith.addf %561, %563 : vector<64x128xf32>
    %565 = arith.negf %564 : vector<64x128xf32>
    %566 = math.exp %565 : vector<64x128xf32>
    %cst_208 = arith.constant 1.000000e+00 : f32
    %567 = vector.broadcast %cst_208 : f32 to vector<64x128xf32>
    %568 = arith.addf %567, %566 : vector<64x128xf32>
    %569 = arith.divf %567, %568 : vector<64x128xf32>
    %570 = vector.extract_strided_slice %569 {offsets = [0, 0], sizes = [8, 128], strides = [1, 1]} : vector<64x128xf32> to vector<8x128xf32>
    %c0_209 = arith.constant 0 : index
    %c0_210 = arith.constant 0 : index
    %c0_211 = arith.constant 0 : index
    %571 = vector.load %arg10[%c0_209, %c0_210, %c0_211] : memref<8x8x128xf32, #tpu.memory_space<vmem>>, vector<1x8x128xf32>
    %572 = vector.shape_cast %571 : vector<1x8x128xf32> to vector<8x128xf32>
    %573 = vector.shape_cast %570 : vector<8x128xf32> to vector<1x8x128xf32>
    tpu.vector_store %arg10[%c0_209, %c0_210, %c0_211], %573 {strides = array<i32>} : memref<8x8x128xf32, #tpu.memory_space<vmem>>, vector<1x8x128xf32>,
    %574 = vector.extract_strided_slice %569 {offsets = [8, 0], sizes = [8, 128], strides = [1, 1]} : vector<64x128xf32> to vector<8x128xf32>
    %c1_212 = arith.constant 1 : index
    %c0_213 = arith.constant 0 : index
    %c0_214 = arith.constant 0 : index
    %575 = vector.load %arg10[%c1_212, %c0_213, %c0_214] : memref<8x8x128xf32, #tpu.memory_space<vmem>>, vector<1x8x128xf32>
    %576 = vector.shape_cast %575 : vector<1x8x128xf32> to vector<8x128xf32>
    %577 = vector.shape_cast %574 : vector<8x128xf32> to vector<1x8x128xf32>
    tpu.vector_store %arg10[%c1_212, %c0_213, %c0_214], %577 {strides = array<i32>} : memref<8x8x128xf32, #tpu.memory_space<vmem>>, vector<1x8x128xf32>,
    %578 = vector.extract_strided_slice %569 {offsets = [16, 0], sizes = [8, 128], strides = [1, 1]} : vector<64x128xf32> to vector<8x128xf32>
    %c2_215 = arith.constant 2 : index
    %c0_216 = arith.constant 0 : index
    %c0_217 = arith.constant 0 : index
    %579 = vector.load %arg10[%c2_215, %c0_216, %c0_217] : memref<8x8x128xf32, #tpu.memory_space<vmem>>, vector<1x8x128xf32>
    %580 = vector.shape_cast %579 : vector<1x8x128xf32> to vector<8x128xf32>
    %581 = vector.shape_cast %578 : vector<8x128xf32> to vector<1x8x128xf32>
    tpu.vector_store %arg10[%c2_215, %c0_216, %c0_217], %581 {strides = array<i32>} : memref<8x8x128xf32, #tpu.memory_space<vmem>>, vector<1x8x128xf32>,
    %582 = vector.extract_strided_slice %569 {offsets = [24, 0], sizes = [8, 128], strides = [1, 1]} : vector<64x128xf32> to vector<8x128xf32>
    %c3_218 = arith.constant 3 : index
    %c0_219 = arith.constant 0 : index
    %c0_220 = arith.constant 0 : index
    %583 = vector.load %arg10[%c3_218, %c0_219, %c0_220] : memref<8x8x128xf32, #tpu.memory_space<vmem>>, vector<1x8x128xf32>
    %584 = vector.shape_cast %583 : vector<1x8x128xf32> to vector<8x128xf32>
    %585 = vector.shape_cast %582 : vector<8x128xf32> to vector<1x8x128xf32>
    tpu.vector_store %arg10[%c3_218, %c0_219, %c0_220], %585 {strides = array<i32>} : memref<8x8x128xf32, #tpu.memory_space<vmem>>, vector<1x8x128xf32>,
    %586 = vector.extract_strided_slice %569 {offsets = [32, 0], sizes = [8, 128], strides = [1, 1]} : vector<64x128xf32> to vector<8x128xf32>
    %c4_221 = arith.constant 4 : index
    %c0_222 = arith.constant 0 : index
    %c0_223 = arith.constant 0 : index
    %587 = vector.load %arg10[%c4_221, %c0_222, %c0_223] : memref<8x8x128xf32, #tpu.memory_space<vmem>>, vector<1x8x128xf32>
    %588 = vector.shape_cast %587 : vector<1x8x128xf32> to vector<8x128xf32>
    %589 = vector.shape_cast %586 : vector<8x128xf32> to vector<1x8x128xf32>
    tpu.vector_store %arg10[%c4_221, %c0_222, %c0_223], %589 {strides = array<i32>} : memref<8x8x128xf32, #tpu.memory_space<vmem>>, vector<1x8x128xf32>,
    %590 = vector.extract_strided_slice %569 {offsets = [40, 0], sizes = [8, 128], strides = [1, 1]} : vector<64x128xf32> to vector<8x128xf32>
    %c5_224 = arith.constant 5 : index
    %c0_225 = arith.constant 0 : index
    %c0_226 = arith.constant 0 : index
    %591 = vector.load %arg10[%c5_224, %c0_225, %c0_226] : memref<8x8x128xf32, #tpu.memory_space<vmem>>, vector<1x8x128xf32>
    %592 = vector.shape_cast %591 : vector<1x8x128xf32> to vector<8x128xf32>
    %593 = vector.shape_cast %590 : vector<8x128xf32> to vector<1x8x128xf32>
    tpu.vector_store %arg10[%c5_224, %c0_225, %c0_226], %593 {strides = array<i32>} : memref<8x8x128xf32, #tpu.memory_space<vmem>>, vector<1x8x128xf32>,
    %594 = vector.extract_strided_slice %569 {offsets = [48, 0], sizes = [8, 128], strides = [1, 1]} : vector<64x128xf32> to vector<8x128xf32>
    %c6_227 = arith.constant 6 : index
    %c0_228 = arith.constant 0 : index
    %c0_229 = arith.constant 0 : index
    %595 = vector.load %arg10[%c6_227, %c0_228, %c0_229] : memref<8x8x128xf32, #tpu.memory_space<vmem>>, vector<1x8x128xf32>
    %596 = vector.shape_cast %595 : vector<1x8x128xf32> to vector<8x128xf32>
    %597 = vector.shape_cast %594 : vector<8x128xf32> to vector<1x8x128xf32>
    tpu.vector_store %arg10[%c6_227, %c0_228, %c0_229], %597 {strides = array<i32>} : memref<8x8x128xf32, #tpu.memory_space<vmem>>, vector<1x8x128xf32>,
    %598 = vector.extract_strided_slice %569 {offsets = [56, 0], sizes = [8, 128], strides = [1, 1]} : vector<64x128xf32> to vector<8x128xf32>
    %c7_230 = arith.constant 7 : index
    %c0_231 = arith.constant 0 : index
    %c0_232 = arith.constant 0 : index
    %599 = vector.load %arg10[%c7_230, %c0_231, %c0_232] : memref<8x8x128xf32, #tpu.memory_space<vmem>>, vector<1x8x128xf32>
    %600 = vector.shape_cast %599 : vector<1x8x128xf32> to vector<8x128xf32>
    %601 = vector.shape_cast %598 : vector<8x128xf32> to vector<1x8x128xf32>
    tpu.vector_store %arg10[%c7_230, %c0_231, %c0_232], %601 {strides = array<i32>} : memref<8x8x128xf32, #tpu.memory_space<vmem>>, vector<1x8x128xf32>,
    return
  }
  func.func @transform_0(%arg0: i32, %arg1: i32) -> (i32, i32, i32) {
    %c0_i32 = arith.constant 0 : i32
    %c0_i32_0 = arith.constant 0 : i32
    return %arg0, %arg1, %c0_i32 : i32, i32, i32
  }
  func.func @transform_1(%arg0: i32, %arg1: i32) -> (i32, i32) {
    %c0_i32 = arith.constant 0 : i32
    %c0_i32_0 = arith.constant 0 : i32
    %c0_i32_1 = arith.constant 0 : i32
    return %c0_i32, %c0_i32_0 : i32, i32
  }
  func.func @transform_2(%arg0: i32, %arg1: i32) -> (i32, i32) {
    %c0_i32 = arith.constant 0 : i32
    %c0_i32_0 = arith.constant 0 : i32
    %c0_i32_1 = arith.constant 0 : i32
    return %c0_i32, %c0_i32_0 : i32, i32
  }
  func.func @transform_3(%arg0: i32, %arg1: i32) -> (i32, i32) {
    %c0_i32 = arith.constant 0 : i32
    %c0_i32_0 = arith.constant 0 : i32
    %c0_i32_1 = arith.constant 0 : i32
    return %c0_i32, %c0_i32_0 : i32, i32
  }
  func.func @transform_4(%arg0: i32, %arg1: i32) -> (i32, i32) {
    %c0_i32 = arith.constant 0 : i32
    %c0_i32_0 = arith.constant 0 : i32
    %c0_i32_1 = arith.constant 0 : i32
    return %c0_i32, %c0_i32_0 : i32, i32
  }
  func.func @transform_5(%arg0: i32, %arg1: i32) -> (i32, i32) {
    %c0_i32 = arith.constant 0 : i32
    %c0_i32_0 = arith.constant 0 : i32
    %c0_i32_1 = arith.constant 0 : i32
    return %c0_i32, %c0_i32_0 : i32, i32
  }
  func.func @transform_6(%arg0: i32, %arg1: i32) -> (i32, i32) {
    %c0_i32 = arith.constant 0 : i32
    %c0_i32_0 = arith.constant 0 : i32
    %c0_i32_1 = arith.constant 0 : i32
    return %c0_i32, %c0_i32_0 : i32, i32
  }
  func.func @transform_7(%arg0: i32, %arg1: i32) -> (i32, i32) {
    %c0_i32 = arith.constant 0 : i32
    %c0_i32_0 = arith.constant 0 : i32
    %c0_i32_1 = arith.constant 0 : i32
    return %c0_i32, %c0_i32_0 : i32, i32
  }
  func.func @transform_8(%arg0: i32, %arg1: i32) -> (i32, i32, i32) {
    %c0_i32 = arith.constant 0 : i32
    %c0_i32_0 = arith.constant 0 : i32
    return %arg1, %arg0, %c0_i32 : i32, i32, i32
  }
}

</mosaic_0001>

<llo_original>
// kernel: tpu_custom_call.1
$region0: #{tpu_custom_call.1}
  #allocation0 [shape = 'u32[]', space=smem, size = 0x4, offset = 0x4, fixed_abs, tag = 'smem constant byte address 0x4 - core index']
  #allocation1 [shape = 'u32[144,128]{1,0:T(1,128)}', space=vmem, size = 0x12000, scoped, tag = 'internal scratch']
  #allocation2 [shape = 'f32[2,8,128]{2,1,0:T(8,128)}', space=vmem, size = 0x2000, scoped, tag = 'scratch operand']
  #allocation3 [shape = 'f32[2,8,128]{2,1,0:T(8,128)}', space=vmem, size = 0x2000, scoped, tag = 'scratch operand']
  #allocation4 [shape = 'f32[64,128]{1,0:T(8,128)}', space=vmem, size = 0x8000, scoped, tag = 'scratch operand']
  %s0 = inlined_call_operand.hbm [shape: f32[8,8,16], index: 0, kind: input, shape index: {}]
  %s1 = inlined_call_operand.hbm [shape: f32[16,512], index: 1, kind: input, shape index: {}]
  %s2 = inlined_call_operand.hbm [shape: f32[128,512], index: 2, kind: input, shape index: {}]
  %s3 = inlined_call_operand.vmem [shape: f32[1,512], index: 3, kind: input, shape index: {}]
  %s4 = inlined_call_operand.hbm [shape: f32[256,512], index: 4, kind: input, shape index: {}]
  %s5 = inlined_call_operand.vmem [shape: f32[1,512], index: 5, kind: input, shape index: {}]
  %s6 = inlined_call_operand.hbm [shape: f32[128,128], index: 6, kind: input, shape index: {}]
  %s7 = inlined_call_operand.vmem [shape: f32[1,128], index: 7, kind: input, shape index: {}]
  %s8 = inlined_call_operand.hbm [shape: f32[8,8,128], index: 8, kind: output, shape index: {}]
  %s9 = sld [smem:[#allocation0]]
  $region66: #{tpu_custom_call.1} parent=0
    _
  %s11 = ssub.s32 1, %s9
  %s12 = scalar_select 0, %s11, %s9
  $region1: #{tpu_custom_call.1} parent=0
    #allocation5 [shape = 'u8[32768]{0}', space=vmem, size = 0x8000, scoped, tag = 'input window, operand 0, single buffered']
    #allocation6 [shape = 's32[1]{0}', space=sflag, size = 0x4, scoped, tag = 'scoped memory for tpu_custom_call.1']
    #allocation7 [shape = 's32[1]{0}', space=sflag, size = 0x4, scoped, tag = 'scoped memory for tpu_custom_call.1']
    #allocation8 [shape = 'u8[32768]{0}', space=vmem, size = 0x8000, scoped, tag = 'input window, operand 1, single buffered']
    #allocation9 [shape = 's32[1]{0}', space=sflag, size = 0x4, scoped, tag = 'scoped memory for tpu_custom_call.1']
    #allocation10 [shape = 'u8[262144]{0}', space=vmem, size = 0x40000, scoped, tag = 'input window, operand 2, single buffered']
    #allocation11 [shape = 'u8[524288]{0}', space=vmem, size = 0x80000, scoped, tag = 'input window, operand 4, single buffered']
    #allocation12 [shape = 's32[1]{0}', space=sflag, size = 0x4, scoped, tag = 'scoped memory for tpu_custom_call.1']
    #allocation13 [shape = 'u8[65536]{0}', space=vmem, size = 0x10000, scoped, tag = 'input window, operand 6, single buffered']
    #allocation14 [shape = 'u8[32768]{0}', space=vmem, size = 0x8000, scoped, tag = 'output window, operand 0, single buffered']
    %13 = vsyncpa [#allocation6], 0
    %14 = vsyncpa [#allocation9], 0
    %15 = vsyncpa [#allocation12], 0
    %16 = vsyncpa [#allocation7], 0
    // Predicated region
    $region2: #{tpu_custom_call.1} parent=1 // pred_check
      _
    $region3: #{tpu_custom_call.1} parent=1 // pred_check_branch
      %18 = sbr.rel (0) target = $region5
    $region4: #{tpu_custom_call.1} parent=1 // pred_region
      %s20 = ssub.s32 1024, 1024
      %21 = vsyncadd [#allocation6], %s20
      %s22 = sshll.u32 [#allocation5], 4
      %s23 = int_to_ptr.vmem [resolvable:$true] %s22
      %28 = dma.hbm_to_vmem [thread:$0]  %s0, 1024, %s23, [#allocation6], 128, 128, 8
    $region5: #{tpu_custom_call.1} parent=1 // pred_fallthru
      _
    // Predicated region
    $region6: #{tpu_custom_call.1} parent=1 // pred_check
      _
    $region7: #{tpu_custom_call.1} parent=1 // pred_check_branch
      %30 = sbr.rel (0) target = $region9
    $region8: #{tpu_custom_call.1} parent=1 // pred_region
      %s32 = ssub.s32 1024, 1024
      %33 = vsyncadd [#allocation9], %s32
      %s34 = sshll.u32 [#allocation8], 4
      %s35 = int_to_ptr.vmem [resolvable:$true] %s34
      %40 = dma.hbm_to_vmem [thread:$0]  %s1, 1024, %s35, [#allocation9], 512, 512, 32
    $region9: #{tpu_custom_call.1} parent=1 // pred_fallthru
      _
    // Predicated region
    $region10: #{tpu_custom_call.1} parent=1 // pred_check
      _
    $region11: #{tpu_custom_call.1} parent=1 // pred_check_branch
      %42 = sbr.rel (0) target = $region13
    $region12: #{tpu_custom_call.1} parent=1 // pred_region
      %s44 = ssub.s32 8192, 8192
      %45 = vsyncadd [#allocation9], %s44
      %s46 = sshll.u32 [#allocation10], 4
      %s47 = int_to_ptr.vmem [resolvable:$true] %s46
      %52 = dma.hbm_to_vmem [thread:$0]  %s2, 8192, %s47, [#allocation9], 512, 512, 32
    $region13: #{tpu_custom_call.1} parent=1 // pred_fallthru
      _
    // Predicated region
    $region14: #{tpu_custom_call.1} parent=1 // pred_check
      _
    $region15: #{tpu_custom_call.1} parent=1 // pred_check_branch
      %54 = sbr.rel (0) target = $region17
    $region16: #{tpu_custom_call.1} parent=1 // pred_region
      _
    $region17: #{tpu_custom_call.1} parent=1 // pred_fallthru
      _
    // Predicated region
    $region18: #{tpu_custom_call.1} parent=1 // pred_check
      _
    $region19: #{tpu_custom_call.1} parent=1 // pred_check_branch
      %56 = sbr.rel (0) target = $region21
    $region20: #{tpu_custom_call.1} parent=1 // pred_region
      %s58 = ssub.s32 16384, 16384
      %59 = vsyncadd [#allocation12], %s58
      %s60 = sshll.u32 [#allocation11], 4
      %s61 = int_to_ptr.vmem [resolvable:$true] %s60
      %66 = dma.hbm_to_vmem [thread:$0]  %s4, 16384, %s61, [#allocation12], 512, 512, 32
    $region21: #{tpu_custom_call.1} parent=1 // pred_fallthru
      _
    // Predicated region
    $region22: #{tpu_custom_call.1} parent=1 // pred_check
      _
    $region23: #{tpu_custom_call.1} parent=1 // pred_check_branch
      %68 = sbr.rel (0) target = $region25
    $region24: #{tpu_custom_call.1} parent=1 // pred_region
      _
    $region25: #{tpu_custom_call.1} parent=1 // pred_fallthru
      _
    // Predicated region
    $region26: #{tpu_custom_call.1} parent=1 // pred_check
      _
    $region27: #{tpu_custom_call.1} parent=1 // pred_check_branch
      %70 = sbr.rel (0) target = $region29
    $region28: #{tpu_custom_call.1} parent=1 // pred_region
      %s72 = ssub.s32 2048, 2048
      %73 = vsyncadd [#allocation12], %s72
      %s74 = sshll.u32 [#allocation13], 4
      %s75 = int_to_ptr.vmem [resolvable:$true] %s74
      %80 = dma.hbm_to_vmem [thread:$0]  %s6, 2048, %s75, [#allocation12], 128, 128, 8
    $region29: #{tpu_custom_call.1} parent=1 // pred_fallthru
      _
    // Predicated region
    $region30: #{tpu_custom_call.1} parent=1 // pred_check
      _
    $region31: #{tpu_custom_call.1} parent=1 // pred_check_branch
      %82 = sbr.rel (0) target = $region33
    $region32: #{tpu_custom_call.1} parent=1 // pred_region
      _
    $region33: #{tpu_custom_call.1} parent=1 // pred_fallthru
      _
    // Predicated region
    $region34: #{tpu_custom_call.1} parent=1 // pred_check
      _
    $region35: #{tpu_custom_call.1} parent=1 // pred_check_branch
      %84 = sbr.rel (0) target = $region37
    $region36: #{tpu_custom_call.1} parent=1 // pred_region
      %85 = dma.done [#allocation6], 1024
    $region37: #{tpu_custom_call.1} parent=1 // pred_fallthru
      _
    // Predicated region
    $region38: #{tpu_custom_call.1} parent=1 // pred_check
      _
    $region39: #{tpu_custom_call.1} parent=1 // pred_check_branch
      %87 = sbr.rel (0) target = $region41
    $region40: #{tpu_custom_call.1} parent=1 // pred_region
      %88 = dma.done [#allocation9], 1024
    $region41: #{tpu_custom_call.1} parent=1 // pred_fallthru
      _
    // Predicated region
    $region42: #{tpu_custom_call.1} parent=1 // pred_check
      _
    $region43: #{tpu_custom_call.1} parent=1 // pred_check_branch
      %90 = sbr.rel (0) target = $region45
    $region44: #{tpu_custom_call.1} parent=1 // pred_region
      %91 = dma.done [#allocation9], 8192
    $region45: #{tpu_custom_call.1} parent=1 // pred_fallthru
      _
    // Predicated region
    $region46: #{tpu_custom_call.1} parent=1 // pred_check
      _
    $region47: #{tpu_custom_call.1} parent=1 // pred_check_branch
      %93 = sbr.rel (0) target = $region49
    $region48: #{tpu_custom_call.1} parent=1 // pred_region
      %94 = dma.done [#allocation12], 16384
    $region49: #{tpu_custom_call.1} parent=1 // pred_fallthru
      _
    // Predicated region
    $region50: #{tpu_custom_call.1} parent=1 // pred_check
      _
    $region51: #{tpu_custom_call.1} parent=1 // pred_check_branch
      %96 = sbr.rel (0) target = $region53
    $region52: #{tpu_custom_call.1} parent=1 // pred_region
      %97 = dma.done [#allocation12], 2048
    $region53: #{tpu_custom_call.1} parent=1 // pred_fallthru
      _
    %p98 = scmp.eq.s32.totalorder 0, 0
    // Predicated region
    $region54: #{tpu_custom_call.1} parent=1 // pred_check
      %p99 = pneg %p98
    $region55: #{tpu_custom_call.1} parent=1 // pred_check_branch
      %101 = sbr.rel (%p99) target = $region57
    $region56: #{tpu_custom_call.1} parent=1 // pred_region
      %102 = vst [vmem:[#allocation2] sm:$0xff] 0.0
      %103 = vst [vmem:[#allocation2 + $0x8] sm:$0xff] 0.0
      %104 = vst [vmem:[#allocation3] sm:$0xff] 0.0
      %105 = vst [vmem:[#allocation3 + $0x8] sm:$0xff] 0.0
    $region57: #{tpu_custom_call.1} parent=1 // pred_fallthru
      _
    %v106 = vld [vmem:[#allocation2] sm:$0xff]
    %s107 = scalar_lea.vmem [#allocation2], 8
    %v108 = vld [vmem:[%s107] sm:$0xff]
    %v109 = vld [vmem:[#allocation3] sm:$0xff]
    %s110 = scalar_lea.vmem [#allocation3], 8
    %v111 = vld [vmem:[%s110] sm:$0xff]
    %v112 = vld [vmem:[#allocation5] sm:$0x1]
    %v113 = vld [vmem:[#allocation5 + $0x8] sm:$0x1]
    %v114 = vld [vmem:[#allocation5 + $0x10] sm:$0x1]
    %v115 = vld [vmem:[#allocation5 + $0x18] sm:$0x1]
    %v116 = vld [vmem:[#allocation5 + $0x20] sm:$0x1]
    %v117 = vld [vmem:[#allocation5 + $0x28] sm:$0x1]
    %v118 = vld [vmem:[#allocation5 + $0x30] sm:$0x1]
    %v119 = vld [vmem:[#allocation5 + $0x38] sm:$0x1]
    %v120 = vld [vmem:[#allocation8] sm:$0xff]
    %v121 = vld [vmem:[#allocation8 + $0x8] sm:$0xff]
    %v122 = vld [vmem:[#allocation8 + $0x10] sm:$0xff]
    %v123 = vld [vmem:[#allocation8 + $0x18] sm:$0xff]
    %v124 = vld [vmem:[#allocation8 + $0x20] sm:$0xff]
    %v125 = vld [vmem:[#allocation8 + $0x28] sm:$0xff]
    %v126 = vld [vmem:[#allocation8 + $0x30] sm:$0xff]
    %v127 = vld [vmem:[#allocation8 + $0x38] sm:$0xff]
    %v128 = vld [vmem:[#allocation10] sm:$0xff]
    %v129 = vld [vmem:[#allocation10 + $0x8] sm:$0xff]
    %v130 = vld [vmem:[#allocation10 + $0x10] sm:$0xff]
    %v131 = vld [vmem:[#allocation10 + $0x18] sm:$0xff]
    %v132 = vld [vmem:[#allocation10 + $0x20] sm:$0xff]
    %v133 = vld [vmem:[#allocation10 + $0x28] sm:$0xff]
    %v134 = vld [vmem:[#allocation10 + $0x30] sm:$0xff]
    %v135 = vld [vmem:[#allocation10 + $0x38] sm:$0xff]
    %v136 = vld [vmem:[#allocation10 + $0x40] sm:$0xff]
    %v137 = vld [vmem:[#allocation10 + $0x48] sm:$0xff]
    %v138 = vld [vmem:[#allocation10 + $0x50] sm:$0xff]
    %v139 = vld [vmem:[#allocation10 + $0x58] sm:$0xff]
    %v140 = vld [vmem:[#allocation10 + $0x60] sm:$0xff]
    %v141 = vld [vmem:[#allocation10 + $0x68] sm:$0xff]
    %v142 = vld [vmem:[#allocation10 + $0x70] sm:$0xff]
    %v143 = vld [vmem:[#allocation10 + $0x78] sm:$0xff]
    %v144 = vld [vmem:[#allocation10 + $0x80] sm:$0xff]
    %v145 = vld [vmem:[#allocation10 + $0x88] sm:$0xff]
    %v146 = vld [vmem:[#allocation10 + $0x90] sm:$0xff]
    %v147 = vld [vmem:[#allocation10 + $0x98] sm:$0xff]
    %v148 = vld [vmem:[#allocation10 + $0xa0] sm:$0xff]
    %v149 = vld [vmem:[#allocation10 + $0xa8] sm:$0xff]
    %v150 = vld [vmem:[#allocation10 + $0xb0] sm:$0xff]
    %v151 = vld [vmem:[#allocation10 + $0xb8] sm:$0xff]
    %v152 = vld [vmem:[#allocation10 + $0xc0] sm:$0xff]
    %v153 = vld [vmem:[#allocation10 + $0xc8] sm:$0xff]
    %v154 = vld [vmem:[#allocation10 + $0xd0] sm:$0xff]
    %v155 = vld [vmem:[#allocation10 + $0xd8] sm:$0xff]
    %v156 = vld [vmem:[#allocation10 + $0xe0] sm:$0xff]
    %v157 = vld [vmem:[#allocation10 + $0xe8] sm:$0xff]
    %v158 = vld [vmem:[#allocation10 + $0xf0] sm:$0xff]
    %v159 = vld [vmem:[#allocation10 + $0xf8] sm:$0xff]
    %v160 = vld [vmem:[#allocation10 + $0x100] sm:$0xff]
    %v161 = vld [vmem:[#allocation10 + $0x108] sm:$0xff]
    %v162 = vld [vmem:[#allocation10 + $0x110] sm:$0xff]
    %v163 = vld [vmem:[#allocation10 + $0x118] sm:$0xff]
    %v164 = vld [vmem:[#allocation10 + $0x120] sm:$0xff]
    %v165 = vld [vmem:[#allocation10 + $0x128] sm:$0xff]
    %v166 = vld [vmem:[#allocation10 + $0x130] sm:$0xff]
    %v167 = vld [vmem:[#allocation10 + $0x138] sm:$0xff]
    %v168 = vld [vmem:[#allocation10 + $0x140] sm:$0xff]
    %v169 = vld [vmem:[#allocation10 + $0x148] sm:$0xff]
    %v170 = vld [vmem:[#allocation10 + $0x150] sm:$0xff]
    %v171 = vld [vmem:[#allocation10 + $0x158] sm:$0xff]
    %v172 = vld [vmem:[#allocation10 + $0x160] sm:$0xff]
    %v173 = vld [vmem:[#allocation10 + $0x168] sm:$0xff]
    %v174 = vld [vmem:[#allocation10 + $0x170] sm:$0xff]
    %v175 = vld [vmem:[#allocation10 + $0x178] sm:$0xff]
    %v176 = vld [vmem:[#allocation10 + $0x180] sm:$0xff]
    %v177 = vld [vmem:[#allocation10 + $0x188] sm:$0xff]
    %v178 = vld [vmem:[#allocation10 + $0x190] sm:$0xff]
    %v179 = vld [vmem:[#allocation10 + $0x198] sm:$0xff]
    %v180 = vld [vmem:[#allocation10 + $0x1a0] sm:$0xff]
    %v181 = vld [vmem:[#allocation10 + $0x1a8] sm:$0xff]
    %v182 = vld [vmem:[#allocation10 + $0x1b0] sm:$0xff]
    %v183 = vld [vmem:[#allocation10 + $0x1b8] sm:$0xff]
    %v184 = vld [vmem:[#allocation10 + $0x1c0] sm:$0xff]
    %v185 = vld [vmem:[#allocation10 + $0x1c8] sm:$0xff]
    %v186 = vld [vmem:[#allocation10 + $0x1d0] sm:$0xff]
    %v187 = vld [vmem:[#allocation10 + $0x1d8] sm:$0xff]
    %v188 = vld [vmem:[#allocation10 + $0x1e0] sm:$0xff]
    %v189 = vld [vmem:[#allocation10 + $0x1e8] sm:$0xff]
    %v190 = vld [vmem:[#allocation10 + $0x1f0] sm:$0xff]
    %v191 = vld [vmem:[#allocation10 + $0x1f8] sm:$0xff]
    %192 = vmatprep.subr.mxu0 %v129
    %193 = vmatpush1.msra.mxu0 %v128
    %194 = vmatprep.subr.mxu0 %v133
    %195 = vmatpush1.msra.mxu0 %v132
    %196 = vmatprep.subr.mxu0 %v137
    %197 = vmatpush1.msra.mxu0 %v136
    %198 = vmatprep.subr.mxu0 %v141
    %199 = vmatpush1.msra.mxu0 %v140
    %200 = vmatprep.subr.mxu0 %v145
    %201 = vmatpush1.msra.mxu0 %v144
    %202 = vmatprep.subr.mxu0 %v149
    %203 = vmatpush1.msra.mxu0 %v148
    %204 = vmatprep.subr.mxu0 %v153
    %205 = vmatpush1.msra.mxu0 %v152
    %206 = vmatprep.subr.mxu0 %v157
    %207 = vmatpush1.msra.mxu0 %v156
    %208 = vmatprep.subr.mxu0 %v161
    %209 = vmatpush1.msra.mxu0 %v160
    %210 = vmatprep.subr.mxu0 %v165
    %211 = vmatpush1.msra.mxu0 %v164
    %212 = vmatprep.subr.mxu0 %v169
    %213 = vmatpush1.msra.mxu0 %v168
    %214 = vmatprep.subr.mxu0 %v173
    %215 = vmatpush1.msra.mxu0 %v172
    %216 = vmatprep.subr.mxu0 %v177
    %217 = vmatpush1.msra.mxu0 %v176
    %218 = vmatprep.subr.mxu0 %v181
    %219 = vmatpush1.msra.mxu0 %v180
    %220 = vmatprep.subr.mxu0 %v185
    %221 = vmatpush1.msra.mxu0 %v184
    %222 = vmatprep.subr.mxu0 %v189
    %223 = vmatpush1.msra.mxu0 %v188
    %224 = vmatprep.subr.mxu0 0.0
    %225 = vmatpush1.msra.mxu0 0.0
    %226 = vmatprep.subr.mxu0 0.0
    %227 = vmatpush1.msra.mxu0 0.0
    %228 = vmatprep.subr.mxu0 0.0
    %229 = vmatpush1.msra.mxu0 0.0
    %230 = vmatprep.subr.mxu0 0.0
    %231 = vmatpush1.msra.mxu0 0.0
    %232 = vmatprep.subr.mxu0 0.0
    %233 = vmatpush1.msra.mxu0 0.0
    %234 = vmatprep.subr.mxu0 0.0
    %235 = vmatpush1.msra.mxu0 0.0
    %236 = vmatprep.subr.mxu0 0.0
    %237 = vmatpush1.msra.mxu0 0.0
    %238 = vmatprep.subr.mxu0 0.0
    %239 = vmatpush1.msra.mxu0 0.0
    %240 = vmatprep.subr.mxu0 0.0
    %241 = vmatpush1.msra.mxu0 0.0
    %242 = vmatprep.subr.mxu0 0.0
    %243 = vmatpush1.msra.mxu0 0.0
    %244 = vmatprep.subr.mxu0 0.0
    %245 = vmatpush1.msra.mxu0 0.0
    %246 = vmatprep.subr.mxu0 0.0
    %247 = vmatpush1.msra.mxu0 0.0
    %248 = vmatprep.subr.mxu0 0.0
    %249 = vmatpush1.msra.mxu0 0.0
    %250 = vmatprep.subr.mxu0 0.0
    %251 = vmatpush1.msra.mxu0 0.0
    %252 = vmatprep.subr.mxu0 0.0
    %253 = vmatpush1.msra.mxu0 0.0
    %254 = vmatprep.subr.mxu0 0.0
    %255 = vmatpush1.msra.mxu0 0.0
    %256 = vmatprep.mubr.f32.mxu0 0.0
    %257 = vmatmul.mubr.f32.gmra.mrb[0].mxu0 %v106
    %v258 = vpop.f32.mrb[0].mxu0
    %v259 = vadd.f32 0.0, %v258
    %v260 = vpop.f32.mrb[0].mxu0
    %v261 = vadd.f32 0.0, %v260
    %262 = vdwg.mxu0
    %263 = vmatprep.subr.mxu0 %v131
    %264 = vmatpush1.msra.mxu0 %v130
    %265 = vmatprep.subr.mxu0 %v135
    %266 = vmatpush1.msra.mxu0 %v134
    %267 = vmatprep.subr.mxu0 %v139
    %268 = vmatpush1.msra.mxu0 %v138
    %269 = vmatprep.subr.mxu0 %v143
    %270 = vmatpush1.msra.mxu0 %v142
    %271 = vmatprep.subr.mxu0 %v147
    %272 = vmatpush1.msra.mxu0 %v146
    %273 = vmatprep.subr.mxu0 %v151
    %274 = vmatpush1.msra.mxu0 %v150
    %275 = vmatprep.subr.mxu0 %v155
    %276 = vmatpush1.msra.mxu0 %v154
    %277 = vmatprep.subr.mxu0 %v159
    %278 = vmatpush1.msra.mxu0 %v158
    %279 = vmatprep.subr.mxu0 %v163
    %280 = vmatpush1.msra.mxu0 %v162
    %281 = vmatprep.subr.mxu0 %v167
    %282 = vmatpush1.msra.mxu0 %v166
    %283 = vmatprep.subr.mxu0 %v171
    %284 = vmatpush1.msra.mxu0 %v170
    %285 = vmatprep.subr.mxu0 %v175
    %286 = vmatpush1.msra.mxu0 %v174
    %287 = vmatprep.subr.mxu0 %v179
    %288 = vmatpush1.msra.mxu0 %v178
    %289 = vmatprep.subr.mxu0 %v183
    %290 = vmatpush1.msra.mxu0 %v182
    %291 = vmatprep.subr.mxu0 %v187
    %292 = vmatpush1.msra.mxu0 %v186
    %293 = vmatprep.subr.mxu0 %v191
    %294 = vmatpush1.msra.mxu0 %v190
    %295 = vmatprep.subr.mxu0 0.0
    %296 = vmatpush1.msra.mxu0 0.0
    %297 = vmatprep.subr.mxu0 0.0
    %298 = vmatpush1.msra.mxu0 0.0
    %299 = vmatprep.subr.mxu0 0.0
    %300 = vmatpush1.msra.mxu0 0.0
    %301 = vmatprep.subr.mxu0 0.0
    %302 = vmatpush1.msra.mxu0 0.0
    %303 = vmatprep.subr.mxu0 0.0
    %304 = vmatpush1.msra.mxu0 0.0
    %305 = vmatprep.subr.mxu0 0.0
    %306 = vmatpush1.msra.mxu0 0.0
    %307 = vmatprep.subr.mxu0 0.0
    %308 = vmatpush1.msra.mxu0 0.0
    %309 = vmatprep.subr.mxu0 0.0
    %310 = vmatpush1.msra.mxu0 0.0
    %311 = vmatprep.subr.mxu0 0.0
    %312 = vmatpush1.msra.mxu0 0.0
    %313 = vmatprep.subr.mxu0 0.0
    %314 = vmatpush1.msra.mxu0 0.0
    %315 = vmatprep.subr.mxu0 0.0
    %316 = vmatpush1.msra.mxu0 0.0
    %317 = vmatprep.subr.mxu0 0.0
    %318 = vmatpush1.msra.mxu0 0.0
    %319 = vmatprep.subr.mxu0 0.0
    %320 = vmatpush1.msra.mxu0 0.0
    %321 = vmatprep.subr.mxu0 0.0
    %322 = vmatpush1.msra.mxu0 0.0
    %323 = vmatprep.subr.mxu0 0.0
    %324 = vmatpush1.msra.mxu0 0.0
    %325 = vmatprep.subr.mxu0 0.0
    %326 = vmatpush1.msra.mxu0 0.0
    %327 = vmatprep.mubr.f32.mxu0 0.0
    %328 = vmatmul.mubr.f32.gmra.mrb[0].mxu0 %v106
    %v329 = vpop.f32.mrb[0].mxu0
    %v330 = vadd.f32 0.0, %v329
    %v331 = vpop.f32.mrb[0].mxu0
    %v332 = vadd.f32 0.0, %v331
    %333 = vdwg.mxu0
    %v342 = vrot.slane %v113, 7
    %vm343 = vcmask 1041409
    %v344 = vsel %vm343, %v342, %v112
    %v345 = vrot.slane %v114, 6
    %vm346 = vcmask 1042434
    %v347 = vsel %vm346, %v345, %v344
    %v348 = vrot.slane %v115, 5
    %vm349 = vcmask 1043459
    %v350 = vsel %vm349, %v348, %v347
    %v351 = vrot.slane %v116, 4
    %vm352 = vcmask 1044484
    %v353 = vsel %vm352, %v351, %v350
    %v354 = vrot.slane %v117, 3
    %vm355 = vcmask 1045509
    %v356 = vsel %vm355, %v354, %v353
    %v357 = vrot.slane %v118, 2
    %vm358 = vcmask 1046534
    %v359 = vsel %vm358, %v357, %v356
    %v360 = vrot.slane %v119, 1
    %vm361 = vcmask 1047559
    %v362 = vsel %vm361, %v360, %v359
    %vm363 = vcmask 130048
    %v364 = vsel %vm363, %v362, 0
    %366 = vmatprep.subr.mxu0 %v121
    %367 = vmatpush1.msra.mxu0 %v120
    %368 = vmatprep.subr.mxu0 %v125
    %369 = vmatpush1.msra.mxu0 %v124
    %370 = vmatprep.subr.mxu0 0.0
    %371 = vmatpush1.msra.mxu0 0.0
    %372 = vmatprep.subr.mxu0 0.0
    %373 = vmatpush1.msra.mxu0 0.0
    %374 = vmatprep.subr.mxu0 0.0
    %375 = vmatpush1.msra.mxu0 0.0
    %376 = vmatprep.subr.mxu0 0.0
    %377 = vmatpush1.msra.mxu0 0.0
    %378 = vmatprep.subr.mxu0 0.0
    %379 = vmatpush1.msra.mxu0 0.0
    %380 = vmatprep.subr.mxu0 0.0
    %381 = vmatpush1.msra.mxu0 0.0
    %382 = vmatprep.subr.mxu0 0.0
    %383 = vmatpush1.msra.mxu0 0.0
    %384 = vmatprep.subr.mxu0 0.0
    %385 = vmatpush1.msra.mxu0 0.0
    %386 = vmatprep.subr.mxu0 0.0
    %387 = vmatpush1.msra.mxu0 0.0
    %388 = vmatprep.subr.mxu0 0.0
    %389 = vmatpush1.msra.mxu0 0.0
    %390 = vmatprep.subr.mxu0 0.0
    %391 = vmatpush1.msra.mxu0 0.0
    %392 = vmatprep.subr.mxu0 0.0
    %393 = vmatpush1.msra.mxu0 0.0
    %394 = vmatprep.subr.mxu0 0.0
    %395 = vmatpush1.msra.mxu0 0.0
    %396 = vmatprep.subr.mxu0 0.0
    %397 = vmatpush1.msra.mxu0 0.0
    %398 = vmatprep.subr.mxu0 0.0
    %399 = vmatpush1.msra.mxu0 0.0
    %400 = vmatprep.subr.mxu0 0.0
    %401 = vmatpush1.msra.mxu0 0.0
    %402 = vmatprep.subr.mxu0 0.0
    %403 = vmatpush1.msra.mxu0 0.0
    %404 = vmatprep.subr.mxu0 0.0
    %405 = vmatpush1.msra.mxu0 0.0
    %406 = vmatprep.subr.mxu0 0.0
    %407 = vmatpush1.msra.mxu0 0.0
    %408 = vmatprep.subr.mxu0 0.0
    %409 = vmatpush1.msra.mxu0 0.0
    %410 = vmatprep.subr.mxu0 0.0
    %411 = vmatpush1.msra.mxu0 0.0
    %412 = vmatprep.subr.mxu0 0.0
    %413 = vmatpush1.msra.mxu0 0.0
    %414 = vmatprep.subr.mxu0 0.0
    %415 = vmatpush1.msra.mxu0 0.0
    %416 = vmatprep.subr.mxu0 0.0
    %417 = vmatpush1.msra.mxu0 0.0
    %418 = vmatprep.subr.mxu0 0.0
    %419 = vmatpush1.msra.mxu0 0.0
    %420 = vmatprep.subr.mxu0 0.0
    %421 = vmatpush1.msra.mxu0 0.0
    %422 = vmatprep.subr.mxu0 0.0
    %423 = vmatpush1.msra.mxu0 0.0
    %424 = vmatprep.subr.mxu0 0.0
    %425 = vmatpush1.msra.mxu0 0.0
    %426 = vmatprep.subr.mxu0 0.0
    %427 = vmatpush1.msra.mxu0 0.0
    %428 = vmatprep.subr.mxu0 0.0
    %429 = vmatpush1.msra.mxu0 0.0
    %430 = vmatprep.mubr.f32.mxu0 0.0
    %431 = vmatmul.mubr.f32.gmra.mrb[0].mxu0 %v364
    %v432 = vpop.f32.mrb[0].mxu0
    %v433 = vadd.f32 %v259, %v432
    %v434 = vpop.f32.mrb[0].mxu0
    %v435 = vadd.f32 %v261, %v434
    %436 = vdwg.mxu0
    %437 = vmatprep.subr.mxu0 %v123
    %438 = vmatpush1.msra.mxu0 %v122
    %439 = vmatprep.subr.mxu0 %v127
    %440 = vmatpush1.msra.mxu0 %v126
    %441 = vmatprep.subr.mxu0 0.0
    %442 = vmatpush1.msra.mxu0 0.0
    %443 = vmatprep.subr.mxu0 0.0
    %444 = vmatpush1.msra.mxu0 0.0
    %445 = vmatprep.subr.mxu0 0.0
    %446 = vmatpush1.msra.mxu0 0.0
    %447 = vmatprep.subr.mxu0 0.0
    %448 = vmatpush1.msra.mxu0 0.0
    %449 = vmatprep.subr.mxu0 0.0
    %450 = vmatpush1.msra.mxu0 0.0
    %451 = vmatprep.subr.mxu0 0.0
    %452 = vmatpush1.msra.mxu0 0.0
    %453 = vmatprep.subr.mxu0 0.0
    %454 = vmatpush1.msra.mxu0 0.0
    %455 = vmatprep.subr.mxu0 0.0
    %456 = vmatpush1.msra.mxu0 0.0
    %457 = vmatprep.subr.mxu0 0.0
    %458 = vmatpush1.msra.mxu0 0.0
    %459 = vmatprep.subr.mxu0 0.0
    %460 = vmatpush1.msra.mxu0 0.0
    %461 = vmatprep.subr.mxu0 0.0
    %462 = vmatpush1.msra.mxu0 0.0
    %463 = vmatprep.subr.mxu0 0.0
    %464 = vmatpush1.msra.mxu0 0.0
    %465 = vmatprep.subr.mxu0 0.0
    %466 = vmatpush1.msra.mxu0 0.0
    %467 = vmatprep.subr.mxu0 0.0
    %468 = vmatpush1.msra.mxu0 0.0
    %469 = vmatprep.subr.mxu0 0.0
    %470 = vmatpush1.msra.mxu0 0.0
    %471 = vmatprep.subr.mxu0 0.0
    %472 = vmatpush1.msra.mxu0 0.0
    %473 = vmatprep.subr.mxu0 0.0
    %474 = vmatpush1.msra.mxu0 0.0
    %475 = vmatprep.subr.mxu0 0.0
    %476 = vmatpush1.msra.mxu0 0.0
    %477 = vmatprep.subr.mxu0 0.0
    %478 = vmatpush1.msra.mxu0 0.0
    %479 = vmatprep.subr.mxu0 0.0
    %480 = vmatpush1.msra.mxu0 0.0
    %481 = vmatprep.subr.mxu0 0.0
    %482 = vmatpush1.msra.mxu0 0.0
    %483 = vmatprep.subr.mxu0 0.0
    %484 = vmatpush1.msra.mxu0 0.0
    %485 = vmatprep.subr.mxu0 0.0
    %486 = vmatpush1.msra.mxu0 0.0
    %487 = vmatprep.subr.mxu0 0.0
    %488 = vmatpush1.msra.mxu0 0.0
    %489 = vmatprep.subr.mxu0 0.0
    %490 = vmatpush1.msra.mxu0 0.0
    %491 = vmatprep.subr.mxu0 0.0
    %492 = vmatpush1.msra.mxu0 0.0
    %493 = vmatprep.subr.mxu0 0.0
    %494 = vmatpush1.msra.mxu0 0.0
    %495 = vmatprep.subr.mxu0 0.0
    %496 = vmatpush1.msra.mxu0 0.0
    %497 = vmatprep.subr.mxu0 0.0
    %498 = vmatpush1.msra.mxu0 0.0
    %499 = vmatprep.subr.mxu0 0.0
    %500 = vmatpush1.msra.mxu0 0.0
    %501 = vmatprep.mubr.f32.mxu0 0.0
    %502 = vmatmul.mubr.f32.gmra.mrb[0].mxu0 %v364
    %v503 = vpop.f32.mrb[0].mxu0
    %v504 = vadd.f32 %v330, %v503
    %v505 = vpop.f32.mrb[0].mxu0
    %v506 = vadd.f32 %v332, %v505
    %507 = vdwg.mxu0
    %v508 = vld [vmem:[%s3] sm:$0xf]
    %v510 = vlaneseq
    %v511 = vshrl.u32 %v510, 7
    %v512 = vsub.s32 0, %v511
    %v513 = vrot.slane %v508, %v512
    %v514 = vlaneseq
    %v515 = vshrl.u32 %v514, 7
    %v516 = vsub.s32 1, %v515
    %v517 = vrot.slane %v508, %v516
    %v518 = vlaneseq
    %v519 = vshrl.u32 %v518, 7
    %v520 = vsub.s32 2, %v519
    %v521 = vrot.slane %v508, %v520
    %v522 = vlaneseq
    %v523 = vshrl.u32 %v522, 7
    %v524 = vsub.s32 3, %v523
    %v525 = vrot.slane %v508, %v524
    %v530 = vadd.f32 %v433, %v513
    %v531 = vadd.f32 %v435, %v517
    %v532 = vadd.f32 %v504, %v521
    %v533 = vadd.f32 %v506, %v525
    %v534 = vxor.u32 %v530, 2147483648
    %v535 = vmul.f32 %v534, 1.442695
    %v536 = vpow.pop %v535
    %v537 = vadd.f32 %v536, 1.0
    %v538 = vrcp.pop %v537
    %v539 = vmul.f32 1.0, %v538
    %v540 = vxor.u32 %v531, 2147483648
    %v541 = vmul.f32 %v540, 1.442695
    %v542 = vpow.pop %v541
    %v543 = vadd.f32 %v542, 1.0
    %v544 = vrcp.pop %v543
    %v545 = vmul.f32 1.0, %v544
    %v546 = vtanh.pop %v532
    %v547 = vxor.u32 %v533, 2147483648
    %v548 = vmul.f32 %v547, 1.442695
    %v549 = vpow.pop %v548
    %v550 = vadd.f32 %v549, 1.0
    %v551 = vrcp.pop %v550
    %v552 = vmul.f32 1.0, %v551
    %v553 = vmul.f32 %v545, %v109
    %v554 = vmul.f32 %v539, %v546
    %v555 = vadd.f32 %v553, %v554
    %v556 = vtanh.pop %v555
    %v557 = vmul.f32 %v552, %v556
    %v558 = vld [vmem:[#allocation11] sm:$0xff]
    %v559 = vld [vmem:[#allocation11 + $0x8] sm:$0xff]
    %v560 = vld [vmem:[#allocation11 + $0x10] sm:$0xff]
    %v561 = vld [vmem:[#allocation11 + $0x18] sm:$0xff]
    %v562 = vld [vmem:[#allocation11 + $0x20] sm:$0xff]
    %v563 = vld [vmem:[#allocation11 + $0x28] sm:$0xff]
    %v564 = vld [vmem:[#allocation11 + $0x30] sm:$0xff]
    %v565 = vld [vmem:[#allocation11 + $0x38] sm:$0xff]
    %v566 = vld [vmem:[#allocation11 + $0x40] sm:$0xff]
    %v567 = vld [vmem:[#allocation11 + $0x48] sm:$0xff]
    %v568 = vld [vmem:[#allocation11 + $0x50] sm:$0xff]
    %v569 = vld [vmem:[#allocation11 + $0x58] sm:$0xff]
    %v570 = vld [vmem:[#allocation11 + $0x60] sm:$0xff]
    %v571 = vld [vmem:[#allocation11 + $0x68] sm:$0xff]
    %v572 = vld [vmem:[#allocation11 + $0x70] sm:$0xff]
    %v573 = vld [vmem:[#allocation11 + $0x78] sm:$0xff]
    %v574 = vld [vmem:[#allocation11 + $0x80] sm:$0xff]
    %v575 = vld [vmem:[#allocation11 + $0x88] sm:$0xff]
    %v576 = vld [vmem:[#allocation11 + $0x90] sm:$0xff]
    %v577 = vld [vmem:[#allocation11 + $0x98] sm:$0xff]
    %v578 = vld [vmem:[#allocation11 + $0xa0] sm:$0xff]
    %v579 = vld [vmem:[#allocation11 + $0xa8] sm:$0xff]
    %v580 = vld [vmem:[#allocation11 + $0xb0] sm:$0xff]
    %v581 = vld [vmem:[#allocation11 + $0xb8] sm:$0xff]
    %v582 = vld [vmem:[#allocation11 + $0xc0] sm:$0xff]
    %v583 = vld [vmem:[#allocation11 + $0xc8] sm:$0xff]
    %v584 = vld [vmem:[#allocation11 + $0xd0] sm:$0xff]
    %v585 = vld [vmem:[#allocation11 + $0xd8] sm:$0xff]
    %v586 = vld [vmem:[#allocation11 + $0xe0] sm:$0xff]
    %v587 = vld [vmem:[#allocation11 + $0xe8] sm:$0xff]
    %v588 = vld [vmem:[#allocation11 + $0xf0] sm:$0xff]
    %v589 = vld [vmem:[#allocation11 + $0xf8] sm:$0xff]
    %v590 = vld [vmem:[#allocation11 + $0x100] sm:$0xff]
    %v591 = vld [vmem:[#allocation11 + $0x108] sm:$0xff]
    %v592 = vld [vmem:[#allocation11 + $0x110] sm:$0xff]
    %v593 = vld [vmem:[#allocation11 + $0x118] sm:$0xff]
    %v594 = vld [vmem:[#allocation11 + $0x120] sm:$0xff]
    %v595 = vld [vmem:[#allocation11 + $0x128] sm:$0xff]
    %v596 = vld [vmem:[#allocation11 + $0x130] sm:$0xff]
    %v597 = vld [vmem:[#allocation11 + $0x138] sm:$0xff]
    %v598 = vld [vmem:[#allocation11 + $0x140] sm:$0xff]
    %v599 = vld [vmem:[#allocation11 + $0x148] sm:$0xff]
    %v600 = vld [vmem:[#allocation11 + $0x150] sm:$0xff]
    %v601 = vld [vmem:[#allocation11 + $0x158] sm:$0xff]
    %v602 = vld [vmem:[#allocation11 + $0x160] sm:$0xff]
    %v603 = vld [vmem:[#allocation11 + $0x168] sm:$0xff]
    %v604 = vld [vmem:[#allocation11 + $0x170] sm:$0xff]
    %v605 = vld [vmem:[#allocation11 + $0x178] sm:$0xff]
    %v606 = vld [vmem:[#allocation11 + $0x180] sm:$0xff]
    %v607 = vld [vmem:[#allocation11 + $0x188] sm:$0xff]
    %v608 = vld [vmem:[#allocation11 + $0x190] sm:$0xff]
    %v609 = vld [vmem:[#allocation11 + $0x198] sm:$0xff]
    %v610 = vld [vmem:[#allocation11 + $0x1a0] sm:$0xff]
    %v611 = vld [vmem:[#allocation11 + $0x1a8] sm:$0xff]
    %v612 = vld [vmem:[#allocation11 + $0x1b0] sm:$0xff]
    %v613 = vld [vmem:[#allocation11 + $0x1b8] sm:$0xff]
    %v614 = vld [vmem:[#allocation11 + $0x1c0] sm:$0xff]
    %v615 = vld [vmem:[#allocation11 + $0x1c8] sm:$0xff]
    %v616 = vld [vmem:[#allocation11 + $0x1d0] sm:$0xff]
    %v617 = vld [vmem:[#allocation11 + $0x1d8] sm:$0xff]
    %v618 = vld [vmem:[#allocation11 + $0x1e0] sm:$0xff]
    %v619 = vld [vmem:[#allocation11 + $0x1e8] sm:$0xff]
    %v620 = vld [vmem:[#allocation11 + $0x1f0] sm:$0xff]
    %v621 = vld [vmem:[#allocation11 + $0x1f8] sm:$0xff]
    %v622 = vld [vmem:[#allocation11 + $0x200] sm:$0xff]
    %v623 = vld [vmem:[#allocation11 + $0x208] sm:$0xff]
    %v624 = vld [vmem:[#allocation11 + $0x210] sm:$0xff]
    %v625 = vld [vmem:[#allocation11 + $0x218] sm:$0xff]
    %v626 = vld [vmem:[#allocation11 + $0x220] sm:$0xff]
    %v627 = vld [vmem:[#allocation11 + $0x228] sm:$0xff]
    %v628 = vld [vmem:[#allocation11 + $0x230] sm:$0xff]
    %v629 = vld [vmem:[#allocation11 + $0x238] sm:$0xff]
    %v630 = vld [vmem:[#allocation11 + $0x240] sm:$0xff]
    %v631 = vld [vmem:[#allocation11 + $0x248] sm:$0xff]
    %v632 = vld [vmem:[#allocation11 + $0x250] sm:$0xff]
    %v633 = vld [vmem:[#allocation11 + $0x258] sm:$0xff]
    %v634 = vld [vmem:[#allocation11 + $0x260] sm:$0xff]
    %v635 = vld [vmem:[#allocation11 + $0x268] sm:$0xff]
    %v636 = vld [vmem:[#allocation11 + $0x270] sm:$0xff]
    %v637 = vld [vmem:[#allocation11 + $0x278] sm:$0xff]
    %v638 = vld [vmem:[#allocation11 + $0x280] sm:$0xff]
    %v639 = vld [vmem:[#allocation11 + $0x288] sm:$0xff]
    %v640 = vld [vmem:[#allocation11 + $0x290] sm:$0xff]
    %v641 = vld [vmem:[#allocation11 + $0x298] sm:$0xff]
    %v642 = vld [vmem:[#allocation11 + $0x2a0] sm:$0xff]
    %v643 = vld [vmem:[#allocation11 + $0x2a8] sm:$0xff]
    %v644 = vld [vmem:[#allocation11 + $0x2b0] sm:$0xff]
    %v645 = vld [vmem:[#allocation11 + $0x2b8] sm:$0xff]
    %v646 = vld [vmem:[#allocation11 + $0x2c0] sm:$0xff]
    %v647 = vld [vmem:[#allocation11 + $0x2c8] sm:$0xff]
    %v648 = vld [vmem:[#allocation11 + $0x2d0] sm:$0xff]
    %v649 = vld [vmem:[#allocation11 + $0x2d8] sm:$0xff]
    %v650 = vld [vmem:[#allocation11 + $0x2e0] sm:$0xff]
    %v651 = vld [vmem:[#allocation11 + $0x2e8] sm:$0xff]
    %v652 = vld [vmem:[#allocation11 + $0x2f0] sm:$0xff]
    %v653 = vld [vmem:[#allocation11 + $0x2f8] sm:$0xff]
    %v654 = vld [vmem:[#allocation11 + $0x300] sm:$0xff]
    %v655 = vld [vmem:[#allocation11 + $0x308] sm:$0xff]
    %v656 = vld [vmem:[#allocation11 + $0x310] sm:$0xff]
    %v657 = vld [vmem:[#allocation11 + $0x318] sm:$0xff]
    %v658 = vld [vmem:[#allocation11 + $0x320] sm:$0xff]
    %v659 = vld [vmem:[#allocation11 + $0x328] sm:$0xff]
    %v660 = vld [vmem:[#allocation11 + $0x330] sm:$0xff]
    %v661 = vld [vmem:[#allocation11 + $0x338] sm:$0xff]
    %v662 = vld [vmem:[#allocation11 + $0x340] sm:$0xff]
    %v663 = vld [vmem:[#allocation11 + $0x348] sm:$0xff]
    %v664 = vld [vmem:[#allocation11 + $0x350] sm:$0xff]
    %v665 = vld [vmem:[#allocation11 + $0x358] sm:$0xff]
    %v666 = vld [vmem:[#allocation11 + $0x360] sm:$0xff]
    %v667 = vld [vmem:[#allocation11 + $0x368] sm:$0xff]
    %v668 = vld [vmem:[#allocation11 + $0x370] sm:$0xff]
    %v669 = vld [vmem:[#allocation11 + $0x378] sm:$0xff]
    %v670 = vld [vmem:[#allocation11 + $0x380] sm:$0xff]
    %v671 = vld [vmem:[#allocation11 + $0x388] sm:$0xff]
    %v672 = vld [vmem:[#allocation11 + $0x390] sm:$0xff]
    %v673 = vld [vmem:[#allocation11 + $0x398] sm:$0xff]
    %v674 = vld [vmem:[#allocation11 + $0x3a0] sm:$0xff]
    %v675 = vld [vmem:[#allocation11 + $0x3a8] sm:$0xff]
    %v676 = vld [vmem:[#allocation11 + $0x3b0] sm:$0xff]
    %v677 = vld [vmem:[#allocation11 + $0x3b8] sm:$0xff]
    %v678 = vld [vmem:[#allocation11 + $0x3c0] sm:$0xff]
    %v679 = vld [vmem:[#allocation11 + $0x3c8] sm:$0xff]
    %v680 = vld [vmem:[#allocation11 + $0x3d0] sm:$0xff]
    %v681 = vld [vmem:[#allocation11 + $0x3d8] sm:$0xff]
    %v682 = vld [vmem:[#allocation11 + $0x3e0] sm:$0xff]
    %v683 = vld [vmem:[#allocation11 + $0x3e8] sm:$0xff]
    %v684 = vld [vmem:[#allocation11 + $0x3f0] sm:$0xff]
    %v685 = vld [vmem:[#allocation11 + $0x3f8] sm:$0xff]
    %v686 = vld [vmem:[%s5] sm:$0xf]
    %v688 = vlaneseq
    %v689 = vshrl.u32 %v688, 7
    %v690 = vsub.s32 0, %v689
    %v691 = vrot.slane %v686, %v690
    %v692 = vlaneseq
    %v693 = vshrl.u32 %v692, 7
    %v694 = vsub.s32 1, %v693
    %v695 = vrot.slane %v686, %v694
    %v696 = vlaneseq
    %v697 = vshrl.u32 %v696, 7
    %v698 = vsub.s32 2, %v697
    %v699 = vrot.slane %v686, %v698
    %v700 = vlaneseq
    %v701 = vshrl.u32 %v700, 7
    %v702 = vsub.s32 3, %v701
    %v703 = vrot.slane %v686, %v702
    %708 = vmatprep.subr.mxu0 %v559
    %709 = vmatpush1.msra.mxu0 %v558
    %710 = vmatprep.subr.mxu0 %v563
    %711 = vmatpush1.msra.mxu0 %v562
    %712 = vmatprep.subr.mxu0 %v567
    %713 = vmatpush1.msra.mxu0 %v566
    %714 = vmatprep.subr.mxu0 %v571
    %715 = vmatpush1.msra.mxu0 %v570
    %716 = vmatprep.subr.mxu0 %v575
    %717 = vmatpush1.msra.mxu0 %v574
    %718 = vmatprep.subr.mxu0 %v579
    %719 = vmatpush1.msra.mxu0 %v578
    %720 = vmatprep.subr.mxu0 %v583
    %721 = vmatpush1.msra.mxu0 %v582
    %722 = vmatprep.subr.mxu0 %v587
    %723 = vmatpush1.msra.mxu0 %v586
    %724 = vmatprep.subr.mxu0 %v591
    %725 = vmatpush1.msra.mxu0 %v590
    %726 = vmatprep.subr.mxu0 %v595
    %727 = vmatpush1.msra.mxu0 %v594
    %728 = vmatprep.subr.mxu0 %v599
    %729 = vmatpush1.msra.mxu0 %v598
    %730 = vmatprep.subr.mxu0 %v603
    %731 = vmatpush1.msra.mxu0 %v602
    %732 = vmatprep.subr.mxu0 %v607
    %733 = vmatpush1.msra.mxu0 %v606
    %734 = vmatprep.subr.mxu0 %v611
    %735 = vmatpush1.msra.mxu0 %v610
    %736 = vmatprep.subr.mxu0 %v615
    %737 = vmatpush1.msra.mxu0 %v614
    %738 = vmatprep.subr.mxu0 %v619
    %739 = vmatpush1.msra.mxu0 %v618
    %740 = vmatprep.subr.mxu0 %v623
    %741 = vmatpush1.msra.mxu0 %v622
    %742 = vmatprep.subr.mxu0 %v627
    %743 = vmatpush1.msra.mxu0 %v626
    %744 = vmatprep.subr.mxu0 %v631
    %745 = vmatpush1.msra.mxu0 %v630
    %746 = vmatprep.subr.mxu0 %v635
    %747 = vmatpush1.msra.mxu0 %v634
    %748 = vmatprep.subr.mxu0 %v639
    %749 = vmatpush1.msra.mxu0 %v638
    %750 = vmatprep.subr.mxu0 %v643
    %751 = vmatpush1.msra.mxu0 %v642
    %752 = vmatprep.subr.mxu0 %v647
    %753 = vmatpush1.msra.mxu0 %v646
    %754 = vmatprep.subr.mxu0 %v651
    %755 = vmatpush1.msra.mxu0 %v650
    %756 = vmatprep.subr.mxu0 %v655
    %757 = vmatpush1.msra.mxu0 %v654
    %758 = vmatprep.subr.mxu0 %v659
    %759 = vmatpush1.msra.mxu0 %v658
    %760 = vmatprep.subr.mxu0 %v663
    %761 = vmatpush1.msra.mxu0 %v662
    %762 = vmatprep.subr.mxu0 %v667
    %763 = vmatpush1.msra.mxu0 %v666
    %764 = vmatprep.subr.mxu0 %v671
    %765 = vmatpush1.msra.mxu0 %v670
    %766 = vmatprep.subr.mxu0 %v675
    %767 = vmatpush1.msra.mxu0 %v674
    %768 = vmatprep.subr.mxu0 %v679
    %769 = vmatpush1.msra.mxu0 %v678
    %770 = vmatprep.subr.mxu0 %v683
    %771 = vmatpush1.msra.mxu0 %v682
    %772 = vmatprep.mubr.f32.mxu0 %v108
    %773 = vmatmul.mubr.f32.gmra.mrb[0].mxu0 %v557
    %v774 = vpop.f32.mrb[0].mxu0
    %v775 = vadd.f32 %v691, %v774
    %v776 = vpop.f32.mrb[0].mxu0
    %v777 = vadd.f32 %v695, %v776
    %778 = vdwg.mxu0
    %779 = vmatprep.subr.mxu0 %v561
    %780 = vmatpush1.msra.mxu0 %v560
    %781 = vmatprep.subr.mxu0 %v565
    %782 = vmatpush1.msra.mxu0 %v564
    %783 = vmatprep.subr.mxu0 %v569
    %784 = vmatpush1.msra.mxu0 %v568
    %785 = vmatprep.subr.mxu0 %v573
    %786 = vmatpush1.msra.mxu0 %v572
    %787 = vmatprep.subr.mxu0 %v577
    %788 = vmatpush1.msra.mxu0 %v576
    %789 = vmatprep.subr.mxu0 %v581
    %790 = vmatpush1.msra.mxu0 %v580
    %791 = vmatprep.subr.mxu0 %v585
    %792 = vmatpush1.msra.mxu0 %v584
    %793 = vmatprep.subr.mxu0 %v589
    %794 = vmatpush1.msra.mxu0 %v588
    %795 = vmatprep.subr.mxu0 %v593
    %796 = vmatpush1.msra.mxu0 %v592
    %797 = vmatprep.subr.mxu0 %v597
    %798 = vmatpush1.msra.mxu0 %v596
    %799 = vmatprep.subr.mxu0 %v601
    %800 = vmatpush1.msra.mxu0 %v600
    %801 = vmatprep.subr.mxu0 %v605
    %802 = vmatpush1.msra.mxu0 %v604
    %803 = vmatprep.subr.mxu0 %v609
    %804 = vmatpush1.msra.mxu0 %v608
    %805 = vmatprep.subr.mxu0 %v613
    %806 = vmatpush1.msra.mxu0 %v612
    %807 = vmatprep.subr.mxu0 %v617
    %808 = vmatpush1.msra.mxu0 %v616
    %809 = vmatprep.subr.mxu0 %v621
    %810 = vmatpush1.msra.mxu0 %v620
    %811 = vmatprep.subr.mxu0 %v625
    %812 = vmatpush1.msra.mxu0 %v624
    %813 = vmatprep.subr.mxu0 %v629
    %814 = vmatpush1.msra.mxu0 %v628
    %815 = vmatprep.subr.mxu0 %v633
    %816 = vmatpush1.msra.mxu0 %v632
    %817 = vmatprep.subr.mxu0 %v637
    %818 = vmatpush1.msra.mxu0 %v636
    %819 = vmatprep.subr.mxu0 %v641
    %820 = vmatpush1.msra.mxu0 %v640
    %821 = vmatprep.subr.mxu0 %v645
    %822 = vmatpush1.msra.mxu0 %v644
    %823 = vmatprep.subr.mxu0 %v649
    %824 = vmatpush1.msra.mxu0 %v648
    %825 = vmatprep.subr.mxu0 %v653
    %826 = vmatpush1.msra.mxu0 %v652
    %827 = vmatprep.subr.mxu0 %v657
    %828 = vmatpush1.msra.mxu0 %v656
    %829 = vmatprep.subr.mxu0 %v661
    %830 = vmatpush1.msra.mxu0 %v660
    %831 = vmatprep.subr.mxu0 %v665
    %832 = vmatpush1.msra.mxu0 %v664
    %833 = vmatprep.subr.mxu0 %v669
    %834 = vmatpush1.msra.mxu0 %v668
    %835 = vmatprep.subr.mxu0 %v673
    %836 = vmatpush1.msra.mxu0 %v672
    %837 = vmatprep.subr.mxu0 %v677
    %838 = vmatpush1.msra.mxu0 %v676
    %839 = vmatprep.subr.mxu0 %v681
    %840 = vmatpush1.msra.mxu0 %v680
    %841 = vmatprep.subr.mxu0 %v685
    %842 = vmatpush1.msra.mxu0 %v684
    %843 = vmatprep.mubr.f32.mxu0 %v108
    %844 = vmatmul.mubr.f32.gmra.mrb[0].mxu0 %v557
    %v845 = vpop.f32.mrb[0].mxu0
    %v846 = vadd.f32 %v699, %v845
    %v847 = vpop.f32.mrb[0].mxu0
    %v848 = vadd.f32 %v703, %v847
    %849 = vdwg.mxu0
    %v850 = vxor.u32 %v775, 2147483648
    %v851 = vmul.f32 %v850, 1.442695
    %v852 = vpow.pop %v851
    %v853 = vadd.f32 %v852, 1.0
    %v854 = vrcp.pop %v853
    %v855 = vmul.f32 1.0, %v854
    %v856 = vxor.u32 %v777, 2147483648
    %v857 = vmul.f32 %v856, 1.442695
    %v858 = vpow.pop %v857
    %v859 = vadd.f32 %v858, 1.0
    %v860 = vrcp.pop %v859
    %v861 = vmul.f32 1.0, %v860
    %v862 = vtanh.pop %v846
    %v863 = vxor.u32 %v848, 2147483648
    %v864 = vmul.f32 %v863, 1.442695
    %v865 = vpow.pop %v864
    %v866 = vadd.f32 %v865, 1.0
    %v867 = vrcp.pop %v866
    %v868 = vmul.f32 1.0, %v867
    %v869 = vmul.f32 %v861, %v111
    %v870 = vmul.f32 %v855, %v862
    %v871 = vadd.f32 %v869, %v870
    %v872 = vtanh.pop %v871
    %v873 = vmul.f32 %v868, %v872
    %874 = vst [vmem:[#allocation4] sm:$0xff] %v873
    %v875 = vld [vmem:[#allocation5 + $0x1] sm:$0x1]
    %v876 = vld [vmem:[#allocation5 + $0x9] sm:$0x1]
    %v877 = vld [vmem:[#allocation5 + $0x11] sm:$0x1]
    %v878 = vld [vmem:[#allocation5 + $0x19] sm:$0x1]
    %v879 = vld [vmem:[#allocation5 + $0x21] sm:$0x1]
    %v880 = vld [vmem:[#allocation5 + $0x29] sm:$0x1]
    %v881 = vld [vmem:[#allocation5 + $0x31] sm:$0x1]
    %v882 = vld [vmem:[#allocation5 + $0x39] sm:$0x1]
    %v883 = vld [vmem:[#allocation8] sm:$0xff]
    %v884 = vld [vmem:[#allocation8 + $0x8] sm:$0xff]
    %v885 = vld [vmem:[#allocation8 + $0x10] sm:$0xff]
    %v886 = vld [vmem:[#allocation8 + $0x18] sm:$0xff]
    %v887 = vld [vmem:[#allocation8 + $0x20] sm:$0xff]
    %v888 = vld [vmem:[#allocation8 + $0x28] sm:$0xff]
    %v889 = vld [vmem:[#allocation8 + $0x30] sm:$0xff]
    %v890 = vld [vmem:[#allocation8 + $0x38] sm:$0xff]
    %v891 = vld [vmem:[#allocation10] sm:$0xff]
    %v892 = vld [vmem:[#allocation10 + $0x8] sm:$0xff]
    %v893 = vld [vmem:[#allocation10 + $0x10] sm:$0xff]
    %v894 = vld [vmem:[#allocation10 + $0x18] sm:$0xff]
    %v895 = vld [vmem:[#allocation10 + $0x20] sm:$0xff]
    %v896 = vld [vmem:[#allocation10 + $0x28] sm:$0xff]
    %v897 = vld [vmem:[#allocation10 + $0x30] sm:$0xff]
    %v898 = vld [vmem:[#allocation10 + $0x38] sm:$0xff]
    %v899 = vld [vmem:[#allocation10 + $0x40] sm:$0xff]
    %v900 = vld [vmem:[#allocation10 + $0x48] sm:$0xff]
    %v901 = vld [vmem:[#allocation10 + $0x50] sm:$0xff]
    %v902 = vld [vmem:[#allocation10 + $0x58] sm:$0xff]
    %v903 = vld [vmem:[#allocation10 + $0x60] sm:$0xff]
    %v904 = vld [vmem:[#allocation10 + $0x68] sm:$0xff]
    %v905 = vld [vmem:[#allocation10 + $0x70] sm:$0xff]
    %v906 = vld [vmem:[#allocation10 + $0x78] sm:$0xff]
    %v907 = vld [vmem:[#allocation10 + $0x80] sm:$0xff]
    %v908 = vld [vmem:[#allocation10 + $0x88] sm:$0xff]
    %v909 = vld [vmem:[#allocation10 + $0x90] sm:$0xff]
    %v910 = vld [vmem:[#allocation10 + $0x98] sm:$0xff]
    %v911 = vld [vmem:[#allocation10 + $0xa0] sm:$0xff]
    %v912 = vld [vmem:[#allocation10 + $0xa8] sm:$0xff]
    %v913 = vld [vmem:[#allocation10 + $0xb0] sm:$0xff]
    %v914 = vld [vmem:[#allocation10 + $0xb8] sm:$0xff]
    %v915 = vld [vmem:[#allocation10 + $0xc0] sm:$0xff]
    %v916 = vld [vmem:[#allocation10 + $0xc8] sm:$0xff]
    %v917 = vld [vmem:[#allocation10 + $0xd0] sm:$0xff]
    %v918 = vld [vmem:[#allocation10 + $0xd8] sm:$0xff]
    %v919 = vld [vmem:[#allocation10 + $0xe0] sm:$0xff]
    %v920 = vld [vmem:[#allocation10 + $0xe8] sm:$0xff]
    %v921 = vld [vmem:[#allocation10 + $0xf0] sm:$0xff]
    %v922 = vld [vmem:[#allocation10 + $0xf8] sm:$0xff]
    %v923 = vld [vmem:[#allocation10 + $0x100] sm:$0xff]
    %v924 = vld [vmem:[#allocation10 + $0x108] sm:$0xff]
    %v925 = vld [vmem:[#allocation10 + $0x110] sm:$0xff]
    %v926 = vld [vmem:[#allocation10 + $0x118] sm:$0xff]
    %v927 = vld [vmem:[#allocation10 + $0x120] sm:$0xff]
    %v928 = vld [vmem:[#allocation10 + $0x128] sm:$0xff]
    %v929 = vld [vmem:[#allocation10 + $0x130] sm:$0xff]
    %v930 = vld [vmem:[#allocation10 + $0x138] sm:$0xff]
    %v931 = vld [vmem:[#allocation10 + $0x140] sm:$0xff]
    %v932 = vld [vmem:[#allocation10 + $0x148] sm:$0xff]
    %v933 = vld [vmem:[#allocation10 + $0x150] sm:$0xff]
    %v934 = vld [vmem:[#allocation10 + $0x158] sm:$0xff]
    %v935 = vld [vmem:[#allocation10 + $0x160] sm:$0xff]
    %v936 = vld [vmem:[#allocation10 + $0x168] sm:$0xff]
    %v937 = vld [vmem:[#allocation10 + $0x170] sm:$0xff]
    %v938 = vld [vmem:[#allocation10 + $0x178] sm:$0xff]
    %v939 = vld [vmem:[#allocation10 + $0x180] sm:$0xff]
    %v940 = vld [vmem:[#allocation10 + $0x188] sm:$0xff]
    %v941 = vld [vmem:[#allocation10 + $0x190] sm:$0xff]
    %v942 = vld [vmem:[#allocation10 + $0x198] sm:$0xff]
    %v943 = vld [vmem:[#allocation10 + $0x1a0] sm:$0xff]
    %v944 = vld [vmem:[#allocation10 + $0x1a8] sm:$0xff]
    %v945 = vld [vmem:[#allocation10 + $0x1b0] sm:$0xff]
    %v946 = vld [vmem:[#allocation10 + $0x1b8] sm:$0xff]
    %v947 = vld [vmem:[#allocation10 + $0x1c0] sm:$0xff]
    %v948 = vld [vmem:[#allocation10 + $0x1c8] sm:$0xff]
    %v949 = vld [vmem:[#allocation10 + $0x1d0] sm:$0xff]
    %v950 = vld [vmem:[#allocation10 + $0x1d8] sm:$0xff]
    %v951 = vld [vmem:[#allocation10 + $0x1e0] sm:$0xff]
    %v952 = vld [vmem:[#allocation10 + $0x1e8] sm:$0xff]
    %v953 = vld [vmem:[#allocation10 + $0x1f0] sm:$0xff]
    %v954 = vld [vmem:[#allocation10 + $0x1f8] sm:$0xff]
    %955 = vmatprep.subr.mxu0 %v892
    %956 = vmatpush1.msra.mxu0 %v891
    %957 = vmatprep.subr.mxu0 %v896
    %958 = vmatpush1.msra.mxu0 %v895
    %959 = vmatprep.subr.mxu0 %v900
    %960 = vmatpush1.msra.mxu0 %v899
    %961 = vmatprep.subr.mxu0 %v904
    %962 = vmatpush1.msra.mxu0 %v903
    %963 = vmatprep.subr.mxu0 %v908
    %964 = vmatpush1.msra.mxu0 %v907
    %965 = vmatprep.subr.mxu0 %v912
    %966 = vmatpush1.msra.mxu0 %v911
    %967 = vmatprep.subr.mxu0 %v916
    %968 = vmatpush1.msra.mxu0 %v915
    %969 = vmatprep.subr.mxu0 %v920
    %970 = vmatpush1.msra.mxu0 %v919
    %971 = vmatprep.subr.mxu0 %v924
    %972 = vmatpush1.msra.mxu0 %v923
    %973 = vmatprep.subr.mxu0 %v928
    %974 = vmatpush1.msra.mxu0 %v927
    %975 = vmatprep.subr.mxu0 %v932
    %976 = vmatpush1.msra.mxu0 %v931
    %977 = vmatprep.subr.mxu0 %v936
    %978 = vmatpush1.msra.mxu0 %v935
    %979 = vmatprep.subr.mxu0 %v940
    %980 = vmatpush1.msra.mxu0 %v939
    %981 = vmatprep.subr.mxu0 %v944
    %982 = vmatpush1.msra.mxu0 %v943
    %983 = vmatprep.subr.mxu0 %v948
    %984 = vmatpush1.msra.mxu0 %v947
    %985 = vmatprep.subr.mxu0 %v952
    %986 = vmatpush1.msra.mxu0 %v951
    %987 = vmatprep.subr.mxu0 0.0
    %988 = vmatpush1.msra.mxu0 0.0
    %989 = vmatprep.subr.mxu0 0.0
    %990 = vmatpush1.msra.mxu0 0.0
    %991 = vmatprep.subr.mxu0 0.0
    %992 = vmatpush1.msra.mxu0 0.0
    %993 = vmatprep.subr.mxu0 0.0
    %994 = vmatpush1.msra.mxu0 0.0
    %995 = vmatprep.subr.mxu0 0.0
    %996 = vmatpush1.msra.mxu0 0.0
    %997 = vmatprep.subr.mxu0 0.0
    %998 = vmatpush1.msra.mxu0 0.0
    %999 = vmatprep.subr.mxu0 0.0
    %1000 = vmatpush1.msra.mxu0 0.0
    %1001 = vmatprep.subr.mxu0 0.0
    %1002 = vmatpush1.msra.mxu0 0.0
    %1003 = vmatprep.subr.mxu0 0.0
    %1004 = vmatpush1.msra.mxu0 0.0
    %1005 = vmatprep.subr.mxu0 0.0
    %1006 = vmatpush1.msra.mxu0 0.0
    %1007 = vmatprep.subr.mxu0 0.0
    %1008 = vmatpush1.msra.mxu0 0.0
    %1009 = vmatprep.subr.mxu0 0.0
    %1010 = vmatpush1.msra.mxu0 0.0
    %1011 = vmatprep.subr.mxu0 0.0
    %1012 = vmatpush1.msra.mxu0 0.0
    %1013 = vmatprep.subr.mxu0 0.0
    %1014 = vmatpush1.msra.mxu0 0.0
    %1015 = vmatprep.subr.mxu0 0.0
    %1016 = vmatpush1.msra.mxu0 0.0
    %1017 = vmatprep.subr.mxu0 0.0
    %1018 = vmatpush1.msra.mxu0 0.0
    %1019 = vmatprep.mubr.f32.mxu0 0.0
    %1020 = vmatmul.mubr.f32.gmra.mrb[0].mxu0 %v557
    %v1021 = vpop.f32.mrb[0].mxu0
    %v1022 = vadd.f32 0.0, %v1021
    %v1023 = vpop.f32.mrb[0].mxu0
    %v1024 = vadd.f32 0.0, %v1023
    %1025 = vdwg.mxu0
    %1026 = vmatprep.subr.mxu0 %v894
    %1027 = vmatpush1.msra.mxu0 %v893
    %1028 = vmatprep.subr.mxu0 %v898
    %1029 = vmatpush1.msra.mxu0 %v897
    %1030 = vmatprep.subr.mxu0 %v902
    %1031 = vmatpush1.msra.mxu0 %v901
    %1032 = vmatprep.subr.mxu0 %v906
    %1033 = vmatpush1.msra.mxu0 %v905
    %1034 = vmatprep.subr.mxu0 %v910
    %1035 = vmatpush1.msra.mxu0 %v909
    %1036 = vmatprep.subr.mxu0 %v914
    %1037 = vmatpush1.msra.mxu0 %v913
    %1038 = vmatprep.subr.mxu0 %v918
    %1039 = vmatpush1.msra.mxu0 %v917
    %1040 = vmatprep.subr.mxu0 %v922
    %1041 = vmatpush1.msra.mxu0 %v921
    %1042 = vmatprep.subr.mxu0 %v926
    %1043 = vmatpush1.msra.mxu0 %v925
    %1044 = vmatprep.subr.mxu0 %v930
    %1045 = vmatpush1.msra.mxu0 %v929
    %1046 = vmatprep.subr.mxu0 %v934
    %1047 = vmatpush1.msra.mxu0 %v933
    %1048 = vmatprep.subr.mxu0 %v938
    %1049 = vmatpush1.msra.mxu0 %v937
    %1050 = vmatprep.subr.mxu0 %v942
    %1051 = vmatpush1.msra.mxu0 %v941
    %1052 = vmatprep.subr.mxu0 %v946
    %1053 = vmatpush1.msra.mxu0 %v945
    %1054 = vmatprep.subr.mxu0 %v950
    %1055 = vmatpush1.msra.mxu0 %v949
    %1056 = vmatprep.subr.mxu0 %v954
    %1057 = vmatpush1.msra.mxu0 %v953
    %1058 = vmatprep.subr.mxu0 0.0
    %1059 = vmatpush1.msra.mxu0 0.0
    %1060 = vmatprep.subr.mxu0 0.0
    %1061 = vmatpush1.msra.mxu0 0.0
    %1062 = vmatprep.subr.mxu0 0.0
    %1063 = vmatpush1.msra.mxu0 0.0
    %1064 = vmatprep.subr.mxu0 0.0
    %1065 = vmatpush1.msra.mxu0 0.0
    %1066 = vmatprep.subr.mxu0 0.0
    %1067 = vmatpush1.msra.mxu0 0.0
    %1068 = vmatprep.subr.mxu0 0.0
    %1069 = vmatpush1.msra.mxu0 0.0
    %1070 = vmatprep.subr.mxu0 0.0
    %1071 = vmatpush1.msra.mxu0 0.0
    %1072 = vmatprep.subr.mxu0 0.0
    %1073 = vmatpush1.msra.mxu0 0.0
    %1074 = vmatprep.subr.mxu0 0.0
    %1075 = vmatpush1.msra.mxu0 0.0
    %1076 = vmatprep.subr.mxu0 0.0
    %1077 = vmatpush1.msra.mxu0 0.0
    %1078 = vmatprep.subr.mxu0 0.0
    %1079 = vmatpush1.msra.mxu0 0.0
    %1080 = vmatprep.subr.mxu0 0.0
    %1081 = vmatpush1.msra.mxu0 0.0
    %1082 = vmatprep.subr.mxu0 0.0
    %1083 = vmatpush1.msra.mxu0 0.0
    %1084 = vmatprep.subr.mxu0 0.0
    %1085 = vmatpush1.msra.mxu0 0.0
    %1086 = vmatprep.subr.mxu0 0.0
    %1087 = vmatpush1.msra.mxu0 0.0
    %1088 = vmatprep.subr.mxu0 0.0
    %1089 = vmatpush1.msra.mxu0 0.0
    %1090 = vmatprep.mubr.f32.mxu0 0.0
    %1091 = vmatmul.mubr.f32.gmra.mrb[0].mxu0 %v557
    %v1092 = vpop.f32.mrb[0].mxu0
    %v1093 = vadd.f32 0.0, %v1092
    %v1094 = vpop.f32.mrb[0].mxu0
    %v1095 = vadd.f32 0.0, %v1094
    %1096 = vdwg.mxu0
    %v1105 = vrot.slane %v876, 7
    %v1106 = vsel %vm343, %v1105, %v875
    %v1107 = vrot.slane %v877, 6
    %v1108 = vsel %vm346, %v1107, %v1106
    %v1109 = vrot.slane %v878, 5
    %v1110 = vsel %vm349, %v1109, %v1108
    %v1111 = vrot.slane %v879, 4
    %v1112 = vsel %vm352, %v1111, %v1110
    %v1113 = vrot.slane %v880, 3
    %v1114 = vsel %vm355, %v1113, %v1112
    %v1115 = vrot.slane %v881, 2
    %v1116 = vsel %vm358, %v1115, %v1114
    %v1117 = vrot.slane %v882, 1
    %v1118 = vsel %vm361, %v1117, %v1116
    %v1119 = vsel %vm363, %v1118, 0
    %1121 = vmatprep.subr.mxu0 %v884
    %1122 = vmatpush1.msra.mxu0 %v883
    %1123 = vmatprep.subr.mxu0 %v888
    %1124 = vmatpush1.msra.mxu0 %v887
    %1125 = vmatprep.subr.mxu0 0.0
    %1126 = vmatpush1.msra.mxu0 0.0
    %1127 = vmatprep.subr.mxu0 0.0
    %1128 = vmatpush1.msra.mxu0 0.0
    %1129 = vmatprep.subr.mxu0 0.0
    %1130 = vmatpush1.msra.mxu0 0.0
    %1131 = vmatprep.subr.mxu0 0.0
    %1132 = vmatpush1.msra.mxu0 0.0
    %1133 = vmatprep.subr.mxu0 0.0
    %1134 = vmatpush1.msra.mxu0 0.0
    %1135 = vmatprep.subr.mxu0 0.0
    %1136 = vmatpush1.msra.mxu0 0.0
    %1137 = vmatprep.subr.mxu0 0.0
    %1138 = vmatpush1.msra.mxu0 0.0
    %1139 = vmatprep.subr.mxu0 0.0
    %1140 = vmatpush1.msra.mxu0 0.0
    %1141 = vmatprep.subr.mxu0 0.0
    %1142 = vmatpush1.msra.mxu0 0.0
    %1143 = vmatprep.subr.mxu0 0.0
    %1144 = vmatpush1.msra.mxu0 0.0
    %1145 = vmatprep.subr.mxu0 0.0
    %1146 = vmatpush1.msra.mxu0 0.0
    %1147 = vmatprep.subr.mxu0 0.0
    %1148 = vmatpush1.msra.mxu0 0.0
    %1149 = vmatprep.subr.mxu0 0.0
    %1150 = vmatpush1.msra.mxu0 0.0
    %1151 = vmatprep.subr.mxu0 0.0
    %1152 = vmatpush1.msra.mxu0 0.0
    %1153 = vmatprep.subr.mxu0 0.0
    %1154 = vmatpush1.msra.mxu0 0.0
    %1155 = vmatprep.subr.mxu0 0.0
    %1156 = vmatpush1.msra.mxu0 0.0
    %1157 = vmatprep.subr.mxu0 0.0
    %1158 = vmatpush1.msra.mxu0 0.0
    %1159 = vmatprep.subr.mxu0 0.0
    %1160 = vmatpush1.msra.mxu0 0.0
    %1161 = vmatprep.subr.mxu0 0.0
    %1162 = vmatpush1.msra.mxu0 0.0
    %1163 = vmatprep.subr.mxu0 0.0
    %1164 = vmatpush1.msra.mxu0 0.0
    %1165 = vmatprep.subr.mxu0 0.0
    %1166 = vmatpush1.msra.mxu0 0.0
    %1167 = vmatprep.subr.mxu0 0.0
    %1168 = vmatpush1.msra.mxu0 0.0
    %1169 = vmatprep.subr.mxu0 0.0
    %1170 = vmatpush1.msra.mxu0 0.0
    %1171 = vmatprep.subr.mxu0 0.0
    %1172 = vmatpush1.msra.mxu0 0.0
    %1173 = vmatprep.subr.mxu0 0.0
    %1174 = vmatpush1.msra.mxu0 0.0
    %1175 = vmatprep.subr.mxu0 0.0
    %1176 = vmatpush1.msra.mxu0 0.0
    %1177 = vmatprep.subr.mxu0 0.0
    %1178 = vmatpush1.msra.mxu0 0.0
    %1179 = vmatprep.subr.mxu0 0.0
    %1180 = vmatpush1.msra.mxu0 0.0
    %1181 = vmatprep.subr.mxu0 0.0
    %1182 = vmatpush1.msra.mxu0 0.0
    %1183 = vmatprep.subr.mxu0 0.0
    %1184 = vmatpush1.msra.mxu0 0.0
    %1185 = vmatprep.mubr.f32.mxu0 0.0
    %1186 = vmatmul.mubr.f32.gmra.mrb[0].mxu0 %v1119
    %v1187 = vpop.f32.mrb[0].mxu0
    %v1188 = vadd.f32 %v1022, %v1187
    %v1189 = vpop.f32.mrb[0].mxu0
    %v1190 = vadd.f32 %v1024, %v1189
    %1191 = vdwg.mxu0
    %1192 = vmatprep.subr.mxu0 %v886
    %1193 = vmatpush1.msra.mxu0 %v885
    %1194 = vmatprep.subr.mxu0 %v890
    %1195 = vmatpush1.msra.mxu0 %v889
    %1196 = vmatprep.subr.mxu0 0.0
    %1197 = vmatpush1.msra.mxu0 0.0
    %1198 = vmatprep.subr.mxu0 0.0
    %1199 = vmatpush1.msra.mxu0 0.0
    %1200 = vmatprep.subr.mxu0 0.0
    %1201 = vmatpush1.msra.mxu0 0.0
    %1202 = vmatprep.subr.mxu0 0.0
    %1203 = vmatpush1.msra.mxu0 0.0
    %1204 = vmatprep.subr.mxu0 0.0
    %1205 = vmatpush1.msra.mxu0 0.0
    %1206 = vmatprep.subr.mxu0 0.0
    %1207 = vmatpush1.msra.mxu0 0.0
    %1208 = vmatprep.subr.mxu0 0.0
    %1209 = vmatpush1.msra.mxu0 0.0
    %1210 = vmatprep.subr.mxu0 0.0
    %1211 = vmatpush1.msra.mxu0 0.0
    %1212 = vmatprep.subr.mxu0 0.0
    %1213 = vmatpush1.msra.mxu0 0.0
    %1214 = vmatprep.subr.mxu0 0.0
    %1215 = vmatpush1.msra.mxu0 0.0
    %1216 = vmatprep.subr.mxu0 0.0
    %1217 = vmatpush1.msra.mxu0 0.0
    %1218 = vmatprep.subr.mxu0 0.0
    %1219 = vmatpush1.msra.mxu0 0.0
    %1220 = vmatprep.subr.mxu0 0.0
    %1221 = vmatpush1.msra.mxu0 0.0
    %1222 = vmatprep.subr.mxu0 0.0
    %1223 = vmatpush1.msra.mxu0 0.0
    %1224 = vmatprep.subr.mxu0 0.0
    %1225 = vmatpush1.msra.mxu0 0.0
    %1226 = vmatprep.subr.mxu0 0.0
    %1227 = vmatpush1.msra.mxu0 0.0
    %1228 = vmatprep.subr.mxu0 0.0
    %1229 = vmatpush1.msra.mxu0 0.0
    %1230 = vmatprep.subr.mxu0 0.0
    %1231 = vmatpush1.msra.mxu0 0.0
    %1232 = vmatprep.subr.mxu0 0.0
    %1233 = vmatpush1.msra.mxu0 0.0
    %1234 = vmatprep.subr.mxu0 0.0
    %1235 = vmatpush1.msra.mxu0 0.0
    %1236 = vmatprep.subr.mxu0 0.0
    %1237 = vmatpush1.msra.mxu0 0.0
    %1238 = vmatprep.subr.mxu0 0.0
    %1239 = vmatpush1.msra.mxu0 0.0
    %1240 = vmatprep.subr.mxu0 0.0
    %1241 = vmatpush1.msra.mxu0 0.0
    %1242 = vmatprep.subr.mxu0 0.0
    %1243 = vmatpush1.msra.mxu0 0.0
    %1244 = vmatprep.subr.mxu0 0.0
    %1245 = vmatpush1.msra.mxu0 0.0
    %1246 = vmatprep.subr.mxu0 0.0
    %1247 = vmatpush1.msra.mxu0 0.0
    %1248 = vmatprep.subr.mxu0 0.0
    %1249 = vmatpush1.msra.mxu0 0.0
    %1250 = vmatprep.subr.mxu0 0.0
    %1251 = vmatpush1.msra.mxu0 0.0
    %1252 = vmatprep.subr.mxu0 0.0
    %1253 = vmatpush1.msra.mxu0 0.0
    %1254 = vmatprep.subr.mxu0 0.0
    %1255 = vmatpush1.msra.mxu0 0.0
    %1256 = vmatprep.mubr.f32.mxu0 0.0
    %1257 = vmatmul.mubr.f32.gmra.mrb[0].mxu0 %v1119
    %v1258 = vpop.f32.mrb[0].mxu0
    %v1259 = vadd.f32 %v1093, %v1258
    %v1260 = vpop.f32.mrb[0].mxu0
    %v1261 = vadd.f32 %v1095, %v1260
    %1262 = vdwg.mxu0
    %v1263 = vld [vmem:[%s3] sm:$0xf]
    %v1265 = vlaneseq
    %v1266 = vshrl.u32 %v1265, 7
    %v1267 = vsub.s32 0, %v1266
    %v1268 = vrot.slane %v1263, %v1267
    %v1269 = vlaneseq
    %v1270 = vshrl.u32 %v1269, 7
    %v1271 = vsub.s32 1, %v1270
    %v1272 = vrot.slane %v1263, %v1271
    %v1273 = vlaneseq
    %v1274 = vshrl.u32 %v1273, 7
    %v1275 = vsub.s32 2, %v1274
    %v1276 = vrot.slane %v1263, %v1275
    %v1277 = vlaneseq
    %v1278 = vshrl.u32 %v1277, 7
    %v1279 = vsub.s32 3, %v1278
    %v1280 = vrot.slane %v1263, %v1279
    %v1285 = vadd.f32 %v1188, %v1268
    %v1286 = vadd.f32 %v1190, %v1272
    %v1287 = vadd.f32 %v1259, %v1276
    %v1288 = vadd.f32 %v1261, %v1280
    %v1289 = vxor.u32 %v1285, 2147483648
    %v1290 = vmul.f32 %v1289, 1.442695
    %v1291 = vpow.pop %v1290
    %v1292 = vadd.f32 %v1291, 1.0
    %v1293 = vrcp.pop %v1292
    %v1294 = vmul.f32 1.0, %v1293
    %v1295 = vxor.u32 %v1286, 2147483648
    %v1296 = vmul.f32 %v1295, 1.442695
    %v1297 = vpow.pop %v1296
    %v1298 = vadd.f32 %v1297, 1.0
    %v1299 = vrcp.pop %v1298
    %v1300 = vmul.f32 1.0, %v1299
    %v1301 = vtanh.pop %v1287
    %v1302 = vxor.u32 %v1288, 2147483648
    %v1303 = vmul.f32 %v1302, 1.442695
    %v1304 = vpow.pop %v1303
    %v1305 = vadd.f32 %v1304, 1.0
    %v1306 = vrcp.pop %v1305
    %v1307 = vmul.f32 1.0, %v1306
    %v1308 = vmul.f32 %v1300, %v555
    %v1309 = vmul.f32 %v1294, %v1301
    %v1310 = vadd.f32 %v1308, %v1309
    %v1311 = vtanh.pop %v1310
    %v1312 = vmul.f32 %v1307, %v1311
    %v1313 = vld [vmem:[#allocation11] sm:$0xff]
    %v1314 = vld [vmem:[#allocation11 + $0x8] sm:$0xff]
    %v1315 = vld [vmem:[#allocation11 + $0x10] sm:$0xff]
    %v1316 = vld [vmem:[#allocation11 + $0x18] sm:$0xff]
    %v1317 = vld [vmem:[#allocation11 + $0x20] sm:$0xff]
    %v1318 = vld [vmem:[#allocation11 + $0x28] sm:$0xff]
    %v1319 = vld [vmem:[#allocation11 + $0x30] sm:$0xff]
    %v1320 = vld [vmem:[#allocation11 + $0x38] sm:$0xff]
    %v1321 = vld [vmem:[#allocation11 + $0x40] sm:$0xff]
    %v1322 = vld [vmem:[#allocation11 + $0x48] sm:$0xff]
    %v1323 = vld [vmem:[#allocation11 + $0x50] sm:$0xff]
    %v1324 = vld [vmem:[#allocation11 + $0x58] sm:$0xff]
    %v1325 = vld [vmem:[#allocation11 + $0x60] sm:$0xff]
    %v1326 = vld [vmem:[#allocation11 + $0x68] sm:$0xff]
    %v1327 = vld [vmem:[#allocation11 + $0x70] sm:$0xff]
    %v1328 = vld [vmem:[#allocation11 + $0x78] sm:$0xff]
    %v1329 = vld [vmem:[#allocation11 + $0x80] sm:$0xff]
    %v1330 = vld [vmem:[#allocation11 + $0x88] sm:$0xff]
    %v1331 = vld [vmem:[#allocation11 + $0x90] sm:$0xff]
    %v1332 = vld [vmem:[#allocation11 + $0x98] sm:$0xff]
    %v1333 = vld [vmem:[#allocation11 + $0xa0] sm:$0xff]
    %v1334 = vld [vmem:[#allocation11 + $0xa8] sm:$0xff]
    %v1335 = vld [vmem:[#allocation11 + $0xb0] sm:$0xff]
    %v1336 = vld [vmem:[#allocation11 + $0xb8] sm:$0xff]
    %v1337 = vld [vmem:[#allocation11 + $0xc0] sm:$0xff]
    %v1338 = vld [vmem:[#allocation11 + $0xc8] sm:$0xff]
    %v1339 = vld [vmem:[#allocation11 + $0xd0] sm:$0xff]
    %v1340 = vld [vmem:[#allocation11 + $0xd8] sm:$0xff]
    %v1341 = vld [vmem:[#allocation11 + $0xe0] sm:$0xff]
    %v1342 = vld [vmem:[#allocation11 + $0xe8] sm:$0xff]
    %v1343 = vld [vmem:[#allocation11 + $0xf0] sm:$0xff]
    %v1344 = vld [vmem:[#allocation11 + $0xf8] sm:$0xff]
    %v1345 = vld [vmem:[#allocation11 + $0x100] sm:$0xff]
    %v1346 = vld [vmem:[#allocation11 + $0x108] sm:$0xff]
    %v1347 = vld [vmem:[#allocation11 + $0x110] sm:$0xff]
    %v1348 = vld [vmem:[#allocation11 + $0x118] sm:$0xff]
    %v1349 = vld [vmem:[#allocation11 + $0x120] sm:$0xff]
    %v1350 = vld [vmem:[#allocation11 + $0x128] sm:$0xff]
    %v1351 = vld [vmem:[#allocation11 + $0x130] sm:$0xff]
    %v1352 = vld [vmem:[#allocation11 + $0x138] sm:$0xff]
    %v1353 = vld [vmem:[#allocation11 + $0x140] sm:$0xff]
    %v1354 = vld [vmem:[#allocation11 + $0x148] sm:$0xff]
    %v1355 = vld [vmem:[#allocation11 + $0x150] sm:$0xff]
    %v1356 = vld [vmem:[#allocation11 + $0x158] sm:$0xff]
    %v1357 = vld [vmem:[#allocation11 + $0x160] sm:$0xff]
    %v1358 = vld [vmem:[#allocation11 + $0x168] sm:$0xff]
    %v1359 = vld [vmem:[#allocation11 + $0x170] sm:$0xff]
    %v1360 = vld [vmem:[#allocation11 + $0x178] sm:$0xff]
    %v1361 = vld [vmem:[#allocation11 + $0x180] sm:$0xff]
    %v1362 = vld [vmem:[#allocation11 + $0x188] sm:$0xff]
    %v1363 = vld [vmem:[#allocation11 + $0x190] sm:$0xff]
    %v1364 = vld [vmem:[#allocation11 + $0x198] sm:$0xff]
    %v1365 = vld [vmem:[#allocation11 + $0x1a0] sm:$0xff]
    %v1366 = vld [vmem:[#allocation11 + $0x1a8] sm:$0xff]
    %v1367 = vld [vmem:[#allocation11 + $0x1b0] sm:$0xff]
    %v1368 = vld [vmem:[#allocation11 + $0x1b8] sm:$0xff]
    %v1369 = vld [vmem:[#allocation11 + $0x1c0] sm:$0xff]
    %v1370 = vld [vmem:[#allocation11 + $0x1c8] sm:$0xff]
    %v1371 = vld [vmem:[#allocation11 + $0x1d0] sm:$0xff]
    %v1372 = vld [vmem:[#allocation11 + $0x1d8] sm:$0xff]
    %v1373 = vld [vmem:[#allocation11 + $0x1e0] sm:$0xff]
    %v1374 = vld [vmem:[#allocation11 + $0x1e8] sm:$0xff]
    %v1375 = vld [vmem:[#allocation11 + $0x1f0] sm:$0xff]
    %v1376 = vld [vmem:[#allocation11 + $0x1f8] sm:$0xff]
    %v1377 = vld [vmem:[#allocation11 + $0x200] sm:$0xff]
    %v1378 = vld [vmem:[#allocation11 + $0x208] sm:$0xff]
    %v1379 = vld [vmem:[#allocation11 + $0x210] sm:$0xff]
    %v1380 = vld [vmem:[#allocation11 + $0x218] sm:$0xff]
    %v1381 = vld [vmem:[#allocation11 + $0x220] sm:$0xff]
    %v1382 = vld [vmem:[#allocation11 + $0x228] sm:$0xff]
    %v1383 = vld [vmem:[#allocation11 + $0x230] sm:$0xff]
    %v1384 = vld [vmem:[#allocation11 + $0x238] sm:$0xff]
    %v1385 = vld [vmem:[#allocation11 + $0x240] sm:$0xff]
    %v1386 = vld [vmem:[#allocation11 + $0x248] sm:$0xff]
    %v1387 = vld [vmem:[#allocation11 + $0x250] sm:$0xff]
    %v1388 = vld [vmem:[#allocation11 + $0x258] sm:$0xff]
    %v1389 = vld [vmem:[#allocation11 + $0x260] sm:$0xff]
    %v1390 = vld [vmem:[#allocation11 + $0x268] sm:$0xff]
    %v1391 = vld [vmem:[#allocation11 + $0x270] sm:$0xff]
    %v1392 = vld [vmem:[#allocation11 + $0x278] sm:$0xff]
    %v1393 = vld [vmem:[#allocation11 + $0x280] sm:$0xff]
    %v1394 = vld [vmem:[#allocation11 + $0x288] sm:$0xff]
    %v1395 = vld [vmem:[#allocation11 + $0x290] sm:$0xff]
    %v1396 = vld [vmem:[#allocation11 + $0x298] sm:$0xff]
    %v1397 = vld [vmem:[#allocation11 + $0x2a0] sm:$0xff]
    %v1398 = vld [vmem:[#allocation11 + $0x2a8] sm:$0xff]
    %v1399 = vld [vmem:[#allocation11 + $0x2b0] sm:$0xff]
    %v1400 = vld [vmem:[#allocation11 + $0x2b8] sm:$0xff]
    %v1401 = vld [vmem:[#allocation11 + $0x2c0] sm:$0xff]
    %v1402 = vld [vmem:[#allocation11 + $0x2c8] sm:$0xff]
    %v1403 = vld [vmem:[#allocation11 + $0x2d0] sm:$0xff]
    %v1404 = vld [vmem:[#allocation11 + $0x2d8] sm:$0xff]
    %v1405 = vld [vmem:[#allocation11 + $0x2e0] sm:$0xff]
    %v1406 = vld [vmem:[#allocation11 + $0x2e8] sm:$0xff]
    %v1407 = vld [vmem:[#allocation11 + $0x2f0] sm:$0xff]
    %v1408 = vld [vmem:[#allocation11 + $0x2f8] sm:$0xff]
    %v1409 = vld [vmem:[#allocation11 + $0x300] sm:$0xff]
    %v1410 = vld [vmem:[#allocation11 + $0x308] sm:$0xff]
    %v1411 = vld [vmem:[#allocation11 + $0x310] sm:$0xff]
    %v1412 = vld [vmem:[#allocation11 + $0x318] sm:$0xff]
    %v1413 = vld [vmem:[#allocation11 + $0x320] sm:$0xff]
    %v1414 = vld [vmem:[#allocation11 + $0x328] sm:$0xff]
    %v1415 = vld [vmem:[#allocation11 + $0x330] sm:$0xff]
    %v1416 = vld [vmem:[#allocation11 + $0x338] sm:$0xff]
    %v1417 = vld [vmem:[#allocation11 + $0x340] sm:$0xff]
    %v1418 = vld [vmem:[#allocation11 + $0x348] sm:$0xff]
    %v1419 = vld [vmem:[#allocation11 + $0x350] sm:$0xff]
    %v1420 = vld [vmem:[#allocation11 + $0x358] sm:$0xff]
    %v1421 = vld [vmem:[#allocation11 + $0x360] sm:$0xff]
    %v1422 = vld [vmem:[#allocation11 + $0x368] sm:$0xff]
    %v1423 = vld [vmem:[#allocation11 + $0x370] sm:$0xff]
    %v1424 = vld [vmem:[#allocation11 + $0x378] sm:$0xff]
    %v1425 = vld [vmem:[#allocation11 + $0x380] sm:$0xff]
    %v1426 = vld [vmem:[#allocation11 + $0x388] sm:$0xff]
    %v1427 = vld [vmem:[#allocation11 + $0x390] sm:$0xff]
    %v1428 = vld [vmem:[#allocation11 + $0x398] sm:$0xff]
    %v1429 = vld [vmem:[#allocation11 + $0x3a0] sm:$0xff]
    %v1430 = vld [vmem:[#allocation11 + $0x3a8] sm:$0xff]
    %v1431 = vld [vmem:[#allocation11 + $0x3b0] sm:$0xff]
    %v1432 = vld [vmem:[#allocation11 + $0x3b8] sm:$0xff]
    %v1433 = vld [vmem:[#allocation11 + $0x3c0] sm:$0xff]
    %v1434 = vld [vmem:[#allocation11 + $0x3c8] sm:$0xff]
    %v1435 = vld [vmem:[#allocation11 + $0x3d0] sm:$0xff]
    %v1436 = vld [vmem:[#allocation11 + $0x3d8] sm:$0xff]
    %v1437 = vld [vmem:[#allocation11 + $0x3e0] sm:$0xff]
    %v1438 = vld [vmem:[#allocation11 + $0x3e8] sm:$0xff]
    %v1439 = vld [vmem:[#allocation11 + $0x3f0] sm:$0xff]
    %v1440 = vld [vmem:[#allocation11 + $0x3f8] sm:$0xff]
    %v1441 = vld [vmem:[%s5] sm:$0xf]
    %v1443 = vlaneseq
    %v1444 = vshrl.u32 %v1443, 7
    %v1445 = vsub.s32 0, %v1444
    %v1446 = vrot.slane %v1441, %v1445
    %v1447 = vlaneseq
    %v1448 = vshrl.u32 %v1447, 7
    %v1449 = vsub.s32 1, %v1448
    %v1450 = vrot.slane %v1441, %v1449
    %v1451 = vlaneseq
    %v1452 = vshrl.u32 %v1451, 7
    %v1453 = vsub.s32 2, %v1452
    %v1454 = vrot.slane %v1441, %v1453
    %v1455 = vlaneseq
    %v1456 = vshrl.u32 %v1455, 7
    %v1457 = vsub.s32 3, %v1456
    %v1458 = vrot.slane %v1441, %v1457
    %1463 = vmatprep.subr.mxu0 %v1314
    %1464 = vmatpush1.msra.mxu0 %v1313
    %1465 = vmatprep.subr.mxu0 %v1318
    %1466 = vmatpush1.msra.mxu0 %v1317
    %1467 = vmatprep.subr.mxu0 %v1322
    %1468 = vmatpush1.msra.mxu0 %v1321
    %1469 = vmatprep.subr.mxu0 %v1326
    %1470 = vmatpush1.msra.mxu0 %v1325
    %1471 = vmatprep.subr.mxu0 %v1330
    %1472 = vmatpush1.msra.mxu0 %v1329
    %1473 = vmatprep.subr.mxu0 %v1334
    %1474 = vmatpush1.msra.mxu0 %v1333
    %1475 = vmatprep.subr.mxu0 %v1338
    %1476 = vmatpush1.msra.mxu0 %v1337
    %1477 = vmatprep.subr.mxu0 %v1342
    %1478 = vmatpush1.msra.mxu0 %v1341
    %1479 = vmatprep.subr.mxu0 %v1346
    %1480 = vmatpush1.msra.mxu0 %v1345
    %1481 = vmatprep.subr.mxu0 %v1350
    %1482 = vmatpush1.msra.mxu0 %v1349
    %1483 = vmatprep.subr.mxu0 %v1354
    %1484 = vmatpush1.msra.mxu0 %v1353
    %1485 = vmatprep.subr.mxu0 %v1358
    %1486 = vmatpush1.msra.mxu0 %v1357
    %1487 = vmatprep.subr.mxu0 %v1362
    %1488 = vmatpush1.msra.mxu0 %v1361
    %1489 = vmatprep.subr.mxu0 %v1366
    %1490 = vmatpush1.msra.mxu0 %v1365
    %1491 = vmatprep.subr.mxu0 %v1370
    %1492 = vmatpush1.msra.mxu0 %v1369
    %1493 = vmatprep.subr.mxu0 %v1374
    %1494 = vmatpush1.msra.mxu0 %v1373
    %1495 = vmatprep.subr.mxu0 %v1378
    %1496 = vmatpush1.msra.mxu0 %v1377
    %1497 = vmatprep.subr.mxu0 %v1382
    %1498 = vmatpush1.msra.mxu0 %v1381
    %1499 = vmatprep.subr.mxu0 %v1386
    %1500 = vmatpush1.msra.mxu0 %v1385
    %1501 = vmatprep.subr.mxu0 %v1390
    %1502 = vmatpush1.msra.mxu0 %v1389
    %1503 = vmatprep.subr.mxu0 %v1394
    %1504 = vmatpush1.msra.mxu0 %v1393
    %1505 = vmatprep.subr.mxu0 %v1398
    %1506 = vmatpush1.msra.mxu0 %v1397
    %1507 = vmatprep.subr.mxu0 %v1402
    %1508 = vmatpush1.msra.mxu0 %v1401
    %1509 = vmatprep.subr.mxu0 %v1406
    %1510 = vmatpush1.msra.mxu0 %v1405
    %1511 = vmatprep.subr.mxu0 %v1410
    %1512 = vmatpush1.msra.mxu0 %v1409
    %1513 = vmatprep.subr.mxu0 %v1414
    %1514 = vmatpush1.msra.mxu0 %v1413
    %1515 = vmatprep.subr.mxu0 %v1418
    %1516 = vmatpush1.msra.mxu0 %v1417
    %1517 = vmatprep.subr.mxu0 %v1422
    %1518 = vmatpush1.msra.mxu0 %v1421
    %1519 = vmatprep.subr.mxu0 %v1426
    %1520 = vmatpush1.msra.mxu0 %v1425
    %1521 = vmatprep.subr.mxu0 %v1430
    %1522 = vmatpush1.msra.mxu0 %v1429
    %1523 = vmatprep.subr.mxu0 %v1434
    %1524 = vmatpush1.msra.mxu0 %v1433
    %1525 = vmatprep.subr.mxu0 %v1438
    %1526 = vmatpush1.msra.mxu0 %v1437
    %1527 = vmatprep.mubr.f32.mxu0 %v873
    %1528 = vmatmul.mubr.f32.gmra.mrb[0].mxu0 %v1312
    %v1529 = vpop.f32.mrb[0].mxu0
    %v1530 = vadd.f32 %v1446, %v1529
    %v1531 = vpop.f32.mrb[0].mxu0
    %v1532 = vadd.f32 %v1450, %v1531
    %1533 = vdwg.mxu0
    %1534 = vmatprep.subr.mxu0 %v1316
    %1535 = vmatpush1.msra.mxu0 %v1315
    %1536 = vmatprep.subr.mxu0 %v1320
    %1537 = vmatpush1.msra.mxu0 %v1319
    %1538 = vmatprep.subr.mxu0 %v1324
    %1539 = vmatpush1.msra.mxu0 %v1323
    %1540 = vmatprep.subr.mxu0 %v1328
    %1541 = vmatpush1.msra.mxu0 %v1327
    %1542 = vmatprep.subr.mxu0 %v1332
    %1543 = vmatpush1.msra.mxu0 %v1331
    %1544 = vmatprep.subr.mxu0 %v1336
    %1545 = vmatpush1.msra.mxu0 %v1335
    %1546 = vmatprep.subr.mxu0 %v1340
    %1547 = vmatpush1.msra.mxu0 %v1339
    %1548 = vmatprep.subr.mxu0 %v1344
    %1549 = vmatpush1.msra.mxu0 %v1343
    %1550 = vmatprep.subr.mxu0 %v1348
    %1551 = vmatpush1.msra.mxu0 %v1347
    %1552 = vmatprep.subr.mxu0 %v1352
    %1553 = vmatpush1.msra.mxu0 %v1351
    %1554 = vmatprep.subr.mxu0 %v1356
    %1555 = vmatpush1.msra.mxu0 %v1355
    %1556 = vmatprep.subr.mxu0 %v1360
    %1557 = vmatpush1.msra.mxu0 %v1359
    %1558 = vmatprep.subr.mxu0 %v1364
    %1559 = vmatpush1.msra.mxu0 %v1363
    %1560 = vmatprep.subr.mxu0 %v1368
    %1561 = vmatpush1.msra.mxu0 %v1367
    %1562 = vmatprep.subr.mxu0 %v1372
    %1563 = vmatpush1.msra.mxu0 %v1371
    %1564 = vmatprep.subr.mxu0 %v1376
    %1565 = vmatpush1.msra.mxu0 %v1375
    %1566 = vmatprep.subr.mxu0 %v1380
    %1567 = vmatpush1.msra.mxu0 %v1379
    %1568 = vmatprep.subr.mxu0 %v1384
    %1569 = vmatpush1.msra.mxu0 %v1383
    %1570 = vmatprep.subr.mxu0 %v1388
    %1571 = vmatpush1.msra.mxu0 %v1387
    %1572 = vmatprep.subr.mxu0 %v1392
    %1573 = vmatpush1.msra.mxu0 %v1391
    %1574 = vmatprep.subr.mxu0 %v1396
    %1575 = vmatpush1.msra.mxu0 %v1395
    %1576 = vmatprep.subr.mxu0 %v1400
    %1577 = vmatpush1.msra.mxu0 %v1399
    %1578 = vmatprep.subr.mxu0 %v1404
    %1579 = vmatpush1.msra.mxu0 %v1403
    %1580 = vmatprep.subr.mxu0 %v1408
    %1581 = vmatpush1.msra.mxu0 %v1407
    %1582 = vmatprep.subr.mxu0 %v1412
    %1583 = vmatpush1.msra.mxu0 %v1411
    %1584 = vmatprep.subr.mxu0 %v1416
    %1585 = vmatpush1.msra.mxu0 %v1415
    %1586 = vmatprep.subr.mxu0 %v1420
    %1587 = vmatpush1.msra.mxu0 %v1419
    %1588 = vmatprep.subr.mxu0 %v1424
    %1589 = vmatpush1.msra.mxu0 %v1423
    %1590 = vmatprep.subr.mxu0 %v1428
    %1591 = vmatpush1.msra.mxu0 %v1427
    %1592 = vmatprep.subr.mxu0 %v1432
    %1593 = vmatpush1.msra.mxu0 %v1431
    %1594 = vmatprep.subr.mxu0 %v1436
    %1595 = vmatpush1.msra.mxu0 %v1435
    %1596 = vmatprep.subr.mxu0 %v1440
    %1597 = vmatpush1.msra.mxu0 %v1439
    %1598 = vmatprep.mubr.f32.mxu0 %v873
    %1599 = vmatmul.mubr.f32.gmra.mrb[0].mxu0 %v1312
    %v1600 = vpop.f32.mrb[0].mxu0
    %v1601 = vadd.f32 %v1454, %v1600
    %v1602 = vpop.f32.mrb[0].mxu0
    %v1603 = vadd.f32 %v1458, %v1602
    %1604 = vdwg.mxu0
    %v1605 = vxor.u32 %v1530, 2147483648
    %v1606 = vmul.f32 %v1605, 1.442695
    %v1607 = vpow.pop %v1606
    %v1608 = vadd.f32 %v1607, 1.0
    %v1609 = vrcp.pop %v1608
    %v1610 = vmul.f32 1.0, %v1609
    %v1611 = vxor.u32 %v1532, 2147483648
    %v1612 = vmul.f32 %v1611, 1.442695
    %v1613 = vpow.pop %v1612
    %v1614 = vadd.f32 %v1613, 1.0
    %v1615 = vrcp.pop %v1614
    %v1616 = vmul.f32 1.0, %v1615
    %v1617 = vtanh.pop %v1601
    %v1618 = vxor.u32 %v1603, 2147483648
    %v1619 = vmul.f32 %v1618, 1.442695
    %v1620 = vpow.pop %v1619
    %v1621 = vadd.f32 %v1620, 1.0
    %v1622 = vrcp.pop %v1621
    %v1623 = vmul.f32 1.0, %v1622
    %v1624 = vmul.f32 %v1616, %v871
    %v1625 = vmul.f32 %v1610, %v1617
    %v1626 = vadd.f32 %v1624, %v1625
    %v1627 = vtanh.pop %v1626
    %v1628 = vmul.f32 %v1623, %v1627
    %1629 = vst [vmem:[#allocation4 + $0x8] sm:$0xff] %v1628
    %v1630 = vld [vmem:[#allocation5 + $0x2] sm:$0x1]
    %v1631 = vld [vmem:[#allocation5 + $0xa] sm:$0x1]
    %v1632 = vld [vmem:[#allocation5 + $0x12] sm:$0x1]
    %v1633 = vld [vmem:[#allocation5 + $0x1a] sm:$0x1]
    %v1634 = vld [vmem:[#allocation5 + $0x22] sm:$0x1]
    %v1635 = vld [vmem:[#allocation5 + $0x2a] sm:$0x1]
    %v1636 = vld [vmem:[#allocation5 + $0x32] sm:$0x1]
    %v1637 = vld [vmem:[#allocation5 + $0x3a] sm:$0x1]
    %v1638 = vld [vmem:[#allocation8] sm:$0xff]
    %v1639 = vld [vmem:[#allocation8 + $0x8] sm:$0xff]
    %v1640 = vld [vmem:[#allocation8 + $0x10] sm:$0xff]
    %v1641 = vld [vmem:[#allocation8 + $0x18] sm:$0xff]
    %v1642 = vld [vmem:[#allocation8 + $0x20] sm:$0xff]
    %v1643 = vld [vmem:[#allocation8 + $0x28] sm:$0xff]
    %v1644 = vld [vmem:[#allocation8 + $0x30] sm:$0xff]
    %v1645 = vld [vmem:[#allocation8 + $0x38] sm:$0xff]
    %v1646 = vld [vmem:[#allocation10] sm:$0xff]
    %v1647 = vld [vmem:[#allocation10 + $0x8] sm:$0xff]
    %v1648 = vld [vmem:[#allocation10 + $0x10] sm:$0xff]
    %v1649 = vld [vmem:[#allocation10 + $0x18] sm:$0xff]
    %v1650 = vld [vmem:[#allocation10 + $0x20] sm:$0xff]
    %v1651 = vld [vmem:[#allocation10 + $0x28] sm:$0xff]
    %v1652 = vld [vmem:[#allocation10 + $0x30] sm:$0xff]
    %v1653 = vld [vmem:[#allocation10 + $0x38] sm:$0xff]
    %v1654 = vld [vmem:[#allocation10 + $0x40] sm:$0xff]
    %v1655 = vld [vmem:[#allocation10 + $0x48] sm:$0xff]
    %v1656 = vld [vmem:[#allocation10 + $0x50] sm:$0xff]
    %v1657 = vld [vmem:[#allocation10 + $0x58] sm:$0xff]
    %v1658 = vld [vmem:[#allocation10 + $0x60] sm:$0xff]
    %v1659 = vld [vmem:[#allocation10 + $0x68] sm:$0xff]
    %v1660 = vld [vmem:[#allocation10 + $0x70] sm:$0xff]
    %v1661 = vld [vmem:[#allocation10 + $0x78] sm:$0xff]
    %v1662 = vld [vmem:[#allocation10 + $0x80] sm:$0xff]
    %v1663 = vld [vmem:[#allocation10 + $0x88] sm:$0xff]
    %v1664 = vld [vmem:[#allocation10 + $0x90] sm:$0xff]
    %v1665 = vld [vmem:[#allocation10 + $0x98] sm:$0xff]
    %v1666 = vld [vmem:[#allocation10 + $0xa0] sm:$0xff]
    %v1667 = vld [vmem:[#allocation10 + $0xa8] sm:$0xff]
    %v1668 = vld [vmem:[#allocation10 + $0xb0] sm:$0xff]
    %v1669 = vld [vmem:[#allocation10 + $0xb8] sm:$0xff]
    %v1670 = vld [vmem:[#allocation10 + $0xc0] sm:$0xff]
    %v1671 = vld [vmem:[#allocation10 + $0xc8] sm:$0xff]
    %v1672 = vld [vmem:[#allocation10 + $0xd0] sm:$0xff]
    %v1673 = vld [vmem:[#allocation10 + $0xd8] sm:$0xff]
    %v1674 = vld [vmem:[#allocation10 + $0xe0] sm:$0xff]
    %v1675 = vld [vmem:[#allocation10 + $0xe8] sm:$0xff]
    %v1676 = vld [vmem:[#allocation10 + $0xf0] sm:$0xff]
    %v1677 = vld [vmem:[#allocation10 + $0xf8] sm:$0xff]
    %v1678 = vld [vmem:[#allocation10 + $0x100] sm:$0xff]
    %v1679 = vld [vmem:[#allocation10 + $0x108] sm:$0xff]
    %v1680 = vld [vmem:[#allocation10 + $0x110] sm:$0xff]
    %v1681 = vld [vmem:[#allocation10 + $0x118] sm:$0xff]
    %v1682 = vld [vmem:[#allocation10 + $0x120] sm:$0xff]
    %v1683 = vld [vmem:[#allocation10 + $0x128] sm:$0xff]
    %v1684 = vld [vmem:[#allocation10 + $0x130] sm:$0xff]
    %v1685 = vld [vmem:[#allocation10 + $0x138] sm:$0xff]
    %v1686 = vld [vmem:[#allocation10 + $0x140] sm:$0xff]
    %v1687 = vld [vmem:[#allocation10 + $0x148] sm:$0xff]
    %v1688 = vld [vmem:[#allocation10 + $0x150] sm:$0xff]
    %v1689 = vld [vmem:[#allocation10 + $0x158] sm:$0xff]
    %v1690 = vld [vmem:[#allocation10 + $0x160] sm:$0xff]
    %v1691 = vld [vmem:[#allocation10 + $0x168] sm:$0xff]
    %v1692 = vld [vmem:[#allocation10 + $0x170] sm:$0xff]
    %v1693 = vld [vmem:[#allocation10 + $0x178] sm:$0xff]
    %v1694 = vld [vmem:[#allocation10 + $0x180] sm:$0xff]
    %v1695 = vld [vmem:[#allocation10 + $0x188] sm:$0xff]
    %v1696 = vld [vmem:[#allocation10 + $0x190] sm:$0xff]
    %v1697 = vld [vmem:[#allocation10 + $0x198] sm:$0xff]
    %v1698 = vld [vmem:[#allocation10 + $0x1a0] sm:$0xff]
    %v1699 = vld [vmem:[#allocation10 + $0x1a8] sm:$0xff]
    %v1700 = vld [vmem:[#allocation10 + $0x1b0] sm:$0xff]
    %v1701 = vld [vmem:[#allocation10 + $0x1b8] sm:$0xff]
    %v1702 = vld [vmem:[#allocation10 + $0x1c0] sm:$0xff]
    %v1703 = vld [vmem:[#allocation10 + $0x1c8] sm:$0xff]
    %v1704 = vld [vmem:[#allocation10 + $0x1d0] sm:$0xff]
    %v1705 = vld [vmem:[#allocation10 + $0x1d8] sm:$0xff]
    %v1706 = vld [vmem:[#allocation10 + $0x1e0] sm:$0xff]
    %v1707 = vld [vmem:[#allocation10 + $0x1e8] sm:$0xff]
    %v1708 = vld [vmem:[#allocation10 + $0x1f0] sm:$0xff]
    %v1709 = vld [vmem:[#allocation10 + $0x1f8] sm:$0xff]
    %1710 = vmatprep.subr.mxu0 %v1647
    %1711 = vmatpush1.msra.mxu0 %v1646
    %1712 = vmatprep.subr.mxu0 %v1651
    %1713 = vmatpush1.msra.mxu0 %v1650
    %1714 = vmatprep.subr.mxu0 %v1655
    %1715 = vmatpush1.msra.mxu0 %v1654
    %1716 = vmatprep.subr.mxu0 %v1659
    %1717 = vmatpush1.msra.mxu0 %v1658
    %1718 = vmatprep.subr.mxu0 %v1663
    %1719 = vmatpush1.msra.mxu0 %v1662
    %1720 = vmatprep.subr.mxu0 %v1667
    %1721 = vmatpush1.msra.mxu0 %v1666
    %1722 = vmatprep.subr.mxu0 %v1671
    %1723 = vmatpush1.msra.mxu0 %v1670
    %1724 = vmatprep.subr.mxu0 %v1675
    %1725 = vmatpush1.msra.mxu0 %v1674
    %1726 = vmatprep.subr.mxu0 %v1679
    %1727 = vmatpush1.msra.mxu0 %v1678
    %1728 = vmatprep.subr.mxu0 %v1683
    %1729 = vmatpush1.msra.mxu0 %v1682
    %1730 = vmatprep.subr.mxu0 %v1687
    %1731 = vmatpush1.msra.mxu0 %v1686
    %1732 = vmatprep.subr.mxu0 %v1691
    %1733 = vmatpush1.msra.mxu0 %v1690
    %1734 = vmatprep.subr.mxu0 %v1695
    %1735 = vmatpush1.msra.mxu0 %v1694
    %1736 = vmatprep.subr.mxu0 %v1699
    %1737 = vmatpush1.msra.mxu0 %v1698
    %1738 = vmatprep.subr.mxu0 %v1703
    %1739 = vmatpush1.msra.mxu0 %v1702
    %1740 = vmatprep.subr.mxu0 %v1707
    %1741 = vmatpush1.msra.mxu0 %v1706
    %1742 = vmatprep.subr.mxu0 0.0
    %1743 = vmatpush1.msra.mxu0 0.0
    %1744 = vmatprep.subr.mxu0 0.0
    %1745 = vmatpush1.msra.mxu0 0.0
    %1746 = vmatprep.subr.mxu0 0.0
    %1747 = vmatpush1.msra.mxu0 0.0
    %1748 = vmatprep.subr.mxu0 0.0
    %1749 = vmatpush1.msra.mxu0 0.0
    %1750 = vmatprep.subr.mxu0 0.0
    %1751 = vmatpush1.msra.mxu0 0.0
    %1752 = vmatprep.subr.mxu0 0.0
    %1753 = vmatpush1.msra.mxu0 0.0
    %1754 = vmatprep.subr.mxu0 0.0
    %1755 = vmatpush1.msra.mxu0 0.0
    %1756 = vmatprep.subr.mxu0 0.0
    %1757 = vmatpush1.msra.mxu0 0.0
    %1758 = vmatprep.subr.mxu0 0.0
    %1759 = vmatpush1.msra.mxu0 0.0
    %1760 = vmatprep.subr.mxu0 0.0
    %1761 = vmatpush1.msra.mxu0 0.0
    %1762 = vmatprep.subr.mxu0 0.0
    %1763 = vmatpush1.msra.mxu0 0.0
    %1764 = vmatprep.subr.mxu0 0.0
    %1765 = vmatpush1.msra.mxu0 0.0
    %1766 = vmatprep.subr.mxu0 0.0
    %1767 = vmatpush1.msra.mxu0 0.0
    %1768 = vmatprep.subr.mxu0 0.0
    %1769 = vmatpush1.msra.mxu0 0.0
    %1770 = vmatprep.subr.mxu0 0.0
    %1771 = vmatpush1.msra.mxu0 0.0
    %1772 = vmatprep.subr.mxu0 0.0
    %1773 = vmatpush1.msra.mxu0 0.0
    %1774 = vmatprep.mubr.f32.mxu0 0.0
    %1775 = vmatmul.mubr.f32.gmra.mrb[0].mxu0 %v1312
    %v1776 = vpop.f32.mrb[0].mxu0
    %v1777 = vadd.f32 0.0, %v1776
    %v1778 = vpop.f32.mrb[0].mxu0
    %v1779 = vadd.f32 0.0, %v1778
    %1780 = vdwg.mxu0
    %1781 = vmatprep.subr.mxu0 %v1649
    %1782 = vmatpush1.msra.mxu0 %v1648
    %1783 = vmatprep.subr.mxu0 %v1653
    %1784 = vmatpush1.msra.mxu0 %v1652
    %1785 = vmatprep.subr.mxu0 %v1657
    %1786 = vmatpush1.msra.mxu0 %v1656
    %1787 = vmatprep.subr.mxu0 %v1661
    %1788 = vmatpush1.msra.mxu0 %v1660
    %1789 = vmatprep.subr.mxu0 %v1665
    %1790 = vmatpush1.msra.mxu0 %v1664
    %1791 = vmatprep.subr.mxu0 %v1669
    %1792 = vmatpush1.msra.mxu0 %v1668
    %1793 = vmatprep.subr.mxu0 %v1673
    %1794 = vmatpush1.msra.mxu0 %v1672
    %1795 = vmatprep.subr.mxu0 %v1677
    %1796 = vmatpush1.msra.mxu0 %v1676
    %1797 = vmatprep.subr.mxu0 %v1681
    %1798 = vmatpush1.msra.mxu0 %v1680
    %1799 = vmatprep.subr.mxu0 %v1685
    %1800 = vmatpush1.msra.mxu0 %v1684
    %1801 = vmatprep.subr.mxu0 %v1689
    %1802 = vmatpush1.msra.mxu0 %v1688
    %1803 = vmatprep.subr.mxu0 %v1693
    %1804 = vmatpush1.msra.mxu0 %v1692
    %1805 = vmatprep.subr.mxu0 %v1697
    %1806 = vmatpush1.msra.mxu0 %v1696
    %1807 = vmatprep.subr.mxu0 %v1701
    %1808 = vmatpush1.msra.mxu0 %v1700
    %1809 = vmatprep.subr.mxu0 %v1705
    %1810 = vmatpush1.msra.mxu0 %v1704
    %1811 = vmatprep.subr.mxu0 %v1709
    %1812 = vmatpush1.msra.mxu0 %v1708
    %1813 = vmatprep.subr.mxu0 0.0
    %1814 = vmatpush1.msra.mxu0 0.0
    %1815 = vmatprep.subr.mxu0 0.0
    %1816 = vmatpush1.msra.mxu0 0.0
    %1817 = vmatprep.subr.mxu0 0.0
    %1818 = vmatpush1.msra.mxu0 0.0
    %1819 = vmatprep.subr.mxu0 0.0
    %1820 = vmatpush1.msra.mxu0 0.0
    %1821 = vmatprep.subr.mxu0 0.0
    %1822 = vmatpush1.msra.mxu0 0.0
    %1823 = vmatprep.subr.mxu0 0.0
    %1824 = vmatpush1.msra.mxu0 0.0
    %1825 = vmatprep.subr.mxu0 0.0
    %1826 = vmatpush1.msra.mxu0 0.0
    %1827 = vmatprep.subr.mxu0 0.0
    %1828 = vmatpush1.msra.mxu0 0.0
    %1829 = vmatprep.subr.mxu0 0.0
    %1830 = vmatpush1.msra.mxu0 0.0
    %1831 = vmatprep.subr.mxu0 0.0
    %1832 = vmatpush1.msra.mxu0 0.0
    %1833 = vmatprep.subr.mxu0 0.0
    %1834 = vmatpush1.msra.mxu0 0.0
    %1835 = vmatprep.subr.mxu0 0.0
    %1836 = vmatpush1.msra.mxu0 0.0
    %1837 = vmatprep.subr.mxu0 0.0
    %1838 = vmatpush1.msra.mxu0 0.0
    %1839 = vmatprep.subr.mxu0 0.0
    %1840 = vmatpush1.msra.mxu0 0.0
    %1841 = vmatprep.subr.mxu0 0.0
    %1842 = vmatpush1.msra.mxu0 0.0
    %1843 = vmatprep.subr.mxu0 0.0
    %1844 = vmatpush1.msra.mxu0 0.0
    %1845 = vmatprep.mubr.f32.mxu0 0.0
    %1846 = vmatmul.mubr.f32.gmra.mrb[0].mxu0 %v1312
    %v1847 = vpop.f32.mrb[0].mxu0
    %v1848 = vadd.f32 0.0, %v1847
    %v1849 = vpop.f32.mrb[0].mxu0
    %v1850 = vadd.f32 0.0, %v1849
    %1851 = vdwg.mxu0
    %v1860 = vrot.slane %v1631, 7
    %v1861 = vsel %vm343, %v1860, %v1630
    %v1862 = vrot.slane %v1632, 6
    %v1863 = vsel %vm346, %v1862, %v1861
    %v1864 = vrot.slane %v1633, 5
    %v1865 = vsel %vm349, %v1864, %v1863
    %v1866 = vrot.slane %v1634, 4
    %v1867 = vsel %vm352, %v1866, %v1865
    %v1868 = vrot.slane %v1635, 3
    %v1869 = vsel %vm355, %v1868, %v1867
    %v1870 = vrot.slane %v1636, 2
    %v1871 = vsel %vm358, %v1870, %v1869
    %v1872 = vrot.slane %v1637, 1
    %v1873 = vsel %vm361, %v1872, %v1871
    %v1874 = vsel %vm363, %v1873, 0
    %1876 = vmatprep.subr.mxu0 %v1639
    %1877 = vmatpush1.msra.mxu0 %v1638
    %1878 = vmatprep.subr.mxu0 %v1643
    %1879 = vmatpush1.msra.mxu0 %v1642
    %1880 = vmatprep.subr.mxu0 0.0
    %1881 = vmatpush1.msra.mxu0 0.0
    %1882 = vmatprep.subr.mxu0 0.0
    %1883 = vmatpush1.msra.mxu0 0.0
    %1884 = vmatprep.subr.mxu0 0.0
    %1885 = vmatpush1.msra.mxu0 0.0
    %1886 = vmatprep.subr.mxu0 0.0
    %1887 = vmatpush1.msra.mxu0 0.0
    %1888 = vmatprep.subr.mxu0 0.0
    %1889 = vmatpush1.msra.mxu0 0.0
    %1890 = vmatprep.subr.mxu0 0.0
    %1891 = vmatpush1.msra.mxu0 0.0
    %1892 = vmatprep.subr.mxu0 0.0
    %1893 = vmatpush1.msra.mxu0 0.0
    %1894 = vmatprep.subr.mxu0 0.0
    %1895 = vmatpush1.msra.mxu0 0.0
    %1896 = vmatprep.subr.mxu0 0.0
    %1897 = vmatpush1.msra.mxu0 0.0
    %1898 = vmatprep.subr.mxu0 0.0
    %1899 = vmatpush1.msra.mxu0 0.0
    %1900 = vmatprep.subr.mxu0 0.0
    %1901 = vmatpush1.msra.mxu0 0.0
    %1902 = vmatprep.subr.mxu0 0.0
    %1903 = vmatpush1.msra.mxu0 0.0
    %1904 = vmatprep.subr.mxu0 0.0
    %1905 = vmatpush1.msra.mxu0 0.0
    %1906 = vmatprep.subr.mxu0 0.0
    %1907 = vmatpush1.msra.mxu0 0.0
    %1908 = vmatprep.subr.mxu0 0.0
    %1909 = vmatpush1.msra.mxu0 0.0
    %1910 = vmatprep.subr.mxu0 0.0
    %1911 = vmatpush1.msra.mxu0 0.0
    %1912 = vmatprep.subr.mxu0 0.0
    %1913 = vmatpush1.msra.mxu0 0.0
    %1914 = vmatprep.subr.mxu0 0.0
    %1915 = vmatpush1.msra.mxu0 0.0
    %1916 = vmatprep.subr.mxu0 0.0
    %1917 = vmatpush1.msra.mxu0 0.0
    %1918 = vmatprep.subr.mxu0 0.0
    %1919 = vmatpush1.msra.mxu0 0.0
    %1920 = vmatprep.subr.mxu0 0.0
    %1921 = vmatpush1.msra.mxu0 0.0
    %1922 = vmatprep.subr.mxu0 0.0
    %1923 = vmatpush1.msra.mxu0 0.0
    %1924 = vmatprep.subr.mxu0 0.0
    %1925 = vmatpush1.msra.mxu0 0.0
    %1926 = vmatprep.subr.mxu0 0.0
    %1927 = vmatpush1.msra.mxu0 0.0
    %1928 = vmatprep.subr.mxu0 0.0
    %1929 = vmatpush1.msra.mxu0 0.0
    %1930 = vmatprep.subr.mxu0 0.0
    %1931 = vmatpush1.msra.mxu0 0.0
    %1932 = vmatprep.subr.mxu0 0.0
    %1933 = vmatpush1.msra.mxu0 0.0
    %1934 = vmatprep.subr.mxu0 0.0
    %1935 = vmatpush1.msra.mxu0 0.0
    %1936 = vmatprep.subr.mxu0 0.0
    %1937 = vmatpush1.msra.mxu0 0.0
    %1938 = vmatprep.subr.mxu0 0.0
    %1939 = vmatpush1.msra.mxu0 0.0
    %1940 = vmatprep.mubr.f32.mxu0 0.0
    %1941 = vmatmul.mubr.f32.gmra.mrb[0].mxu0 %v1874
    %v1942 = vpop.f32.mrb[0].mxu0
    %v1943 = vadd.f32 %v1777, %v1942
    %v1944 = vpop.f32.mrb[0].mxu0
    %v1945 = vadd.f32 %v1779, %v1944
    %1946 = vdwg.mxu0
    %1947 = vmatprep.subr.mxu0 %v1641
    %1948 = vmatpush1.msra.mxu0 %v1640
    %1949 = vmatprep.subr.mxu0 %v1645
    %1950 = vmatpush1.msra.mxu0 %v1644
    %1951 = vmatprep.subr.mxu0 0.0
    %1952 = vmatpush1.msra.mxu0 0.0
    %1953 = vmatprep.subr.mxu0 0.0
    %1954 = vmatpush1.msra.mxu0 0.0
    %1955 = vmatprep.subr.mxu0 0.0
    %1956 = vmatpush1.msra.mxu0 0.0
    %1957 = vmatprep.subr.mxu0 0.0
    %1958 = vmatpush1.msra.mxu0 0.0
    %1959 = vmatprep.subr.mxu0 0.0
    %1960 = vmatpush1.msra.mxu0 0.0
    %1961 = vmatprep.subr.mxu0 0.0
    %1962 = vmatpush1.msra.mxu0 0.0
    %1963 = vmatprep.subr.mxu0 0.0
    %1964 = vmatpush1.msra.mxu0 0.0
    %1965 = vmatprep.subr.mxu0 0.0
    %1966 = vmatpush1.msra.mxu0 0.0
    %1967 = vmatprep.subr.mxu0 0.0
    %1968 = vmatpush1.msra.mxu0 0.0
    %1969 = vmatprep.subr.mxu0 0.0
    %1970 = vmatpush1.msra.mxu0 0.0
    %1971 = vmatprep.subr.mxu0 0.0
    %1972 = vmatpush1.msra.mxu0 0.0
    %1973 = vmatprep.subr.mxu0 0.0
    %1974 = vmatpush1.msra.mxu0 0.0
    %1975 = vmatprep.subr.mxu0 0.0
    %1976 = vmatpush1.msra.mxu0 0.0
    %1977 = vmatprep.subr.mxu0 0.0
    %1978 = vmatpush1.msra.mxu0 0.0
    %1979 = vmatprep.subr.mxu0 0.0
    %1980 = vmatpush1.msra.mxu0 0.0
    %1981 = vmatprep.subr.mxu0 0.0
    %1982 = vmatpush1.msra.mxu0 0.0
    %1983 = vmatprep.subr.mxu0 0.0
    %1984 = vmatpush1.msra.mxu0 0.0
    %1985 = vmatprep.subr.mxu0 0.0
    %1986 = vmatpush1.msra.mxu0 0.0
    %1987 = vmatprep.subr.mxu0 0.0
    %1988 = vmatpush1.msra.mxu0 0.0
    %1989 = vmatprep.subr.mxu0 0.0
    %1990 = vmatpush1.msra.mxu0 0.0
    %1991 = vmatprep.subr.mxu0 0.0
    %1992 = vmatpush1.msra.mxu0 0.0
    %1993 = vmatprep.subr.mxu0 0.0
    %1994 = vmatpush1.msra.mxu0 0.0
    %1995 = vmatprep.subr.mxu0 0.0
    %1996 = vmatpush1.msra.mxu0 0.0
    %1997 = vmatprep.subr.mxu0 0.0
    %1998 = vmatpush1.msra.mxu0 0.0
    %1999 = vmatprep.subr.mxu0 0.0
    %2000 = vmatpush1.msra.mxu0 0.0
    %2001 = vmatprep.subr.mxu0 0.0
    %2002 = vmatpush1.msra.mxu0 0.0
    %2003 = vmatprep.subr.mxu0 0.0
    %2004 = vmatpush1.msra.mxu0 0.0
    %2005 = vmatprep.subr.mxu0 0.0
    %2006 = vmatpush1.msra.mxu0 0.0
    %2007 = vmatprep.subr.mxu0 0.0
    %2008 = vmatpush1.msra.mxu0 0.0
    %2009 = vmatprep.subr.mxu0 0.0
    %2010 = vmatpush1.msra.mxu0 0.0
    %2011 = vmatprep.mubr.f32.mxu0 0.0
    %2012 = vmatmul.mubr.f32.gmra.mrb[0].mxu0 %v1874
    %v2013 = vpop.f32.mrb[0].mxu0
    %v2014 = vadd.f32 %v1848, %v2013
    %v2015 = vpop.f32.mrb[0].mxu0
    %v2016 = vadd.f32 %v1850, %v2015
    %2017 = vdwg.mxu0
    %v2018 = vld [vmem:[%s3] sm:$0xf]
    %v2020 = vlaneseq
    %v2021 = vshrl.u32 %v2020, 7
    %v2022 = vsub.s32 0, %v2021
    %v2023 = vrot.slane %v2018, %v2022
    %v2024 = vlaneseq
    %v2025 = vshrl.u32 %v2024, 7
    %v2026 = vsub.s32 1, %v2025
    %v2027 = vrot.slane %v2018, %v2026
    %v2028 = vlaneseq
    %v2029 = vshrl.u32 %v2028, 7
    %v2030 = vsub.s32 2, %v2029
    %v2031 = vrot.slane %v2018, %v2030
    %v2032 = vlaneseq
    %v2033 = vshrl.u32 %v2032, 7
    %v2034 = vsub.s32 3, %v2033
    %v2035 = vrot.slane %v2018, %v2034
    %v2040 = vadd.f32 %v1943, %v2023
    %v2041 = vadd.f32 %v1945, %v2027
    %v2042 = vadd.f32 %v2014, %v2031
    %v2043 = vadd.f32 %v2016, %v2035
    %v2044 = vxor.u32 %v2040, 2147483648
    %v2045 = vmul.f32 %v2044, 1.442695
    %v2046 = vpow.pop %v2045
    %v2047 = vadd.f32 %v2046, 1.0
    %v2048 = vrcp.pop %v2047
    %v2049 = vmul.f32 1.0, %v2048
    %v2050 = vxor.u32 %v2041, 2147483648
    %v2051 = vmul.f32 %v2050, 1.442695
    %v2052 = vpow.pop %v2051
    %v2053 = vadd.f32 %v2052, 1.0
    %v2054 = vrcp.pop %v2053
    %v2055 = vmul.f32 1.0, %v2054
    %v2056 = vtanh.pop %v2042
    %v2057 = vxor.u32 %v2043, 2147483648
    %v2058 = vmul.f32 %v2057, 1.442695
    %v2059 = vpow.pop %v2058
    %v2060 = vadd.f32 %v2059, 1.0
    %v2061 = vrcp.pop %v2060
    %v2062 = vmul.f32 1.0, %v2061
    %v2063 = vmul.f32 %v2055, %v1310
    %v2064 = vmul.f32 %v2049, %v2056
    %v2065 = vadd.f32 %v2063, %v2064
    %v2066 = vtanh.pop %v2065
    %v2067 = vmul.f32 %v2062, %v2066
    %v2068 = vld [vmem:[#allocation11] sm:$0xff]
    %v2069 = vld [vmem:[#allocation11 + $0x8] sm:$0xff]
    %v2070 = vld [vmem:[#allocation11 + $0x10] sm:$0xff]
    %v2071 = vld [vmem:[#allocation11 + $0x18] sm:$0xff]
    %v2072 = vld [vmem:[#allocation11 + $0x20] sm:$0xff]
    %v2073 = vld [vmem:[#allocation11 + $0x28] sm:$0xff]
    %v2074 = vld [vmem:[#allocation11 + $0x30] sm:$0xff]
    %v2075 = vld [vmem:[#allocation11 + $0x38] sm:$0xff]
    %v2076 = vld [vmem:[#allocation11 + $0x40] sm:$0xff]
    %v2077 = vld [vmem:[#allocation11 + $0x48] sm:$0xff]
    %v2078 = vld [vmem:[#allocation11 + $0x50] sm:$0xff]
    %v2079 = vld [vmem:[#allocation11 + $0x58] sm:$0xff]
    %v2080 = vld [vmem:[#allocation11 + $0x60] sm:$0xff]
    %v2081 = vld [vmem:[#allocation11 + $0x68] sm:$0xff]
    %v2082 = vld [vmem:[#allocation11 + $0x70] sm:$0xff]
    %v2083 = vld [vmem:[#allocation11 + $0x78] sm:$0xff]
    %v2084 = vld [vmem:[#allocation11 + $0x80] sm:$0xff]
    %v2085 = vld [vmem:[#allocation11 + $0x88] sm:$0xff]
    %v2086 = vld [vmem:[#allocation11 + $0x90] sm:$0xff]
    %v2087 = vld [vmem:[#allocation11 + $0x98] sm:$0xff]
    %v2088 = vld [vmem:[#allocation11 + $0xa0] sm:$0xff]
    %v2089 = vld [vmem:[#allocation11 + $0xa8] sm:$0xff]
    %v2090 = vld [vmem:[#allocation11 + $0xb0] sm:$0xff]
    %v2091 = vld [vmem:[#allocation11 + $0xb8] sm:$0xff]
    %v2092 = vld [vmem:[#allocation11 + $0xc0] sm:$0xff]
    %v2093 = vld [vmem:[#allocation11 + $0xc8] sm:$0xff]
    %v2094 = vld [vmem:[#allocation11 + $0xd0] sm:$0xff]
    %v2095 = vld [vmem:[#allocation11 + $0xd8] sm:$0xff]
    %v2096 = vld [vmem:[#allocation11 + $0xe0] sm:$0xff]
    %v2097 = vld [vmem:[#allocation11 + $0xe8] sm:$0xff]
    %v2098 = vld [vmem:[#allocation11 + $0xf0] sm:$0xff]
    %v2099 = vld [vmem:[#allocation11 + $0xf8] sm:$0xff]
    %v2100 = vld [vmem:[#allocation11 + $0x100] sm:$0xff]
    %v2101 = vld [vmem:[#allocation11 + $0x108] sm:$0xff]
    %v2102 = vld [vmem:[#allocation11 + $0x110] sm:$0xff]
    %v2103 = vld [vmem:[#allocation11 + $0x118] sm:$0xff]
    %v2104 = vld [vmem:[#allocation11 + $0x120] sm:$0xff]
    %v2105 = vld [vmem:[#allocation11 + $0x128] sm:$0xff]
    %v2106 = vld [vmem:[#allocation11 + $0x130] sm:$0xff]
    %v2107 = vld [vmem:[#allocation11 + $0x138] sm:$0xff]
    %v2108 = vld [vmem:[#allocation11 + $0x140] sm:$0xff]
    %v2109 = vld [vmem:[#allocation11 + $0x148] sm:$0xff]
    %v2110 = vld [vmem:[#allocation11 + $0x150] sm:$0xff]
    %v2111 = vld [vmem:[#allocation11 + $0x158] sm:$0xff]
    %v2112 = vld [vmem:[#allocation11 + $0x160] sm:$0xff]
    %v2113 = vld [vmem:[#allocation11 + $0x168] sm:$0xff]
    %v2114 = vld [vmem:[#allocation11 + $0x170] sm:$0xff]
    %v2115 = vld [vmem:[#allocation11 + $0x178] sm:$0xff]
    %v2116 = vld [vmem:[#allocation11 + $0x180] sm:$0xff]
    %v2117 = vld [vmem:[#allocation11 + $0x188] sm:$0xff]
    %v2118 = vld [vmem:[#allocation11 + $0x190] sm:$0xff]
    %v2119 = vld [vmem:[#allocation11 + $0x198] sm:$0xff]
    %v2120 = vld [vmem:[#allocation11 + $0x1a0] sm:$0xff]
    %v2121 = vld [vmem:[#allocation11 + $0x1a8] sm:$0xff]
    %v2122 = vld [vmem:[#allocation11 + $0x1b0] sm:$0xff]
    %v2123 = vld [vmem:[#allocation11 + $0x1b8] sm:$0xff]
    %v2124 = vld [vmem:[#allocation11 + $0x1c0] sm:$0xff]
    %v2125 = vld [vmem:[#allocation11 + $0x1c8] sm:$0xff]
    %v2126 = vld [vmem:[#allocation11 + $0x1d0] sm:$0xff]
    %v2127 = vld [vmem:[#allocation11 + $0x1d8] sm:$0xff]
    %v2128 = vld [vmem:[#allocation11 + $0x1e0] sm:$0xff]
    %v2129 = vld [vmem:[#allocation11 + $0x1e8] sm:$0xff]
    %v2130 = vld [vmem:[#allocation11 + $0x1f0] sm:$0xff]
    %v2131 = vld [vmem:[#allocation11 + $0x1f8] sm:$0xff]
    %v2132 = vld [vmem:[#allocation11 + $0x200] sm:$0xff]
    %v2133 = vld [vmem:[#allocation11 + $0x208] sm:$0xff]
    %v2134 = vld [vmem:[#allocation11 + $0x210] sm:$0xff]
    %v2135 = vld [vmem:[#allocation11 + $0x218] sm:$0xff]
    %v2136 = vld [vmem:[#allocation11 + $0x220] sm:$0xff]
    %v2137 = vld [vmem:[#allocation11 + $0x228] sm:$0xff]
    %v2138 = vld [vmem:[#allocation11 + $0x230] sm:$0xff]
    %v2139 = vld [vmem:[#allocation11 + $0x238] sm:$0xff]
    %v2140 = vld [vmem:[#allocation11 + $0x240] sm:$0xff]
    %v2141 = vld [vmem:[#allocation11 + $0x248] sm:$0xff]
    %v2142 = vld [vmem:[#allocation11 + $0x250] sm:$0xff]
    %v2143 = vld [vmem:[#allocation11 + $0x258] sm:$0xff]
    %v2144 = vld [vmem:[#allocation11 + $0x260] sm:$0xff]
    %v2145 = vld [vmem:[#allocation11 + $0x268] sm:$0xff]
    %v2146 = vld [vmem:[#allocation11 + $0x270] sm:$0xff]
    %v2147 = vld [vmem:[#allocation11 + $0x278] sm:$0xff]
    %v2148 = vld [vmem:[#allocation11 + $0x280] sm:$0xff]
    %v2149 = vld [vmem:[#allocation11 + $0x288] sm:$0xff]
    %v2150 = vld [vmem:[#allocation11 + $0x290] sm:$0xff]
    %v2151 = vld [vmem:[#allocation11 + $0x298] sm:$0xff]
    %v2152 = vld [vmem:[#allocation11 + $0x2a0] sm:$0xff]
    %v2153 = vld [vmem:[#allocation11 + $0x2a8] sm:$0xff]
    %v2154 = vld [vmem:[#allocation11 + $0x2b0] sm:$0xff]
    %v2155 = vld [vmem:[#allocation11 + $0x2b8] sm:$0xff]
    %v2156 = vld [vmem:[#allocation11 + $0x2c0] sm:$0xff]
    %v2157 = vld [vmem:[#allocation11 + $0x2c8] sm:$0xff]
    %v2158 = vld [vmem:[#allocation11 + $0x2d0] sm:$0xff]
    %v2159 = vld [vmem:[#allocation11 + $0x2d8] sm:$0xff]
    %v2160 = vld [vmem:[#allocation11 + $0x2e0] sm:$0xff]
    %v2161 = vld [vmem:[#allocation11 + $0x2e8] sm:$0xff]
    %v2162 = vld [vmem:[#allocation11 + $0x2f0] sm:$0xff]
    %v2163 = vld [vmem:[#allocation11 + $0x2f8] sm:$0xff]
    %v2164 = vld [vmem:[#allocation11 + $0x300] sm:$0xff]
    %v2165 = vld [vmem:[#allocation11 + $0x308] sm:$0xff]
    %v2166 = vld [vmem:[#allocation11 + $0x310] sm:$0xff]
    %v2167 = vld [vmem:[#allocation11 + $0x318] sm:$0xff]
    %v2168 = vld [vmem:[#allocation11 + $0x320] sm:$0xff]
    %v2169 = vld [vmem:[#allocation11 + $0x328] sm:$0xff]
    %v2170 = vld [vmem:[#allocation11 + $0x330] sm:$0xff]
    %v2171 = vld [vmem:[#allocation11 + $0x338] sm:$0xff]
    %v2172 = vld [vmem:[#allocation11 + $0x340] sm:$0xff]
    %v2173 = vld [vmem:[#allocation11 + $0x348] sm:$0xff]
    %v2174 = vld [vmem:[#allocation11 + $0x350] sm:$0xff]
    %v2175 = vld [vmem:[#allocation11 + $0x358] sm:$0xff]
    %v2176 = vld [vmem:[#allocation11 + $0x360] sm:$0xff]
    %v2177 = vld [vmem:[#allocation11 + $0x368] sm:$0xff]
    %v2178 = vld [vmem:[#allocation11 + $0x370] sm:$0xff]
    %v2179 = vld [vmem:[#allocation11 + $0x378] sm:$0xff]
    %v2180 = vld [vmem:[#allocation11 + $0x380] sm:$0xff]
    %v2181 = vld [vmem:[#allocation11 + $0x388] sm:$0xff]
    %v2182 = vld [vmem:[#allocation11 + $0x390] sm:$0xff]
    %v2183 = vld [vmem:[#allocation11 + $0x398] sm:$0xff]
    %v2184 = vld [vmem:[#allocation11 + $0x3a0] sm:$0xff]
    %v2185 = vld [vmem:[#allocation11 + $0x3a8] sm:$0xff]
    %v2186 = vld [vmem:[#allocation11 + $0x3b0] sm:$0xff]
    %v2187 = vld [vmem:[#allocation11 + $0x3b8] sm:$0xff]
    %v2188 = vld [vmem:[#allocation11 + $0x3c0] sm:$0xff]
    %v2189 = vld [vmem:[#allocation11 + $0x3c8] sm:$0xff]
    %v2190 = vld [vmem:[#allocation11 + $0x3d0] sm:$0xff]
    %v2191 = vld [vmem:[#allocation11 + $0x3d8] sm:$0xff]
    %v2192 = vld [vmem:[#allocation11 + $0x3e0] sm:$0xff]
    %v2193 = vld [vmem:[#allocation11 + $0x3e8] sm:$0xff]
    %v2194 = vld [vmem:[#allocation11 + $0x3f0] sm:$0xff]
    %v2195 = vld [vmem:[#allocation11 + $0x3f8] sm:$0xff]
    %v2196 = vld [vmem:[%s5] sm:$0xf]
    %v2198 = vlaneseq
    %v2199 = vshrl.u32 %v2198, 7
    %v2200 = vsub.s32 0, %v2199
    %v2201 = vrot.slane %v2196, %v2200
    %v2202 = vlaneseq
    %v2203 = vshrl.u32 %v2202, 7
    %v2204 = vsub.s32 1, %v2203
    %v2205 = vrot.slane %v2196, %v2204
    %v2206 = vlaneseq
    %v2207 = vshrl.u32 %v2206, 7
    %v2208 = vsub.s32 2, %v2207
    %v2209 = vrot.slane %v2196, %v2208
    %v2210 = vlaneseq
    %v2211 = vshrl.u32 %v2210, 7
    %v2212 = vsub.s32 3, %v2211
    %v2213 = vrot.slane %v2196, %v2212
    %2218 = vmatprep.subr.mxu0 %v2069
    %2219 = vmatpush1.msra.mxu0 %v2068
    %2220 = vmatprep.subr.mxu0 %v2073
    %2221 = vmatpush1.msra.mxu0 %v2072
    %2222 = vmatprep.subr.mxu0 %v2077
    %2223 = vmatpush1.msra.mxu0 %v2076
    %2224 = vmatprep.subr.mxu0 %v2081
    %2225 = vmatpush1.msra.mxu0 %v2080
    %2226 = vmatprep.subr.mxu0 %v2085
    %2227 = vmatpush1.msra.mxu0 %v2084
    %2228 = vmatprep.subr.mxu0 %v2089
    %2229 = vmatpush1.msra.mxu0 %v2088
    %2230 = vmatprep.subr.mxu0 %v2093
    %2231 = vmatpush1.msra.mxu0 %v2092
    %2232 = vmatprep.subr.mxu0 %v2097
    %2233 = vmatpush1.msra.mxu0 %v2096
    %2234 = vmatprep.subr.mxu0 %v2101
    %2235 = vmatpush1.msra.mxu0 %v2100
    %2236 = vmatprep.subr.mxu0 %v2105
    %2237 = vmatpush1.msra.mxu0 %v2104
    %2238 = vmatprep.subr.mxu0 %v2109
    %2239 = vmatpush1.msra.mxu0 %v2108
    %2240 = vmatprep.subr.mxu0 %v2113
    %2241 = vmatpush1.msra.mxu0 %v2112
    %2242 = vmatprep.subr.mxu0 %v2117
    %2243 = vmatpush1.msra.mxu0 %v2116
    %2244 = vmatprep.subr.mxu0 %v2121
    %2245 = vmatpush1.msra.mxu0 %v2120
    %2246 = vmatprep.subr.mxu0 %v2125
    %2247 = vmatpush1.msra.mxu0 %v2124
    %2248 = vmatprep.subr.mxu0 %v2129
    %2249 = vmatpush1.msra.mxu0 %v2128
    %2250 = vmatprep.subr.mxu0 %v2133
    %2251 = vmatpush1.msra.mxu0 %v2132
    %2252 = vmatprep.subr.mxu0 %v2137
    %2253 = vmatpush1.msra.mxu0 %v2136
    %2254 = vmatprep.subr.mxu0 %v2141
    %2255 = vmatpush1.msra.mxu0 %v2140
    %2256 = vmatprep.subr.mxu0 %v2145
    %2257 = vmatpush1.msra.mxu0 %v2144
    %2258 = vmatprep.subr.mxu0 %v2149
    %2259 = vmatpush1.msra.mxu0 %v2148
    %2260 = vmatprep.subr.mxu0 %v2153
    %2261 = vmatpush1.msra.mxu0 %v2152
    %2262 = vmatprep.subr.mxu0 %v2157
    %2263 = vmatpush1.msra.mxu0 %v2156
    %2264 = vmatprep.subr.mxu0 %v2161
    %2265 = vmatpush1.msra.mxu0 %v2160
    %2266 = vmatprep.subr.mxu0 %v2165
    %2267 = vmatpush1.msra.mxu0 %v2164
    %2268 = vmatprep.subr.mxu0 %v2169
    %2269 = vmatpush1.msra.mxu0 %v2168
    %2270 = vmatprep.subr.mxu0 %v2173
    %2271 = vmatpush1.msra.mxu0 %v2172
    %2272 = vmatprep.subr.mxu0 %v2177
    %2273 = vmatpush1.msra.mxu0 %v2176
    %2274 = vmatprep.subr.mxu0 %v2181
    %2275 = vmatpush1.msra.mxu0 %v2180
    %2276 = vmatprep.subr.mxu0 %v2185
    %2277 = vmatpush1.msra.mxu0 %v2184
    %2278 = vmatprep.subr.mxu0 %v2189
    %2279 = vmatpush1.msra.mxu0 %v2188
    %2280 = vmatprep.subr.mxu0 %v2193
    %2281 = vmatpush1.msra.mxu0 %v2192
    %2282 = vmatprep.mubr.f32.mxu0 %v1628
    %2283 = vmatmul.mubr.f32.gmra.mrb[0].mxu0 %v2067
    %v2284 = vpop.f32.mrb[0].mxu0
    %v2285 = vadd.f32 %v2201, %v2284
    %v2286 = vpop.f32.mrb[0].mxu0
    %v2287 = vadd.f32 %v2205, %v2286
    %2288 = vdwg.mxu0
    %2289 = vmatprep.subr.mxu0 %v2071
    %2290 = vmatpush1.msra.mxu0 %v2070
    %2291 = vmatprep.subr.mxu0 %v2075
    %2292 = vmatpush1.msra.mxu0 %v2074
    %2293 = vmatprep.subr.mxu0 %v2079
    %2294 = vmatpush1.msra.mxu0 %v2078
    %2295 = vmatprep.subr.mxu0 %v2083
    %2296 = vmatpush1.msra.mxu0 %v2082
    %2297 = vmatprep.subr.mxu0 %v2087
    %2298 = vmatpush1.msra.mxu0 %v2086
    %2299 = vmatprep.subr.mxu0 %v2091
    %2300 = vmatpush1.msra.mxu0 %v2090
    %2301 = vmatprep.subr.mxu0 %v2095
    %2302 = vmatpush1.msra.mxu0 %v2094
    %2303 = vmatprep.subr.mxu0 %v2099
    %2304 = vmatpush1.msra.mxu0 %v2098
    %2305 = vmatprep.subr.mxu0 %v2103
    %2306 = vmatpush1.msra.mxu0 %v2102
    %2307 = vmatprep.subr.mxu0 %v2107
    %2308 = vmatpush1.msra.mxu0 %v2106
    %2309 = vmatprep.subr.mxu0 %v2111
    %2310 = vmatpush1.msra.mxu0 %v2110
    %2311 = vmatprep.subr.mxu0 %v2115
    %2312 = vmatpush1.msra.mxu0 %v2114
    %2313 = vmatprep.subr.mxu0 %v2119
    %2314 = vmatpush1.msra.mxu0 %v2118
    %2315 = vmatprep.subr.mxu0 %v2123
    %2316 = vmatpush1.msra.mxu0 %v2122
    %2317 = vmatprep.subr.mxu0 %v2127
    %2318 = vmatpush1.msra.mxu0 %v2126
    %2319 = vmatprep.subr.mxu0 %v2131
    %2320 = vmatpush1.msra.mxu0 %v2130
    %2321 = vmatprep.subr.mxu0 %v2135
    %2322 = vmatpush1.msra.mxu0 %v2134
    %2323 = vmatprep.subr.mxu0 %v2139
    %2324 = vmatpush1.msra.mxu0 %v2138
    %2325 = vmatprep.subr.mxu0 %v2143
    %2326 = vmatpush1.msra.mxu0 %v2142
    %2327 = vmatprep.subr.mxu0 %v2147
    %2328 = vmatpush1.msra.mxu0 %v2146
    %2329 = vmatprep.subr.mxu0 %v2151
    %2330 = vmatpush1.msra.mxu0 %v2150
    %2331 = vmatprep.subr.mxu0 %v2155
    %2332 = vmatpush1.msra.mxu0 %v2154
    %2333 = vmatprep.subr.mxu0 %v2159
    %2334 = vmatpush1.msra.mxu0 %v2158
    %2335 = vmatprep.subr.mxu0 %v2163
    %2336 = vmatpush1.msra.mxu0 %v2162
    %2337 = vmatprep.subr.mxu0 %v2167
    %2338 = vmatpush1.msra.mxu0 %v2166
    %2339 = vmatprep.subr.mxu0 %v2171
    %2340 = vmatpush1.msra.mxu0 %v2170
    %2341 = vmatprep.subr.mxu0 %v2175
    %2342 = vmatpush1.msra.mxu0 %v2174
    %2343 = vmatprep.subr.mxu0 %v2179
    %2344 = vmatpush1.msra.mxu0 %v2178
    %2345 = vmatprep.subr.mxu0 %v2183
    %2346 = vmatpush1.msra.mxu0 %v2182
    %2347 = vmatprep.subr.mxu0 %v2187
    %2348 = vmatpush1.msra.mxu0 %v2186
    %2349 = vmatprep.subr.mxu0 %v2191
    %2350 = vmatpush1.msra.mxu0 %v2190
    %2351 = vmatprep.subr.mxu0 %v2195
    %2352 = vmatpush1.msra.mxu0 %v2194
    %2353 = vmatprep.mubr.f32.mxu0 %v1628
    %2354 = vmatmul.mubr.f32.gmra.mrb[0].mxu0 %v2067
    %v2355 = vpop.f32.mrb[0].mxu0
    %v2356 = vadd.f32 %v2209, %v2355
    %v2357 = vpop.f32.mrb[0].mxu0
    %v2358 = vadd.f32 %v2213, %v2357
    %2359 = vdwg.mxu0
    %v2360 = vxor.u32 %v2285, 2147483648
    %v2361 = vmul.f32 %v2360, 1.442695
    %v2362 = vpow.pop %v2361
    %v2363 = vadd.f32 %v2362, 1.0
    %v2364 = vrcp.pop %v2363
    %v2365 = vmul.f32 1.0, %v2364
    %v2366 = vxor.u32 %v2287, 2147483648
    %v2367 = vmul.f32 %v2366, 1.442695
    %v2368 = vpow.pop %v2367
    %v2369 = vadd.f32 %v2368, 1.0
    %v2370 = vrcp.pop %v2369
    %v2371 = vmul.f32 1.0, %v2370
    %v2372 = vtanh.pop %v2356
    %v2373 = vxor.u32 %v2358, 2147483648
    %v2374 = vmul.f32 %v2373, 1.442695
    %v2375 = vpow.pop %v2374
    %v2376 = vadd.f32 %v2375, 1.0
    %v2377 = vrcp.pop %v2376
    %v2378 = vmul.f32 1.0, %v2377
    %v2379 = vmul.f32 %v2371, %v1626
    %v2380 = vmul.f32 %v2365, %v2372
    %v2381 = vadd.f32 %v2379, %v2380
    %v2382 = vtanh.pop %v2381
    %v2383 = vmul.f32 %v2378, %v2382
    %2384 = vst [vmem:[#allocation4 + $0x10] sm:$0xff] %v2383
    %v2385 = vld [vmem:[#allocation5 + $0x3] sm:$0x1]
    %v2386 = vld [vmem:[#allocation5 + $0xb] sm:$0x1]
    %v2387 = vld [vmem:[#allocation5 + $0x13] sm:$0x1]
    %v2388 = vld [vmem:[#allocation5 + $0x1b] sm:$0x1]
    %v2389 = vld [vmem:[#allocation5 + $0x23] sm:$0x1]
    %v2390 = vld [vmem:[#allocation5 + $0x2b] sm:$0x1]
    %v2391 = vld [vmem:[#allocation5 + $0x33] sm:$0x1]
    %v2392 = vld [vmem:[#allocation5 + $0x3b] sm:$0x1]
    %v2393 = vld [vmem:[#allocation8] sm:$0xff]
    %v2394 = vld [vmem:[#allocation8 + $0x8] sm:$0xff]
    %v2395 = vld [vmem:[#allocation8 + $0x10] sm:$0xff]
    %v2396 = vld [vmem:[#allocation8 + $0x18] sm:$0xff]
    %v2397 = vld [vmem:[#allocation8 + $0x20] sm:$0xff]
    %v2398 = vld [vmem:[#allocation8 + $0x28] sm:$0xff]
    %v2399 = vld [vmem:[#allocation8 + $0x30] sm:$0xff]
    %v2400 = vld [vmem:[#allocation8 + $0x38] sm:$0xff]
    %v2401 = vld [vmem:[#allocation10] sm:$0xff]
    %v2402 = vld [vmem:[#allocation10 + $0x8] sm:$0xff]
    %v2403 = vld [vmem:[#allocation10 + $0x10] sm:$0xff]
    %v2404 = vld [vmem:[#allocation10 + $0x18] sm:$0xff]
    %v2405 = vld [vmem:[#allocation10 + $0x20] sm:$0xff]
    %v2406 = vld [vmem:[#allocation10 + $0x28] sm:$0xff]
    %v2407 = vld [vmem:[#allocation10 + $0x30] sm:$0xff]
    %v2408 = vld [vmem:[#allocation10 + $0x38] sm:$0xff]
    %v2409 = vld [vmem:[#allocation10 + $0x40] sm:$0xff]
    %v2410 = vld [vmem:[#allocation10 + $0x48] sm:$0xff]
    %v2411 = vld [vmem:[#allocation10 + $0x50] sm:$0xff]
    %v2412 = vld [vmem:[#allocation10 + $0x58] sm:$0xff]
    %v2413 = vld [vmem:[#allocation10 + $0x60] sm:$0xff]
    %v2414 = vld [vmem:[#allocation10 + $0x68] sm:$0xff]
    %v2415 = vld [vmem:[#allocation10 + $0x70] sm:$0xff]
    %v2416 = vld [vmem:[#allocation10 + $0x78] sm:$0xff]
    %v2417 = vld [vmem:[#allocation10 + $0x80] sm:$0xff]
    %v2418 = vld [vmem:[#allocation10 + $0x88] sm:$0xff]
    %v2419 = vld [vmem:[#allocation10 + $0x90] sm:$0xff]
    %v2420 = vld [vmem:[#allocation10 + $0x98] sm:$0xff]
    %v2421 = vld [vmem:[#allocation10 + $0xa0] sm:$0xff]
    %v2422 = vld [vmem:[#allocation10 + $0xa8] sm:$0xff]
    %v2423 = vld [vmem:[#allocation10 + $0xb0] sm:$0xff]
    %v2424 = vld [vmem:[#allocation10 + $0xb8] sm:$0xff]
    %v2425 = vld [vmem:[#allocation10 + $0xc0] sm:$0xff]
    %v2426 = vld [vmem:[#allocation10 + $0xc8] sm:$0xff]
    %v2427 = vld [vmem:[#allocation10 + $0xd0] sm:$0xff]
    %v2428 = vld [vmem:[#allocation10 + $0xd8] sm:$0xff]
    %v2429 = vld [vmem:[#allocation10 + $0xe0] sm:$0xff]
    %v2430 = vld [vmem:[#allocation10 + $0xe8] sm:$0xff]
    %v2431 = vld [vmem:[#allocation10 + $0xf0] sm:$0xff]
    %v2432 = vld [vmem:[#allocation10 + $0xf8] sm:$0xff]
    %v2433 = vld [vmem:[#allocation10 + $0x100] sm:$0xff]
    %v2434 = vld [vmem:[#allocation10 + $0x108] sm:$0xff]
    %v2435 = vld [vmem:[#allocation10 + $0x110] sm:$0xff]
    %v2436 = vld [vmem:[#allocation10 + $0x118] sm:$0xff]
    %v2437 = vld [vmem:[#allocation10 + $0x120] sm:$0xff]
    %v2438 = vld [vmem:[#allocation10 + $0x128] sm:$0xff]
    %v2439 = vld [vmem:[#allocation10 + $0x130] sm:$0xff]
    %v2440 = vld [vmem:[#allocation10 + $0x138] sm:$0xff]
    %v2441 = vld [vmem:[#allocation10 + $0x140] sm:$0xff]
    %v2442 = vld [vmem:[#allocation10 + $0x148] sm:$0xff]
    %v2443 = vld [vmem:[#allocation10 + $0x150] sm:$0xff]
    %v2444 = vld [vmem:[#allocation10 + $0x158] sm:$0xff]
    %v2445 = vld [vmem:[#allocation10 + $0x160] sm:$0xff]
    %v2446 = vld [vmem:[#allocation10 + $0x168] sm:$0xff]
    %v2447 = vld [vmem:[#allocation10 + $0x170] sm:$0xff]
    %v2448 = vld [vmem:[#allocation10 + $0x178] sm:$0xff]
    %v2449 = vld [vmem:[#allocation10 + $0x180] sm:$0xff]
    %v2450 = vld [vmem:[#allocation10 + $0x188] sm:$0xff]
    %v2451 = vld [vmem:[#allocation10 + $0x190] sm:$0xff]
    %v2452 = vld [vmem:[#allocation10 + $0x198] sm:$0xff]
    %v2453 = vld [vmem:[#allocation10 + $0x1a0] sm:$0xff]
    %v2454 = vld [vmem:[#allocation10 + $0x1a8] sm:$0xff]
    %v2455 = vld [vmem:[#allocation10 + $0x1b0] sm:$0xff]
    %v2456 = vld [vmem:[#allocation10 + $0x1b8] sm:$0xff]
    %v2457 = vld [vmem:[#allocation10 + $0x1c0] sm:$0xff]
    %v2458 = vld [vmem:[#allocation10 + $0x1c8] sm:$0xff]
    %v2459 = vld [vmem:[#allocation10 + $0x1d0] sm:$0xff]
    %v2460 = vld [vmem:[#allocation10 + $0x1d8] sm:$0xff]
    %v2461 = vld [vmem:[#allocation10 + $0x1e0] sm:$0xff]
    %v2462 = vld [vmem:[#allocation10 + $0x1e8] sm:$0xff]
    %v2463 = vld [vmem:[#allocation10 + $0x1f0] sm:$0xff]
    %v2464 = vld [vmem:[#allocation10 + $0x1f8] sm:$0xff]
    %2465 = vmatprep.subr.mxu0 %v2402
    %2466 = vmatpush1.msra.mxu0 %v2401
    %2467 = vmatprep.subr.mxu0 %v2406
    %2468 = vmatpush1.msra.mxu0 %v2405
    %2469 = vmatprep.subr.mxu0 %v2410
    %2470 = vmatpush1.msra.mxu0 %v2409
    %2471 = vmatprep.subr.mxu0 %v2414
    %2472 = vmatpush1.msra.mxu0 %v2413
    %2473 = vmatprep.subr.mxu0 %v2418
    %2474 = vmatpush1.msra.mxu0 %v2417
    %2475 = vmatprep.subr.mxu0 %v2422
    %2476 = vmatpush1.msra.mxu0 %v2421
    %2477 = vmatprep.subr.mxu0 %v2426
    %2478 = vmatpush1.msra.mxu0 %v2425
    %2479 = vmatprep.subr.mxu0 %v2430
    %2480 = vmatpush1.msra.mxu0 %v2429
    %2481 = vmatprep.subr.mxu0 %v2434
    %2482 = vmatpush1.msra.mxu0 %v2433
    %2483 = vmatprep.subr.mxu0 %v2438
    %2484 = vmatpush1.msra.mxu0 %v2437
    %2485 = vmatprep.subr.mxu0 %v2442
    %2486 = vmatpush1.msra.mxu0 %v2441
    %2487 = vmatprep.subr.mxu0 %v2446
    %2488 = vmatpush1.msra.mxu0 %v2445
    %2489 = vmatprep.subr.mxu0 %v2450
    %2490 = vmatpush1.msra.mxu0 %v2449
    %2491 = vmatprep.subr.mxu0 %v2454
    %2492 = vmatpush1.msra.mxu0 %v2453
    %2493 = vmatprep.subr.mxu0 %v2458
    %2494 = vmatpush1.msra.mxu0 %v2457
    %2495 = vmatprep.subr.mxu0 %v2462
    %2496 = vmatpush1.msra.mxu0 %v2461
    %2497 = vmatprep.subr.mxu0 0.0
    %2498 = vmatpush1.msra.mxu0 0.0
    %2499 = vmatprep.subr.mxu0 0.0
    %2500 = vmatpush1.msra.mxu0 0.0
    %2501 = vmatprep.subr.mxu0 0.0
    %2502 = vmatpush1.msra.mxu0 0.0
    %2503 = vmatprep.subr.mxu0 0.0
    %2504 = vmatpush1.msra.mxu0 0.0
    %2505 = vmatprep.subr.mxu0 0.0
    %2506 = vmatpush1.msra.mxu0 0.0
    %2507 = vmatprep.subr.mxu0 0.0
    %2508 = vmatpush1.msra.mxu0 0.0
    %2509 = vmatprep.subr.mxu0 0.0
    %2510 = vmatpush1.msra.mxu0 0.0
    %2511 = vmatprep.subr.mxu0 0.0
    %2512 = vmatpush1.msra.mxu0 0.0
    %2513 = vmatprep.subr.mxu0 0.0
    %2514 = vmatpush1.msra.mxu0 0.0
    %2515 = vmatprep.subr.mxu0 0.0
    %2516 = vmatpush1.msra.mxu0 0.0
    %2517 = vmatprep.subr.mxu0 0.0
    %2518 = vmatpush1.msra.mxu0 0.0
    %2519 = vmatprep.subr.mxu0 0.0
    %2520 = vmatpush1.msra.mxu0 0.0
    %2521 = vmatprep.subr.mxu0 0.0
    %2522 = vmatpush1.msra.mxu0 0.0
    %2523 = vmatprep.subr.mxu0 0.0
    %2524 = vmatpush1.msra.mxu0 0.0
    %2525 = vmatprep.subr.mxu0 0.0
    %2526 = vmatpush1.msra.mxu0 0.0
    %2527 = vmatprep.subr.mxu0 0.0
    %2528 = vmatpush1.msra.mxu0 0.0
    %2529 = vmatprep.mubr.f32.mxu0 0.0
    %2530 = vmatmul.mubr.f32.gmra.mrb[0].mxu0 %v2067
    %v2531 = vpop.f32.mrb[0].mxu0
    %v2532 = vadd.f32 0.0, %v2531
    %v2533 = vpop.f32.mrb[0].mxu0
    %v2534 = vadd.f32 0.0, %v2533
    %2535 = vdwg.mxu0
    %2536 = vmatprep.subr.mxu0 %v2404
    %2537 = vmatpush1.msra.mxu0 %v2403
    %2538 = vmatprep.subr.mxu0 %v2408
    %2539 = vmatpush1.msra.mxu0 %v2407
    %2540 = vmatprep.subr.mxu0 %v2412
    %2541 = vmatpush1.msra.mxu0 %v2411
    %2542 = vmatprep.subr.mxu0 %v2416
    %2543 = vmatpush1.msra.mxu0 %v2415
    %2544 = vmatprep.subr.mxu0 %v2420
    %2545 = vmatpush1.msra.mxu0 %v2419
    %2546 = vmatprep.subr.mxu0 %v2424
    %2547 = vmatpush1.msra.mxu0 %v2423
    %2548 = vmatprep.subr.mxu0 %v2428
    %2549 = vmatpush1.msra.mxu0 %v2427
    %2550 = vmatprep.subr.mxu0 %v2432
    %2551 = vmatpush1.msra.mxu0 %v2431
    %2552 = vmatprep.subr.mxu0 %v2436
    %2553 = vmatpush1.msra.mxu0 %v2435
    %2554 = vmatprep.subr.mxu0 %v2440
    %2555 = vmatpush1.msra.mxu0 %v2439
    %2556 = vmatprep.subr.mxu0 %v2444
    %2557 = vmatpush1.msra.mxu0 %v2443
    %2558 = vmatprep.subr.mxu0 %v2448
    %2559 = vmatpush1.msra.mxu0 %v2447
    %2560 = vmatprep.subr.mxu0 %v2452
    %2561 = vmatpush1.msra.mxu0 %v2451
    %2562 = vmatprep.subr.mxu0 %v2456
    %2563 = vmatpush1.msra.mxu0 %v2455
    %2564 = vmatprep.subr.mxu0 %v2460
    %2565 = vmatpush1.msra.mxu0 %v2459
    %2566 = vmatprep.subr.mxu0 %v2464
    %2567 = vmatpush1.msra.mxu0 %v2463
    %2568 = vmatprep.subr.mxu0 0.0
    %2569 = vmatpush1.msra.mxu0 0.0
    %2570 = vmatprep.subr.mxu0 0.0
    %2571 = vmatpush1.msra.mxu0 0.0
    %2572 = vmatprep.subr.mxu0 0.0
    %2573 = vmatpush1.msra.mxu0 0.0
    %2574 = vmatprep.subr.mxu0 0.0
    %2575 = vmatpush1.msra.mxu0 0.0
    %2576 = vmatprep.subr.mxu0 0.0
    %2577 = vmatpush1.msra.mxu0 0.0
    %2578 = vmatprep.subr.mxu0 0.0
    %2579 = vmatpush1.msra.mxu0 0.0
    %2580 = vmatprep.subr.mxu0 0.0
    %2581 = vmatpush1.msra.mxu0 0.0
    %2582 = vmatprep.subr.mxu0 0.0
    %2583 = vmatpush1.msra.mxu0 0.0
    %2584 = vmatprep.subr.mxu0 0.0
    %2585 = vmatpush1.msra.mxu0 0.0
    %2586 = vmatprep.subr.mxu0 0.0
    %2587 = vmatpush1.msra.mxu0 0.0
    %2588 = vmatprep.subr.mxu0 0.0
    %2589 = vmatpush1.msra.mxu0 0.0
    %2590 = vmatprep.subr.mxu0 0.0
    %2591 = vmatpush1.msra.mxu0 0.0
    %2592 = vmatprep.subr.mxu0 0.0
    %2593 = vmatpush1.msra.mxu0 0.0
    %2594 = vmatprep.subr.mxu0 0.0
    %2595 = vmatpush1.msra.mxu0 0.0
    %2596 = vmatprep.subr.mxu0 0.0
    %2597 = vmatpush1.msra.mxu0 0.0
    %2598 = vmatprep.subr.mxu0 0.0
    %2599 = vmatpush1.msra.mxu0 0.0
    %2600 = vmatprep.mubr.f32.mxu0 0.0
    %2601 = vmatmul.mubr.f32.gmra.mrb[0].mxu0 %v2067
    %v2602 = vpop.f32.mrb[0].mxu0
    %v2603 = vadd.f32 0.0, %v2602
    %v2604 = vpop.f32.mrb[0].mxu0
    %v2605 = vadd.f32 0.0, %v2604
    %2606 = vdwg.mxu0
    %v2615 = vrot.slane %v2386, 7
    %v2616 = vsel %vm343, %v2615, %v2385
    %v2617 = vrot.slane %v2387, 6
    %v2618 = vsel %vm346, %v2617, %v2616
    %v2619 = vrot.slane %v2388, 5
    %v2620 = vsel %vm349, %v2619, %v2618
    %v2621 = vrot.slane %v2389, 4
    %v2622 = vsel %vm352, %v2621, %v2620
    %v2623 = vrot.slane %v2390, 3
    %v2624 = vsel %vm355, %v2623, %v2622
    %v2625 = vrot.slane %v2391, 2
    %v2626 = vsel %vm358, %v2625, %v2624
    %v2627 = vrot.slane %v2392, 1
    %v2628 = vsel %vm361, %v2627, %v2626
    %v2629 = vsel %vm363, %v2628, 0
    %2631 = vmatprep.subr.mxu0 %v2394
    %2632 = vmatpush1.msra.mxu0 %v2393
    %2633 = vmatprep.subr.mxu0 %v2398
    %2634 = vmatpush1.msra.mxu0 %v2397
    %2635 = vmatprep.subr.mxu0 0.0
    %2636 = vmatpush1.msra.mxu0 0.0
    %2637 = vmatprep.subr.mxu0 0.0
    %2638 = vmatpush1.msra.mxu0 0.0
    %2639 = vmatprep.subr.mxu0 0.0
    %2640 = vmatpush1.msra.mxu0 0.0
    %2641 = vmatprep.subr.mxu0 0.0
    %2642 = vmatpush1.msra.mxu0 0.0
    %2643 = vmatprep.subr.mxu0 0.0
    %2644 = vmatpush1.msra.mxu0 0.0
    %2645 = vmatprep.subr.mxu0 0.0
    %2646 = vmatpush1.msra.mxu0 0.0
    %2647 = vmatprep.subr.mxu0 0.0
    %2648 = vmatpush1.msra.mxu0 0.0
    %2649 = vmatprep.subr.mxu0 0.0
    %2650 = vmatpush1.msra.mxu0 0.0
    %2651 = vmatprep.subr.mxu0 0.0
    %2652 = vmatpush1.msra.mxu0 0.0
    %2653 = vmatprep.subr.mxu0 0.0
    %2654 = vmatpush1.msra.mxu0 0.0
    %2655 = vmatprep.subr.mxu0 0.0
    %2656 = vmatpush1.msra.mxu0 0.0
    %2657 = vmatprep.subr.mxu0 0.0
    %2658 = vmatpush1.msra.mxu0 0.0
    %2659 = vmatprep.subr.mxu0 0.0
    %2660 = vmatpush1.msra.mxu0 0.0
    %2661 = vmatprep.subr.mxu0 0.0
    %2662 = vmatpush1.msra.mxu0 0.0
    %2663 = vmatprep.subr.mxu0 0.0
    %2664 = vmatpush1.msra.mxu0 0.0
    %2665 = vmatprep.subr.mxu0 0.0
    %2666 = vmatpush1.msra.mxu0 0.0
    %2667 = vmatprep.subr.mxu0 0.0
    %2668 = vmatpush1.msra.mxu0 0.0
    %2669 = vmatprep.subr.mxu0 0.0
    %2670 = vmatpush1.msra.mxu0 0.0
    %2671 = vmatprep.subr.mxu0 0.0
    %2672 = vmatpush1.msra.mxu0 0.0
    %2673 = vmatprep.subr.mxu0 0.0
    %2674 = vmatpush1.msra.mxu0 0.0
    %2675 = vmatprep.subr.mxu0 0.0
    %2676 = vmatpush1.msra.mxu0 0.0
    %2677 = vmatprep.subr.mxu0 0.0
    %2678 = vmatpush1.msra.mxu0 0.0
    %2679 = vmatprep.subr.mxu0 0.0
    %2680 = vmatpush1.msra.mxu0 0.0
    %2681 = vmatprep.subr.mxu0 0.0
    %2682 = vmatpush1.msra.mxu0 0.0
    %2683 = vmatprep.subr.mxu0 0.0
    %2684 = vmatpush1.msra.mxu0 0.0
    %2685 = vmatprep.subr.mxu0 0.0
    %2686 = vmatpush1.msra.mxu0 0.0
    %2687 = vmatprep.subr.mxu0 0.0
    %2688 = vmatpush1.msra.mxu0 0.0
    %2689 = vmatprep.subr.mxu0 0.0
    %2690 = vmatpush1.msra.mxu0 0.0
    %2691 = vmatprep.subr.mxu0 0.0
    %2692 = vmatpush1.msra.mxu0 0.0
    %2693 = vmatprep.subr.mxu0 0.0
    %2694 = vmatpush1.msra.mxu0 0.0
    %2695 = vmatprep.mubr.f32.mxu0 0.0
    %2696 = vmatmul.mubr.f32.gmra.mrb[0].mxu0 %v2629
    %v2697 = vpop.f32.mrb[0].mxu0
    %v2698 = vadd.f32 %v2532, %v2697
    %v2699 = vpop.f32.mrb[0].mxu0
    %v2700 = vadd.f32 %v2534, %v2699
    %2701 = vdwg.mxu0
    %2702 = vmatprep.subr.mxu0 %v2396
    %2703 = vmatpush1.msra.mxu0 %v2395
    %2704 = vmatprep.subr.mxu0 %v2400
    %2705 = vmatpush1.msra.mxu0 %v2399
    %2706 = vmatprep.subr.mxu0 0.0
    %2707 = vmatpush1.msra.mxu0 0.0
    %2708 = vmatprep.subr.mxu0 0.0
    %2709 = vmatpush1.msra.mxu0 0.0
    %2710 = vmatprep.subr.mxu0 0.0
    %2711 = vmatpush1.msra.mxu0 0.0
    %2712 = vmatprep.subr.mxu0 0.0
    %2713 = vmatpush1.msra.mxu0 0.0
    %2714 = vmatprep.subr.mxu0 0.0
    %2715 = vmatpush1.msra.mxu0 0.0
    %2716 = vmatprep.subr.mxu0 0.0
    %2717 = vmatpush1.msra.mxu0 0.0
    %2718 = vmatprep.subr.mxu0 0.0
    %2719 = vmatpush1.msra.mxu0 0.0
    %2720 = vmatprep.subr.mxu0 0.0
    %2721 = vmatpush1.msra.mxu0 0.0
    %2722 = vmatprep.subr.mxu0 0.0
    %2723 = vmatpush1.msra.mxu0 0.0
    %2724 = vmatprep.subr.mxu0 0.0
    %2725 = vmatpush1.msra.mxu0 0.0
    %2726 = vmatprep.subr.mxu0 0.0
    %2727 = vmatpush1.msra.mxu0 0.0
    %2728 = vmatprep.subr.mxu0 0.0
    %2729 = vmatpush1.msra.mxu0 0.0
    %2730 = vmatprep.subr.mxu0 0.0
    %2731 = vmatpush1.msra.mxu0 0.0
    %2732 = vmatprep.subr.mxu0 0.0
    %2733 = vmatpush1.msra.mxu0 0.0
    %2734 = vmatprep.subr.mxu0 0.0
    %2735 = vmatpush1.msra.mxu0 0.0
    %2736 = vmatprep.subr.mxu0 0.0
    %2737 = vmatpush1.msra.mxu0 0.0
    %2738 = vmatprep.subr.mxu0 0.0
    %2739 = vmatpush1.msra.mxu0 0.0
    %2740 = vmatprep.subr.mxu0 0.0
    %2741 = vmatpush1.msra.mxu0 0.0
    %2742 = vmatprep.subr.mxu0 0.0
    %2743 = vmatpush1.msra.mxu0 0.0
    %2744 = vmatprep.subr.mxu0 0.0
    %2745 = vmatpush1.msra.mxu0 0.0
    %2746 = vmatprep.subr.mxu0 0.0
    %2747 = vmatpush1.msra.mxu0 0.0
    %2748 = vmatprep.subr.mxu0 0.0
    %2749 = vmatpush1.msra.mxu0 0.0
    %2750 = vmatprep.subr.mxu0 0.0
    %2751 = vmatpush1.msra.mxu0 0.0
    %2752 = vmatprep.subr.mxu0 0.0
    %2753 = vmatpush1.msra.mxu0 0.0
    %2754 = vmatprep.subr.mxu0 0.0
    %2755 = vmatpush1.msra.mxu0 0.0
    %2756 = vmatprep.subr.mxu0 0.0
    %2757 = vmatpush1.msra.mxu0 0.0
    %2758 = vmatprep.subr.mxu0 0.0
    %2759 = vmatpush1.msra.mxu0 0.0
    %2760 = vmatprep.subr.mxu0 0.0
    %2761 = vmatpush1.msra.mxu0 0.0
    %2762 = vmatprep.subr.mxu0 0.0
    %2763 = vmatpush1.msra.mxu0 0.0
    %2764 = vmatprep.subr.mxu0 0.0
    %2765 = vmatpush1.msra.mxu0 0.0
    %2766 = vmatprep.mubr.f32.mxu0 0.0
    %2767 = vmatmul.mubr.f32.gmra.mrb[0].mxu0 %v2629
    %v2768 = vpop.f32.mrb[0].mxu0
    %v2769 = vadd.f32 %v2603, %v2768
    %v2770 = vpop.f32.mrb[0].mxu0
    %v2771 = vadd.f32 %v2605, %v2770
    %2772 = vdwg.mxu0
    %v2773 = vld [vmem:[%s3] sm:$0xf]
    %v2775 = vlaneseq
    %v2776 = vshrl.u32 %v2775, 7
    %v2777 = vsub.s32 0, %v2776
    %v2778 = vrot.slane %v2773, %v2777
    %v2779 = vlaneseq
    %v2780 = vshrl.u32 %v2779, 7
    %v2781 = vsub.s32 1, %v2780
    %v2782 = vrot.slane %v2773, %v2781
    %v2783 = vlaneseq
    %v2784 = vshrl.u32 %v2783, 7
    %v2785 = vsub.s32 2, %v2784
    %v2786 = vrot.slane %v2773, %v2785
    %v2787 = vlaneseq
    %v2788 = vshrl.u32 %v2787, 7
    %v2789 = vsub.s32 3, %v2788
    %v2790 = vrot.slane %v2773, %v2789
    %v2795 = vadd.f32 %v2698, %v2778
    %v2796 = vadd.f32 %v2700, %v2782
    %v2797 = vadd.f32 %v2769, %v2786
    %v2798 = vadd.f32 %v2771, %v2790
    %v2799 = vxor.u32 %v2795, 2147483648
    %v2800 = vmul.f32 %v2799, 1.442695
    %v2801 = vpow.pop %v2800
    %v2802 = vadd.f32 %v2801, 1.0
    %v2803 = vrcp.pop %v2802
    %v2804 = vmul.f32 1.0, %v2803
    %v2805 = vxor.u32 %v2796, 2147483648
    %v2806 = vmul.f32 %v2805, 1.442695
    %v2807 = vpow.pop %v2806
    %v2808 = vadd.f32 %v2807, 1.0
    %v2809 = vrcp.pop %v2808
    %v2810 = vmul.f32 1.0, %v2809
    %v2811 = vtanh.pop %v2797
    %v2812 = vxor.u32 %v2798, 2147483648
    %v2813 = vmul.f32 %v2812, 1.442695
    %v2814 = vpow.pop %v2813
    %v2815 = vadd.f32 %v2814, 1.0
    %v2816 = vrcp.pop %v2815
    %v2817 = vmul.f32 1.0, %v2816
    %v2818 = vmul.f32 %v2810, %v2065
    %v2819 = vmul.f32 %v2804, %v2811
    %v2820 = vadd.f32 %v2818, %v2819
    %v2821 = vtanh.pop %v2820
    %v2822 = vmul.f32 %v2817, %v2821
    %v2823 = vld [vmem:[#allocation11] sm:$0xff]
    %v2824 = vld [vmem:[#allocation11 + $0x8] sm:$0xff]
    %v2825 = vld [vmem:[#allocation11 + $0x10] sm:$0xff]
    %v2826 = vld [vmem:[#allocation11 + $0x18] sm:$0xff]
    %v2827 = vld [vmem:[#allocation11 + $0x20] sm:$0xff]
    %v2828 = vld [vmem:[#allocation11 + $0x28] sm:$0xff]
    %v2829 = vld [vmem:[#allocation11 + $0x30] sm:$0xff]
    %v2830 = vld [vmem:[#allocation11 + $0x38] sm:$0xff]
    %v2831 = vld [vmem:[#allocation11 + $0x40] sm:$0xff]
    %v2832 = vld [vmem:[#allocation11 + $0x48] sm:$0xff]
    %v2833 = vld [vmem:[#allocation11 + $0x50] sm:$0xff]
    %v2834 = vld [vmem:[#allocation11 + $0x58] sm:$0xff]
    %v2835 = vld [vmem:[#allocation11 + $0x60] sm:$0xff]
    %v2836 = vld [vmem:[#allocation11 + $0x68] sm:$0xff]
    %v2837 = vld [vmem:[#allocation11 + $0x70] sm:$0xff]
    %v2838 = vld [vmem:[#allocation11 + $0x78] sm:$0xff]
    %v2839 = vld [vmem:[#allocation11 + $0x80] sm:$0xff]
    %v2840 = vld [vmem:[#allocation11 + $0x88] sm:$0xff]
    %v2841 = vld [vmem:[#allocation11 + $0x90] sm:$0xff]
    %v2842 = vld [vmem:[#allocation11 + $0x98] sm:$0xff]
    %v2843 = vld [vmem:[#allocation11 + $0xa0] sm:$0xff]
    %v2844 = vld [vmem:[#allocation11 + $0xa8] sm:$0xff]
    %v2845 = vld [vmem:[#allocation11 + $0xb0] sm:$0xff]
    %v2846 = vld [vmem:[#allocation11 + $0xb8] sm:$0xff]
    %v2847 = vld [vmem:[#allocation11 + $0xc0] sm:$0xff]
    %v2848 = vld [vmem:[#allocation11 + $0xc8] sm:$0xff]
    %v2849 = vld [vmem:[#allocation11 + $0xd0] sm:$0xff]
    %v2850 = vld [vmem:[#allocation11 + $0xd8] sm:$0xff]
    %v2851 = vld [vmem:[#allocation11 + $0xe0] sm:$0xff]
    %v2852 = vld [vmem:[#allocation11 + $0xe8] sm:$0xff]
    %v2853 = vld [vmem:[#allocation11 + $0xf0] sm:$0xff]
    %v2854 = vld [vmem:[#allocation11 + $0xf8] sm:$0xff]
    %v2855 = vld [vmem:[#allocation11 + $0x100] sm:$0xff]
    %v2856 = vld [vmem:[#allocation11 + $0x108] sm:$0xff]
    %v2857 = vld [vmem:[#allocation11 + $0x110] sm:$0xff]
    %v2858 = vld [vmem:[#allocation11 + $0x118] sm:$0xff]
    %v2859 = vld [vmem:[#allocation11 + $0x120] sm:$0xff]
    %v2860 = vld [vmem:[#allocation11 + $0x128] sm:$0xff]
    %v2861 = vld [vmem:[#allocation11 + $0x130] sm:$0xff]
    %v2862 = vld [vmem:[#allocation11 + $0x138] sm:$0xff]
    %v2863 = vld [vmem:[#allocation11 + $0x140] sm:$0xff]
    %v2864 = vld [vmem:[#allocation11 + $0x148] sm:$0xff]
    %v2865 = vld [vmem:[#allocation11 + $0x150] sm:$0xff]
    %v2866 = vld [vmem:[#allocation11 + $0x158] sm:$0xff]
    %v2867 = vld [vmem:[#allocation11 + $0x160] sm:$0xff]
    %v2868 = vld [vmem:[#allocation11 + $0x168] sm:$0xff]
    %v2869 = vld [vmem:[#allocation11 + $0x170] sm:$0xff]
    %v2870 = vld [vmem:[#allocation11 + $0x178] sm:$0xff]
    %v2871 = vld [vmem:[#allocation11 + $0x180] sm:$0xff]
    %v2872 = vld [vmem:[#allocation11 + $0x188] sm:$0xff]
    %v2873 = vld [vmem:[#allocation11 + $0x190] sm:$0xff]
    %v2874 = vld [vmem:[#allocation11 + $0x198] sm:$0xff]
    %v2875 = vld [vmem:[#allocation11 + $0x1a0] sm:$0xff]
    %v2876 = vld [vmem:[#allocation11 + $0x1a8] sm:$0xff]
    %v2877 = vld [vmem:[#allocation11 + $0x1b0] sm:$0xff]
    %v2878 = vld [vmem:[#allocation11 + $0x1b8] sm:$0xff]
    %v2879 = vld [vmem:[#allocation11 + $0x1c0] sm:$0xff]
    %v2880 = vld [vmem:[#allocation11 + $0x1c8] sm:$0xff]
    %v2881 = vld [vmem:[#allocation11 + $0x1d0] sm:$0xff]
    %v2882 = vld [vmem:[#allocation11 + $0x1d8] sm:$0xff]
    %v2883 = vld [vmem:[#allocation11 + $0x1e0] sm:$0xff]
    %v2884 = vld [vmem:[#allocation11 + $0x1e8] sm:$0xff]
    %v2885 = vld [vmem:[#allocation11 + $0x1f0] sm:$0xff]
    %v2886 = vld [vmem:[#allocation11 + $0x1f8] sm:$0xff]
    %v2887 = vld [vmem:[#allocation11 + $0x200] sm:$0xff]
    %v2888 = vld [vmem:[#allocation11 + $0x208] sm:$0xff]
    %v2889 = vld [vmem:[#allocation11 + $0x210] sm:$0xff]
    %v2890 = vld [vmem:[#allocation11 + $0x218] sm:$0xff]
    %v2891 = vld [vmem:[#allocation11 + $0x220] sm:$0xff]
    %v2892 = vld [vmem:[#allocation11 + $0x228] sm:$0xff]
    %v2893 = vld [vmem:[#allocation11 + $0x230] sm:$0xff]
    %v2894 = vld [vmem:[#allocation11 + $0x238] sm:$0xff]
    %v2895 = vld [vmem:[#allocation11 + $0x240] sm:$0xff]
    %v2896 = vld [vmem:[#allocation11 + $0x248] sm:$0xff]
    %v2897 = vld [vmem:[#allocation11 + $0x250] sm:$0xff]
    %v2898 = vld [vmem:[#allocation11 + $0x258] sm:$0xff]
    %v2899 = vld [vmem:[#allocation11 + $0x260] sm:$0xff]
    %v2900 = vld [vmem:[#allocation11 + $0x268] sm:$0xff]
    %v2901 = vld [vmem:[#allocation11 + $0x270] sm:$0xff]
    %v2902 = vld [vmem:[#allocation11 + $0x278] sm:$0xff]
    %v2903 = vld [vmem:[#allocation11 + $0x280] sm:$0xff]
    %v2904 = vld [vmem:[#allocation11 + $0x288] sm:$0xff]
    %v2905 = vld [vmem:[#allocation11 + $0x290] sm:$0xff]
    %v2906 = vld [vmem:[#allocation11 + $0x298] sm:$0xff]
    %v2907 = vld [vmem:[#allocation11 + $0x2a0] sm:$0xff]
    %v2908 = vld [vmem:[#allocation11 + $0x2a8] sm:$0xff]
    %v2909 = vld [vmem:[#allocation11 + $0x2b0] sm:$0xff]
    %v2910 = vld [vmem:[#allocation11 + $0x2b8] sm:$0xff]
    %v2911 = vld [vmem:[#allocation11 + $0x2c0] sm:$0xff]
    %v2912 = vld [vmem:[#allocation11 + $0x2c8] sm:$0xff]
    %v2913 = vld [vmem:[#allocation11 + $0x2d0] sm:$0xff]
    %v2914 = vld [vmem:[#allocation11 + $0x2d8] sm:$0xff]
    %v2915 = vld [vmem:[#allocation11 + $0x2e0] sm:$0xff]
    %v2916 = vld [vmem:[#allocation11 + $0x2e8] sm:$0xff]
    %v2917 = vld [vmem:[#allocation11 + $0x2f0] sm:$0xff]
    %v2918 = vld [vmem:[#allocation11 + $0x2f8] sm:$0xff]
    %v2919 = vld [vmem:[#allocation11 + $0x300] sm:$0xff]
    %v2920 = vld [vmem:[#allocation11 + $0x308] sm:$0xff]
    %v2921 = vld [vmem:[#allocation11 + $0x310] sm:$0xff]
    %v2922 = vld [vmem:[#allocation11 + $0x318] sm:$0xff]
    %v2923 = vld [vmem:[#allocation11 + $0x320] sm:$0xff]
    %v2924 = vld [vmem:[#allocation11 + $0x328] sm:$0xff]
    %v2925 = vld [vmem:[#allocation11 + $0x330] sm:$0xff]
    %v2926 = vld [vmem:[#allocation11 + $0x338] sm:$0xff]
    %v2927 = vld [vmem:[#allocation11 + $0x340] sm:$0xff]
    %v2928 = vld [vmem:[#allocation11 + $0x348] sm:$0xff]
    %v2929 = vld [vmem:[#allocation11 + $0x350] sm:$0xff]
    %v2930 = vld [vmem:[#allocation11 + $0x358] sm:$0xff]
    %v2931 = vld [vmem:[#allocation11 + $0x360] sm:$0xff]
    %v2932 = vld [vmem:[#allocation11 + $0x368] sm:$0xff]
    %v2933 = vld [vmem:[#allocation11 + $0x370] sm:$0xff]
    %v2934 = vld [vmem:[#allocation11 + $0x378] sm:$0xff]
    %v2935 = vld [vmem:[#allocation11 + $0x380] sm:$0xff]
    %v2936 = vld [vmem:[#allocation11 + $0x388] sm:$0xff]
    %v2937 = vld [vmem:[#allocation11 + $0x390] sm:$0xff]
    %v2938 = vld [vmem:[#allocation11 + $0x398] sm:$0xff]
    %v2939 = vld [vmem:[#allocation11 + $0x3a0] sm:$0xff]
    %v2940 = vld [vmem:[#allocation11 + $0x3a8] sm:$0xff]
    %v2941 = vld [vmem:[#allocation11 + $0x3b0] sm:$0xff]
    %v2942 = vld [vmem:[#allocation11 + $0x3b8] sm:$0xff]
    %v2943 = vld [vmem:[#allocation11 + $0x3c0] sm:$0xff]
    %v2944 = vld [vmem:[#allocation11 + $0x3c8] sm:$0xff]
    %v2945 = vld [vmem:[#allocation11 + $0x3d0] sm:$0xff]
    %v2946 = vld [vmem:[#allocation11 + $0x3d8] sm:$0xff]
    %v2947 = vld [vmem:[#allocation11 + $0x3e0] sm:$0xff]
    %v2948 = vld [vmem:[#allocation11 + $0x3e8] sm:$0xff]
    %v2949 = vld [vmem:[#allocation11 + $0x3f0] sm:$0xff]
    %v2950 = vld [vmem:[#allocation11 + $0x3f8] sm:$0xff]
    %v2951 = vld [vmem:[%s5] sm:$0xf]
    %v2953 = vlaneseq
    %v2954 = vshrl.u32 %v2953, 7
    %v2955 = vsub.s32 0, %v2954
    %v2956 = vrot.slane %v2951, %v2955
    %v2957 = vlaneseq
    %v2958 = vshrl.u32 %v2957, 7
    %v2959 = vsub.s32 1, %v2958
    %v2960 = vrot.slane %v2951, %v2959
    %v2961 = vlaneseq
    %v2962 = vshrl.u32 %v2961, 7
    %v2963 = vsub.s32 2, %v2962
    %v2964 = vrot.slane %v2951, %v2963
    %v2965 = vlaneseq
    %v2966 = vshrl.u32 %v2965, 7
    %v2967 = vsub.s32 3, %v2966
    %v2968 = vrot.slane %v2951, %v2967
    %2973 = vmatprep.subr.mxu0 %v2824
    %2974 = vmatpush1.msra.mxu0 %v2823
    %2975 = vmatprep.subr.mxu0 %v2828
    %2976 = vmatpush1.msra.mxu0 %v2827
    %2977 = vmatprep.subr.mxu0 %v2832
    %2978 = vmatpush1.msra.mxu0 %v2831
    %2979 = vmatprep.subr.mxu0 %v2836
    %2980 = vmatpush1.msra.mxu0 %v2835
    %2981 = vmatprep.subr.mxu0 %v2840
    %2982 = vmatpush1.msra.mxu0 %v2839
    %2983 = vmatprep.subr.mxu0 %v2844
    %2984 = vmatpush1.msra.mxu0 %v2843
    %2985 = vmatprep.subr.mxu0 %v2848
    %2986 = vmatpush1.msra.mxu0 %v2847
    %2987 = vmatprep.subr.mxu0 %v2852
    %2988 = vmatpush1.msra.mxu0 %v2851
    %2989 = vmatprep.subr.mxu0 %v2856
    %2990 = vmatpush1.msra.mxu0 %v2855
    %2991 = vmatprep.subr.mxu0 %v2860
    %2992 = vmatpush1.msra.mxu0 %v2859
    %2993 = vmatprep.subr.mxu0 %v2864
    %2994 = vmatpush1.msra.mxu0 %v2863
    %2995 = vmatprep.subr.mxu0 %v2868
    %2996 = vmatpush1.msra.mxu0 %v2867
    %2997 = vmatprep.subr.mxu0 %v2872
    %2998 = vmatpush1.msra.mxu0 %v2871
    %2999 = vmatprep.subr.mxu0 %v2876
    %3000 = vmatpush1.msra.mxu0 %v2875
    %3001 = vmatprep.subr.mxu0 %v2880
    %3002 = vmatpush1.msra.mxu0 %v2879
    %3003 = vmatprep.subr.mxu0 %v2884
    %3004 = vmatpush1.msra.mxu0 %v2883
    %3005 = vmatprep.subr.mxu0 %v2888
    %3006 = vmatpush1.msra.mxu0 %v2887
    %3007 = vmatprep.subr.mxu0 %v2892
    %3008 = vmatpush1.msra.mxu0 %v2891
    %3009 = vmatprep.subr.mxu0 %v2896
    %3010 = vmatpush1.msra.mxu0 %v2895
    %3011 = vmatprep.subr.mxu0 %v2900
    %3012 = vmatpush1.msra.mxu0 %v2899
    %3013 = vmatprep.subr.mxu0 %v2904
    %3014 = vmatpush1.msra.mxu0 %v2903
    %3015 = vmatprep.subr.mxu0 %v2908
    %3016 = vmatpush1.msra.mxu0 %v2907
    %3017 = vmatprep.subr.mxu0 %v2912
    %3018 = vmatpush1.msra.mxu0 %v2911
    %3019 = vmatprep.subr.mxu0 %v2916
    %3020 = vmatpush1.msra.mxu0 %v2915
    %3021 = vmatprep.subr.mxu0 %v2920
    %3022 = vmatpush1.msra.mxu0 %v2919
    %3023 = vmatprep.subr.mxu0 %v2924
    %3024 = vmatpush1.msra.mxu0 %v2923
    %3025 = vmatprep.subr.mxu0 %v2928
    %3026 = vmatpush1.msra.mxu0 %v2927
    %3027 = vmatprep.subr.mxu0 %v2932
    %3028 = vmatpush1.msra.mxu0 %v2931
    %3029 = vmatprep.subr.mxu0 %v2936
    %3030 = vmatpush1.msra.mxu0 %v2935
    %3031 = vmatprep.subr.mxu0 %v2940
    %3032 = vmatpush1.msra.mxu0 %v2939
    %3033 = vmatprep.subr.mxu0 %v2944
    %3034 = vmatpush1.msra.mxu0 %v2943
    %3035 = vmatprep.subr.mxu0 %v2948
    %3036 = vmatpush1.msra.mxu0 %v2947
    %3037 = vmatprep.mubr.f32.mxu0 %v2383
    %3038 = vmatmul.mubr.f32.gmra.mrb[0].mxu0 %v2822
    %v3039 = vpop.f32.mrb[0].mxu0
    %v3040 = vadd.f32 %v2956, %v3039
    %v3041 = vpop.f32.mrb[0].mxu0
    %v3042 = vadd.f32 %v2960, %v3041
    %3043 = vdwg.mxu0
    %3044 = vmatprep.subr.mxu0 %v2826
    %3045 = vmatpush1.msra.mxu0 %v2825
    %3046 = vmatprep.subr.mxu0 %v2830
    %3047 = vmatpush1.msra.mxu0 %v2829
    %3048 = vmatprep.subr.mxu0 %v2834
    %3049 = vmatpush1.msra.mxu0 %v2833
    %3050 = vmatprep.subr.mxu0 %v2838
    %3051 = vmatpush1.msra.mxu0 %v2837
    %3052 = vmatprep.subr.mxu0 %v2842
    %3053 = vmatpush1.msra.mxu0 %v2841
    %3054 = vmatprep.subr.mxu0 %v2846
    %3055 = vmatpush1.msra.mxu0 %v2845
    %3056 = vmatprep.subr.mxu0 %v2850
    %3057 = vmatpush1.msra.mxu0 %v2849
    %3058 = vmatprep.subr.mxu0 %v2854
    %3059 = vmatpush1.msra.mxu0 %v2853
    %3060 = vmatprep.subr.mxu0 %v2858
    %3061 = vmatpush1.msra.mxu0 %v2857
    %3062 = vmatprep.subr.mxu0 %v2862
    %3063 = vmatpush1.msra.mxu0 %v2861
    %3064 = vmatprep.subr.mxu0 %v2866
    %3065 = vmatpush1.msra.mxu0 %v2865
    %3066 = vmatprep.subr.mxu0 %v2870
    %3067 = vmatpush1.msra.mxu0 %v2869
    %3068 = vmatprep.subr.mxu0 %v2874
    %3069 = vmatpush1.msra.mxu0 %v2873
    %3070 = vmatprep.subr.mxu0 %v2878
    %3071 = vmatpush1.msra.mxu0 %v2877
    %3072 = vmatprep.subr.mxu0 %v2882
    %3073 = vmatpush1.msra.mxu0 %v2881
    %3074 = vmatprep.subr.mxu0 %v2886
    %3075 = vmatpush1.msra.mxu0 %v2885
    %3076 = vmatprep.subr.mxu0 %v2890
    %3077 = vmatpush1.msra.mxu0 %v2889
    %3078 = vmatprep.subr.mxu0 %v2894
    %3079 = vmatpush1.msra.mxu0 %v2893
    %3080 = vmatprep.subr.mxu0 %v2898
    %3081 = vmatpush1.msra.mxu0 %v2897
    %3082 = vmatprep.subr.mxu0 %v2902
    %3083 = vmatpush1.msra.mxu0 %v2901
    %3084 = vmatprep.subr.mxu0 %v2906
    %3085 = vmatpush1.msra.mxu0 %v2905
    %3086 = vmatprep.subr.mxu0 %v2910
    %3087 = vmatpush1.msra.mxu0 %v2909
    %3088 = vmatprep.subr.mxu0 %v2914
    %3089 = vmatpush1.msra.mxu0 %v2913
    %3090 = vmatprep.subr.mxu0 %v2918
    %3091 = vmatpush1.msra.mxu0 %v2917
    %3092 = vmatprep.subr.mxu0 %v2922
    %3093 = vmatpush1.msra.mxu0 %v2921
    %3094 = vmatprep.subr.mxu0 %v2926
    %3095 = vmatpush1.msra.mxu0 %v2925
    %3096 = vmatprep.subr.mxu0 %v2930
    %3097 = vmatpush1.msra.mxu0 %v2929
    %3098 = vmatprep.subr.mxu0 %v2934
    %3099 = vmatpush1.msra.mxu0 %v2933
    %3100 = vmatprep.subr.mxu0 %v2938
    %3101 = vmatpush1.msra.mxu0 %v2937
    %3102 = vmatprep.subr.mxu0 %v2942
    %3103 = vmatpush1.msra.mxu0 %v2941
    %3104 = vmatprep.subr.mxu0 %v2946
    %3105 = vmatpush1.msra.mxu0 %v2945
    %3106 = vmatprep.subr.mxu0 %v2950
    %3107 = vmatpush1.msra.mxu0 %v2949
    %3108 = vmatprep.mubr.f32.mxu0 %v2383
    %3109 = vmatmul.mubr.f32.gmra.mrb[0].mxu0 %v2822
    %v3110 = vpop.f32.mrb[0].mxu0
    %v3111 = vadd.f32 %v2964, %v3110
    %v3112 = vpop.f32.mrb[0].mxu0
    %v3113 = vadd.f32 %v2968, %v3112
    %3114 = vdwg.mxu0
    %v3115 = vxor.u32 %v3040, 2147483648
    %v3116 = vmul.f32 %v3115, 1.442695
    %v3117 = vpow.pop %v3116
    %v3118 = vadd.f32 %v3117, 1.0
    %v3119 = vrcp.pop %v3118
    %v3120 = vmul.f32 1.0, %v3119
    %v3121 = vxor.u32 %v3042, 2147483648
    %v3122 = vmul.f32 %v3121, 1.442695
    %v3123 = vpow.pop %v3122
    %v3124 = vadd.f32 %v3123, 1.0
    %v3125 = vrcp.pop %v3124
    %v3126 = vmul.f32 1.0, %v3125
    %v3127 = vtanh.pop %v3111
    %v3128 = vxor.u32 %v3113, 2147483648
    %v3129 = vmul.f32 %v3128, 1.442695
    %v3130 = vpow.pop %v3129
    %v3131 = vadd.f32 %v3130, 1.0
    %v3132 = vrcp.pop %v3131
    %v3133 = vmul.f32 1.0, %v3132
    %v3134 = vmul.f32 %v3126, %v2381
    %v3135 = vmul.f32 %v3120, %v3127
    %v3136 = vadd.f32 %v3134, %v3135
    %v3137 = vtanh.pop %v3136
    %v3138 = vmul.f32 %v3133, %v3137
    %3139 = vst [vmem:[#allocation4 + $0x18] sm:$0xff] %v3138
    %v3140 = vld [vmem:[#allocation5 + $0x4] sm:$0x1]
    %v3141 = vld [vmem:[#allocation5 + $0xc] sm:$0x1]
    %v3142 = vld [vmem:[#allocation5 + $0x14] sm:$0x1]
    %v3143 = vld [vmem:[#allocation5 + $0x1c] sm:$0x1]
    %v3144 = vld [vmem:[#allocation5 + $0x24] sm:$0x1]
    %v3145 = vld [vmem:[#allocation5 + $0x2c] sm:$0x1]
    %v3146 = vld [vmem:[#allocation5 + $0x34] sm:$0x1]
    %v3147 = vld [vmem:[#allocation5 + $0x3c] sm:$0x1]
    %v3148 = vld [vmem:[#allocation8] sm:$0xff]
    %v3149 = vld [vmem:[#allocation8 + $0x8] sm:$0xff]
    %v3150 = vld [vmem:[#allocation8 + $0x10] sm:$0xff]
    %v3151 = vld [vmem:[#allocation8 + $0x18] sm:$0xff]
    %v3152 = vld [vmem:[#allocation8 + $0x20] sm:$0xff]
    %v3153 = vld [vmem:[#allocation8 + $0x28] sm:$0xff]
    %v3154 = vld [vmem:[#allocation8 + $0x30] sm:$0xff]
    %v3155 = vld [vmem:[#allocation8 + $0x38] sm:$0xff]
    %v3156 = vld [vmem:[#allocation10] sm:$0xff]
    %v3157 = vld [vmem:[#allocation10 + $0x8] sm:$0xff]
    %v3158 = vld [vmem:[#allocation10 + $0x10] sm:$0xff]
    %v3159 = vld [vmem:[#allocation10 + $0x18] sm:$0xff]
    %v3160 = vld [vmem:[#allocation10 + $0x20] sm:$0xff]
    %v3161 = vld [vmem:[#allocation10 + $0x28] sm:$0xff]
    %v3162 = vld [vmem:[#allocation10 + $0x30] sm:$0xff]
    %v3163 = vld [vmem:[#allocation10 + $0x38] sm:$0xff]
    %v3164 = vld [vmem:[#allocation10 + $0x40] sm:$0xff]
    %v3165 = vld [vmem:[#allocation10 + $0x48] sm:$0xff]
    %v3166 = vld [vmem:[#allocation10 + $0x50] sm:$0xff]
    %v3167 = vld [vmem:[#allocation10 + $0x58] sm:$0xff]
    %v3168 = vld [vmem:[#allocation10 + $0x60] sm:$0xff]
    %v3169 = vld [vmem:[#allocation10 + $0x68] sm:$0xff]
    %v3170 = vld [vmem:[#allocation10 + $0x70] sm:$0xff]
    %v3171 = vld [vmem:[#allocation10 + $0x78] sm:$0xff]
    %v3172 = vld [vmem:[#allocation10 + $0x80] sm:$0xff]
    %v3173 = vld [vmem:[#allocation10 + $0x88] sm:$0xff]
    %v3174 = vld [vmem:[#allocation10 + $0x90] sm:$0xff]
    %v3175 = vld [vmem:[#allocation10 + $0x98] sm:$0xff]
    %v3176 = vld [vmem:[#allocation10 + $0xa0] sm:$0xff]
    %v3177 = vld [vmem:[#allocation10 + $0xa8] sm:$0xff]
    %v3178 = vld [vmem:[#allocation10 + $0xb0] sm:$0xff]
    %v3179 = vld [vmem:[#allocation10 + $0xb8] sm:$0xff]
    %v3180 = vld [vmem:[#allocation10 + $0xc0] sm:$0xff]
    %v3181 = vld [vmem:[#allocation10 + $0xc8] sm:$0xff]
    %v3182 = vld [vmem:[#allocation10 + $0xd0] sm:$0xff]
    %v3183 = vld [vmem:[#allocation10 + $0xd8] sm:$0xff]
    %v3184 = vld [vmem:[#allocation10 + $0xe0] sm:$0xff]
    %v3185 = vld [vmem:[#allocation10 + $0xe8] sm:$0xff]
    %v3186 = vld [vmem:[#allocation10 + $0xf0] sm:$0xff]
    %v3187 = vld [vmem:[#allocation10 + $0xf8] sm:$0xff]
    %v3188 = vld [vmem:[#allocation10 + $0x100] sm:$0xff]
    %v3189 = vld [vmem:[#allocation10 + $0x108] sm:$0xff]
    %v3190 = vld [vmem:[#allocation10 + $0x110] sm:$0xff]
    %v3191 = vld [vmem:[#allocation10 + $0x118] sm:$0xff]
    %v3192 = vld [vmem:[#allocation10 + $0x120] sm:$0xff]
    %v3193 = vld [vmem:[#allocation10 + $0x128] sm:$0xff]
    %v3194 = vld [vmem:[#allocation10 + $0x130] sm:$0xff]
    %v3195 = vld [vmem:[#allocation10 + $0x138] sm:$0xff]
    %v3196 = vld [vmem:[#allocation10 + $0x140] sm:$0xff]
    %v3197 = vld [vmem:[#allocation10 + $0x148] sm:$0xff]
    %v3198 = vld [vmem:[#allocation10 + $0x150] sm:$0xff]
    %v3199 = vld [vmem:[#allocation10 + $0x158] sm:$0xff]
    %v3200 = vld [vmem:[#allocation10 + $0x160] sm:$0xff]
    %v3201 = vld [vmem:[#allocation10 + $0x168] sm:$0xff]
    %v3202 = vld [vmem:[#allocation10 + $0x170] sm:$0xff]
    %v3203 = vld [vmem:[#allocation10 + $0x178] sm:$0xff]
    %v3204 = vld [vmem:[#allocation10 + $0x180] sm:$0xff]
    %v3205 = vld [vmem:[#allocation10 + $0x188] sm:$0xff]
    %v3206 = vld [vmem:[#allocation10 + $0x190] sm:$0xff]
    %v3207 = vld [vmem:[#allocation10 + $0x198] sm:$0xff]
    %v3208 = vld [vmem:[#allocation10 + $0x1a0] sm:$0xff]
    %v3209 = vld [vmem:[#allocation10 + $0x1a8] sm:$0xff]
    %v3210 = vld [vmem:[#allocation10 + $0x1b0] sm:$0xff]
    %v3211 = vld [vmem:[#allocation10 + $0x1b8] sm:$0xff]
    %v3212 = vld [vmem:[#allocation10 + $0x1c0] sm:$0xff]
    %v3213 = vld [vmem:[#allocation10 + $0x1c8] sm:$0xff]
    %v3214 = vld [vmem:[#allocation10 + $0x1d0] sm:$0xff]
    %v3215 = vld [vmem:[#allocation10 + $0x1d8] sm:$0xff]
    %v3216 = vld [vmem:[#allocation10 + $0x1e0] sm:$0xff]
    %v3217 = vld [vmem:[#allocation10 + $0x1e8] sm:$0xff]
    %v3218 = vld [vmem:[#allocation10 + $0x1f0] sm:$0xff]
    %v3219 = vld [vmem:[#allocation10 + $0x1f8] sm:$0xff]
    %3220 = vmatprep.subr.mxu0 %v3157
    %3221 = vmatpush1.msra.mxu0 %v3156
    %3222 = vmatprep.subr.mxu0 %v3161
    %3223 = vmatpush1.msra.mxu0 %v3160
    %3224 = vmatprep.subr.mxu0 %v3165
    %3225 = vmatpush1.msra.mxu0 %v3164
    %3226 = vmatprep.subr.mxu0 %v3169
    %3227 = vmatpush1.msra.mxu0 %v3168
    %3228 = vmatprep.subr.mxu0 %v3173
    %3229 = vmatpush1.msra.mxu0 %v3172
    %3230 = vmatprep.subr.mxu0 %v3177
    %3231 = vmatpush1.msra.mxu0 %v3176
    %3232 = vmatprep.subr.mxu0 %v3181
    %3233 = vmatpush1.msra.mxu0 %v3180
    %3234 = vmatprep.subr.mxu0 %v3185
    %3235 = vmatpush1.msra.mxu0 %v3184
    %3236 = vmatprep.subr.mxu0 %v3189
    %3237 = vmatpush1.msra.mxu0 %v3188
    %3238 = vmatprep.subr.mxu0 %v3193
    %3239 = vmatpush1.msra.mxu0 %v3192
    %3240 = vmatprep.subr.mxu0 %v3197
    %3241 = vmatpush1.msra.mxu0 %v3196
    %3242 = vmatprep.subr.mxu0 %v3201
    %3243 = vmatpush1.msra.mxu0 %v3200
    %3244 = vmatprep.subr.mxu0 %v3205
    %3245 = vmatpush1.msra.mxu0 %v3204
    %3246 = vmatprep.subr.mxu0 %v3209
    %3247 = vmatpush1.msra.mxu0 %v3208
    %3248 = vmatprep.subr.mxu0 %v3213
    %3249 = vmatpush1.msra.mxu0 %v3212
    %3250 = vmatprep.subr.mxu0 %v3217
    %3251 = vmatpush1.msra.mxu0 %v3216
    %3252 = vmatprep.subr.mxu0 0.0
    %3253 = vmatpush1.msra.mxu0 0.0
    %3254 = vmatprep.subr.mxu0 0.0
    %3255 = vmatpush1.msra.mxu0 0.0
    %3256 = vmatprep.subr.mxu0 0.0
    %3257 = vmatpush1.msra.mxu0 0.0
    %3258 = vmatprep.subr.mxu0 0.0
    %3259 = vmatpush1.msra.mxu0 0.0
    %3260 = vmatprep.subr.mxu0 0.0
    %3261 = vmatpush1.msra.mxu0 0.0
    %3262 = vmatprep.subr.mxu0 0.0
    %3263 = vmatpush1.msra.mxu0 0.0
    %3264 = vmatprep.subr.mxu0 0.0
    %3265 = vmatpush1.msra.mxu0 0.0
    %3266 = vmatprep.subr.mxu0 0.0
    %3267 = vmatpush1.msra.mxu0 0.0
    %3268 = vmatprep.subr.mxu0 0.0
    %3269 = vmatpush1.msra.mxu0 0.0
    %3270 = vmatprep.subr.mxu0 0.0
    %3271 = vmatpush1.msra.mxu0 0.0
    %3272 = vmatprep.subr.mxu0 0.0
    %3273 = vmatpush1.msra.mxu0 0.0
    %3274 = vmatprep.subr.mxu0 0.0
    %3275 = vmatpush1.msra.mxu0 0.0
    %3276 = vmatprep.subr.mxu0 0.0
    %3277 = vmatpush1.msra.mxu0 0.0
    %3278 = vmatprep.subr.mxu0 0.0
    %3279 = vmatpush1.msra.mxu0 0.0
    %3280 = vmatprep.subr.mxu0 0.0
    %3281 = vmatpush1.msra.mxu0 0.0
    %3282 = vmatprep.subr.mxu0 0.0
    %3283 = vmatpush1.msra.mxu0 0.0
    %3284 = vmatprep.mubr.f32.mxu0 0.0
    %3285 = vmatmul.mubr.f32.gmra.mrb[0].mxu0 %v2822
    %v3286 = vpop.f32.mrb[0].mxu0
    %v3287 = vadd.f32 0.0, %v3286
    %v3288 = vpop.f32.mrb[0].mxu0
    %v3289 = vadd.f32 0.0, %v3288
    %3290 = vdwg.mxu0
    %3291 = vmatprep.subr.mxu0 %v3159
    %3292 = vmatpush1.msra.mxu0 %v3158
    %3293 = vmatprep.subr.mxu0 %v3163
    %3294 = vmatpush1.msra.mxu0 %v3162
    %3295 = vmatprep.subr.mxu0 %v3167
    %3296 = vmatpush1.msra.mxu0 %v3166
    %3297 = vmatprep.subr.mxu0 %v3171
    %3298 = vmatpush1.msra.mxu0 %v3170
    %3299 = vmatprep.subr.mxu0 %v3175
    %3300 = vmatpush1.msra.mxu0 %v3174
    %3301 = vmatprep.subr.mxu0 %v3179
    %3302 = vmatpush1.msra.mxu0 %v3178
    %3303 = vmatprep.subr.mxu0 %v3183
    %3304 = vmatpush1.msra.mxu0 %v3182
    %3305 = vmatprep.subr.mxu0 %v3187
    %3306 = vmatpush1.msra.mxu0 %v3186
    %3307 = vmatprep.subr.mxu0 %v3191
    %3308 = vmatpush1.msra.mxu0 %v3190
    %3309 = vmatprep.subr.mxu0 %v3195
    %3310 = vmatpush1.msra.mxu0 %v3194
    %3311 = vmatprep.subr.mxu0 %v3199
    %3312 = vmatpush1.msra.mxu0 %v3198
    %3313 = vmatprep.subr.mxu0 %v3203
    %3314 = vmatpush1.msra.mxu0 %v3202
    %3315 = vmatprep.subr.mxu0 %v3207
    %3316 = vmatpush1.msra.mxu0 %v3206
    %3317 = vmatprep.subr.mxu0 %v3211
    %3318 = vmatpush1.msra.mxu0 %v3210
    %3319 = vmatprep.subr.mxu0 %v3215
    %3320 = vmatpush1.msra.mxu0 %v3214
    %3321 = vmatprep.subr.mxu0 %v3219
    %3322 = vmatpush1.msra.mxu0 %v3218
    %3323 = vmatprep.subr.mxu0 0.0
    %3324 = vmatpush1.msra.mxu0 0.0
    %3325 = vmatprep.subr.mxu0 0.0
    %3326 = vmatpush1.msra.mxu0 0.0
    %3327 = vmatprep.subr.mxu0 0.0
    %3328 = vmatpush1.msra.mxu0 0.0
    %3329 = vmatprep.subr.mxu0 0.0
    %3330 = vmatpush1.msra.mxu0 0.0
    %3331 = vmatprep.subr.mxu0 0.0
    %3332 = vmatpush1.msra.mxu0 0.0
    %3333 = vmatprep.subr.mxu0 0.0
    %3334 = vmatpush1.msra.mxu0 0.0
    %3335 = vmatprep.subr.mxu0 0.0
    %3336 = vmatpush1.msra.mxu0 0.0
    %3337 = vmatprep.subr.mxu0 0.0
    %3338 = vmatpush1.msra.mxu0 0.0
    %3339 = vmatprep.subr.mxu0 0.0
    %3340 = vmatpush1.msra.mxu0 0.0
    %3341 = vmatprep.subr.mxu0 0.0
    %3342 = vmatpush1.msra.mxu0 0.0
    %3343 = vmatprep.subr.mxu0 0.0
    %3344 = vmatpush1.msra.mxu0 0.0
    %3345 = vmatprep.subr.mxu0 0.0
    %3346 = vmatpush1.msra.mxu0 0.0
    %3347 = vmatprep.subr.mxu0 0.0
    %3348 = vmatpush1.msra.mxu0 0.0
    %3349 = vmatprep.subr.mxu0 0.0
    %3350 = vmatpush1.msra.mxu0 0.0
    %3351 = vmatprep.subr.mxu0 0.0
    %3352 = vmatpush1.msra.mxu0 0.0
    %3353 = vmatprep.subr.mxu0 0.0
    %3354 = vmatpush1.msra.mxu0 0.0
    %3355 = vmatprep.mubr.f32.mxu0 0.0
    %3356 = vmatmul.mubr.f32.gmra.mrb[0].mxu0 %v2822
    %v3357 = vpop.f32.mrb[0].mxu0
    %v3358 = vadd.f32 0.0, %v3357
    %v3359 = vpop.f32.mrb[0].mxu0
    %v3360 = vadd.f32 0.0, %v3359
    %3361 = vdwg.mxu0
    %v3370 = vrot.slane %v3141, 7
    %v3371 = vsel %vm343, %v3370, %v3140
    %v3372 = vrot.slane %v3142, 6
    %v3373 = vsel %vm346, %v3372, %v3371
    %v3374 = vrot.slane %v3143, 5
    %v3375 = vsel %vm349, %v3374, %v3373
    %v3376 = vrot.slane %v3144, 4
    %v3377 = vsel %vm352, %v3376, %v3375
    %v3378 = vrot.slane %v3145, 3
    %v3379 = vsel %vm355, %v3378, %v3377
    %v3380 = vrot.slane %v3146, 2
    %v3381 = vsel %vm358, %v3380, %v3379
    %v3382 = vrot.slane %v3147, 1
    %v3383 = vsel %vm361, %v3382, %v3381
    %v3384 = vsel %vm363, %v3383, 0
    %3386 = vmatprep.subr.mxu0 %v3149
    %3387 = vmatpush1.msra.mxu0 %v3148
    %3388 = vmatprep.subr.mxu0 %v3153
    %3389 = vmatpush1.msra.mxu0 %v3152
    %3390 = vmatprep.subr.mxu0 0.0
    %3391 = vmatpush1.msra.mxu0 0.0
    %3392 = vmatprep.subr.mxu0 0.0
    %3393 = vmatpush1.msra.mxu0 0.0
    %3394 = vmatprep.subr.mxu0 0.0
    %3395 = vmatpush1.msra.mxu0 0.0
    %3396 = vmatprep.subr.mxu0 0.0
    %3397 = vmatpush1.msra.mxu0 0.0
    %3398 = vmatprep.subr.mxu0 0.0
    %3399 = vmatpush1.msra.mxu0 0.0
    %3400 = vmatprep.subr.mxu0 0.0
    %3401 = vmatpush1.msra.mxu0 0.0
    %3402 = vmatprep.subr.mxu0 0.0
    %3403 = vmatpush1.msra.mxu0 0.0
    %3404 = vmatprep.subr.mxu0 0.0
    %3405 = vmatpush1.msra.mxu0 0.0
    %3406 = vmatprep.subr.mxu0 0.0
    %3407 = vmatpush1.msra.mxu0 0.0
    %3408 = vmatprep.subr.mxu0 0.0
    %3409 = vmatpush1.msra.mxu0 0.0
    %3410 = vmatprep.subr.mxu0 0.0
    %3411 = vmatpush1.msra.mxu0 0.0
    %3412 = vmatprep.subr.mxu0 0.0
    %3413 = vmatpush1.msra.mxu0 0.0
    %3414 = vmatprep.subr.mxu0 0.0
    %3415 = vmatpush1.msra.mxu0 0.0
    %3416 = vmatprep.subr.mxu0 0.0
    %3417 = vmatpush1.msra.mxu0 0.0
    %3418 = vmatprep.subr.mxu0 0.0
    %3419 = vmatpush1.msra.mxu0 0.0
    %3420 = vmatprep.subr.mxu0 0.0
    %3421 = vmatpush1.msra.mxu0 0.0
    %3422 = vmatprep.subr.mxu0 0.0
    %3423 = vmatpush1.msra.mxu0 0.0
    %3424 = vmatprep.subr.mxu0 0.0
    %3425 = vmatpush1.msra.mxu0 0.0
    %3426 = vmatprep.subr.mxu0 0.0
    %3427 = vmatpush1.msra.mxu0 0.0
    %3428 = vmatprep.subr.mxu0 0.0
    %3429 = vmatpush1.msra.mxu0 0.0
    %3430 = vmatprep.subr.mxu0 0.0
    %3431 = vmatpush1.msra.mxu0 0.0
    %3432 = vmatprep.subr.mxu0 0.0
    %3433 = vmatpush1.msra.mxu0 0.0
    %3434 = vmatprep.subr.mxu0 0.0
    %3435 = vmatpush1.msra.mxu0 0.0
    %3436 = vmatprep.subr.mxu0 0.0
    %3437 = vmatpush1.msra.mxu0 0.0
    %3438 = vmatprep.subr.mxu0 0.0
    %3439 = vmatpush1.msra.mxu0 0.0
    %3440 = vmatprep.subr.mxu0 0.0
    %3441 = vmatpush1.msra.mxu0 0.0
    %3442 = vmatprep.subr.mxu0 0.0
    %3443 = vmatpush1.msra.mxu0 0.0
    %3444 = vmatprep.subr.mxu0 0.0
    %3445 = vmatpush1.msra.mxu0 0.0
    %3446 = vmatprep.subr.mxu0 0.0
    %3447 = vmatpush1.msra.mxu0 0.0
    %3448 = vmatprep.subr.mxu0 0.0
    %3449 = vmatpush1.msra.mxu0 0.0
    %3450 = vmatprep.mubr.f32.mxu0 0.0
    %3451 = vmatmul.mubr.f32.gmra.mrb[0].mxu0 %v3384
    %v3452 = vpop.f32.mrb[0].mxu0
    %v3453 = vadd.f32 %v3287, %v3452
    %v3454 = vpop.f32.mrb[0].mxu0
    %v3455 = vadd.f32 %v3289, %v3454
    %3456 = vdwg.mxu0
    %3457 = vmatprep.subr.mxu0 %v3151
    %3458 = vmatpush1.msra.mxu0 %v3150
    %3459 = vmatprep.subr.mxu0 %v3155
    %3460 = vmatpush1.msra.mxu0 %v3154
    %3461 = vmatprep.subr.mxu0 0.0
    %3462 = vmatpush1.msra.mxu0 0.0
    %3463 = vmatprep.subr.mxu0 0.0
    %3464 = vmatpush1.msra.mxu0 0.0
    %3465 = vmatprep.subr.mxu0 0.0
    %3466 = vmatpush1.msra.mxu0 0.0
    %3467 = vmatprep.subr.mxu0 0.0
    %3468 = vmatpush1.msra.mxu0 0.0
    %3469 = vmatprep.subr.mxu0 0.0
    %3470 = vmatpush1.msra.mxu0 0.0
    %3471 = vmatprep.subr.mxu0 0.0
    %3472 = vmatpush1.msra.mxu0 0.0
    %3473 = vmatprep.subr.mxu0 0.0
    %3474 = vmatpush1.msra.mxu0 0.0
    %3475 = vmatprep.subr.mxu0 0.0
    %3476 = vmatpush1.msra.mxu0 0.0
    %3477 = vmatprep.subr.mxu0 0.0
    %3478 = vmatpush1.msra.mxu0 0.0
    %3479 = vmatprep.subr.mxu0 0.0
    %3480 = vmatpush1.msra.mxu0 0.0
    %3481 = vmatprep.subr.mxu0 0.0
    %3482 = vmatpush1.msra.mxu0 0.0
    %3483 = vmatprep.subr.mxu0 0.0
    %3484 = vmatpush1.msra.mxu0 0.0
    %3485 = vmatprep.subr.mxu0 0.0
    %3486 = vmatpush1.msra.mxu0 0.0
    %3487 = vmatprep.subr.mxu0 0.0
    %3488 = vmatpush1.msra.mxu0 0.0
    %3489 = vmatprep.subr.mxu0 0.0
    %3490 = vmatpush1.msra.mxu0 0.0
    %3491 = vmatprep.subr.mxu0 0.0
    %3492 = vmatpush1.msra.mxu0 0.0
    %3493 = vmatprep.subr.mxu0 0.0
    %3494 = vmatpush1.msra.mxu0 0.0
    %3495 = vmatprep.subr.mxu0 0.0
    %3496 = vmatpush1.msra.mxu0 0.0
    %3497 = vmatprep.subr.mxu0 0.0
    %3498 = vmatpush1.msra.mxu0 0.0
    %3499 = vmatprep.subr.mxu0 0.0
    %3500 = vmatpush1.msra.mxu0 0.0
    %3501 = vmatprep.subr.mxu0 0.0
    %3502 = vmatpush1.msra.mxu0 0.0
    %3503 = vmatprep.subr.mxu0 0.0
    %3504 = vmatpush1.msra.mxu0 0.0
    %3505 = vmatprep.subr.mxu0 0.0
    %3506 = vmatpush1.msra.mxu0 0.0
    %3507 = vmatprep.subr.mxu0 0.0
    %3508 = vmatpush1.msra.mxu0 0.0
    %3509 = vmatprep.subr.mxu0 0.0
    %3510 = vmatpush1.msra.mxu0 0.0
    %3511 = vmatprep.subr.mxu0 0.0
    %3512 = vmatpush1.msra.mxu0 0.0
    %3513 = vmatprep.subr.mxu0 0.0
    %3514 = vmatpush1.msra.mxu0 0.0
    %3515 = vmatprep.subr.mxu0 0.0
    %3516 = vmatpush1.msra.mxu0 0.0
    %3517 = vmatprep.subr.mxu0 0.0
    %3518 = vmatpush1.msra.mxu0 0.0
    %3519 = vmatprep.subr.mxu0 0.0
    %3520 = vmatpush1.msra.mxu0 0.0
    %3521 = vmatprep.mubr.f32.mxu0 0.0
    %3522 = vmatmul.mubr.f32.gmra.mrb[0].mxu0 %v3384
    %v3523 = vpop.f32.mrb[0].mxu0
    %v3524 = vadd.f32 %v3358, %v3523
    %v3525 = vpop.f32.mrb[0].mxu0
    %v3526 = vadd.f32 %v3360, %v3525
    %3527 = vdwg.mxu0
    %v3528 = vld [vmem:[%s3] sm:$0xf]
    %v3530 = vlaneseq
    %v3531 = vshrl.u32 %v3530, 7
    %v3532 = vsub.s32 0, %v3531
    %v3533 = vrot.slane %v3528, %v3532
    %v3534 = vlaneseq
    %v3535 = vshrl.u32 %v3534, 7
    %v3536 = vsub.s32 1, %v3535
    %v3537 = vrot.slane %v3528, %v3536
    %v3538 = vlaneseq
    %v3539 = vshrl.u32 %v3538, 7
    %v3540 = vsub.s32 2, %v3539
    %v3541 = vrot.slane %v3528, %v3540
    %v3542 = vlaneseq
    %v3543 = vshrl.u32 %v3542, 7
    %v3544 = vsub.s32 3, %v3543
    %v3545 = vrot.slane %v3528, %v3544
    %v3550 = vadd.f32 %v3453, %v3533
    %v3551 = vadd.f32 %v3455, %v3537
    %v3552 = vadd.f32 %v3524, %v3541
    %v3553 = vadd.f32 %v3526, %v3545
    %v3554 = vxor.u32 %v3550, 2147483648
    %v3555 = vmul.f32 %v3554, 1.442695
    %v3556 = vpow.pop %v3555
    %v3557 = vadd.f32 %v3556, 1.0
    %v3558 = vrcp.pop %v3557
    %v3559 = vmul.f32 1.0, %v3558
    %v3560 = vxor.u32 %v3551, 2147483648
    %v3561 = vmul.f32 %v3560, 1.442695
    %v3562 = vpow.pop %v3561
    %v3563 = vadd.f32 %v3562, 1.0
    %v3564 = vrcp.pop %v3563
    %v3565 = vmul.f32 1.0, %v3564
    %v3566 = vtanh.pop %v3552
    %v3567 = vxor.u32 %v3553, 2147483648
    %v3568 = vmul.f32 %v3567, 1.442695
    %v3569 = vpow.pop %v3568
    %v3570 = vadd.f32 %v3569, 1.0
    %v3571 = vrcp.pop %v3570
    %v3572 = vmul.f32 1.0, %v3571
    %v3573 = vmul.f32 %v3565, %v2820
    %v3574 = vmul.f32 %v3559, %v3566
    %v3575 = vadd.f32 %v3573, %v3574
    %v3576 = vtanh.pop %v3575
    %v3577 = vmul.f32 %v3572, %v3576
    %v3578 = vld [vmem:[#allocation11] sm:$0xff]
    %v3579 = vld [vmem:[#allocation11 + $0x8] sm:$0xff]
    %v3580 = vld [vmem:[#allocation11 + $0x10] sm:$0xff]
    %v3581 = vld [vmem:[#allocation11 + $0x18] sm:$0xff]
    %v3582 = vld [vmem:[#allocation11 + $0x20] sm:$0xff]
    %v3583 = vld [vmem:[#allocation11 + $0x28] sm:$0xff]
    %v3584 = vld [vmem:[#allocation11 + $0x30] sm:$0xff]
    %v3585 = vld [vmem:[#allocation11 + $0x38] sm:$0xff]
    %v3586 = vld [vmem:[#allocation11 + $0x40] sm:$0xff]
    %v3587 = vld [vmem:[#allocation11 + $0x48] sm:$0xff]
    %v3588 = vld [vmem:[#allocation11 + $0x50] sm:$0xff]
    %v3589 = vld [vmem:[#allocation11 + $0x58] sm:$0xff]
    %v3590 = vld [vmem:[#allocation11 + $0x60] sm:$0xff]
    %v3591 = vld [vmem:[#allocation11 + $0x68] sm:$0xff]
    %v3592 = vld [vmem:[#allocation11 + $0x70] sm:$0xff]
    %v3593 = vld [vmem:[#allocation11 + $0x78] sm:$0xff]
    %v3594 = vld [vmem:[#allocation11 + $0x80] sm:$0xff]
    %v3595 = vld [vmem:[#allocation11 + $0x88] sm:$0xff]
    %v3596 = vld [vmem:[#allocation11 + $0x90] sm:$0xff]
    %v3597 = vld [vmem:[#allocation11 + $0x98] sm:$0xff]
    %v3598 = vld [vmem:[#allocation11 + $0xa0] sm:$0xff]
    %v3599 = vld [vmem:[#allocation11 + $0xa8] sm:$0xff]
    %v3600 = vld [vmem:[#allocation11 + $0xb0] sm:$0xff]
    %v3601 = vld [vmem:[#allocation11 + $0xb8] sm:$0xff]
    %v3602 = vld [vmem:[#allocation11 + $0xc0] sm:$0xff]
    %v3603 = vld [vmem:[#allocation11 + $0xc8] sm:$0xff]
    %v3604 = vld [vmem:[#allocation11 + $0xd0] sm:$0xff]
    %v3605 = vld [vmem:[#allocation11 + $0xd8] sm:$0xff]
    %v3606 = vld [vmem:[#allocation11 + $0xe0] sm:$0xff]
    %v3607 = vld [vmem:[#allocation11 + $0xe8] sm:$0xff]
    %v3608 = vld [vmem:[#allocation11 + $0xf0] sm:$0xff]
    %v3609 = vld [vmem:[#allocation11 + $0xf8] sm:$0xff]
    %v3610 = vld [vmem:[#allocation11 + $0x100] sm:$0xff]
    %v3611 = vld [vmem:[#allocation11 + $0x108] sm:$0xff]
    %v3612 = vld [vmem:[#allocation11 + $0x110] sm:$0xff]
    %v3613 = vld [vmem:[#allocation11 + $0x118] sm:$0xff]
    %v3614 = vld [vmem:[#allocation11 + $0x120] sm:$0xff]
    %v3615 = vld [vmem:[#allocation11 + $0x128] sm:$0xff]
    %v3616 = vld [vmem:[#allocation11 + $0x130] sm:$0xff]
    %v3617 = vld [vmem:[#allocation11 + $0x138] sm:$0xff]
    %v3618 = vld [vmem:[#allocation11 + $0x140] sm:$0xff]
    %v3619 = vld [vmem:[#allocation11 + $0x148] sm:$0xff]
    %v3620 = vld [vmem:[#allocation11 + $0x150] sm:$0xff]
    %v3621 = vld [vmem:[#allocation11 + $0x158] sm:$0xff]
    %v3622 = vld [vmem:[#allocation11 + $0x160] sm:$0xff]
    %v3623 = vld [vmem:[#allocation11 + $0x168] sm:$0xff]
    %v3624 = vld [vmem:[#allocation11 + $0x170] sm:$0xff]
    %v3625 = vld [vmem:[#allocation11 + $0x178] sm:$0xff]
    %v3626 = vld [vmem:[#allocation11 + $0x180] sm:$0xff]
    %v3627 = vld [vmem:[#allocation11 + $0x188] sm:$0xff]
    %v3628 = vld [vmem:[#allocation11 + $0x190] sm:$0xff]
    %v3629 = vld [vmem:[#allocation11 + $0x198] sm:$0xff]
    %v3630 = vld [vmem:[#allocation11 + $0x1a0] sm:$0xff]
    %v3631 = vld [vmem:[#allocation11 + $0x1a8] sm:$0xff]
    %v3632 = vld [vmem:[#allocation11 + $0x1b0] sm:$0xff]
    %v3633 = vld [vmem:[#allocation11 + $0x1b8] sm:$0xff]
    %v3634 = vld [vmem:[#allocation11 + $0x1c0] sm:$0xff]
    %v3635 = vld [vmem:[#allocation11 + $0x1c8] sm:$0xff]
    %v3636 = vld [vmem:[#allocation11 + $0x1d0] sm:$0xff]
    %v3637 = vld [vmem:[#allocation11 + $0x1d8] sm:$0xff]
    %v3638 = vld [vmem:[#allocation11 + $0x1e0] sm:$0xff]
    %v3639 = vld [vmem:[#allocation11 + $0x1e8] sm:$0xff]
    %v3640 = vld [vmem:[#allocation11 + $0x1f0] sm:$0xff]
    %v3641 = vld [vmem:[#allocation11 + $0x1f8] sm:$0xff]
    %v3642 = vld [vmem:[#allocation11 + $0x200] sm:$0xff]
    %v3643 = vld [vmem:[#allocation11 + $0x208] sm:$0xff]
    %v3644 = vld [vmem:[#allocation11 + $0x210] sm:$0xff]
    %v3645 = vld [vmem:[#allocation11 + $0x218] sm:$0xff]
    %v3646 = vld [vmem:[#allocation11 + $0x220] sm:$0xff]
    %v3647 = vld [vmem:[#allocation11 + $0x228] sm:$0xff]
    %v3648 = vld [vmem:[#allocation11 + $0x230] sm:$0xff]
    %v3649 = vld [vmem:[#allocation11 + $0x238] sm:$0xff]
    %v3650 = vld [vmem:[#allocation11 + $0x240] sm:$0xff]
    %v3651 = vld [vmem:[#allocation11 + $0x248] sm:$0xff]
    %v3652 = vld [vmem:[#allocation11 + $0x250] sm:$0xff]
    %v3653 = vld [vmem:[#allocation11 + $0x258] sm:$0xff]
    %v3654 = vld [vmem:[#allocation11 + $0x260] sm:$0xff]
    %v3655 = vld [vmem:[#allocation11 + $0x268] sm:$0xff]
    %v3656 = vld [vmem:[#allocation11 + $0x270] sm:$0xff]
    %v3657 = vld [vmem:[#allocation11 + $0x278] sm:$0xff]
    %v3658 = vld [vmem:[#allocation11 + $0x280] sm:$0xff]
    %v3659 = vld [vmem:[#allocation11 + $0x288] sm:$0xff]
    %v3660 = vld [vmem:[#allocation11 + $0x290] sm:$0xff]
    %v3661 = vld [vmem:[#allocation11 + $0x298] sm:$0xff]
    %v3662 = vld [vmem:[#allocation11 + $0x2a0] sm:$0xff]
    %v3663 = vld [vmem:[#allocation11 + $0x2a8] sm:$0xff]
    %v3664 = vld [vmem:[#allocation11 + $0x2b0] sm:$0xff]
    %v3665 = vld [vmem:[#allocation11 + $0x2b8] sm:$0xff]
    %v3666 = vld [vmem:[#allocation11 + $0x2c0] sm:$0xff]
    %v3667 = vld [vmem:[#allocation11 + $0x2c8] sm:$0xff]
    %v3668 = vld [vmem:[#allocation11 + $0x2d0] sm:$0xff]
    %v3669 = vld [vmem:[#allocation11 + $0x2d8] sm:$0xff]
    %v3670 = vld [vmem:[#allocation11 + $0x2e0] sm:$0xff]
    %v3671 = vld [vmem:[#allocation11 + $0x2e8] sm:$0xff]
    %v3672 = vld [vmem:[#allocation11 + $0x2f0] sm:$0xff]
    %v3673 = vld [vmem:[#allocation11 + $0x2f8] sm:$0xff]
    %v3674 = vld [vmem:[#allocation11 + $0x300] sm:$0xff]
    %v3675 = vld [vmem:[#allocation11 + $0x308] sm:$0xff]
    %v3676 = vld [vmem:[#allocation11 + $0x310] sm:$0xff]
    %v3677 = vld [vmem:[#allocation11 + $0x318] sm:$0xff]
    %v3678 = vld [vmem:[#allocation11 + $0x320] sm:$0xff]
    %v3679 = vld [vmem:[#allocation11 + $0x328] sm:$0xff]
    %v3680 = vld [vmem:[#allocation11 + $0x330] sm:$0xff]
    %v3681 = vld [vmem:[#allocation11 + $0x338] sm:$0xff]
    %v3682 = vld [vmem:[#allocation11 + $0x340] sm:$0xff]
    %v3683 = vld [vmem:[#allocation11 + $0x348] sm:$0xff]
    %v3684 = vld [vmem:[#allocation11 + $0x350] sm:$0xff]
    %v3685 = vld [vmem:[#allocation11 + $0x358] sm:$0xff]
    %v3686 = vld [vmem:[#allocation11 + $0x360] sm:$0xff]
    %v3687 = vld [vmem:[#allocation11 + $0x368] sm:$0xff]
    %v3688 = vld [vmem:[#allocation11 + $0x370] sm:$0xff]
    %v3689 = vld [vmem:[#allocation11 + $0x378] sm:$0xff]
    %v3690 = vld [vmem:[#allocation11 + $0x380] sm:$0xff]
    %v3691 = vld [vmem:[#allocation11 + $0x388] sm:$0xff]
    %v3692 = vld [vmem:[#allocation11 + $0x390] sm:$0xff]
    %v3693 = vld [vmem:[#allocation11 + $0x398] sm:$0xff]
    %v3694 = vld [vmem:[#allocation11 + $0x3a0] sm:$0xff]
    %v3695 = vld [vmem:[#allocation11 + $0x3a8] sm:$0xff]
    %v3696 = vld [vmem:[#allocation11 + $0x3b0] sm:$0xff]
    %v3697 = vld [vmem:[#allocation11 + $0x3b8] sm:$0xff]
    %v3698 = vld [vmem:[#allocation11 + $0x3c0] sm:$0xff]
    %v3699 = vld [vmem:[#allocation11 + $0x3c8] sm:$0xff]
    %v3700 = vld [vmem:[#allocation11 + $0x3d0] sm:$0xff]
    %v3701 = vld [vmem:[#allocation11 + $0x3d8] sm:$0xff]
    %v3702 = vld [vmem:[#allocation11 + $0x3e0] sm:$0xff]
    %v3703 = vld [vmem:[#allocation11 + $0x3e8] sm:$0xff]
    %v3704 = vld [vmem:[#allocation11 + $0x3f0] sm:$0xff]
    %v3705 = vld [vmem:[#allocation11 + $0x3f8] sm:$0xff]
    %v3706 = vld [vmem:[%s5] sm:$0xf]
    %v3708 = vlaneseq
    %v3709 = vshrl.u32 %v3708, 7
    %v3710 = vsub.s32 0, %v3709
    %v3711 = vrot.slane %v3706, %v3710
    %v3712 = vlaneseq
    %v3713 = vshrl.u32 %v3712, 7
    %v3714 = vsub.s32 1, %v3713
    %v3715 = vrot.slane %v3706, %v3714
    %v3716 = vlaneseq
    %v3717 = vshrl.u32 %v3716, 7
    %v3718 = vsub.s32 2, %v3717
    %v3719 = vrot.slane %v3706, %v3718
    %v3720 = vlaneseq
    %v3721 = vshrl.u32 %v3720, 7
    %v3722 = vsub.s32 3, %v3721
    %v3723 = vrot.slane %v3706, %v3722
    %3728 = vmatprep.subr.mxu0 %v3579
    %3729 = vmatpush1.msra.mxu0 %v3578
    %3730 = vmatprep.subr.mxu0 %v3583
    %3731 = vmatpush1.msra.mxu0 %v3582
    %3732 = vmatprep.subr.mxu0 %v3587
    %3733 = vmatpush1.msra.mxu0 %v3586
    %3734 = vmatprep.subr.mxu0 %v3591
    %3735 = vmatpush1.msra.mxu0 %v3590
    %3736 = vmatprep.subr.mxu0 %v3595
    %3737 = vmatpush1.msra.mxu0 %v3594
    %3738 = vmatprep.subr.mxu0 %v3599
    %3739 = vmatpush1.msra.mxu0 %v3598
    %3740 = vmatprep.subr.mxu0 %v3603
    %3741 = vmatpush1.msra.mxu0 %v3602
    %3742 = vmatprep.subr.mxu0 %v3607
    %3743 = vmatpush1.msra.mxu0 %v3606
    %3744 = vmatprep.subr.mxu0 %v3611
    %3745 = vmatpush1.msra.mxu0 %v3610
    %3746 = vmatprep.subr.mxu0 %v3615
    %3747 = vmatpush1.msra.mxu0 %v3614
    %3748 = vmatprep.subr.mxu0 %v3619
    %3749 = vmatpush1.msra.mxu0 %v3618
    %3750 = vmatprep.subr.mxu0 %v3623
    %3751 = vmatpush1.msra.mxu0 %v3622
    %3752 = vmatprep.subr.mxu0 %v3627
    %3753 = vmatpush1.msra.mxu0 %v3626
    %3754 = vmatprep.subr.mxu0 %v3631
    %3755 = vmatpush1.msra.mxu0 %v3630
    %3756 = vmatprep.subr.mxu0 %v3635
    %3757 = vmatpush1.msra.mxu0 %v3634
    %3758 = vmatprep.subr.mxu0 %v3639
    %3759 = vmatpush1.msra.mxu0 %v3638
    %3760 = vmatprep.subr.mxu0 %v3643
    %3761 = vmatpush1.msra.mxu0 %v3642
    %3762 = vmatprep.subr.mxu0 %v3647
    %3763 = vmatpush1.msra.mxu0 %v3646
    %3764 = vmatprep.subr.mxu0 %v3651
    %3765 = vmatpush1.msra.mxu0 %v3650
    %3766 = vmatprep.subr.mxu0 %v3655
    %3767 = vmatpush1.msra.mxu0 %v3654
    %3768 = vmatprep.subr.mxu0 %v3659
    %3769 = vmatpush1.msra.mxu0 %v3658
    %3770 = vmatprep.subr.mxu0 %v3663
    %3771 = vmatpush1.msra.mxu0 %v3662
    %3772 = vmatprep.subr.mxu0 %v3667
    %3773 = vmatpush1.msra.mxu0 %v3666
    %3774 = vmatprep.subr.mxu0 %v3671
    %3775 = vmatpush1.msra.mxu0 %v3670
    %3776 = vmatprep.subr.mxu0 %v3675
    %3777 = vmatpush1.msra.mxu0 %v3674
    %3778 = vmatprep.subr.mxu0 %v3679
    %3779 = vmatpush1.msra.mxu0 %v3678
    %3780 = vmatprep.subr.mxu0 %v3683
    %3781 = vmatpush1.msra.mxu0 %v3682
    %3782 = vmatprep.subr.mxu0 %v3687
    %3783 = vmatpush1.msra.mxu0 %v3686
    %3784 = vmatprep.subr.mxu0 %v3691
    %3785 = vmatpush1.msra.mxu0 %v3690
    %3786 = vmatprep.subr.mxu0 %v3695
    %3787 = vmatpush1.msra.mxu0 %v3694
    %3788 = vmatprep.subr.mxu0 %v3699
    %3789 = vmatpush1.msra.mxu0 %v3698
    %3790 = vmatprep.subr.mxu0 %v3703
    %3791 = vmatpush1.msra.mxu0 %v3702
    %3792 = vmatprep.mubr.f32.mxu0 %v3138
    %3793 = vmatmul.mubr.f32.gmra.mrb[0].mxu0 %v3577
    %v3794 = vpop.f32.mrb[0].mxu0
    %v3795 = vadd.f32 %v3711, %v3794
    %v3796 = vpop.f32.mrb[0].mxu0
    %v3797 = vadd.f32 %v3715, %v3796
    %3798 = vdwg.mxu0
    %3799 = vmatprep.subr.mxu0 %v3581
    %3800 = vmatpush1.msra.mxu0 %v3580
    %3801 = vmatprep.subr.mxu0 %v3585
    %3802 = vmatpush1.msra.mxu0 %v3584
    %3803 = vmatprep.subr.mxu0 %v3589
    %3804 = vmatpush1.msra.mxu0 %v3588
    %3805 = vmatprep.subr.mxu0 %v3593
    %3806 = vmatpush1.msra.mxu0 %v3592
    %3807 = vmatprep.subr.mxu0 %v3597
    %3808 = vmatpush1.msra.mxu0 %v3596
    %3809 = vmatprep.subr.mxu0 %v3601
    %3810 = vmatpush1.msra.mxu0 %v3600
    %3811 = vmatprep.subr.mxu0 %v3605
    %3812 = vmatpush1.msra.mxu0 %v3604
    %3813 = vmatprep.subr.mxu0 %v3609
    %3814 = vmatpush1.msra.mxu0 %v3608
    %3815 = vmatprep.subr.mxu0 %v3613
    %3816 = vmatpush1.msra.mxu0 %v3612
    %3817 = vmatprep.subr.mxu0 %v3617
    %3818 = vmatpush1.msra.mxu0 %v3616
    %3819 = vmatprep.subr.mxu0 %v3621
    %3820 = vmatpush1.msra.mxu0 %v3620
    %3821 = vmatprep.subr.mxu0 %v3625
    %3822 = vmatpush1.msra.mxu0 %v3624
    %3823 = vmatprep.subr.mxu0 %v3629
    %3824 = vmatpush1.msra.mxu0 %v3628
    %3825 = vmatprep.subr.mxu0 %v3633
    %3826 = vmatpush1.msra.mxu0 %v3632
    %3827 = vmatprep.subr.mxu0 %v3637
    %3828 = vmatpush1.msra.mxu0 %v3636
    %3829 = vmatprep.subr.mxu0 %v3641
    %3830 = vmatpush1.msra.mxu0 %v3640
    %3831 = vmatprep.subr.mxu0 %v3645
    %3832 = vmatpush1.msra.mxu0 %v3644
    %3833 = vmatprep.subr.mxu0 %v3649
    %3834 = vmatpush1.msra.mxu0 %v3648
    %3835 = vmatprep.subr.mxu0 %v3653
    %3836 = vmatpush1.msra.mxu0 %v3652
    %3837 = vmatprep.subr.mxu0 %v3657
    %3838 = vmatpush1.msra.mxu0 %v3656
    %3839 = vmatprep.subr.mxu0 %v3661
    %3840 = vmatpush1.msra.mxu0 %v3660
    %3841 = vmatprep.subr.mxu0 %v3665
    %3842 = vmatpush1.msra.mxu0 %v3664
    %3843 = vmatprep.subr.mxu0 %v3669
    %3844 = vmatpush1.msra.mxu0 %v3668
    %3845 = vmatprep.subr.mxu0 %v3673
    %3846 = vmatpush1.msra.mxu0 %v3672
    %3847 = vmatprep.subr.mxu0 %v3677
    %3848 = vmatpush1.msra.mxu0 %v3676
    %3849 = vmatprep.subr.mxu0 %v3681
    %3850 = vmatpush1.msra.mxu0 %v3680
    %3851 = vmatprep.subr.mxu0 %v3685
    %3852 = vmatpush1.msra.mxu0 %v3684
    %3853 = vmatprep.subr.mxu0 %v3689
    %3854 = vmatpush1.msra.mxu0 %v3688
    %3855 = vmatprep.subr.mxu0 %v3693
    %3856 = vmatpush1.msra.mxu0 %v3692
    %3857 = vmatprep.subr.mxu0 %v3697
    %3858 = vmatpush1.msra.mxu0 %v3696
    %3859 = vmatprep.subr.mxu0 %v3701
    %3860 = vmatpush1.msra.mxu0 %v3700
    %3861 = vmatprep.subr.mxu0 %v3705
    %3862 = vmatpush1.msra.mxu0 %v3704
    %3863 = vmatprep.mubr.f32.mxu0 %v3138
    %3864 = vmatmul.mubr.f32.gmra.mrb[0].mxu0 %v3577
    %v3865 = vpop.f32.mrb[0].mxu0
    %v3866 = vadd.f32 %v3719, %v3865
    %v3867 = vpop.f32.mrb[0].mxu0
    %v3868 = vadd.f32 %v3723, %v3867
    %3869 = vdwg.mxu0
    %v3870 = vxor.u32 %v3795, 2147483648
    %v3871 = vmul.f32 %v3870, 1.442695
    %v3872 = vpow.pop %v3871
    %v3873 = vadd.f32 %v3872, 1.0
    %v3874 = vrcp.pop %v3873
    %v3875 = vmul.f32 1.0, %v3874
    %v3876 = vxor.u32 %v3797, 2147483648
    %v3877 = vmul.f32 %v3876, 1.442695
    %v3878 = vpow.pop %v3877
    %v3879 = vadd.f32 %v3878, 1.0
    %v3880 = vrcp.pop %v3879
    %v3881 = vmul.f32 1.0, %v3880
    %v3882 = vtanh.pop %v3866
    %v3883 = vxor.u32 %v3868, 2147483648
    %v3884 = vmul.f32 %v3883, 1.442695
    %v3885 = vpow.pop %v3884
    %v3886 = vadd.f32 %v3885, 1.0
    %v3887 = vrcp.pop %v3886
    %v3888 = vmul.f32 1.0, %v3887
    %v3889 = vmul.f32 %v3881, %v3136
    %v3890 = vmul.f32 %v3875, %v3882
    %v3891 = vadd.f32 %v3889, %v3890
    %v3892 = vtanh.pop %v3891
    %v3893 = vmul.f32 %v3888, %v3892
    %3894 = vst [vmem:[#allocation4 + $0x20] sm:$0xff] %v3893
    %v3895 = vld [vmem:[#allocation5 + $0x5] sm:$0x1]
    %v3896 = vld [vmem:[#allocation5 + $0xd] sm:$0x1]
    %v3897 = vld [vmem:[#allocation5 + $0x15] sm:$0x1]
    %v3898 = vld [vmem:[#allocation5 + $0x1d] sm:$0x1]
    %v3899 = vld [vmem:[#allocation5 + $0x25] sm:$0x1]
    %v3900 = vld [vmem:[#allocation5 + $0x2d] sm:$0x1]
    %v3901 = vld [vmem:[#allocation5 + $0x35] sm:$0x1]
    %v3902 = vld [vmem:[#allocation5 + $0x3d] sm:$0x1]
    %v3903 = vld [vmem:[#allocation8] sm:$0xff]
    %v3904 = vld [vmem:[#allocation8 + $0x8] sm:$0xff]
    %v3905 = vld [vmem:[#allocation8 + $0x10] sm:$0xff]
    %v3906 = vld [vmem:[#allocation8 + $0x18] sm:$0xff]
    %v3907 = vld [vmem:[#allocation8 + $0x20] sm:$0xff]
    %v3908 = vld [vmem:[#allocation8 + $0x28] sm:$0xff]
    %v3909 = vld [vmem:[#allocation8 + $0x30] sm:$0xff]
    %v3910 = vld [vmem:[#allocation8 + $0x38] sm:$0xff]
    %v3911 = vld [vmem:[#allocation10] sm:$0xff]
    %v3912 = vld [vmem:[#allocation10 + $0x8] sm:$0xff]
    %v3913 = vld [vmem:[#allocation10 + $0x10] sm:$0xff]
    %v3914 = vld [vmem:[#allocation10 + $0x18] sm:$0xff]
    %v3915 = vld [vmem:[#allocation10 + $0x20] sm:$0xff]
    %v3916 = vld [vmem:[#allocation10 + $0x28] sm:$0xff]
    %v3917 = vld [vmem:[#allocation10 + $0x30] sm:$0xff]
    %v3918 = vld [vmem:[#allocation10 + $0x38] sm:$0xff]
    %v3919 = vld [vmem:[#allocation10 + $0x40] sm:$0xff]
    %v3920 = vld [vmem:[#allocation10 + $0x48] sm:$0xff]
    %v3921 = vld [vmem:[#allocation10 + $0x50] sm:$0xff]
    %v3922 = vld [vmem:[#allocation10 + $0x58] sm:$0xff]
    %v3923 = vld [vmem:[#allocation10 + $0x60] sm:$0xff]
    %v3924 = vld [vmem:[#allocation10 + $0x68] sm:$0xff]
    %v3925 = vld [vmem:[#allocation10 + $0x70] sm:$0xff]
    %v3926 = vld [vmem:[#allocation10 + $0x78] sm:$0xff]
    %v3927 = vld [vmem:[#allocation10 + $0x80] sm:$0xff]
    %v3928 = vld [vmem:[#allocation10 + $0x88] sm:$0xff]
    %v3929 = vld [vmem:[#allocation10 + $0x90] sm:$0xff]
    %v3930 = vld [vmem:[#allocation10 + $0x98] sm:$0xff]
    %v3931 = vld [vmem:[#allocation10 + $0xa0] sm:$0xff]
    %v3932 = vld [vmem:[#allocation10 + $0xa8] sm:$0xff]
    %v3933 = vld [vmem:[#allocation10 + $0xb0] sm:$0xff]
    %v3934 = vld [vmem:[#allocation10 + $0xb8] sm:$0xff]
    %v3935 = vld [vmem:[#allocation10 + $0xc0] sm:$0xff]
    %v3936 = vld [vmem:[#allocation10 + $0xc8] sm:$0xff]
    %v3937 = vld [vmem:[#allocation10 + $0xd0] sm:$0xff]
    %v3938 = vld [vmem:[#allocation10 + $0xd8] sm:$0xff]
    %v3939 = vld [vmem:[#allocation10 + $0xe0] sm:$0xff]
    %v3940 = vld [vmem:[#allocation10 + $0xe8] sm:$0xff]
    %v3941 = vld [vmem:[#allocation10 + $0xf0] sm:$0xff]
    %v3942 = vld [vmem:[#allocation10 + $0xf8] sm:$0xff]
    %v3943 = vld [vmem:[#allocation10 + $0x100] sm:$0xff]
    %v3944 = vld [vmem:[#allocation10 + $0x108] sm:$0xff]
    %v3945 = vld [vmem:[#allocation10 + $0x110] sm:$0xff]
    %v3946 = vld [vmem:[#allocation10 + $0x118] sm:$0xff]
    %v3947 = vld [vmem:[#allocation10 + $0x120] sm:$0xff]
    %v3948 = vld [vmem:[#allocation10 + $0x128] sm:$0xff]
    %v3949 = vld [vmem:[#allocation10 + $0x130] sm:$0xff]
    %v3950 = vld [vmem:[#allocation10 + $0x138] sm:$0xff]
    %v3951 = vld [vmem:[#allocation10 + $0x140] sm:$0xff]
    %v3952 = vld [vmem:[#allocation10 + $0x148] sm:$0xff]
    %v3953 = vld [vmem:[#allocation10 + $0x150] sm:$0xff]
    %v3954 = vld [vmem:[#allocation10 + $0x158] sm:$0xff]
    %v3955 = vld [vmem:[#allocation10 + $0x160] sm:$0xff]
    %v3956 = vld [vmem:[#allocation10 + $0x168] sm:$0xff]
    %v3957 = vld [vmem:[#allocation10 + $0x170] sm:$0xff]
    %v3958 = vld [vmem:[#allocation10 + $0x178] sm:$0xff]
    %v3959 = vld [vmem:[#allocation10 + $0x180] sm:$0xff]
    %v3960 = vld [vmem:[#allocation10 + $0x188] sm:$0xff]
    %v3961 = vld [vmem:[#allocation10 + $0x190] sm:$0xff]
    %v3962 = vld [vmem:[#allocation10 + $0x198] sm:$0xff]
    %v3963 = vld [vmem:[#allocation10 + $0x1a0] sm:$0xff]
    %v3964 = vld [vmem:[#allocation10 + $0x1a8] sm:$0xff]
    %v3965 = vld [vmem:[#allocation10 + $0x1b0] sm:$0xff]
    %v3966 = vld [vmem:[#allocation10 + $0x1b8] sm:$0xff]
    %v3967 = vld [vmem:[#allocation10 + $0x1c0] sm:$0xff]
    %v3968 = vld [vmem:[#allocation10 + $0x1c8] sm:$0xff]
    %v3969 = vld [vmem:[#allocation10 + $0x1d0] sm:$0xff]
    %v3970 = vld [vmem:[#allocation10 + $0x1d8] sm:$0xff]
    %v3971 = vld [vmem:[#allocation10 + $0x1e0] sm:$0xff]
    %v3972 = vld [vmem:[#allocation10 + $0x1e8] sm:$0xff]
    %v3973 = vld [vmem:[#allocation10 + $0x1f0] sm:$0xff]
    %v3974 = vld [vmem:[#allocation10 + $0x1f8] sm:$0xff]
    %3975 = vmatprep.subr.mxu0 %v3912
    %3976 = vmatpush1.msra.mxu0 %v3911
    %3977 = vmatprep.subr.mxu0 %v3916
    %3978 = vmatpush1.msra.mxu0 %v3915
    %3979 = vmatprep.subr.mxu0 %v3920
    %3980 = vmatpush1.msra.mxu0 %v3919
    %3981 = vmatprep.subr.mxu0 %v3924
    %3982 = vmatpush1.msra.mxu0 %v3923
    %3983 = vmatprep.subr.mxu0 %v3928
    %3984 = vmatpush1.msra.mxu0 %v3927
    %3985 = vmatprep.subr.mxu0 %v3932
    %3986 = vmatpush1.msra.mxu0 %v3931
    %3987 = vmatprep.subr.mxu0 %v3936
    %3988 = vmatpush1.msra.mxu0 %v3935
    %3989 = vmatprep.subr.mxu0 %v3940
    %3990 = vmatpush1.msra.mxu0 %v3939
    %3991 = vmatprep.subr.mxu0 %v3944
    %3992 = vmatpush1.msra.mxu0 %v3943
    %3993 = vmatprep.subr.mxu0 %v3948
    %3994 = vmatpush1.msra.mxu0 %v3947
    %3995 = vmatprep.subr.mxu0 %v3952
    %3996 = vmatpush1.msra.mxu0 %v3951
    %3997 = vmatprep.subr.mxu0 %v3956
    %3998 = vmatpush1.msra.mxu0 %v3955
    %3999 = vmatprep.subr.mxu0 %v3960
    %4000 = vmatpush1.msra.mxu0 %v3959
    %4001 = vmatprep.subr.mxu0 %v3964
    %4002 = vmatpush1.msra.mxu0 %v3963
    %4003 = vmatprep.subr.mxu0 %v3968
    %4004 = vmatpush1.msra.mxu0 %v3967
    %4005 = vmatprep.subr.mxu0 %v3972
    %4006 = vmatpush1.msra.mxu0 %v3971
    %4007 = vmatprep.subr.mxu0 0.0
    %4008 = vmatpush1.msra.mxu0 0.0
    %4009 = vmatprep.subr.mxu0 0.0
    %4010 = vmatpush1.msra.mxu0 0.0
    %4011 = vmatprep.subr.mxu0 0.0
    %4012 = vmatpush1.msra.mxu0 0.0
    %4013 = vmatprep.subr.mxu0 0.0
    %4014 = vmatpush1.msra.mxu0 0.0
    %4015 = vmatprep.subr.mxu0 0.0
    %4016 = vmatpush1.msra.mxu0 0.0
    %4017 = vmatprep.subr.mxu0 0.0
    %4018 = vmatpush1.msra.mxu0 0.0
    %4019 = vmatprep.subr.mxu0 0.0
    %4020 = vmatpush1.msra.mxu0 0.0
    %4021 = vmatprep.subr.mxu0 0.0
    %4022 = vmatpush1.msra.mxu0 0.0
    %4023 = vmatprep.subr.mxu0 0.0
    %4024 = vmatpush1.msra.mxu0 0.0
    %4025 = vmatprep.subr.mxu0 0.0
    %4026 = vmatpush1.msra.mxu0 0.0
    %4027 = vmatprep.subr.mxu0 0.0
    %4028 = vmatpush1.msra.mxu0 0.0
    %4029 = vmatprep.subr.mxu0 0.0
    %4030 = vmatpush1.msra.mxu0 0.0
    %4031 = vmatprep.subr.mxu0 0.0
    %4032 = vmatpush1.msra.mxu0 0.0
    %4033 = vmatprep.subr.mxu0 0.0
    %4034 = vmatpush1.msra.mxu0 0.0
    %4035 = vmatprep.subr.mxu0 0.0
    %4036 = vmatpush1.msra.mxu0 0.0
    %4037 = vmatprep.subr.mxu0 0.0
    %4038 = vmatpush1.msra.mxu0 0.0
    %4039 = vmatprep.mubr.f32.mxu0 0.0
    %4040 = vmatmul.mubr.f32.gmra.mrb[0].mxu0 %v3577
    %v4041 = vpop.f32.mrb[0].mxu0
    %v4042 = vadd.f32 0.0, %v4041
    %v4043 = vpop.f32.mrb[0].mxu0
    %v4044 = vadd.f32 0.0, %v4043
    %4045 = vdwg.mxu0
    %4046 = vmatprep.subr.mxu0 %v3914
    %4047 = vmatpush1.msra.mxu0 %v3913
    %4048 = vmatprep.subr.mxu0 %v3918
    %4049 = vmatpush1.msra.mxu0 %v3917
    %4050 = vmatprep.subr.mxu0 %v3922
    %4051 = vmatpush1.msra.mxu0 %v3921
    %4052 = vmatprep.subr.mxu0 %v3926
    %4053 = vmatpush1.msra.mxu0 %v3925
    %4054 = vmatprep.subr.mxu0 %v3930
    %4055 = vmatpush1.msra.mxu0 %v3929
    %4056 = vmatprep.subr.mxu0 %v3934
    %4057 = vmatpush1.msra.mxu0 %v3933
    %4058 = vmatprep.subr.mxu0 %v3938
    %4059 = vmatpush1.msra.mxu0 %v3937
    %4060 = vmatprep.subr.mxu0 %v3942
    %4061 = vmatpush1.msra.mxu0 %v3941
    %4062 = vmatprep.subr.mxu0 %v3946
    %4063 = vmatpush1.msra.mxu0 %v3945
    %4064 = vmatprep.subr.mxu0 %v3950
    %4065 = vmatpush1.msra.mxu0 %v3949
    %4066 = vmatprep.subr.mxu0 %v3954
    %4067 = vmatpush1.msra.mxu0 %v3953
    %4068 = vmatprep.subr.mxu0 %v3958
    %4069 = vmatpush1.msra.mxu0 %v3957
    %4070 = vmatprep.subr.mxu0 %v3962
    %4071 = vmatpush1.msra.mxu0 %v3961
    %4072 = vmatprep.subr.mxu0 %v3966
    %4073 = vmatpush1.msra.mxu0 %v3965
    %4074 = vmatprep.subr.mxu0 %v3970
    %4075 = vmatpush1.msra.mxu0 %v3969
    %4076 = vmatprep.subr.mxu0 %v3974
    %4077 = vmatpush1.msra.mxu0 %v3973
    %4078 = vmatprep.subr.mxu0 0.0
    %4079 = vmatpush1.msra.mxu0 0.0
    %4080 = vmatprep.subr.mxu0 0.0
    %4081 = vmatpush1.msra.mxu0 0.0
    %4082 = vmatprep.subr.mxu0 0.0
    %4083 = vmatpush1.msra.mxu0 0.0
    %4084 = vmatprep.subr.mxu0 0.0
    %4085 = vmatpush1.msra.mxu0 0.0
    %4086 = vmatprep.subr.mxu0 0.0
    %4087 = vmatpush1.msra.mxu0 0.0
    %4088 = vmatprep.subr.mxu0 0.0
    %4089 = vmatpush1.msra.mxu0 0.0
    %4090 = vmatprep.subr.mxu0 0.0
    %4091 = vmatpush1.msra.mxu0 0.0
    %4092 = vmatprep.subr.mxu0 0.0
    %4093 = vmatpush1.msra.mxu0 0.0
    %4094 = vmatprep.subr.mxu0 0.0
    %4095 = vmatpush1.msra.mxu0 0.0
    %4096 = vmatprep.subr.mxu0 0.0
    %4097 = vmatpush1.msra.mxu0 0.0
    %4098 = vmatprep.subr.mxu0 0.0
    %4099 = vmatpush1.msra.mxu0 0.0
    %4100 = vmatprep.subr.mxu0 0.0
    %4101 = vmatpush1.msra.mxu0 0.0
    %4102 = vmatprep.subr.mxu0 0.0
    %4103 = vmatpush1.msra.mxu0 0.0
    %4104 = vmatprep.subr.mxu0 0.0
    %4105 = vmatpush1.msra.mxu0 0.0
    %4106 = vmatprep.subr.mxu0 0.0
    %4107 = vmatpush1.msra.mxu0 0.0
    %4108 = vmatprep.subr.mxu0 0.0
    %4109 = vmatpush1.msra.mxu0 0.0
    %4110 = vmatprep.mubr.f32.mxu0 0.0
    %4111 = vmatmul.mubr.f32.gmra.mrb[0].mxu0 %v3577
    %v4112 = vpop.f32.mrb[0].mxu0
    %v4113 = vadd.f32 0.0, %v4112
    %v4114 = vpop.f32.mrb[0].mxu0
    %v4115 = vadd.f32 0.0, %v4114
    %4116 = vdwg.mxu0
    %v4125 = vrot.slane %v3896, 7
    %v4126 = vsel %vm343, %v4125, %v3895
    %v4127 = vrot.slane %v3897, 6
    %v4128 = vsel %vm346, %v4127, %v4126
    %v4129 = vrot.slane %v3898, 5
    %v4130 = vsel %vm349, %v4129, %v4128
    %v4131 = vrot.slane %v3899, 4
    %v4132 = vsel %vm352, %v4131, %v4130
    %v4133 = vrot.slane %v3900, 3
    %v4134 = vsel %vm355, %v4133, %v4132
    %v4135 = vrot.slane %v3901, 2
    %v4136 = vsel %vm358, %v4135, %v4134
    %v4137 = vrot.slane %v3902, 1
    %v4138 = vsel %vm361, %v4137, %v4136
    %v4139 = vsel %vm363, %v4138, 0
    %4141 = vmatprep.subr.mxu0 %v3904
    %4142 = vmatpush1.msra.mxu0 %v3903
    %4143 = vmatprep.subr.mxu0 %v3908
    %4144 = vmatpush1.msra.mxu0 %v3907
    %4145 = vmatprep.subr.mxu0 0.0
    %4146 = vmatpush1.msra.mxu0 0.0
    %4147 = vmatprep.subr.mxu0 0.0
    %4148 = vmatpush1.msra.mxu0 0.0
    %4149 = vmatprep.subr.mxu0 0.0
    %4150 = vmatpush1.msra.mxu0 0.0
    %4151 = vmatprep.subr.mxu0 0.0
    %4152 = vmatpush1.msra.mxu0 0.0
    %4153 = vmatprep.subr.mxu0 0.0
    %4154 = vmatpush1.msra.mxu0 0.0
    %4155 = vmatprep.subr.mxu0 0.0
    %4156 = vmatpush1.msra.mxu0 0.0
    %4157 = vmatprep.subr.mxu0 0.0
    %4158 = vmatpush1.msra.mxu0 0.0
    %4159 = vmatprep.subr.mxu0 0.0
    %4160 = vmatpush1.msra.mxu0 0.0
    %4161 = vmatprep.subr.mxu0 0.0
    %4162 = vmatpush1.msra.mxu0 0.0
    %4163 = vmatprep.subr.mxu0 0.0
    %4164 = vmatpush1.msra.mxu0 0.0
    %4165 = vmatprep.subr.mxu0 0.0
    %4166 = vmatpush1.msra.mxu0 0.0
    %4167 = vmatprep.subr.mxu0 0.0
    %4168 = vmatpush1.msra.mxu0 0.0
    %4169 = vmatprep.subr.mxu0 0.0
    %4170 = vmatpush1.msra.mxu0 0.0
    %4171 = vmatprep.subr.mxu0 0.0
    %4172 = vmatpush1.msra.mxu0 0.0
    %4173 = vmatprep.subr.mxu0 0.0
    %4174 = vmatpush1.msra.mxu0 0.0
    %4175 = vmatprep.subr.mxu0 0.0
    %4176 = vmatpush1.msra.mxu0 0.0
    %4177 = vmatprep.subr.mxu0 0.0
    %4178 = vmatpush1.msra.mxu0 0.0
    %4179 = vmatprep.subr.mxu0 0.0
    %4180 = vmatpush1.msra.mxu0 0.0
    %4181 = vmatprep.subr.mxu0 0.0
    %4182 = vmatpush1.msra.mxu0 0.0
    %4183 = vmatprep.subr.mxu0 0.0
    %4184 = vmatpush1.msra.mxu0 0.0
    %4185 = vmatprep.subr.mxu0 0.0
    %4186 = vmatpush1.msra.mxu0 0.0
    %4187 = vmatprep.subr.mxu0 0.0
    %4188 = vmatpush1.msra.mxu0 0.0
    %4189 = vmatprep.subr.mxu0 0.0
    %4190 = vmatpush1.msra.mxu0 0.0
    %4191 = vmatprep.subr.mxu0 0.0
    %4192 = vmatpush1.msra.mxu0 0.0
    %4193 = vmatprep.subr.mxu0 0.0
    %4194 = vmatpush1.msra.mxu0 0.0
    %4195 = vmatprep.subr.mxu0 0.0
    %4196 = vmatpush1.msra.mxu0 0.0
    %4197 = vmatprep.subr.mxu0 0.0
    %4198 = vmatpush1.msra.mxu0 0.0
    %4199 = vmatprep.subr.mxu0 0.0
    %4200 = vmatpush1.msra.mxu0 0.0
    %4201 = vmatprep.subr.mxu0 0.0
    %4202 = vmatpush1.msra.mxu0 0.0
    %4203 = vmatprep.subr.mxu0 0.0
    %4204 = vmatpush1.msra.mxu0 0.0
    %4205 = vmatprep.mubr.f32.mxu0 0.0
    %4206 = vmatmul.mubr.f32.gmra.mrb[0].mxu0 %v4139
    %v4207 = vpop.f32.mrb[0].mxu0
    %v4208 = vadd.f32 %v4042, %v4207
    %v4209 = vpop.f32.mrb[0].mxu0
    %v4210 = vadd.f32 %v4044, %v4209
    %4211 = vdwg.mxu0
    %4212 = vmatprep.subr.mxu0 %v3906
    %4213 = vmatpush1.msra.mxu0 %v3905
    %4214 = vmatprep.subr.mxu0 %v3910
    %4215 = vmatpush1.msra.mxu0 %v3909
    %4216 = vmatprep.subr.mxu0 0.0
    %4217 = vmatpush1.msra.mxu0 0.0
    %4218 = vmatprep.subr.mxu0 0.0
    %4219 = vmatpush1.msra.mxu0 0.0
    %4220 = vmatprep.subr.mxu0 0.0
    %4221 = vmatpush1.msra.mxu0 0.0
    %4222 = vmatprep.subr.mxu0 0.0
    %4223 = vmatpush1.msra.mxu0 0.0
    %4224 = vmatprep.subr.mxu0 0.0
    %4225 = vmatpush1.msra.mxu0 0.0
    %4226 = vmatprep.subr.mxu0 0.0
    %4227 = vmatpush1.msra.mxu0 0.0
    %4228 = vmatprep.subr.mxu0 0.0
    %4229 = vmatpush1.msra.mxu0 0.0
    %4230 = vmatprep.subr.mxu0 0.0
    %4231 = vmatpush1.msra.mxu0 0.0
    %4232 = vmatprep.subr.mxu0 0.0
    %4233 = vmatpush1.msra.mxu0 0.0
    %4234 = vmatprep.subr.mxu0 0.0
    %4235 = vmatpush1.msra.mxu0 0.0
    %4236 = vmatprep.subr.mxu0 0.0
    %4237 = vmatpush1.msra.mxu0 0.0
    %4238 = vmatprep.subr.mxu0 0.0
    %4239 = vmatpush1.msra.mxu0 0.0
    %4240 = vmatprep.subr.mxu0 0.0
    %4241 = vmatpush1.msra.mxu0 0.0
    %4242 = vmatprep.subr.mxu0 0.0
    %4243 = vmatpush1.msra.mxu0 0.0
    %4244 = vmatprep.subr.mxu0 0.0
    %4245 = vmatpush1.msra.mxu0 0.0
    %4246 = vmatprep.subr.mxu0 0.0
    %4247 = vmatpush1.msra.mxu0 0.0
    %4248 = vmatprep.subr.mxu0 0.0
    %4249 = vmatpush1.msra.mxu0 0.0
    %4250 = vmatprep.subr.mxu0 0.0
    %4251 = vmatpush1.msra.mxu0 0.0
    %4252 = vmatprep.subr.mxu0 0.0
    %4253 = vmatpush1.msra.mxu0 0.0
    %4254 = vmatprep.subr.mxu0 0.0
    %4255 = vmatpush1.msra.mxu0 0.0
    %4256 = vmatprep.subr.mxu0 0.0
    %4257 = vmatpush1.msra.mxu0 0.0
    %4258 = vmatprep.subr.mxu0 0.0
    %4259 = vmatpush1.msra.mxu0 0.0
    %4260 = vmatprep.subr.mxu0 0.0
    %4261 = vmatpush1.msra.mxu0 0.0
    %4262 = vmatprep.subr.mxu0 0.0
    %4263 = vmatpush1.msra.mxu0 0.0
    %4264 = vmatprep.subr.mxu0 0.0
    %4265 = vmatpush1.msra.mxu0 0.0
    %4266 = vmatprep.subr.mxu0 0.0
    %4267 = vmatpush1.msra.mxu0 0.0
    %4268 = vmatprep.subr.mxu0 0.0
    %4269 = vmatpush1.msra.mxu0 0.0
    %4270 = vmatprep.subr.mxu0 0.0
    %4271 = vmatpush1.msra.mxu0 0.0
    %4272 = vmatprep.subr.mxu0 0.0
    %4273 = vmatpush1.msra.mxu0 0.0
    %4274 = vmatprep.subr.mxu0 0.0
    %4275 = vmatpush1.msra.mxu0 0.0
    %4276 = vmatprep.mubr.f32.mxu0 0.0
    %4277 = vmatmul.mubr.f32.gmra.mrb[0].mxu0 %v4139
    %v4278 = vpop.f32.mrb[0].mxu0
    %v4279 = vadd.f32 %v4113, %v4278
    %v4280 = vpop.f32.mrb[0].mxu0
    %v4281 = vadd.f32 %v4115, %v4280
    %4282 = vdwg.mxu0
    %v4283 = vld [vmem:[%s3] sm:$0xf]
    %v4285 = vlaneseq
    %v4286 = vshrl.u32 %v4285, 7
    %v4287 = vsub.s32 0, %v4286
    %v4288 = vrot.slane %v4283, %v4287
    %v4289 = vlaneseq
    %v4290 = vshrl.u32 %v4289, 7
    %v4291 = vsub.s32 1, %v4290
    %v4292 = vrot.slane %v4283, %v4291
    %v4293 = vlaneseq
    %v4294 = vshrl.u32 %v4293, 7
    %v4295 = vsub.s32 2, %v4294
    %v4296 = vrot.slane %v4283, %v4295
    %v4297 = vlaneseq
    %v4298 = vshrl.u32 %v4297, 7
    %v4299 = vsub.s32 3, %v4298
    %v4300 = vrot.slane %v4283, %v4299
    %v4305 = vadd.f32 %v4208, %v4288
    %v4306 = vadd.f32 %v4210, %v4292
    %v4307 = vadd.f32 %v4279, %v4296
    %v4308 = vadd.f32 %v4281, %v4300
    %v4309 = vxor.u32 %v4305, 2147483648
    %v4310 = vmul.f32 %v4309, 1.442695
    %v4311 = vpow.pop %v4310
    %v4312 = vadd.f32 %v4311, 1.0
    %v4313 = vrcp.pop %v4312
    %v4314 = vmul.f32 1.0, %v4313
    %v4315 = vxor.u32 %v4306, 2147483648
    %v4316 = vmul.f32 %v4315, 1.442695
    %v4317 = vpow.pop %v4316
    %v4318 = vadd.f32 %v4317, 1.0
    %v4319 = vrcp.pop %v4318
    %v4320 = vmul.f32 1.0, %v4319
    %v4321 = vtanh.pop %v4307
    %v4322 = vxor.u32 %v4308, 2147483648
    %v4323 = vmul.f32 %v4322, 1.442695
    %v4324 = vpow.pop %v4323
    %v4325 = vadd.f32 %v4324, 1.0
    %v4326 = vrcp.pop %v4325
    %v4327 = vmul.f32 1.0, %v4326
    %v4328 = vmul.f32 %v4320, %v3575
    %v4329 = vmul.f32 %v4314, %v4321
    %v4330 = vadd.f32 %v4328, %v4329
    %v4331 = vtanh.pop %v4330
    %v4332 = vmul.f32 %v4327, %v4331
    %v4333 = vld [vmem:[#allocation11] sm:$0xff]
    %v4334 = vld [vmem:[#allocation11 + $0x8] sm:$0xff]
    %v4335 = vld [vmem:[#allocation11 + $0x10] sm:$0xff]
    %v4336 = vld [vmem:[#allocation11 + $0x18] sm:$0xff]
    %v4337 = vld [vmem:[#allocation11 + $0x20] sm:$0xff]
    %v4338 = vld [vmem:[#allocation11 + $0x28] sm:$0xff]
    %v4339 = vld [vmem:[#allocation11 + $0x30] sm:$0xff]
    %v4340 = vld [vmem:[#allocation11 + $0x38] sm:$0xff]
    %v4341 = vld [vmem:[#allocation11 + $0x40] sm:$0xff]
    %v4342 = vld [vmem:[#allocation11 + $0x48] sm:$0xff]
    %v4343 = vld [vmem:[#allocation11 + $0x50] sm:$0xff]
    %v4344 = vld [vmem:[#allocation11 + $0x58] sm:$0xff]
    %v4345 = vld [vmem:[#allocation11 + $0x60] sm:$0xff]
    %v4346 = vld [vmem:[#allocation11 + $0x68] sm:$0xff]
    %v4347 = vld [vmem:[#allocation11 + $0x70] sm:$0xff]
    %v4348 = vld [vmem:[#allocation11 + $0x78] sm:$0xff]
    %v4349 = vld [vmem:[#allocation11 + $0x80] sm:$0xff]
    %v4350 = vld [vmem:[#allocation11 + $0x88] sm:$0xff]
    %v4351 = vld [vmem:[#allocation11 + $0x90] sm:$0xff]
    %v4352 = vld [vmem:[#allocation11 + $0x98] sm:$0xff]
    %v4353 = vld [vmem:[#allocation11 + $0xa0] sm:$0xff]
    %v4354 = vld [vmem:[#allocation11 + $0xa8] sm:$0xff]
    %v4355 = vld [vmem:[#allocation11 + $0xb0] sm:$0xff]
    %v4356 = vld [vmem:[#allocation11 + $0xb8] sm:$0xff]
    %v4357 = vld [vmem:[#allocation11 + $0xc0] sm:$0xff]
    %v4358 = vld [vmem:[#allocation11 + $0xc8] sm:$0xff]
    %v4359 = vld [vmem:[#allocation11 + $0xd0] sm:$0xff]
    %v4360 = vld [vmem:[#allocation11 + $0xd8] sm:$0xff]
    %v4361 = vld [vmem:[#allocation11 + $0xe0] sm:$0xff]
    %v4362 = vld [vmem:[#allocation11 + $0xe8] sm:$0xff]
    %v4363 = vld [vmem:[#allocation11 + $0xf0] sm:$0xff]
    %v4364 = vld [vmem:[#allocation11 + $0xf8] sm:$0xff]
    %v4365 = vld [vmem:[#allocation11 + $0x100] sm:$0xff]
    %v4366 = vld [vmem:[#allocation11 + $0x108] sm:$0xff]
    %v4367 = vld [vmem:[#allocation11 + $0x110] sm:$0xff]
    %v4368 = vld [vmem:[#allocation11 + $0x118] sm:$0xff]
    %v4369 = vld [vmem:[#allocation11 + $0x120] sm:$0xff]
    %v4370 = vld [vmem:[#allocation11 + $0x128] sm:$0xff]
    %v4371 = vld [vmem:[#allocation11 + $0x130] sm:$0xff]
    %v4372 = vld [vmem:[#allocation11 + $0x138] sm:$0xff]
    %v4373 = vld [vmem:[#allocation11 + $0x140] sm:$0xff]
    %v4374 = vld [vmem:[#allocation11 + $0x148] sm:$0xff]
    %v4375 = vld [vmem:[#allocation11 + $0x150] sm:$0xff]
    %v4376 = vld [vmem:[#allocation11 + $0x158] sm:$0xff]
    %v4377 = vld [vmem:[#allocation11 + $0x160] sm:$0xff]
    %v4378 = vld [vmem:[#allocation11 + $0x168] sm:$0xff]
    %v4379 = vld [vmem:[#allocation11 + $0x170] sm:$0xff]
    %v4380 = vld [vmem:[#allocation11 + $0x178] sm:$0xff]
    %v4381 = vld [vmem:[#allocation11 + $0x180] sm:$0xff]
    %v4382 = vld [vmem:[#allocation11 + $0x188] sm:$0xff]
    %v4383 = vld [vmem:[#allocation11 + $0x190] sm:$0xff]
    %v4384 = vld [vmem:[#allocation11 + $0x198] sm:$0xff]
    %v4385 = vld [vmem:[#allocation11 + $0x1a0] sm:$0xff]
    %v4386 = vld [vmem:[#allocation11 + $0x1a8] sm:$0xff]
    %v4387 = vld [vmem:[#allocation11 + $0x1b0] sm:$0xff]
    %v4388 = vld [vmem:[#allocation11 + $0x1b8] sm:$0xff]
    %v4389 = vld [vmem:[#allocation11 + $0x1c0] sm:$0xff]
    %v4390 = vld [vmem:[#allocation11 + $0x1c8] sm:$0xff]
    %v4391 = vld [vmem:[#allocation11 + $0x1d0] sm:$0xff]
    %v4392 = vld [vmem:[#allocation11 + $0x1d8] sm:$0xff]
    %v4393 = vld [vmem:[#allocation11 + $0x1e0] sm:$0xff]
    %v4394 = vld [vmem:[#allocation11 + $0x1e8] sm:$0xff]
    %v4395 = vld [vmem:[#allocation11 + $0x1f0] sm:$0xff]
    %v4396 = vld [vmem:[#allocation11 + $0x1f8] sm:$0xff]
    %v4397 = vld [vmem:[#allocation11 + $0x200] sm:$0xff]
    %v4398 = vld [vmem:[#allocation11 + $0x208] sm:$0xff]
    %v4399 = vld [vmem:[#allocation11 + $0x210] sm:$0xff]
    %v4400 = vld [vmem:[#allocation11 + $0x218] sm:$0xff]
    %v4401 = vld [vmem:[#allocation11 + $0x220] sm:$0xff]
    %v4402 = vld [vmem:[#allocation11 + $0x228] sm:$0xff]
    %v4403 = vld [vmem:[#allocation11 + $0x230] sm:$0xff]
    %v4404 = vld [vmem:[#allocation11 + $0x238] sm:$0xff]
    %v4405 = vld [vmem:[#allocation11 + $0x240] sm:$0xff]
    %v4406 = vld [vmem:[#allocation11 + $0x248] sm:$0xff]
    %v4407 = vld [vmem:[#allocation11 + $0x250] sm:$0xff]
    %v4408 = vld [vmem:[#allocation11 + $0x258] sm:$0xff]
    %v4409 = vld [vmem:[#allocation11 + $0x260] sm:$0xff]
    %v4410 = vld [vmem:[#allocation11 + $0x268] sm:$0xff]
    %v4411 = vld [vmem:[#allocation11 + $0x270] sm:$0xff]
    %v4412 = vld [vmem:[#allocation11 + $0x278] sm:$0xff]
    %v4413 = vld [vmem:[#allocation11 + $0x280] sm:$0xff]
    %v4414 = vld [vmem:[#allocation11 + $0x288] sm:$0xff]
    %v4415 = vld [vmem:[#allocation11 + $0x290] sm:$0xff]
    %v4416 = vld [vmem:[#allocation11 + $0x298] sm:$0xff]
    %v4417 = vld [vmem:[#allocation11 + $0x2a0] sm:$0xff]
    %v4418 = vld [vmem:[#allocation11 + $0x2a8] sm:$0xff]
    %v4419 = vld [vmem:[#allocation11 + $0x2b0] sm:$0xff]
    %v4420 = vld [vmem:[#allocation11 + $0x2b8] sm:$0xff]
    %v4421 = vld [vmem:[#allocation11 + $0x2c0] sm:$0xff]
    %v4422 = vld [vmem:[#allocation11 + $0x2c8] sm:$0xff]
    %v4423 = vld [vmem:[#allocation11 + $0x2d0] sm:$0xff]
    %v4424 = vld [vmem:[#allocation11 + $0x2d8] sm:$0xff]
    %v4425 = vld [vmem:[#allocation11 + $0x2e0] sm:$0xff]
    %v4426 = vld [vmem:[#allocation11 + $0x2e8] sm:$0xff]
    %v4427 = vld [vmem:[#allocation11 + $0x2f0] sm:$0xff]
    %v4428 = vld [vmem:[#allocation11 + $0x2f8] sm:$0xff]
    %v4429 = vld [vmem:[#allocation11 + $0x300] sm:$0xff]
    %v4430 = vld [vmem:[#allocation11 + $0x308] sm:$0xff]
    %v4431 = vld [vmem:[#allocation11 + $0x310] sm:$0xff]
    %v4432 = vld [vmem:[#allocation11 + $0x318] sm:$0xff]
    %v4433 = vld [vmem:[#allocation11 + $0x320] sm:$0xff]
    %v4434 = vld [vmem:[#allocation11 + $0x328] sm:$0xff]
    %v4435 = vld [vmem:[#allocation11 + $0x330] sm:$0xff]
    %v4436 = vld [vmem:[#allocation11 + $0x338] sm:$0xff]
    %v4437 = vld [vmem:[#allocation11 + $0x340] sm:$0xff]
    %v4438 = vld [vmem:[#allocation11 + $0x348] sm:$0xff]
    %v4439 = vld [vmem:[#allocation11 + $0x350] sm:$0xff]
    %v4440 = vld [vmem:[#allocation11 + $0x358] sm:$0xff]
    %v4441 = vld [vmem:[#allocation11 + $0x360] sm:$0xff]
    %v4442 = vld [vmem:[#allocation11 + $0x368] sm:$0xff]
    %v4443 = vld [vmem:[#allocation11 + $0x370] sm:$0xff]
    %v4444 = vld [vmem:[#allocation11 + $0x378] sm:$0xff]
    %v4445 = vld [vmem:[#allocation11 + $0x380] sm:$0xff]
    %v4446 = vld [vmem:[#allocation11 + $0x388] sm:$0xff]
    %v4447 = vld [vmem:[#allocation11 + $0x390] sm:$0xff]
    %v4448 = vld [vmem:[#allocation11 + $0x398] sm:$0xff]
    %v4449 = vld [vmem:[#allocation11 + $0x3a0] sm:$0xff]
    %v4450 = vld [vmem:[#allocation11 + $0x3a8] sm:$0xff]
    %v4451 = vld [vmem:[#allocation11 + $0x3b0] sm:$0xff]
    %v4452 = vld [vmem:[#allocation11 + $0x3b8] sm:$0xff]
    %v4453 = vld [vmem:[#allocation11 + $0x3c0] sm:$0xff]
    %v4454 = vld [vmem:[#allocation11 + $0x3c8] sm:$0xff]
    %v4455 = vld [vmem:[#allocation11 + $0x3d0] sm:$0xff]
    %v4456 = vld [vmem:[#allocation11 + $0x3d8] sm:$0xff]
    %v4457 = vld [vmem:[#allocation11 + $0x3e0] sm:$0xff]
    %v4458 = vld [vmem:[#allocation11 + $0x3e8] sm:$0xff]
    %v4459 = vld [vmem:[#allocation11 + $0x3f0] sm:$0xff]
    %v4460 = vld [vmem:[#allocation11 + $0x3f8] sm:$0xff]
    %v4461 = vld [vmem:[%s5] sm:$0xf]
    %v4463 = vlaneseq
    %v4464 = vshrl.u32 %v4463, 7
    %v4465 = vsub.s32 0, %v4464
    %v4466 = vrot.slane %v4461, %v4465
    %v4467 = vlaneseq
    %v4468 = vshrl.u32 %v4467, 7
    %v4469 = vsub.s32 1, %v4468
    %v4470 = vrot.slane %v4461, %v4469
    %v4471 = vlaneseq
    %v4472 = vshrl.u32 %v4471, 7
    %v4473 = vsub.s32 2, %v4472
    %v4474 = vrot.slane %v4461, %v4473
    %v4475 = vlaneseq
    %v4476 = vshrl.u32 %v4475, 7
    %v4477 = vsub.s32 3, %v4476
    %v4478 = vrot.slane %v4461, %v4477
    %4483 = vmatprep.subr.mxu0 %v4334
    %4484 = vmatpush1.msra.mxu0 %v4333
    %4485 = vmatprep.subr.mxu0 %v4338
    %4486 = vmatpush1.msra.mxu0 %v4337
    %4487 = vmatprep.subr.mxu0 %v4342
    %4488 = vmatpush1.msra.mxu0 %v4341
    %4489 = vmatprep.subr.mxu0 %v4346
    %4490 = vmatpush1.msra.mxu0 %v4345
    %4491 = vmatprep.subr.mxu0 %v4350
    %4492 = vmatpush1.msra.mxu0 %v4349
    %4493 = vmatprep.subr.mxu0 %v4354
    %4494 = vmatpush1.msra.mxu0 %v4353
    %4495 = vmatprep.subr.mxu0 %v4358
    %4496 = vmatpush1.msra.mxu0 %v4357
    %4497 = vmatprep.subr.mxu0 %v4362
    %4498 = vmatpush1.msra.mxu0 %v4361
    %4499 = vmatprep.subr.mxu0 %v4366
    %4500 = vmatpush1.msra.mxu0 %v4365
    %4501 = vmatprep.subr.mxu0 %v4370
    %4502 = vmatpush1.msra.mxu0 %v4369
    %4503 = vmatprep.subr.mxu0 %v4374
    %4504 = vmatpush1.msra.mxu0 %v4373
    %4505 = vmatprep.subr.mxu0 %v4378
    %4506 = vmatpush1.msra.mxu0 %v4377
    %4507 = vmatprep.subr.mxu0 %v4382
    %4508 = vmatpush1.msra.mxu0 %v4381
    %4509 = vmatprep.subr.mxu0 %v4386
    %4510 = vmatpush1.msra.mxu0 %v4385
    %4511 = vmatprep.subr.mxu0 %v4390
    %4512 = vmatpush1.msra.mxu0 %v4389
    %4513 = vmatprep.subr.mxu0 %v4394
    %4514 = vmatpush1.msra.mxu0 %v4393
    %4515 = vmatprep.subr.mxu0 %v4398
    %4516 = vmatpush1.msra.mxu0 %v4397
    %4517 = vmatprep.subr.mxu0 %v4402
    %4518 = vmatpush1.msra.mxu0 %v4401
    %4519 = vmatprep.subr.mxu0 %v4406
    %4520 = vmatpush1.msra.mxu0 %v4405
    %4521 = vmatprep.subr.mxu0 %v4410
    %4522 = vmatpush1.msra.mxu0 %v4409
    %4523 = vmatprep.subr.mxu0 %v4414
    %4524 = vmatpush1.msra.mxu0 %v4413
    %4525 = vmatprep.subr.mxu0 %v4418
    %4526 = vmatpush1.msra.mxu0 %v4417
    %4527 = vmatprep.subr.mxu0 %v4422
    %4528 = vmatpush1.msra.mxu0 %v4421
    %4529 = vmatprep.subr.mxu0 %v4426
    %4530 = vmatpush1.msra.mxu0 %v4425
    %4531 = vmatprep.subr.mxu0 %v4430
    %4532 = vmatpush1.msra.mxu0 %v4429
    %4533 = vmatprep.subr.mxu0 %v4434
    %4534 = vmatpush1.msra.mxu0 %v4433
    %4535 = vmatprep.subr.mxu0 %v4438
    %4536 = vmatpush1.msra.mxu0 %v4437
    %4537 = vmatprep.subr.mxu0 %v4442
    %4538 = vmatpush1.msra.mxu0 %v4441
    %4539 = vmatprep.subr.mxu0 %v4446
    %4540 = vmatpush1.msra.mxu0 %v4445
    %4541 = vmatprep.subr.mxu0 %v4450
    %4542 = vmatpush1.msra.mxu0 %v4449
    %4543 = vmatprep.subr.mxu0 %v4454
    %4544 = vmatpush1.msra.mxu0 %v4453
    %4545 = vmatprep.subr.mxu0 %v4458
    %4546 = vmatpush1.msra.mxu0 %v4457
    %4547 = vmatprep.mubr.f32.mxu0 %v3893
    %4548 = vmatmul.mubr.f32.gmra.mrb[0].mxu0 %v4332
    %v4549 = vpop.f32.mrb[0].mxu0
    %v4550 = vadd.f32 %v4466, %v4549
    %v4551 = vpop.f32.mrb[0].mxu0
    %v4552 = vadd.f32 %v4470, %v4551
    %4553 = vdwg.mxu0
    %4554 = vmatprep.subr.mxu0 %v4336
    %4555 = vmatpush1.msra.mxu0 %v4335
    %4556 = vmatprep.subr.mxu0 %v4340
    %4557 = vmatpush1.msra.mxu0 %v4339
    %4558 = vmatprep.subr.mxu0 %v4344
    %4559 = vmatpush1.msra.mxu0 %v4343
    %4560 = vmatprep.subr.mxu0 %v4348
    %4561 = vmatpush1.msra.mxu0 %v4347
    %4562 = vmatprep.subr.mxu0 %v4352
    %4563 = vmatpush1.msra.mxu0 %v4351
    %4564 = vmatprep.subr.mxu0 %v4356
    %4565 = vmatpush1.msra.mxu0 %v4355
    %4566 = vmatprep.subr.mxu0 %v4360
    %4567 = vmatpush1.msra.mxu0 %v4359
    %4568 = vmatprep.subr.mxu0 %v4364
    %4569 = vmatpush1.msra.mxu0 %v4363
    %4570 = vmatprep.subr.mxu0 %v4368
    %4571 = vmatpush1.msra.mxu0 %v4367
    %4572 = vmatprep.subr.mxu0 %v4372
    %4573 = vmatpush1.msra.mxu0 %v4371
    %4574 = vmatprep.subr.mxu0 %v4376
    %4575 = vmatpush1.msra.mxu0 %v4375
    %4576 = vmatprep.subr.mxu0 %v4380
    %4577 = vmatpush1.msra.mxu0 %v4379
    %4578 = vmatprep.subr.mxu0 %v4384
    %4579 = vmatpush1.msra.mxu0 %v4383
    %4580 = vmatprep.subr.mxu0 %v4388
    %4581 = vmatpush1.msra.mxu0 %v4387
    %4582 = vmatprep.subr.mxu0 %v4392
    %4583 = vmatpush1.msra.mxu0 %v4391
    %4584 = vmatprep.subr.mxu0 %v4396
    %4585 = vmatpush1.msra.mxu0 %v4395
    %4586 = vmatprep.subr.mxu0 %v4400
    %4587 = vmatpush1.msra.mxu0 %v4399
    %4588 = vmatprep.subr.mxu0 %v4404
    %4589 = vmatpush1.msra.mxu0 %v4403
    %4590 = vmatprep.subr.mxu0 %v4408
    %4591 = vmatpush1.msra.mxu0 %v4407
    %4592 = vmatprep.subr.mxu0 %v4412
    %4593 = vmatpush1.msra.mxu0 %v4411
    %4594 = vmatprep.subr.mxu0 %v4416
    %4595 = vmatpush1.msra.mxu0 %v4415
    %4596 = vmatprep.subr.mxu0 %v4420
    %4597 = vmatpush1.msra.mxu0 %v4419
    %4598 = vmatprep.subr.mxu0 %v4424
    %4599 = vmatpush1.msra.mxu0 %v4423
    %4600 = vmatprep.subr.mxu0 %v4428
    %4601 = vmatpush1.msra.mxu0 %v4427
    %4602 = vmatprep.subr.mxu0 %v4432
    %4603 = vmatpush1.msra.mxu0 %v4431
    %4604 = vmatprep.subr.mxu0 %v4436
    %4605 = vmatpush1.msra.mxu0 %v4435
    %4606 = vmatprep.subr.mxu0 %v4440
    %4607 = vmatpush1.msra.mxu0 %v4439
    %4608 = vmatprep.subr.mxu0 %v4444
    %4609 = vmatpush1.msra.mxu0 %v4443
    %4610 = vmatprep.subr.mxu0 %v4448
    %4611 = vmatpush1.msra.mxu0 %v4447
    %4612 = vmatprep.subr.mxu0 %v4452
    %4613 = vmatpush1.msra.mxu0 %v4451
    %4614 = vmatprep.subr.mxu0 %v4456
    %4615 = vmatpush1.msra.mxu0 %v4455
    %4616 = vmatprep.subr.mxu0 %v4460
    %4617 = vmatpush1.msra.mxu0 %v4459
    %4618 = vmatprep.mubr.f32.mxu0 %v3893
    %4619 = vmatmul.mubr.f32.gmra.mrb[0].mxu0 %v4332
    %v4620 = vpop.f32.mrb[0].mxu0
    %v4621 = vadd.f32 %v4474, %v4620
    %v4622 = vpop.f32.mrb[0].mxu0
    %v4623 = vadd.f32 %v4478, %v4622
    %4624 = vdwg.mxu0
    %v4625 = vxor.u32 %v4550, 2147483648
    %v4626 = vmul.f32 %v4625, 1.442695
    %v4627 = vpow.pop %v4626
    %v4628 = vadd.f32 %v4627, 1.0
    %v4629 = vrcp.pop %v4628
    %v4630 = vmul.f32 1.0, %v4629
    %v4631 = vxor.u32 %v4552, 2147483648
    %v4632 = vmul.f32 %v4631, 1.442695
    %v4633 = vpow.pop %v4632
    %v4634 = vadd.f32 %v4633, 1.0
    %v4635 = vrcp.pop %v4634
    %v4636 = vmul.f32 1.0, %v4635
    %v4637 = vtanh.pop %v4621
    %v4638 = vxor.u32 %v4623, 2147483648
    %v4639 = vmul.f32 %v4638, 1.442695
    %v4640 = vpow.pop %v4639
    %v4641 = vadd.f32 %v4640, 1.0
    %v4642 = vrcp.pop %v4641
    %v4643 = vmul.f32 1.0, %v4642
    %v4644 = vmul.f32 %v4636, %v3891
    %v4645 = vmul.f32 %v4630, %v4637
    %v4646 = vadd.f32 %v4644, %v4645
    %v4647 = vtanh.pop %v4646
    %v4648 = vmul.f32 %v4643, %v4647
    %4649 = vst [vmem:[#allocation4 + $0x28] sm:$0xff] %v4648
    %v4650 = vld [vmem:[#allocation5 + $0x6] sm:$0x1]
    %v4651 = vld [vmem:[#allocation5 + $0xe] sm:$0x1]
    %v4652 = vld [vmem:[#allocation5 + $0x16] sm:$0x1]
    %v4653 = vld [vmem:[#allocation5 + $0x1e] sm:$0x1]
    %v4654 = vld [vmem:[#allocation5 + $0x26] sm:$0x1]
    %v4655 = vld [vmem:[#allocation5 + $0x2e] sm:$0x1]
    %v4656 = vld [vmem:[#allocation5 + $0x36] sm:$0x1]
    %v4657 = vld [vmem:[#allocation5 + $0x3e] sm:$0x1]
    %v4658 = vld [vmem:[#allocation8] sm:$0xff]
    %v4659 = vld [vmem:[#allocation8 + $0x8] sm:$0xff]
    %v4660 = vld [vmem:[#allocation8 + $0x10] sm:$0xff]
    %v4661 = vld [vmem:[#allocation8 + $0x18] sm:$0xff]
    %v4662 = vld [vmem:[#allocation8 + $0x20] sm:$0xff]
    %v4663 = vld [vmem:[#allocation8 + $0x28] sm:$0xff]
    %v4664 = vld [vmem:[#allocation8 + $0x30] sm:$0xff]
    %v4665 = vld [vmem:[#allocation8 + $0x38] sm:$0xff]
    %v4666 = vld [vmem:[#allocation10] sm:$0xff]
    %v4667 = vld [vmem:[#allocation10 + $0x8] sm:$0xff]
    %v4668 = vld [vmem:[#allocation10 + $0x10] sm:$0xff]
    %v4669 = vld [vmem:[#allocation10 + $0x18] sm:$0xff]
    %v4670 = vld [vmem:[#allocation10 + $0x20] sm:$0xff]
    %v4671 = vld [vmem:[#allocation10 + $0x28] sm:$0xff]
    %v4672 = vld [vmem:[#allocation10 + $0x30] sm:$0xff]
    %v4673 = vld [vmem:[#allocation10 + $0x38] sm:$0xff]
    %v4674 = vld [vmem:[#allocation10 + $0x40] sm:$0xff]
    %v4675 = vld [vmem:[#allocation10 + $0x48] sm:$0xff]
    %v4676 = vld [vmem:[#allocation10 + $0x50] sm:$0xff]
    %v4677 = vld [vmem:[#allocation10 + $0x58] sm:$0xff]
    %v4678 = vld [vmem:[#allocation10 + $0x60] sm:$0xff]
    %v4679 = vld [vmem:[#allocation10 + $0x68] sm:$0xff]
    %v4680 = vld [vmem:[#allocation10 + $0x70] sm:$0xff]
    %v4681 = vld [vmem:[#allocation10 + $0x78] sm:$0xff]
    %v4682 = vld [vmem:[#allocation10 + $0x80] sm:$0xff]
    %v4683 = vld [vmem:[#allocation10 + $0x88] sm:$0xff]
    %v4684 = vld [vmem:[#allocation10 + $0x90] sm:$0xff]
    %v4685 = vld [vmem:[#allocation10 + $0x98] sm:$0xff]
    %v4686 = vld [vmem:[#allocation10 + $0xa0] sm:$0xff]
    %v4687 = vld [vmem:[#allocation10 + $0xa8] sm:$0xff]
    %v4688 = vld [vmem:[#allocation10 + $0xb0] sm:$0xff]
    %v4689 = vld [vmem:[#allocation10 + $0xb8] sm:$0xff]
    %v4690 = vld [vmem:[#allocation10 + $0xc0] sm:$0xff]
    %v4691 = vld [vmem:[#allocation10 + $0xc8] sm:$0xff]
    %v4692 = vld [vmem:[#allocation10 + $0xd0] sm:$0xff]
    %v4693 = vld [vmem:[#allocation10 + $0xd8] sm:$0xff]
    %v4694 = vld [vmem:[#allocation10 + $0xe0] sm:$0xff]
    %v4695 = vld [vmem:[#allocation10 + $0xe8] sm:$0xff]
    %v4696 = vld [vmem:[#allocation10 + $0xf0] sm:$0xff]
    %v4697 = vld [vmem:[#allocation10 + $0xf8] sm:$0xff]
    %v4698 = vld [vmem:[#allocation10 + $0x100] sm:$0xff]
    %v4699 = vld [vmem:[#allocation10 + $0x108] sm:$0xff]
    %v4700 = vld [vmem:[#allocation10 + $0x110] sm:$0xff]
    %v4701 = vld [vmem:[#allocation10 + $0x118] sm:$0xff]
    %v4702 = vld [vmem:[#allocation10 + $0x120] sm:$0xff]
    %v4703 = vld [vmem:[#allocation10 + $0x128] sm:$0xff]
    %v4704 = vld [vmem:[#allocation10 + $0x130] sm:$0xff]
    %v4705 = vld [vmem:[#allocation10 + $0x138] sm:$0xff]
    %v4706 = vld [vmem:[#allocation10 + $0x140] sm:$0xff]
    %v4707 = vld [vmem:[#allocation10 + $0x148] sm:$0xff]
    %v4708 = vld [vmem:[#allocation10 + $0x150] sm:$0xff]
    %v4709 = vld [vmem:[#allocation10 + $0x158] sm:$0xff]
    %v4710 = vld [vmem:[#allocation10 + $0x160] sm:$0xff]
    %v4711 = vld [vmem:[#allocation10 + $0x168] sm:$0xff]
    %v4712 = vld [vmem:[#allocation10 + $0x170] sm:$0xff]
    %v4713 = vld [vmem:[#allocation10 + $0x178] sm:$0xff]
    %v4714 = vld [vmem:[#allocation10 + $0x180] sm:$0xff]
    %v4715 = vld [vmem:[#allocation10 + $0x188] sm:$0xff]
    %v4716 = vld [vmem:[#allocation10 + $0x190] sm:$0xff]
    %v4717 = vld [vmem:[#allocation10 + $0x198] sm:$0xff]
    %v4718 = vld [vmem:[#allocation10 + $0x1a0] sm:$0xff]
    %v4719 = vld [vmem:[#allocation10 + $0x1a8] sm:$0xff]
    %v4720 = vld [vmem:[#allocation10 + $0x1b0] sm:$0xff]
    %v4721 = vld [vmem:[#allocation10 + $0x1b8] sm:$0xff]
    %v4722 = vld [vmem:[#allocation10 + $0x1c0] sm:$0xff]
    %v4723 = vld [vmem:[#allocation10 + $0x1c8] sm:$0xff]
    %v4724 = vld [vmem:[#allocation10 + $0x1d0] sm:$0xff]
    %v4725 = vld [vmem:[#allocation10 + $0x1d8] sm:$0xff]
    %v4726 = vld [vmem:[#allocation10 + $0x1e0] sm:$0xff]
    %v4727 = vld [vmem:[#allocation10 + $0x1e8] sm:$0xff]
    %v4728 = vld [vmem:[#allocation10 + $0x1f0] sm:$0xff]
    %v4729 = vld [vmem:[#allocation10 + $0x1f8] sm:$0xff]
    %4730 = vmatprep.subr.mxu0 %v4667
    %4731 = vmatpush1.msra.mxu0 %v4666
    %4732 = vmatprep.subr.mxu0 %v4671
    %4733 = vmatpush1.msra.mxu0 %v4670
    %4734 = vmatprep.subr.mxu0 %v4675
    %4735 = vmatpush1.msra.mxu0 %v4674
    %4736 = vmatprep.subr.mxu0 %v4679
    %4737 = vmatpush1.msra.mxu0 %v4678
    %4738 = vmatprep.subr.mxu0 %v4683
    %4739 = vmatpush1.msra.mxu0 %v4682
    %4740 = vmatprep.subr.mxu0 %v4687
    %4741 = vmatpush1.msra.mxu0 %v4686
    %4742 = vmatprep.subr.mxu0 %v4691
    %4743 = vmatpush1.msra.mxu0 %v4690
    %4744 = vmatprep.subr.mxu0 %v4695
    %4745 = vmatpush1.msra.mxu0 %v4694
    %4746 = vmatprep.subr.mxu0 %v4699
    %4747 = vmatpush1.msra.mxu0 %v4698
    %4748 = vmatprep.subr.mxu0 %v4703
    %4749 = vmatpush1.msra.mxu0 %v4702
    %4750 = vmatprep.subr.mxu0 %v4707
    %4751 = vmatpush1.msra.mxu0 %v4706
    %4752 = vmatprep.subr.mxu0 %v4711
    %4753 = vmatpush1.msra.mxu0 %v4710
    %4754 = vmatprep.subr.mxu0 %v4715
    %4755 = vmatpush1.msra.mxu0 %v4714
    %4756 = vmatprep.subr.mxu0 %v4719
    %4757 = vmatpush1.msra.mxu0 %v4718
    %4758 = vmatprep.subr.mxu0 %v4723
    %4759 = vmatpush1.msra.mxu0 %v4722
    %4760 = vmatprep.subr.mxu0 %v4727
    %4761 = vmatpush1.msra.mxu0 %v4726
    %4762 = vmatprep.subr.mxu0 0.0
    %4763 = vmatpush1.msra.mxu0 0.0
    %4764 = vmatprep.subr.mxu0 0.0
    %4765 = vmatpush1.msra.mxu0 0.0
    %4766 = vmatprep.subr.mxu0 0.0
    %4767 = vmatpush1.msra.mxu0 0.0
    %4768 = vmatprep.subr.mxu0 0.0
    %4769 = vmatpush1.msra.mxu0 0.0
    %4770 = vmatprep.subr.mxu0 0.0
    %4771 = vmatpush1.msra.mxu0 0.0
    %4772 = vmatprep.subr.mxu0 0.0
    %4773 = vmatpush1.msra.mxu0 0.0
    %4774 = vmatprep.subr.mxu0 0.0
    %4775 = vmatpush1.msra.mxu0 0.0
    %4776 = vmatprep.subr.mxu0 0.0
    %4777 = vmatpush1.msra.mxu0 0.0
    %4778 = vmatprep.subr.mxu0 0.0
    %4779 = vmatpush1.msra.mxu0 0.0
    %4780 = vmatprep.subr.mxu0 0.0
    %4781 = vmatpush1.msra.mxu0 0.0
    %4782 = vmatprep.subr.mxu0 0.0
    %4783 = vmatpush1.msra.mxu0 0.0
    %4784 = vmatprep.subr.mxu0 0.0
    %4785 = vmatpush1.msra.mxu0 0.0
    %4786 = vmatprep.subr.mxu0 0.0
    %4787 = vmatpush1.msra.mxu0 0.0
    %4788 = vmatprep.subr.mxu0 0.0
    %4789 = vmatpush1.msra.mxu0 0.0
    %4790 = vmatprep.subr.mxu0 0.0
    %4791 = vmatpush1.msra.mxu0 0.0
    %4792 = vmatprep.subr.mxu0 0.0
    %4793 = vmatpush1.msra.mxu0 0.0
    %4794 = vmatprep.mubr.f32.mxu0 0.0
    %4795 = vmatmul.mubr.f32.gmra.mrb[0].mxu0 %v4332
    %v4796 = vpop.f32.mrb[0].mxu0
    %v4797 = vadd.f32 0.0, %v4796
    %v4798 = vpop.f32.mrb[0].mxu0
    %v4799 = vadd.f32 0.0, %v4798
    %4800 = vdwg.mxu0
    %4801 = vmatprep.subr.mxu0 %v4669
    %4802 = vmatpush1.msra.mxu0 %v4668
    %4803 = vmatprep.subr.mxu0 %v4673
    %4804 = vmatpush1.msra.mxu0 %v4672
    %4805 = vmatprep.subr.mxu0 %v4677
    %4806 = vmatpush1.msra.mxu0 %v4676
    %4807 = vmatprep.subr.mxu0 %v4681
    %4808 = vmatpush1.msra.mxu0 %v4680
    %4809 = vmatprep.subr.mxu0 %v4685
    %4810 = vmatpush1.msra.mxu0 %v4684
    %4811 = vmatprep.subr.mxu0 %v4689
    %4812 = vmatpush1.msra.mxu0 %v4688
    %4813 = vmatprep.subr.mxu0 %v4693
    %4814 = vmatpush1.msra.mxu0 %v4692
    %4815 = vmatprep.subr.mxu0 %v4697
    %4816 = vmatpush1.msra.mxu0 %v4696
    %4817 = vmatprep.subr.mxu0 %v4701
    %4818 = vmatpush1.msra.mxu0 %v4700
    %4819 = vmatprep.subr.mxu0 %v4705
    %4820 = vmatpush1.msra.mxu0 %v4704
    %4821 = vmatprep.subr.mxu0 %v4709
    %4822 = vmatpush1.msra.mxu0 %v4708
    %4823 = vmatprep.subr.mxu0 %v4713
    %4824 = vmatpush1.msra.mxu0 %v4712
    %4825 = vmatprep.subr.mxu0 %v4717
    %4826 = vmatpush1.msra.mxu0 %v4716
    %4827 = vmatprep.subr.mxu0 %v4721
    %4828 = vmatpush1.msra.mxu0 %v4720
    %4829 = vmatprep.subr.mxu0 %v4725
    %4830 = vmatpush1.msra.mxu0 %v4724
    %4831 = vmatprep.subr.mxu0 %v4729
    %4832 = vmatpush1.msra.mxu0 %v4728
    %4833 = vmatprep.subr.mxu0 0.0
    %4834 = vmatpush1.msra.mxu0 0.0
    %4835 = vmatprep.subr.mxu0 0.0
    %4836 = vmatpush1.msra.mxu0 0.0
    %4837 = vmatprep.subr.mxu0 0.0
    %4838 = vmatpush1.msra.mxu0 0.0
    %4839 = vmatprep.subr.mxu0 0.0
    %4840 = vmatpush1.msra.mxu0 0.0
    %4841 = vmatprep.subr.mxu0 0.0
    %4842 = vmatpush1.msra.mxu0 0.0
    %4843 = vmatprep.subr.mxu0 0.0
    %4844 = vmatpush1.msra.mxu0 0.0
    %4845 = vmatprep.subr.mxu0 0.0
    %4846 = vmatpush1.msra.mxu0 0.0
    %4847 = vmatprep.subr.mxu0 0.0
    %4848 = vmatpush1.msra.mxu0 0.0
    %4849 = vmatprep.subr.mxu0 0.0
    %4850 = vmatpush1.msra.mxu0 0.0
    %4851 = vmatprep.subr.mxu0 0.0
    %4852 = vmatpush1.msra.mxu0 0.0
    %4853 = vmatprep.subr.mxu0 0.0
    %4854 = vmatpush1.msra.mxu0 0.0
    %4855 = vmatprep.subr.mxu0 0.0
    %4856 = vmatpush1.msra.mxu0 0.0
    %4857 = vmatprep.subr.mxu0 0.0
    %4858 = vmatpush1.msra.mxu0 0.0
    %4859 = vmatprep.subr.mxu0 0.0
    %4860 = vmatpush1.msra.mxu0 0.0
    %4861 = vmatprep.subr.mxu0 0.0
    %4862 = vmatpush1.msra.mxu0 0.0
    %4863 = vmatprep.subr.mxu0 0.0
    %4864 = vmatpush1.msra.mxu0 0.0
    %4865 = vmatprep.mubr.f32.mxu0 0.0
    %4866 = vmatmul.mubr.f32.gmra.mrb[0].mxu0 %v4332
    %v4867 = vpop.f32.mrb[0].mxu0
    %v4868 = vadd.f32 0.0, %v4867
    %v4869 = vpop.f32.mrb[0].mxu0
    %v4870 = vadd.f32 0.0, %v4869
    %4871 = vdwg.mxu0
    %v4880 = vrot.slane %v4651, 7
    %v4881 = vsel %vm343, %v4880, %v4650
    %v4882 = vrot.slane %v4652, 6
    %v4883 = vsel %vm346, %v4882, %v4881
    %v4884 = vrot.slane %v4653, 5
    %v4885 = vsel %vm349, %v4884, %v4883
    %v4886 = vrot.slane %v4654, 4
    %v4887 = vsel %vm352, %v4886, %v4885
    %v4888 = vrot.slane %v4655, 3
    %v4889 = vsel %vm355, %v4888, %v4887
    %v4890 = vrot.slane %v4656, 2
    %v4891 = vsel %vm358, %v4890, %v4889
    %v4892 = vrot.slane %v4657, 1
    %v4893 = vsel %vm361, %v4892, %v4891
    %v4894 = vsel %vm363, %v4893, 0
    %4896 = vmatprep.subr.mxu0 %v4659
    %4897 = vmatpush1.msra.mxu0 %v4658
    %4898 = vmatprep.subr.mxu0 %v4663
    %4899 = vmatpush1.msra.mxu0 %v4662
    %4900 = vmatprep.subr.mxu0 0.0
    %4901 = vmatpush1.msra.mxu0 0.0
    %4902 = vmatprep.subr.mxu0 0.0
    %4903 = vmatpush1.msra.mxu0 0.0
    %4904 = vmatprep.subr.mxu0 0.0
    %4905 = vmatpush1.msra.mxu0 0.0
    %4906 = vmatprep.subr.mxu0 0.0
    %4907 = vmatpush1.msra.mxu0 0.0
    %4908 = vmatprep.subr.mxu0 0.0
    %4909 = vmatpush1.msra.mxu0 0.0
    %4910 = vmatprep.subr.mxu0 0.0
    %4911 = vmatpush1.msra.mxu0 0.0
    %4912 = vmatprep.subr.mxu0 0.0
    %4913 = vmatpush1.msra.mxu0 0.0
    %4914 = vmatprep.subr.mxu0 0.0
    %4915 = vmatpush1.msra.mxu0 0.0
    %4916 = vmatprep.subr.mxu0 0.0
    %4917 = vmatpush1.msra.mxu0 0.0
    %4918 = vmatprep.subr.mxu0 0.0
    %4919 = vmatpush1.msra.mxu0 0.0
    %4920 = vmatprep.subr.mxu0 0.0
    %4921 = vmatpush1.msra.mxu0 0.0
    %4922 = vmatprep.subr.mxu0 0.0
    %4923 = vmatpush1.msra.mxu0 0.0
    %4924 = vmatprep.subr.mxu0 0.0
    %4925 = vmatpush1.msra.mxu0 0.0
    %4926 = vmatprep.subr.mxu0 0.0
    %4927 = vmatpush1.msra.mxu0 0.0
    %4928 = vmatprep.subr.mxu0 0.0
    %4929 = vmatpush1.msra.mxu0 0.0
    %4930 = vmatprep.subr.mxu0 0.0
    %4931 = vmatpush1.msra.mxu0 0.0
    %4932 = vmatprep.subr.mxu0 0.0
    %4933 = vmatpush1.msra.mxu0 0.0
    %4934 = vmatprep.subr.mxu0 0.0
    %4935 = vmatpush1.msra.mxu0 0.0
    %4936 = vmatprep.subr.mxu0 0.0
    %4937 = vmatpush1.msra.mxu0 0.0
    %4938 = vmatprep.subr.mxu0 0.0
    %4939 = vmatpush1.msra.mxu0 0.0
    %4940 = vmatprep.subr.mxu0 0.0
    %4941 = vmatpush1.msra.mxu0 0.0
    %4942 = vmatprep.subr.mxu0 0.0
    %4943 = vmatpush1.msra.mxu0 0.0
    %4944 = vmatprep.subr.mxu0 0.0
    %4945 = vmatpush1.msra.mxu0 0.0
    %4946 = vmatprep.subr.mxu0 0.0
    %4947 = vmatpush1.msra.mxu0 0.0
    %4948 = vmatprep.subr.mxu0 0.0
    %4949 = vmatpush1.msra.mxu0 0.0
    %4950 = vmatprep.subr.mxu0 0.0
    %4951 = vmatpush1.msra.mxu0 0.0
    %4952 = vmatprep.subr.mxu0 0.0
    %4953 = vmatpush1.msra.mxu0 0.0
    %4954 = vmatprep.subr.mxu0 0.0
    %4955 = vmatpush1.msra.mxu0 0.0
    %4956 = vmatprep.subr.mxu0 0.0
    %4957 = vmatpush1.msra.mxu0 0.0
    %4958 = vmatprep.subr.mxu0 0.0
    %4959 = vmatpush1.msra.mxu0 0.0
    %4960 = vmatprep.mubr.f32.mxu0 0.0
    %4961 = vmatmul.mubr.f32.gmra.mrb[0].mxu0 %v4894
    %v4962 = vpop.f32.mrb[0].mxu0
    %v4963 = vadd.f32 %v4797, %v4962
    %v4964 = vpop.f32.mrb[0].mxu0
    %v4965 = vadd.f32 %v4799, %v4964
    %4966 = vdwg.mxu0
    %4967 = vmatprep.subr.mxu0 %v4661
    %4968 = vmatpush1.msra.mxu0 %v4660
    %4969 = vmatprep.subr.mxu0 %v4665
    %4970 = vmatpush1.msra.mxu0 %v4664
    %4971 = vmatprep.subr.mxu0 0.0
    %4972 = vmatpush1.msra.mxu0 0.0
    %4973 = vmatprep.subr.mxu0 0.0
    %4974 = vmatpush1.msra.mxu0 0.0
    %4975 = vmatprep.subr.mxu0 0.0
    %4976 = vmatpush1.msra.mxu0 0.0
    %4977 = vmatprep.subr.mxu0 0.0
    %4978 = vmatpush1.msra.mxu0 0.0
    %4979 = vmatprep.subr.mxu0 0.0
    %4980 = vmatpush1.msra.mxu0 0.0
    %4981 = vmatprep.subr.mxu0 0.0
    %4982 = vmatpush1.msra.mxu0 0.0
    %4983 = vmatprep.subr.mxu0 0.0
    %4984 = vmatpush1.msra.mxu0 0.0
    %4985 = vmatprep.subr.mxu0 0.0
    %4986 = vmatpush1.msra.mxu0 0.0
    %4987 = vmatprep.subr.mxu0 0.0
    %4988 = vmatpush1.msra.mxu0 0.0
    %4989 = vmatprep.subr.mxu0 0.0
    %4990 = vmatpush1.msra.mxu0 0.0
    %4991 = vmatprep.subr.mxu0 0.0
    %4992 = vmatpush1.msra.mxu0 0.0
    %4993 = vmatprep.subr.mxu0 0.0
    %4994 = vmatpush1.msra.mxu0 0.0
    %4995 = vmatprep.subr.mxu0 0.0
    %4996 = vmatpush1.msra.mxu0 0.0
    %4997 = vmatprep.subr.mxu0 0.0
    %4998 = vmatpush1.msra.mxu0 0.0
    %4999 = vmatprep.subr.mxu0 0.0
    %5000 = vmatpush1.msra.mxu0 0.0
    %5001 = vmatprep.subr.mxu0 0.0
    %5002 = vmatpush1.msra.mxu0 0.0
    %5003 = vmatprep.subr.mxu0 0.0
    %5004 = vmatpush1.msra.mxu0 0.0
    %5005 = vmatprep.subr.mxu0 0.0
    %5006 = vmatpush1.msra.mxu0 0.0
    %5007 = vmatprep.subr.mxu0 0.0
    %5008 = vmatpush1.msra.mxu0 0.0
    %5009 = vmatprep.subr.mxu0 0.0
    %5010 = vmatpush1.msra.mxu0 0.0
    %5011 = vmatprep.subr.mxu0 0.0
    %5012 = vmatpush1.msra.mxu0 0.0
    %5013 = vmatprep.subr.mxu0 0.0
    %5014 = vmatpush1.msra.mxu0 0.0
    %5015 = vmatprep.subr.mxu0 0.0
    %5016 = vmatpush1.msra.mxu0 0.0
    %5017 = vmatprep.subr.mxu0 0.0
    %5018 = vmatpush1.msra.mxu0 0.0
    %5019 = vmatprep.subr.mxu0 0.0
    %5020 = vmatpush1.msra.mxu0 0.0
    %5021 = vmatprep.subr.mxu0 0.0
    %5022 = vmatpush1.msra.mxu0 0.0
    %5023 = vmatprep.subr.mxu0 0.0
    %5024 = vmatpush1.msra.mxu0 0.0
    %5025 = vmatprep.subr.mxu0 0.0
    %5026 = vmatpush1.msra.mxu0 0.0
    %5027 = vmatprep.subr.mxu0 0.0
    %5028 = vmatpush1.msra.mxu0 0.0
    %5029 = vmatprep.subr.mxu0 0.0
    %5030 = vmatpush1.msra.mxu0 0.0
    %5031 = vmatprep.mubr.f32.mxu0 0.0
    %5032 = vmatmul.mubr.f32.gmra.mrb[0].mxu0 %v4894
    %v5033 = vpop.f32.mrb[0].mxu0
    %v5034 = vadd.f32 %v4868, %v5033
    %v5035 = vpop.f32.mrb[0].mxu0
    %v5036 = vadd.f32 %v4870, %v5035
    %5037 = vdwg.mxu0
    %v5038 = vld [vmem:[%s3] sm:$0xf]
    %v5040 = vlaneseq
    %v5041 = vshrl.u32 %v5040, 7
    %v5042 = vsub.s32 0, %v5041
    %v5043 = vrot.slane %v5038, %v5042
    %v5044 = vlaneseq
    %v5045 = vshrl.u32 %v5044, 7
    %v5046 = vsub.s32 1, %v5045
    %v5047 = vrot.slane %v5038, %v5046
    %v5048 = vlaneseq
    %v5049 = vshrl.u32 %v5048, 7
    %v5050 = vsub.s32 2, %v5049
    %v5051 = vrot.slane %v5038, %v5050
    %v5052 = vlaneseq
    %v5053 = vshrl.u32 %v5052, 7
    %v5054 = vsub.s32 3, %v5053
    %v5055 = vrot.slane %v5038, %v5054
    %v5060 = vadd.f32 %v4963, %v5043
    %v5061 = vadd.f32 %v4965, %v5047
    %v5062 = vadd.f32 %v5034, %v5051
    %v5063 = vadd.f32 %v5036, %v5055
    %v5064 = vxor.u32 %v5060, 2147483648
    %v5065 = vmul.f32 %v5064, 1.442695
    %v5066 = vpow.pop %v5065
    %v5067 = vadd.f32 %v5066, 1.0
    %v5068 = vrcp.pop %v5067
    %v5069 = vmul.f32 1.0, %v5068
    %v5070 = vxor.u32 %v5061, 2147483648
    %v5071 = vmul.f32 %v5070, 1.442695
    %v5072 = vpow.pop %v5071
    %v5073 = vadd.f32 %v5072, 1.0
    %v5074 = vrcp.pop %v5073
    %v5075 = vmul.f32 1.0, %v5074
    %v5076 = vtanh.pop %v5062
    %v5077 = vxor.u32 %v5063, 2147483648
    %v5078 = vmul.f32 %v5077, 1.442695
    %v5079 = vpow.pop %v5078
    %v5080 = vadd.f32 %v5079, 1.0
    %v5081 = vrcp.pop %v5080
    %v5082 = vmul.f32 1.0, %v5081
    %v5083 = vmul.f32 %v5075, %v4330
    %v5084 = vmul.f32 %v5069, %v5076
    %v5085 = vadd.f32 %v5083, %v5084
    %v5086 = vtanh.pop %v5085
    %v5087 = vmul.f32 %v5082, %v5086
    %v5088 = vld [vmem:[#allocation11] sm:$0xff]
    %v5089 = vld [vmem:[#allocation11 + $0x8] sm:$0xff]
    %v5090 = vld [vmem:[#allocation11 + $0x10] sm:$0xff]
    %v5091 = vld [vmem:[#allocation11 + $0x18] sm:$0xff]
    %v5092 = vld [vmem:[#allocation11 + $0x20] sm:$0xff]
    %v5093 = vld [vmem:[#allocation11 + $0x28] sm:$0xff]
    %v5094 = vld [vmem:[#allocation11 + $0x30] sm:$0xff]
    %v5095 = vld [vmem:[#allocation11 + $0x38] sm:$0xff]
    %v5096 = vld [vmem:[#allocation11 + $0x40] sm:$0xff]
    %v5097 = vld [vmem:[#allocation11 + $0x48] sm:$0xff]
    %v5098 = vld [vmem:[#allocation11 + $0x50] sm:$0xff]
    %v5099 = vld [vmem:[#allocation11 + $0x58] sm:$0xff]
    %v5100 = vld [vmem:[#allocation11 + $0x60] sm:$0xff]
    %v5101 = vld [vmem:[#allocation11 + $0x68] sm:$0xff]
    %v5102 = vld [vmem:[#allocation11 + $0x70] sm:$0xff]
    %v5103 = vld [vmem:[#allocation11 + $0x78] sm:$0xff]
    %v5104 = vld [vmem:[#allocation11 + $0x80] sm:$0xff]
    %v5105 = vld [vmem:[#allocation11 + $0x88] sm:$0xff]
    %v5106 = vld [vmem:[#allocation11 + $0x90] sm:$0xff]
    %v5107 = vld [vmem:[#allocation11 + $0x98] sm:$0xff]
    %v5108 = vld [vmem:[#allocation11 + $0xa0] sm:$0xff]
    %v5109 = vld [vmem:[#allocation11 + $0xa8] sm:$0xff]
    %v5110 = vld [vmem:[#allocation11 + $0xb0] sm:$0xff]
    %v5111 = vld [vmem:[#allocation11 + $0xb8] sm:$0xff]
    %v5112 = vld [vmem:[#allocation11 + $0xc0] sm:$0xff]
    %v5113 = vld [vmem:[#allocation11 + $0xc8] sm:$0xff]
    %v5114 = vld [vmem:[#allocation11 + $0xd0] sm:$0xff]
    %v5115 = vld [vmem:[#allocation11 + $0xd8] sm:$0xff]
    %v5116 = vld [vmem:[#allocation11 + $0xe0] sm:$0xff]
    %v5117 = vld [vmem:[#allocation11 + $0xe8] sm:$0xff]
    %v5118 = vld [vmem:[#allocation11 + $0xf0] sm:$0xff]
    %v5119 = vld [vmem:[#allocation11 + $0xf8] sm:$0xff]
    %v5120 = vld [vmem:[#allocation11 + $0x100] sm:$0xff]
    %v5121 = vld [vmem:[#allocation11 + $0x108] sm:$0xff]
    %v5122 = vld [vmem:[#allocation11 + $0x110] sm:$0xff]
    %v5123 = vld [vmem:[#allocation11 + $0x118] sm:$0xff]
    %v5124 = vld [vmem:[#allocation11 + $0x120] sm:$0xff]
    %v5125 = vld [vmem:[#allocation11 + $0x128] sm:$0xff]
    %v5126 = vld [vmem:[#allocation11 + $0x130] sm:$0xff]
    %v5127 = vld [vmem:[#allocation11 + $0x138] sm:$0xff]
    %v5128 = vld [vmem:[#allocation11 + $0x140] sm:$0xff]
    %v5129 = vld [vmem:[#allocation11 + $0x148] sm:$0xff]
    %v5130 = vld [vmem:[#allocation11 + $0x150] sm:$0xff]
    %v5131 = vld [vmem:[#allocation11 + $0x158] sm:$0xff]
    %v5132 = vld [vmem:[#allocation11 + $0x160] sm:$0xff]
    %v5133 = vld [vmem:[#allocation11 + $0x168] sm:$0xff]
    %v5134 = vld [vmem:[#allocation11 + $0x170] sm:$0xff]
    %v5135 = vld [vmem:[#allocation11 + $0x178] sm:$0xff]
    %v5136 = vld [vmem:[#allocation11 + $0x180] sm:$0xff]
    %v5137 = vld [vmem:[#allocation11 + $0x188] sm:$0xff]
    %v5138 = vld [vmem:[#allocation11 + $0x190] sm:$0xff]
    %v5139 = vld [vmem:[#allocation11 + $0x198] sm:$0xff]
    %v5140 = vld [vmem:[#allocation11 + $0x1a0] sm:$0xff]
    %v5141 = vld [vmem:[#allocation11 + $0x1a8] sm:$0xff]
    %v5142 = vld [vmem:[#allocation11 + $0x1b0] sm:$0xff]
    %v5143 = vld [vmem:[#allocation11 + $0x1b8] sm:$0xff]
    %v5144 = vld [vmem:[#allocation11 + $0x1c0] sm:$0xff]
    %v5145 = vld [vmem:[#allocation11 + $0x1c8] sm:$0xff]
    %v5146 = vld [vmem:[#allocation11 + $0x1d0] sm:$0xff]
    %v5147 = vld [vmem:[#allocation11 + $0x1d8] sm:$0xff]
    %v5148 = vld [vmem:[#allocation11 + $0x1e0] sm:$0xff]
    %v5149 = vld [vmem:[#allocation11 + $0x1e8] sm:$0xff]
    %v5150 = vld [vmem:[#allocation11 + $0x1f0] sm:$0xff]
    %v5151 = vld [vmem:[#allocation11 + $0x1f8] sm:$0xff]
    %v5152 = vld [vmem:[#allocation11 + $0x200] sm:$0xff]
    %v5153 = vld [vmem:[#allocation11 + $0x208] sm:$0xff]
    %v5154 = vld [vmem:[#allocation11 + $0x210] sm:$0xff]
    %v5155 = vld [vmem:[#allocation11 + $0x218] sm:$0xff]
    %v5156 = vld [vmem:[#allocation11 + $0x220] sm:$0xff]
    %v5157 = vld [vmem:[#allocation11 + $0x228] sm:$0xff]
    %v5158 = vld [vmem:[#allocation11 + $0x230] sm:$0xff]
    %v5159 = vld [vmem:[#allocation11 + $0x238] sm:$0xff]
    %v5160 = vld [vmem:[#allocation11 + $0x240] sm:$0xff]
    %v5161 = vld [vmem:[#allocation11 + $0x248] sm:$0xff]
    %v5162 = vld [vmem:[#allocation11 + $0x250] sm:$0xff]
    %v5163 = vld [vmem:[#allocation11 + $0x258] sm:$0xff]
    %v5164 = vld [vmem:[#allocation11 + $0x260] sm:$0xff]
    %v5165 = vld [vmem:[#allocation11 + $0x268] sm:$0xff]
    %v5166 = vld [vmem:[#allocation11 + $0x270] sm:$0xff]
    %v5167 = vld [vmem:[#allocation11 + $0x278] sm:$0xff]
    %v5168 = vld [vmem:[#allocation11 + $0x280] sm:$0xff]
    %v5169 = vld [vmem:[#allocation11 + $0x288] sm:$0xff]
    %v5170 = vld [vmem:[#allocation11 + $0x290] sm:$0xff]
    %v5171 = vld [vmem:[#allocation11 + $0x298] sm:$0xff]
    %v5172 = vld [vmem:[#allocation11 + $0x2a0] sm:$0xff]
    %v5173 = vld [vmem:[#allocation11 + $0x2a8] sm:$0xff]
    %v5174 = vld [vmem:[#allocation11 + $0x2b0] sm:$0xff]
    %v5175 = vld [vmem:[#allocation11 + $0x2b8] sm:$0xff]
    %v5176 = vld [vmem:[#allocation11 + $0x2c0] sm:$0xff]
    %v5177 = vld [vmem:[#allocation11 + $0x2c8] sm:$0xff]
    %v5178 = vld [vmem:[#allocation11 + $0x2d0] sm:$0xff]
    %v5179 = vld [vmem:[#allocation11 + $0x2d8] sm:$0xff]
    %v5180 = vld [vmem:[#allocation11 + $0x2e0] sm:$0xff]
    %v5181 = vld [vmem:[#allocation11 + $0x2e8] sm:$0xff]
    %v5182 = vld [vmem:[#allocation11 + $0x2f0] sm:$0xff]
    %v5183 = vld [vmem:[#allocation11 + $0x2f8] sm:$0xff]
    %v5184 = vld [vmem:[#allocation11 + $0x300] sm:$0xff]
    %v5185 = vld [vmem:[#allocation11 + $0x308] sm:$0xff]
    %v5186 = vld [vmem:[#allocation11 + $0x310] sm:$0xff]
    %v5187 = vld [vmem:[#allocation11 + $0x318] sm:$0xff]
    %v5188 = vld [vmem:[#allocation11 + $0x320] sm:$0xff]
    %v5189 = vld [vmem:[#allocation11 + $0x328] sm:$0xff]
    %v5190 = vld [vmem:[#allocation11 + $0x330] sm:$0xff]
    %v5191 = vld [vmem:[#allocation11 + $0x338] sm:$0xff]
    %v5192 = vld [vmem:[#allocation11 + $0x340] sm:$0xff]
    %v5193 = vld [vmem:[#allocation11 + $0x348] sm:$0xff]
    %v5194 = vld [vmem:[#allocation11 + $0x350] sm:$0xff]
    %v5195 = vld [vmem:[#allocation11 + $0x358] sm:$0xff]
    %v5196 = vld [vmem:[#allocation11 + $0x360] sm:$0xff]
    %v5197 = vld [vmem:[#allocation11 + $0x368] sm:$0xff]
    %v5198 = vld [vmem:[#allocation11 + $0x370] sm:$0xff]
    %v5199 = vld [vmem:[#allocation11 + $0x378] sm:$0xff]
    %v5200 = vld [vmem:[#allocation11 + $0x380] sm:$0xff]
    %v5201 = vld [vmem:[#allocation11 + $0x388] sm:$0xff]
    %v5202 = vld [vmem:[#allocation11 + $0x390] sm:$0xff]
    %v5203 = vld [vmem:[#allocation11 + $0x398] sm:$0xff]
    %v5204 = vld [vmem:[#allocation11 + $0x3a0] sm:$0xff]
    %v5205 = vld [vmem:[#allocation11 + $0x3a8] sm:$0xff]
    %v5206 = vld [vmem:[#allocation11 + $0x3b0] sm:$0xff]
    %v5207 = vld [vmem:[#allocation11 + $0x3b8] sm:$0xff]
    %v5208 = vld [vmem:[#allocation11 + $0x3c0] sm:$0xff]
    %v5209 = vld [vmem:[#allocation11 + $0x3c8] sm:$0xff]
    %v5210 = vld [vmem:[#allocation11 + $0x3d0] sm:$0xff]
    %v5211 = vld [vmem:[#allocation11 + $0x3d8] sm:$0xff]
    %v5212 = vld [vmem:[#allocation11 + $0x3e0] sm:$0xff]
    %v5213 = vld [vmem:[#allocation11 + $0x3e8] sm:$0xff]
    %v5214 = vld [vmem:[#allocation11 + $0x3f0] sm:$0xff]
    %v5215 = vld [vmem:[#allocation11 + $0x3f8] sm:$0xff]
    %v5216 = vld [vmem:[%s5] sm:$0xf]
    %v5218 = vlaneseq
    %v5219 = vshrl.u32 %v5218, 7
    %v5220 = vsub.s32 0, %v5219
    %v5221 = vrot.slane %v5216, %v5220
    %v5222 = vlaneseq
    %v5223 = vshrl.u32 %v5222, 7
    %v5224 = vsub.s32 1, %v5223
    %v5225 = vrot.slane %v5216, %v5224
    %v5226 = vlaneseq
    %v5227 = vshrl.u32 %v5226, 7
    %v5228 = vsub.s32 2, %v5227
    %v5229 = vrot.slane %v5216, %v5228
    %v5230 = vlaneseq
    %v5231 = vshrl.u32 %v5230, 7
    %v5232 = vsub.s32 3, %v5231
    %v5233 = vrot.slane %v5216, %v5232
    %5238 = vmatprep.subr.mxu0 %v5089
    %5239 = vmatpush1.msra.mxu0 %v5088
    %5240 = vmatprep.subr.mxu0 %v5093
    %5241 = vmatpush1.msra.mxu0 %v5092
    %5242 = vmatprep.subr.mxu0 %v5097
    %5243 = vmatpush1.msra.mxu0 %v5096
    %5244 = vmatprep.subr.mxu0 %v5101
    %5245 = vmatpush1.msra.mxu0 %v5100
    %5246 = vmatprep.subr.mxu0 %v5105
    %5247 = vmatpush1.msra.mxu0 %v5104
    %5248 = vmatprep.subr.mxu0 %v5109
    %5249 = vmatpush1.msra.mxu0 %v5108
    %5250 = vmatprep.subr.mxu0 %v5113
    %5251 = vmatpush1.msra.mxu0 %v5112
    %5252 = vmatprep.subr.mxu0 %v5117
    %5253 = vmatpush1.msra.mxu0 %v5116
    %5254 = vmatprep.subr.mxu0 %v5121
    %5255 = vmatpush1.msra.mxu0 %v5120
    %5256 = vmatprep.subr.mxu0 %v5125
    %5257 = vmatpush1.msra.mxu0 %v5124
    %5258 = vmatprep.subr.mxu0 %v5129
    %5259 = vmatpush1.msra.mxu0 %v5128
    %5260 = vmatprep.subr.mxu0 %v5133
    %5261 = vmatpush1.msra.mxu0 %v5132
    %5262 = vmatprep.subr.mxu0 %v5137
    %5263 = vmatpush1.msra.mxu0 %v5136
    %5264 = vmatprep.subr.mxu0 %v5141
    %5265 = vmatpush1.msra.mxu0 %v5140
    %5266 = vmatprep.subr.mxu0 %v5145
    %5267 = vmatpush1.msra.mxu0 %v5144
    %5268 = vmatprep.subr.mxu0 %v5149
    %5269 = vmatpush1.msra.mxu0 %v5148
    %5270 = vmatprep.subr.mxu0 %v5153
    %5271 = vmatpush1.msra.mxu0 %v5152
    %5272 = vmatprep.subr.mxu0 %v5157
    %5273 = vmatpush1.msra.mxu0 %v5156
    %5274 = vmatprep.subr.mxu0 %v5161
    %5275 = vmatpush1.msra.mxu0 %v5160
    %5276 = vmatprep.subr.mxu0 %v5165
    %5277 = vmatpush1.msra.mxu0 %v5164
    %5278 = vmatprep.subr.mxu0 %v5169
    %5279 = vmatpush1.msra.mxu0 %v5168
    %5280 = vmatprep.subr.mxu0 %v5173
    %5281 = vmatpush1.msra.mxu0 %v5172
    %5282 = vmatprep.subr.mxu0 %v5177
    %5283 = vmatpush1.msra.mxu0 %v5176
    %5284 = vmatprep.subr.mxu0 %v5181
    %5285 = vmatpush1.msra.mxu0 %v5180
    %5286 = vmatprep.subr.mxu0 %v5185
    %5287 = vmatpush1.msra.mxu0 %v5184
    %5288 = vmatprep.subr.mxu0 %v5189
    %5289 = vmatpush1.msra.mxu0 %v5188
    %5290 = vmatprep.subr.mxu0 %v5193
    %5291 = vmatpush1.msra.mxu0 %v5192
    %5292 = vmatprep.subr.mxu0 %v5197
    %5293 = vmatpush1.msra.mxu0 %v5196
    %5294 = vmatprep.subr.mxu0 %v5201
    %5295 = vmatpush1.msra.mxu0 %v5200
    %5296 = vmatprep.subr.mxu0 %v5205
    %5297 = vmatpush1.msra.mxu0 %v5204
    %5298 = vmatprep.subr.mxu0 %v5209
    %5299 = vmatpush1.msra.mxu0 %v5208
    %5300 = vmatprep.subr.mxu0 %v5213
    %5301 = vmatpush1.msra.mxu0 %v5212
    %5302 = vmatprep.mubr.f32.mxu0 %v4648
    %5303 = vmatmul.mubr.f32.gmra.mrb[0].mxu0 %v5087
    %v5304 = vpop.f32.mrb[0].mxu0
    %v5305 = vadd.f32 %v5221, %v5304
    %v5306 = vpop.f32.mrb[0].mxu0
    %v5307 = vadd.f32 %v5225, %v5306
    %5308 = vdwg.mxu0
    %5309 = vmatprep.subr.mxu0 %v5091
    %5310 = vmatpush1.msra.mxu0 %v5090
    %5311 = vmatprep.subr.mxu0 %v5095
    %5312 = vmatpush1.msra.mxu0 %v5094
    %5313 = vmatprep.subr.mxu0 %v5099
    %5314 = vmatpush1.msra.mxu0 %v5098
    %5315 = vmatprep.subr.mxu0 %v5103
    %5316 = vmatpush1.msra.mxu0 %v5102
    %5317 = vmatprep.subr.mxu0 %v5107
    %5318 = vmatpush1.msra.mxu0 %v5106
    %5319 = vmatprep.subr.mxu0 %v5111
    %5320 = vmatpush1.msra.mxu0 %v5110
    %5321 = vmatprep.subr.mxu0 %v5115
    %5322 = vmatpush1.msra.mxu0 %v5114
    %5323 = vmatprep.subr.mxu0 %v5119
    %5324 = vmatpush1.msra.mxu0 %v5118
    %5325 = vmatprep.subr.mxu0 %v5123
    %5326 = vmatpush1.msra.mxu0 %v5122
    %5327 = vmatprep.subr.mxu0 %v5127
    %5328 = vmatpush1.msra.mxu0 %v5126
    %5329 = vmatprep.subr.mxu0 %v5131
    %5330 = vmatpush1.msra.mxu0 %v5130
    %5331 = vmatprep.subr.mxu0 %v5135
    %5332 = vmatpush1.msra.mxu0 %v5134
    %5333 = vmatprep.subr.mxu0 %v5139
    %5334 = vmatpush1.msra.mxu0 %v5138
    %5335 = vmatprep.subr.mxu0 %v5143
    %5336 = vmatpush1.msra.mxu0 %v5142
    %5337 = vmatprep.subr.mxu0 %v5147
    %5338 = vmatpush1.msra.mxu0 %v5146
    %5339 = vmatprep.subr.mxu0 %v5151
    %5340 = vmatpush1.msra.mxu0 %v5150
    %5341 = vmatprep.subr.mxu0 %v5155
    %5342 = vmatpush1.msra.mxu0 %v5154
    %5343 = vmatprep.subr.mxu0 %v5159
    %5344 = vmatpush1.msra.mxu0 %v5158
    %5345 = vmatprep.subr.mxu0 %v5163
    %5346 = vmatpush1.msra.mxu0 %v5162
    %5347 = vmatprep.subr.mxu0 %v5167
    %5348 = vmatpush1.msra.mxu0 %v5166
    %5349 = vmatprep.subr.mxu0 %v5171
    %5350 = vmatpush1.msra.mxu0 %v5170
    %5351 = vmatprep.subr.mxu0 %v5175
    %5352 = vmatpush1.msra.mxu0 %v5174
    %5353 = vmatprep.subr.mxu0 %v5179
    %5354 = vmatpush1.msra.mxu0 %v5178
    %5355 = vmatprep.subr.mxu0 %v5183
    %5356 = vmatpush1.msra.mxu0 %v5182
    %5357 = vmatprep.subr.mxu0 %v5187
    %5358 = vmatpush1.msra.mxu0 %v5186
    %5359 = vmatprep.subr.mxu0 %v5191
    %5360 = vmatpush1.msra.mxu0 %v5190
    %5361 = vmatprep.subr.mxu0 %v5195
    %5362 = vmatpush1.msra.mxu0 %v5194
    %5363 = vmatprep.subr.mxu0 %v5199
    %5364 = vmatpush1.msra.mxu0 %v5198
    %5365 = vmatprep.subr.mxu0 %v5203
    %5366 = vmatpush1.msra.mxu0 %v5202
    %5367 = vmatprep.subr.mxu0 %v5207
    %5368 = vmatpush1.msra.mxu0 %v5206
    %5369 = vmatprep.subr.mxu0 %v5211
    %5370 = vmatpush1.msra.mxu0 %v5210
    %5371 = vmatprep.subr.mxu0 %v5215
    %5372 = vmatpush1.msra.mxu0 %v5214
    %5373 = vmatprep.mubr.f32.mxu0 %v4648
    %5374 = vmatmul.mubr.f32.gmra.mrb[0].mxu0 %v5087
    %v5375 = vpop.f32.mrb[0].mxu0
    %v5376 = vadd.f32 %v5229, %v5375
    %v5377 = vpop.f32.mrb[0].mxu0
    %v5378 = vadd.f32 %v5233, %v5377
    %5379 = vdwg.mxu0
    %v5380 = vxor.u32 %v5305, 2147483648
    %v5381 = vmul.f32 %v5380, 1.442695
    %v5382 = vpow.pop %v5381
    %v5383 = vadd.f32 %v5382, 1.0
    %v5384 = vrcp.pop %v5383
    %v5385 = vmul.f32 1.0, %v5384
    %v5386 = vxor.u32 %v5307, 2147483648
    %v5387 = vmul.f32 %v5386, 1.442695
    %v5388 = vpow.pop %v5387
    %v5389 = vadd.f32 %v5388, 1.0
    %v5390 = vrcp.pop %v5389
    %v5391 = vmul.f32 1.0, %v5390
    %v5392 = vtanh.pop %v5376
    %v5393 = vxor.u32 %v5378, 2147483648
    %v5394 = vmul.f32 %v5393, 1.442695
    %v5395 = vpow.pop %v5394
    %v5396 = vadd.f32 %v5395, 1.0
    %v5397 = vrcp.pop %v5396
    %v5398 = vmul.f32 1.0, %v5397
    %v5399 = vmul.f32 %v5391, %v4646
    %v5400 = vmul.f32 %v5385, %v5392
    %v5401 = vadd.f32 %v5399, %v5400
    %v5402 = vtanh.pop %v5401
    %v5403 = vmul.f32 %v5398, %v5402
    %5404 = vst [vmem:[#allocation4 + $0x30] sm:$0xff] %v5403
    %v5405 = vld [vmem:[#allocation5 + $0x7] sm:$0x1]
    %v5406 = vld [vmem:[#allocation5 + $0xf] sm:$0x1]
    %v5407 = vld [vmem:[#allocation5 + $0x17] sm:$0x1]
    %v5408 = vld [vmem:[#allocation5 + $0x1f] sm:$0x1]
    %v5409 = vld [vmem:[#allocation5 + $0x27] sm:$0x1]
    %v5410 = vld [vmem:[#allocation5 + $0x2f] sm:$0x1]
    %v5411 = vld [vmem:[#allocation5 + $0x37] sm:$0x1]
    %v5412 = vld [vmem:[#allocation5 + $0x3f] sm:$0x1]
    %v5413 = vld [vmem:[#allocation8] sm:$0xff]
    %v5414 = vld [vmem:[#allocation8 + $0x8] sm:$0xff]
    %v5415 = vld [vmem:[#allocation8 + $0x10] sm:$0xff]
    %v5416 = vld [vmem:[#allocation8 + $0x18] sm:$0xff]
    %v5417 = vld [vmem:[#allocation8 + $0x20] sm:$0xff]
    %v5418 = vld [vmem:[#allocation8 + $0x28] sm:$0xff]
    %v5419 = vld [vmem:[#allocation8 + $0x30] sm:$0xff]
    %v5420 = vld [vmem:[#allocation8 + $0x38] sm:$0xff]
    %v5421 = vld [vmem:[#allocation10] sm:$0xff]
    %v5422 = vld [vmem:[#allocation10 + $0x8] sm:$0xff]
    %v5423 = vld [vmem:[#allocation10 + $0x10] sm:$0xff]
    %v5424 = vld [vmem:[#allocation10 + $0x18] sm:$0xff]
    %v5425 = vld [vmem:[#allocation10 + $0x20] sm:$0xff]
    %v5426 = vld [vmem:[#allocation10 + $0x28] sm:$0xff]
    %v5427 = vld [vmem:[#allocation10 + $0x30] sm:$0xff]
    %v5428 = vld [vmem:[#allocation10 + $0x38] sm:$0xff]
    %v5429 = vld [vmem:[#allocation10 + $0x40] sm:$0xff]
    %v5430 = vld [vmem:[#allocation10 + $0x48] sm:$0xff]
    %v5431 = vld [vmem:[#allocation10 + $0x50] sm:$0xff]
    %v5432 = vld [vmem:[#allocation10 + $0x58] sm:$0xff]
    %v5433 = vld [vmem:[#allocation10 + $0x60] sm:$0xff]
    %v5434 = vld [vmem:[#allocation10 + $0x68] sm:$0xff]
    %v5435 = vld [vmem:[#allocation10 + $0x70] sm:$0xff]
    %v5436 = vld [vmem:[#allocation10 + $0x78] sm:$0xff]
    %v5437 = vld [vmem:[#allocation10 + $0x80] sm:$0xff]
    %v5438 = vld [vmem:[#allocation10 + $0x88] sm:$0xff]
    %v5439 = vld [vmem:[#allocation10 + $0x90] sm:$0xff]
    %v5440 = vld [vmem:[#allocation10 + $0x98] sm:$0xff]
    %v5441 = vld [vmem:[#allocation10 + $0xa0] sm:$0xff]
    %v5442 = vld [vmem:[#allocation10 + $0xa8] sm:$0xff]
    %v5443 = vld [vmem:[#allocation10 + $0xb0] sm:$0xff]
    %v5444 = vld [vmem:[#allocation10 + $0xb8] sm:$0xff]
    %v5445 = vld [vmem:[#allocation10 + $0xc0] sm:$0xff]
    %v5446 = vld [vmem:[#allocation10 + $0xc8] sm:$0xff]
    %v5447 = vld [vmem:[#allocation10 + $0xd0] sm:$0xff]
    %v5448 = vld [vmem:[#allocation10 + $0xd8] sm:$0xff]
    %v5449 = vld [vmem:[#allocation10 + $0xe0] sm:$0xff]
    %v5450 = vld [vmem:[#allocation10 + $0xe8] sm:$0xff]
    %v5451 = vld [vmem:[#allocation10 + $0xf0] sm:$0xff]
    %v5452 = vld [vmem:[#allocation10 + $0xf8] sm:$0xff]
    %v5453 = vld [vmem:[#allocation10 + $0x100] sm:$0xff]
    %v5454 = vld [vmem:[#allocation10 + $0x108] sm:$0xff]
    %v5455 = vld [vmem:[#allocation10 + $0x110] sm:$0xff]
    %v5456 = vld [vmem:[#allocation10 + $0x118] sm:$0xff]
    %v5457 = vld [vmem:[#allocation10 + $0x120] sm:$0xff]
    %v5458 = vld [vmem:[#allocation10 + $0x128] sm:$0xff]
    %v5459 = vld [vmem:[#allocation10 + $0x130] sm:$0xff]
    %v5460 = vld [vmem:[#allocation10 + $0x138] sm:$0xff]
    %v5461 = vld [vmem:[#allocation10 + $0x140] sm:$0xff]
    %v5462 = vld [vmem:[#allocation10 + $0x148] sm:$0xff]
    %v5463 = vld [vmem:[#allocation10 + $0x150] sm:$0xff]
    %v5464 = vld [vmem:[#allocation10 + $0x158] sm:$0xff]
    %v5465 = vld [vmem:[#allocation10 + $0x160] sm:$0xff]
    %v5466 = vld [vmem:[#allocation10 + $0x168] sm:$0xff]
    %v5467 = vld [vmem:[#allocation10 + $0x170] sm:$0xff]
    %v5468 = vld [vmem:[#allocation10 + $0x178] sm:$0xff]
    %v5469 = vld [vmem:[#allocation10 + $0x180] sm:$0xff]
    %v5470 = vld [vmem:[#allocation10 + $0x188] sm:$0xff]
    %v5471 = vld [vmem:[#allocation10 + $0x190] sm:$0xff]
    %v5472 = vld [vmem:[#allocation10 + $0x198] sm:$0xff]
    %v5473 = vld [vmem:[#allocation10 + $0x1a0] sm:$0xff]
    %v5474 = vld [vmem:[#allocation10 + $0x1a8] sm:$0xff]
    %v5475 = vld [vmem:[#allocation10 + $0x1b0] sm:$0xff]
    %v5476 = vld [vmem:[#allocation10 + $0x1b8] sm:$0xff]
    %v5477 = vld [vmem:[#allocation10 + $0x1c0] sm:$0xff]
    %v5478 = vld [vmem:[#allocation10 + $0x1c8] sm:$0xff]
    %v5479 = vld [vmem:[#allocation10 + $0x1d0] sm:$0xff]
    %v5480 = vld [vmem:[#allocation10 + $0x1d8] sm:$0xff]
    %v5481 = vld [vmem:[#allocation10 + $0x1e0] sm:$0xff]
    %v5482 = vld [vmem:[#allocation10 + $0x1e8] sm:$0xff]
    %v5483 = vld [vmem:[#allocation10 + $0x1f0] sm:$0xff]
    %v5484 = vld [vmem:[#allocation10 + $0x1f8] sm:$0xff]
    %5485 = vmatprep.subr.mxu0 %v5422
    %5486 = vmatpush1.msra.mxu0 %v5421
    %5487 = vmatprep.subr.mxu0 %v5426
    %5488 = vmatpush1.msra.mxu0 %v5425
    %5489 = vmatprep.subr.mxu0 %v5430
    %5490 = vmatpush1.msra.mxu0 %v5429
    %5491 = vmatprep.subr.mxu0 %v5434
    %5492 = vmatpush1.msra.mxu0 %v5433
    %5493 = vmatprep.subr.mxu0 %v5438
    %5494 = vmatpush1.msra.mxu0 %v5437
    %5495 = vmatprep.subr.mxu0 %v5442
    %5496 = vmatpush1.msra.mxu0 %v5441
    %5497 = vmatprep.subr.mxu0 %v5446
    %5498 = vmatpush1.msra.mxu0 %v5445
    %5499 = vmatprep.subr.mxu0 %v5450
    %5500 = vmatpush1.msra.mxu0 %v5449
    %5501 = vmatprep.subr.mxu0 %v5454
    %5502 = vmatpush1.msra.mxu0 %v5453
    %5503 = vmatprep.subr.mxu0 %v5458
    %5504 = vmatpush1.msra.mxu0 %v5457
    %5505 = vmatprep.subr.mxu0 %v5462
    %5506 = vmatpush1.msra.mxu0 %v5461
    %5507 = vmatprep.subr.mxu0 %v5466
    %5508 = vmatpush1.msra.mxu0 %v5465
    %5509 = vmatprep.subr.mxu0 %v5470
    %5510 = vmatpush1.msra.mxu0 %v5469
    %5511 = vmatprep.subr.mxu0 %v5474
    %5512 = vmatpush1.msra.mxu0 %v5473
    %5513 = vmatprep.subr.mxu0 %v5478
    %5514 = vmatpush1.msra.mxu0 %v5477
    %5515 = vmatprep.subr.mxu0 %v5482
    %5516 = vmatpush1.msra.mxu0 %v5481
    %5517 = vmatprep.subr.mxu0 0.0
    %5518 = vmatpush1.msra.mxu0 0.0
    %5519 = vmatprep.subr.mxu0 0.0
    %5520 = vmatpush1.msra.mxu0 0.0
    %5521 = vmatprep.subr.mxu0 0.0
    %5522 = vmatpush1.msra.mxu0 0.0
    %5523 = vmatprep.subr.mxu0 0.0
    %5524 = vmatpush1.msra.mxu0 0.0
    %5525 = vmatprep.subr.mxu0 0.0
    %5526 = vmatpush1.msra.mxu0 0.0
    %5527 = vmatprep.subr.mxu0 0.0
    %5528 = vmatpush1.msra.mxu0 0.0
    %5529 = vmatprep.subr.mxu0 0.0
    %5530 = vmatpush1.msra.mxu0 0.0
    %5531 = vmatprep.subr.mxu0 0.0
    %5532 = vmatpush1.msra.mxu0 0.0
    %5533 = vmatprep.subr.mxu0 0.0
    %5534 = vmatpush1.msra.mxu0 0.0
    %5535 = vmatprep.subr.mxu0 0.0
    %5536 = vmatpush1.msra.mxu0 0.0
    %5537 = vmatprep.subr.mxu0 0.0
    %5538 = vmatpush1.msra.mxu0 0.0
    %5539 = vmatprep.subr.mxu0 0.0
    %5540 = vmatpush1.msra.mxu0 0.0
    %5541 = vmatprep.subr.mxu0 0.0
    %5542 = vmatpush1.msra.mxu0 0.0
    %5543 = vmatprep.subr.mxu0 0.0
    %5544 = vmatpush1.msra.mxu0 0.0
    %5545 = vmatprep.subr.mxu0 0.0
    %5546 = vmatpush1.msra.mxu0 0.0
    %5547 = vmatprep.subr.mxu0 0.0
    %5548 = vmatpush1.msra.mxu0 0.0
    %5549 = vmatprep.mubr.f32.mxu0 0.0
    %5550 = vmatmul.mubr.f32.gmra.mrb[0].mxu0 %v5087
    %v5551 = vpop.f32.mrb[0].mxu0
    %v5552 = vadd.f32 0.0, %v5551
    %v5553 = vpop.f32.mrb[0].mxu0
    %v5554 = vadd.f32 0.0, %v5553
    %5555 = vdwg.mxu0
    %5556 = vmatprep.subr.mxu0 %v5424
    %5557 = vmatpush1.msra.mxu0 %v5423
    %5558 = vmatprep.subr.mxu0 %v5428
    %5559 = vmatpush1.msra.mxu0 %v5427
    %5560 = vmatprep.subr.mxu0 %v5432
    %5561 = vmatpush1.msra.mxu0 %v5431
    %5562 = vmatprep.subr.mxu0 %v5436
    %5563 = vmatpush1.msra.mxu0 %v5435
    %5564 = vmatprep.subr.mxu0 %v5440
    %5565 = vmatpush1.msra.mxu0 %v5439
    %5566 = vmatprep.subr.mxu0 %v5444
    %5567 = vmatpush1.msra.mxu0 %v5443
    %5568 = vmatprep.subr.mxu0 %v5448
    %5569 = vmatpush1.msra.mxu0 %v5447
    %5570 = vmatprep.subr.mxu0 %v5452
    %5571 = vmatpush1.msra.mxu0 %v5451
    %5572 = vmatprep.subr.mxu0 %v5456
    %5573 = vmatpush1.msra.mxu0 %v5455
    %5574 = vmatprep.subr.mxu0 %v5460
    %5575 = vmatpush1.msra.mxu0 %v5459
    %5576 = vmatprep.subr.mxu0 %v5464
    %5577 = vmatpush1.msra.mxu0 %v5463
    %5578 = vmatprep.subr.mxu0 %v5468
    %5579 = vmatpush1.msra.mxu0 %v5467
    %5580 = vmatprep.subr.mxu0 %v5472
    %5581 = vmatpush1.msra.mxu0 %v5471
    %5582 = vmatprep.subr.mxu0 %v5476
    %5583 = vmatpush1.msra.mxu0 %v5475
    %5584 = vmatprep.subr.mxu0 %v5480
    %5585 = vmatpush1.msra.mxu0 %v5479
    %5586 = vmatprep.subr.mxu0 %v5484
    %5587 = vmatpush1.msra.mxu0 %v5483
    %5588 = vmatprep.subr.mxu0 0.0
    %5589 = vmatpush1.msra.mxu0 0.0
    %5590 = vmatprep.subr.mxu0 0.0
    %5591 = vmatpush1.msra.mxu0 0.0
    %5592 = vmatprep.subr.mxu0 0.0
    %5593 = vmatpush1.msra.mxu0 0.0
    %5594 = vmatprep.subr.mxu0 0.0
    %5595 = vmatpush1.msra.mxu0 0.0
    %5596 = vmatprep.subr.mxu0 0.0
    %5597 = vmatpush1.msra.mxu0 0.0
    %5598 = vmatprep.subr.mxu0 0.0
    %5599 = vmatpush1.msra.mxu0 0.0
    %5600 = vmatprep.subr.mxu0 0.0
    %5601 = vmatpush1.msra.mxu0 0.0
    %5602 = vmatprep.subr.mxu0 0.0
    %5603 = vmatpush1.msra.mxu0 0.0
    %5604 = vmatprep.subr.mxu0 0.0
    %5605 = vmatpush1.msra.mxu0 0.0
    %5606 = vmatprep.subr.mxu0 0.0
    %5607 = vmatpush1.msra.mxu0 0.0
    %5608 = vmatprep.subr.mxu0 0.0
    %5609 = vmatpush1.msra.mxu0 0.0
    %5610 = vmatprep.subr.mxu0 0.0
    %5611 = vmatpush1.msra.mxu0 0.0
    %5612 = vmatprep.subr.mxu0 0.0
    %5613 = vmatpush1.msra.mxu0 0.0
    %5614 = vmatprep.subr.mxu0 0.0
    %5615 = vmatpush1.msra.mxu0 0.0
    %5616 = vmatprep.subr.mxu0 0.0
    %5617 = vmatpush1.msra.mxu0 0.0
    %5618 = vmatprep.subr.mxu0 0.0
    %5619 = vmatpush1.msra.mxu0 0.0
    %5620 = vmatprep.mubr.f32.mxu0 0.0
    %5621 = vmatmul.mubr.f32.gmra.mrb[0].mxu0 %v5087
    %v5622 = vpop.f32.mrb[0].mxu0
    %v5623 = vadd.f32 0.0, %v5622
    %v5624 = vpop.f32.mrb[0].mxu0
    %v5625 = vadd.f32 0.0, %v5624
    %5626 = vdwg.mxu0
    %v5635 = vrot.slane %v5406, 7
    %v5636 = vsel %vm343, %v5635, %v5405
    %v5637 = vrot.slane %v5407, 6
    %v5638 = vsel %vm346, %v5637, %v5636
    %v5639 = vrot.slane %v5408, 5
    %v5640 = vsel %vm349, %v5639, %v5638
    %v5641 = vrot.slane %v5409, 4
    %v5642 = vsel %vm352, %v5641, %v5640
    %v5643 = vrot.slane %v5410, 3
    %v5644 = vsel %vm355, %v5643, %v5642
    %v5645 = vrot.slane %v5411, 2
    %v5646 = vsel %vm358, %v5645, %v5644
    %v5647 = vrot.slane %v5412, 1
    %v5648 = vsel %vm361, %v5647, %v5646
    %v5649 = vsel %vm363, %v5648, 0
    %5651 = vmatprep.subr.mxu0 %v5414
    %5652 = vmatpush1.msra.mxu0 %v5413
    %5653 = vmatprep.subr.mxu0 %v5418
    %5654 = vmatpush1.msra.mxu0 %v5417
    %5655 = vmatprep.subr.mxu0 0.0
    %5656 = vmatpush1.msra.mxu0 0.0
    %5657 = vmatprep.subr.mxu0 0.0
    %5658 = vmatpush1.msra.mxu0 0.0
    %5659 = vmatprep.subr.mxu0 0.0
    %5660 = vmatpush1.msra.mxu0 0.0
    %5661 = vmatprep.subr.mxu0 0.0
    %5662 = vmatpush1.msra.mxu0 0.0
    %5663 = vmatprep.subr.mxu0 0.0
    %5664 = vmatpush1.msra.mxu0 0.0
    %5665 = vmatprep.subr.mxu0 0.0
    %5666 = vmatpush1.msra.mxu0 0.0
    %5667 = vmatprep.subr.mxu0 0.0
    %5668 = vmatpush1.msra.mxu0 0.0
    %5669 = vmatprep.subr.mxu0 0.0
    %5670 = vmatpush1.msra.mxu0 0.0
    %5671 = vmatprep.subr.mxu0 0.0
    %5672 = vmatpush1.msra.mxu0 0.0
    %5673 = vmatprep.subr.mxu0 0.0
    %5674 = vmatpush1.msra.mxu0 0.0
    %5675 = vmatprep.subr.mxu0 0.0
    %5676 = vmatpush1.msra.mxu0 0.0
    %5677 = vmatprep.subr.mxu0 0.0
    %5678 = vmatpush1.msra.mxu0 0.0
    %5679 = vmatprep.subr.mxu0 0.0
    %5680 = vmatpush1.msra.mxu0 0.0
    %5681 = vmatprep.subr.mxu0 0.0
    %5682 = vmatpush1.msra.mxu0 0.0
    %5683 = vmatprep.subr.mxu0 0.0
    %5684 = vmatpush1.msra.mxu0 0.0
    %5685 = vmatprep.subr.mxu0 0.0
    %5686 = vmatpush1.msra.mxu0 0.0
    %5687 = vmatprep.subr.mxu0 0.0
    %5688 = vmatpush1.msra.mxu0 0.0
    %5689 = vmatprep.subr.mxu0 0.0
    %5690 = vmatpush1.msra.mxu0 0.0
    %5691 = vmatprep.subr.mxu0 0.0
    %5692 = vmatpush1.msra.mxu0 0.0
    %5693 = vmatprep.subr.mxu0 0.0
    %5694 = vmatpush1.msra.mxu0 0.0
    %5695 = vmatprep.subr.mxu0 0.0
    %5696 = vmatpush1.msra.mxu0 0.0
    %5697 = vmatprep.subr.mxu0 0.0
    %5698 = vmatpush1.msra.mxu0 0.0
    %5699 = vmatprep.subr.mxu0 0.0
    %5700 = vmatpush1.msra.mxu0 0.0
    %5701 = vmatprep.subr.mxu0 0.0
    %5702 = vmatpush1.msra.mxu0 0.0
    %5703 = vmatprep.subr.mxu0 0.0
    %5704 = vmatpush1.msra.mxu0 0.0
    %5705 = vmatprep.subr.mxu0 0.0
    %5706 = vmatpush1.msra.mxu0 0.0
    %5707 = vmatprep.subr.mxu0 0.0
    %5708 = vmatpush1.msra.mxu0 0.0
    %5709 = vmatprep.subr.mxu0 0.0
    %5710 = vmatpush1.msra.mxu0 0.0
    %5711 = vmatprep.subr.mxu0 0.0
    %5712 = vmatpush1.msra.mxu0 0.0
    %5713 = vmatprep.subr.mxu0 0.0
    %5714 = vmatpush1.msra.mxu0 0.0
    %5715 = vmatprep.mubr.f32.mxu0 0.0
    %5716 = vmatmul.mubr.f32.gmra.mrb[0].mxu0 %v5649
    %v5717 = vpop.f32.mrb[0].mxu0
    %v5718 = vadd.f32 %v5552, %v5717
    %v5719 = vpop.f32.mrb[0].mxu0
    %v5720 = vadd.f32 %v5554, %v5719
    %5721 = vdwg.mxu0
    %5722 = vmatprep.subr.mxu0 %v5416
    %5723 = vmatpush1.msra.mxu0 %v5415
    %5724 = vmatprep.subr.mxu0 %v5420
    %5725 = vmatpush1.msra.mxu0 %v5419
    %5726 = vmatprep.subr.mxu0 0.0
    %5727 = vmatpush1.msra.mxu0 0.0
    %5728 = vmatprep.subr.mxu0 0.0
    %5729 = vmatpush1.msra.mxu0 0.0
    %5730 = vmatprep.subr.mxu0 0.0
    %5731 = vmatpush1.msra.mxu0 0.0
    %5732 = vmatprep.subr.mxu0 0.0
    %5733 = vmatpush1.msra.mxu0 0.0
    %5734 = vmatprep.subr.mxu0 0.0
    %5735 = vmatpush1.msra.mxu0 0.0
    %5736 = vmatprep.subr.mxu0 0.0
    %5737 = vmatpush1.msra.mxu0 0.0
    %5738 = vmatprep.subr.mxu0 0.0
    %5739 = vmatpush1.msra.mxu0 0.0
    %5740 = vmatprep.subr.mxu0 0.0
    %5741 = vmatpush1.msra.mxu0 0.0
    %5742 = vmatprep.subr.mxu0 0.0
    %5743 = vmatpush1.msra.mxu0 0.0
    %5744 = vmatprep.subr.mxu0 0.0
    %5745 = vmatpush1.msra.mxu0 0.0
    %5746 = vmatprep.subr.mxu0 0.0
    %5747 = vmatpush1.msra.mxu0 0.0
    %5748 = vmatprep.subr.mxu0 0.0
    %5749 = vmatpush1.msra.mxu0 0.0
    %5750 = vmatprep.subr.mxu0 0.0
    %5751 = vmatpush1.msra.mxu0 0.0
    %5752 = vmatprep.subr.mxu0 0.0
    %5753 = vmatpush1.msra.mxu0 0.0
    %5754 = vmatprep.subr.mxu0 0.0
    %5755 = vmatpush1.msra.mxu0 0.0
    %5756 = vmatprep.subr.mxu0 0.0
    %5757 = vmatpush1.msra.mxu0 0.0
    %5758 = vmatprep.subr.mxu0 0.0
    %5759 = vmatpush1.msra.mxu0 0.0
    %5760 = vmatprep.subr.mxu0 0.0
    %5761 = vmatpush1.msra.mxu0 0.0
    %5762 = vmatprep.subr.mxu0 0.0
    %5763 = vmatpush1.msra.mxu0 0.0
    %5764 = vmatprep.subr.mxu0 0.0
    %5765 = vmatpush1.msra.mxu0 0.0
    %5766 = vmatprep.subr.mxu0 0.0
    %5767 = vmatpush1.msra.mxu0 0.0
    %5768 = vmatprep.subr.mxu0 0.0
    %5769 = vmatpush1.msra.mxu0 0.0
    %5770 = vmatprep.subr.mxu0 0.0
    %5771 = vmatpush1.msra.mxu0 0.0
    %5772 = vmatprep.subr.mxu0 0.0
    %5773 = vmatpush1.msra.mxu0 0.0
    %5774 = vmatprep.subr.mxu0 0.0
    %5775 = vmatpush1.msra.mxu0 0.0
    %5776 = vmatprep.subr.mxu0 0.0
    %5777 = vmatpush1.msra.mxu0 0.0
    %5778 = vmatprep.subr.mxu0 0.0
    %5779 = vmatpush1.msra.mxu0 0.0
    %5780 = vmatprep.subr.mxu0 0.0
    %5781 = vmatpush1.msra.mxu0 0.0
    %5782 = vmatprep.subr.mxu0 0.0
    %5783 = vmatpush1.msra.mxu0 0.0
    %5784 = vmatprep.subr.mxu0 0.0
    %5785 = vmatpush1.msra.mxu0 0.0
    %5786 = vmatprep.mubr.f32.mxu0 0.0
    %5787 = vmatmul.mubr.f32.gmra.mrb[0].mxu0 %v5649
    %v5788 = vpop.f32.mrb[0].mxu0
    %v5789 = vadd.f32 %v5623, %v5788
    %v5790 = vpop.f32.mrb[0].mxu0
    %v5791 = vadd.f32 %v5625, %v5790
    %5792 = vdwg.mxu0
    %v5793 = vld [vmem:[%s3] sm:$0xf]
    %v5795 = vlaneseq
    %v5796 = vshrl.u32 %v5795, 7
    %v5797 = vsub.s32 0, %v5796
    %v5798 = vrot.slane %v5793, %v5797
    %v5799 = vlaneseq
    %v5800 = vshrl.u32 %v5799, 7
    %v5801 = vsub.s32 1, %v5800
    %v5802 = vrot.slane %v5793, %v5801
    %v5803 = vlaneseq
    %v5804 = vshrl.u32 %v5803, 7
    %v5805 = vsub.s32 2, %v5804
    %v5806 = vrot.slane %v5793, %v5805
    %v5807 = vlaneseq
    %v5808 = vshrl.u32 %v5807, 7
    %v5809 = vsub.s32 3, %v5808
    %v5810 = vrot.slane %v5793, %v5809
    %v5815 = vadd.f32 %v5718, %v5798
    %v5816 = vadd.f32 %v5720, %v5802
    %v5817 = vadd.f32 %v5789, %v5806
    %v5818 = vadd.f32 %v5791, %v5810
    %v5819 = vxor.u32 %v5815, 2147483648
    %v5820 = vmul.f32 %v5819, 1.442695
    %v5821 = vpow.pop %v5820
    %v5822 = vadd.f32 %v5821, 1.0
    %v5823 = vrcp.pop %v5822
    %v5824 = vmul.f32 1.0, %v5823
    %v5825 = vxor.u32 %v5816, 2147483648
    %v5826 = vmul.f32 %v5825, 1.442695
    %v5827 = vpow.pop %v5826
    %v5828 = vadd.f32 %v5827, 1.0
    %v5829 = vrcp.pop %v5828
    %v5830 = vmul.f32 1.0, %v5829
    %v5831 = vtanh.pop %v5817
    %v5832 = vxor.u32 %v5818, 2147483648
    %v5833 = vmul.f32 %v5832, 1.442695
    %v5834 = vpow.pop %v5833
    %v5835 = vadd.f32 %v5834, 1.0
    %v5836 = vrcp.pop %v5835
    %v5837 = vmul.f32 1.0, %v5836
    %v5838 = vmul.f32 %v5830, %v5085
    %v5839 = vmul.f32 %v5824, %v5831
    %v5840 = vadd.f32 %v5838, %v5839
    %v5841 = vtanh.pop %v5840
    %v5842 = vmul.f32 %v5837, %v5841
    %v5843 = vld [vmem:[#allocation11] sm:$0xff]
    %v5844 = vld [vmem:[#allocation11 + $0x8] sm:$0xff]
    %v5845 = vld [vmem:[#allocation11 + $0x10] sm:$0xff]
    %v5846 = vld [vmem:[#allocation11 + $0x18] sm:$0xff]
    %v5847 = vld [vmem:[#allocation11 + $0x20] sm:$0xff]
    %v5848 = vld [vmem:[#allocation11 + $0x28] sm:$0xff]
    %v5849 = vld [vmem:[#allocation11 + $0x30] sm:$0xff]
    %v5850 = vld [vmem:[#allocation11 + $0x38] sm:$0xff]
    %v5851 = vld [vmem:[#allocation11 + $0x40] sm:$0xff]
    %v5852 = vld [vmem:[#allocation11 + $0x48] sm:$0xff]
    %v5853 = vld [vmem:[#allocation11 + $0x50] sm:$0xff]
    %v5854 = vld [vmem:[#allocation11 + $0x58] sm:$0xff]
    %v5855 = vld [vmem:[#allocation11 + $0x60] sm:$0xff]
    %v5856 = vld [vmem:[#allocation11 + $0x68] sm:$0xff]
    %v5857 = vld [vmem:[#allocation11 + $0x70] sm:$0xff]
    %v5858 = vld [vmem:[#allocation11 + $0x78] sm:$0xff]
    %v5859 = vld [vmem:[#allocation11 + $0x80] sm:$0xff]
    %v5860 = vld [vmem:[#allocation11 + $0x88] sm:$0xff]
    %v5861 = vld [vmem:[#allocation11 + $0x90] sm:$0xff]
    %v5862 = vld [vmem:[#allocation11 + $0x98] sm:$0xff]
    %v5863 = vld [vmem:[#allocation11 + $0xa0] sm:$0xff]
    %v5864 = vld [vmem:[#allocation11 + $0xa8] sm:$0xff]
    %v5865 = vld [vmem:[#allocation11 + $0xb0] sm:$0xff]
    %v5866 = vld [vmem:[#allocation11 + $0xb8] sm:$0xff]
    %v5867 = vld [vmem:[#allocation11 + $0xc0] sm:$0xff]
    %v5868 = vld [vmem:[#allocation11 + $0xc8] sm:$0xff]
    %v5869 = vld [vmem:[#allocation11 + $0xd0] sm:$0xff]
    %v5870 = vld [vmem:[#allocation11 + $0xd8] sm:$0xff]
    %v5871 = vld [vmem:[#allocation11 + $0xe0] sm:$0xff]
    %v5872 = vld [vmem:[#allocation11 + $0xe8] sm:$0xff]
    %v5873 = vld [vmem:[#allocation11 + $0xf0] sm:$0xff]
    %v5874 = vld [vmem:[#allocation11 + $0xf8] sm:$0xff]
    %v5875 = vld [vmem:[#allocation11 + $0x100] sm:$0xff]
    %v5876 = vld [vmem:[#allocation11 + $0x108] sm:$0xff]
    %v5877 = vld [vmem:[#allocation11 + $0x110] sm:$0xff]
    %v5878 = vld [vmem:[#allocation11 + $0x118] sm:$0xff]
    %v5879 = vld [vmem:[#allocation11 + $0x120] sm:$0xff]
    %v5880 = vld [vmem:[#allocation11 + $0x128] sm:$0xff]
    %v5881 = vld [vmem:[#allocation11 + $0x130] sm:$0xff]
    %v5882 = vld [vmem:[#allocation11 + $0x138] sm:$0xff]
    %v5883 = vld [vmem:[#allocation11 + $0x140] sm:$0xff]
    %v5884 = vld [vmem:[#allocation11 + $0x148] sm:$0xff]
    %v5885 = vld [vmem:[#allocation11 + $0x150] sm:$0xff]
    %v5886 = vld [vmem:[#allocation11 + $0x158] sm:$0xff]
    %v5887 = vld [vmem:[#allocation11 + $0x160] sm:$0xff]
    %v5888 = vld [vmem:[#allocation11 + $0x168] sm:$0xff]
    %v5889 = vld [vmem:[#allocation11 + $0x170] sm:$0xff]
    %v5890 = vld [vmem:[#allocation11 + $0x178] sm:$0xff]
    %v5891 = vld [vmem:[#allocation11 + $0x180] sm:$0xff]
    %v5892 = vld [vmem:[#allocation11 + $0x188] sm:$0xff]
    %v5893 = vld [vmem:[#allocation11 + $0x190] sm:$0xff]
    %v5894 = vld [vmem:[#allocation11 + $0x198] sm:$0xff]
    %v5895 = vld [vmem:[#allocation11 + $0x1a0] sm:$0xff]
    %v5896 = vld [vmem:[#allocation11 + $0x1a8] sm:$0xff]
    %v5897 = vld [vmem:[#allocation11 + $0x1b0] sm:$0xff]
    %v5898 = vld [vmem:[#allocation11 + $0x1b8] sm:$0xff]
    %v5899 = vld [vmem:[#allocation11 + $0x1c0] sm:$0xff]
    %v5900 = vld [vmem:[#allocation11 + $0x1c8] sm:$0xff]
    %v5901 = vld [vmem:[#allocation11 + $0x1d0] sm:$0xff]
    %v5902 = vld [vmem:[#allocation11 + $0x1d8] sm:$0xff]
    %v5903 = vld [vmem:[#allocation11 + $0x1e0] sm:$0xff]
    %v5904 = vld [vmem:[#allocation11 + $0x1e8] sm:$0xff]
    %v5905 = vld [vmem:[#allocation11 + $0x1f0] sm:$0xff]
    %v5906 = vld [vmem:[#allocation11 + $0x1f8] sm:$0xff]
    %v5907 = vld [vmem:[#allocation11 + $0x200] sm:$0xff]
    %v5908 = vld [vmem:[#allocation11 + $0x208] sm:$0xff]
    %v5909 = vld [vmem:[#allocation11 + $0x210] sm:$0xff]
    %v5910 = vld [vmem:[#allocation11 + $0x218] sm:$0xff]
    %v5911 = vld [vmem:[#allocation11 + $0x220] sm:$0xff]
    %v5912 = vld [vmem:[#allocation11 + $0x228] sm:$0xff]
    %v5913 = vld [vmem:[#allocation11 + $0x230] sm:$0xff]
    %v5914 = vld [vmem:[#allocation11 + $0x238] sm:$0xff]
    %v5915 = vld [vmem:[#allocation11 + $0x240] sm:$0xff]
    %v5916 = vld [vmem:[#allocation11 + $0x248] sm:$0xff]
    %v5917 = vld [vmem:[#allocation11 + $0x250] sm:$0xff]
    %v5918 = vld [vmem:[#allocation11 + $0x258] sm:$0xff]
    %v5919 = vld [vmem:[#allocation11 + $0x260] sm:$0xff]
    %v5920 = vld [vmem:[#allocation11 + $0x268] sm:$0xff]
    %v5921 = vld [vmem:[#allocation11 + $0x270] sm:$0xff]
    %v5922 = vld [vmem:[#allocation11 + $0x278] sm:$0xff]
    %v5923 = vld [vmem:[#allocation11 + $0x280] sm:$0xff]
    %v5924 = vld [vmem:[#allocation11 + $0x288] sm:$0xff]
    %v5925 = vld [vmem:[#allocation11 + $0x290] sm:$0xff]
    %v5926 = vld [vmem:[#allocation11 + $0x298] sm:$0xff]
    %v5927 = vld [vmem:[#allocation11 + $0x2a0] sm:$0xff]
    %v5928 = vld [vmem:[#allocation11 + $0x2a8] sm:$0xff]
    %v5929 = vld [vmem:[#allocation11 + $0x2b0] sm:$0xff]
    %v5930 = vld [vmem:[#allocation11 + $0x2b8] sm:$0xff]
    %v5931 = vld [vmem:[#allocation11 + $0x2c0] sm:$0xff]
    %v5932 = vld [vmem:[#allocation11 + $0x2c8] sm:$0xff]
    %v5933 = vld [vmem:[#allocation11 + $0x2d0] sm:$0xff]
    %v5934 = vld [vmem:[#allocation11 + $0x2d8] sm:$0xff]
    %v5935 = vld [vmem:[#allocation11 + $0x2e0] sm:$0xff]
    %v5936 = vld [vmem:[#allocation11 + $0x2e8] sm:$0xff]
    %v5937 = vld [vmem:[#allocation11 + $0x2f0] sm:$0xff]
    %v5938 = vld [vmem:[#allocation11 + $0x2f8] sm:$0xff]
    %v5939 = vld [vmem:[#allocation11 + $0x300] sm:$0xff]
    %v5940 = vld [vmem:[#allocation11 + $0x308] sm:$0xff]
    %v5941 = vld [vmem:[#allocation11 + $0x310] sm:$0xff]
    %v5942 = vld [vmem:[#allocation11 + $0x318] sm:$0xff]
    %v5943 = vld [vmem:[#allocation11 + $0x320] sm:$0xff]
    %v5944 = vld [vmem:[#allocation11 + $0x328] sm:$0xff]
    %v5945 = vld [vmem:[#allocation11 + $0x330] sm:$0xff]
    %v5946 = vld [vmem:[#allocation11 + $0x338] sm:$0xff]
    %v5947 = vld [vmem:[#allocation11 + $0x340] sm:$0xff]
    %v5948 = vld [vmem:[#allocation11 + $0x348] sm:$0xff]
    %v5949 = vld [vmem:[#allocation11 + $0x350] sm:$0xff]
    %v5950 = vld [vmem:[#allocation11 + $0x358] sm:$0xff]
    %v5951 = vld [vmem:[#allocation11 + $0x360] sm:$0xff]
    %v5952 = vld [vmem:[#allocation11 + $0x368] sm:$0xff]
    %v5953 = vld [vmem:[#allocation11 + $0x370] sm:$0xff]
    %v5954 = vld [vmem:[#allocation11 + $0x378] sm:$0xff]
    %v5955 = vld [vmem:[#allocation11 + $0x380] sm:$0xff]
    %v5956 = vld [vmem:[#allocation11 + $0x388] sm:$0xff]
    %v5957 = vld [vmem:[#allocation11 + $0x390] sm:$0xff]
    %v5958 = vld [vmem:[#allocation11 + $0x398] sm:$0xff]
    %v5959 = vld [vmem:[#allocation11 + $0x3a0] sm:$0xff]
    %v5960 = vld [vmem:[#allocation11 + $0x3a8] sm:$0xff]
    %v5961 = vld [vmem:[#allocation11 + $0x3b0] sm:$0xff]
    %v5962 = vld [vmem:[#allocation11 + $0x3b8] sm:$0xff]
    %v5963 = vld [vmem:[#allocation11 + $0x3c0] sm:$0xff]
    %v5964 = vld [vmem:[#allocation11 + $0x3c8] sm:$0xff]
    %v5965 = vld [vmem:[#allocation11 + $0x3d0] sm:$0xff]
    %v5966 = vld [vmem:[#allocation11 + $0x3d8] sm:$0xff]
    %v5967 = vld [vmem:[#allocation11 + $0x3e0] sm:$0xff]
    %v5968 = vld [vmem:[#allocation11 + $0x3e8] sm:$0xff]
    %v5969 = vld [vmem:[#allocation11 + $0x3f0] sm:$0xff]
    %v5970 = vld [vmem:[#allocation11 + $0x3f8] sm:$0xff]
    %v5971 = vld [vmem:[%s5] sm:$0xf]
    %v5973 = vlaneseq
    %v5974 = vshrl.u32 %v5973, 7
    %v5975 = vsub.s32 0, %v5974
    %v5976 = vrot.slane %v5971, %v5975
    %v5977 = vlaneseq
    %v5978 = vshrl.u32 %v5977, 7
    %v5979 = vsub.s32 1, %v5978
    %v5980 = vrot.slane %v5971, %v5979
    %v5981 = vlaneseq
    %v5982 = vshrl.u32 %v5981, 7
    %v5983 = vsub.s32 2, %v5982
    %v5984 = vrot.slane %v5971, %v5983
    %v5985 = vlaneseq
    %v5986 = vshrl.u32 %v5985, 7
    %v5987 = vsub.s32 3, %v5986
    %v5988 = vrot.slane %v5971, %v5987
    %5993 = vmatprep.subr.mxu0 %v5844
    %5994 = vmatpush1.msra.mxu0 %v5843
    %5995 = vmatprep.subr.mxu0 %v5848
    %5996 = vmatpush1.msra.mxu0 %v5847
    %5997 = vmatprep.subr.mxu0 %v5852
    %5998 = vmatpush1.msra.mxu0 %v5851
    %5999 = vmatprep.subr.mxu0 %v5856
    %6000 = vmatpush1.msra.mxu0 %v5855
    %6001 = vmatprep.subr.mxu0 %v5860
    %6002 = vmatpush1.msra.mxu0 %v5859
    %6003 = vmatprep.subr.mxu0 %v5864
    %6004 = vmatpush1.msra.mxu0 %v5863
    %6005 = vmatprep.subr.mxu0 %v5868
    %6006 = vmatpush1.msra.mxu0 %v5867
    %6007 = vmatprep.subr.mxu0 %v5872
    %6008 = vmatpush1.msra.mxu0 %v5871
    %6009 = vmatprep.subr.mxu0 %v5876
    %6010 = vmatpush1.msra.mxu0 %v5875
    %6011 = vmatprep.subr.mxu0 %v5880
    %6012 = vmatpush1.msra.mxu0 %v5879
    %6013 = vmatprep.subr.mxu0 %v5884
    %6014 = vmatpush1.msra.mxu0 %v5883
    %6015 = vmatprep.subr.mxu0 %v5888
    %6016 = vmatpush1.msra.mxu0 %v5887
    %6017 = vmatprep.subr.mxu0 %v5892
    %6018 = vmatpush1.msra.mxu0 %v5891
    %6019 = vmatprep.subr.mxu0 %v5896
    %6020 = vmatpush1.msra.mxu0 %v5895
    %6021 = vmatprep.subr.mxu0 %v5900
    %6022 = vmatpush1.msra.mxu0 %v5899
    %6023 = vmatprep.subr.mxu0 %v5904
    %6024 = vmatpush1.msra.mxu0 %v5903
    %6025 = vmatprep.subr.mxu0 %v5908
    %6026 = vmatpush1.msra.mxu0 %v5907
    %6027 = vmatprep.subr.mxu0 %v5912
    %6028 = vmatpush1.msra.mxu0 %v5911
    %6029 = vmatprep.subr.mxu0 %v5916
    %6030 = vmatpush1.msra.mxu0 %v5915
    %6031 = vmatprep.subr.mxu0 %v5920
    %6032 = vmatpush1.msra.mxu0 %v5919
    %6033 = vmatprep.subr.mxu0 %v5924
    %6034 = vmatpush1.msra.mxu0 %v5923
    %6035 = vmatprep.subr.mxu0 %v5928
    %6036 = vmatpush1.msra.mxu0 %v5927
    %6037 = vmatprep.subr.mxu0 %v5932
    %6038 = vmatpush1.msra.mxu0 %v5931
    %6039 = vmatprep.subr.mxu0 %v5936
    %6040 = vmatpush1.msra.mxu0 %v5935
    %6041 = vmatprep.subr.mxu0 %v5940
    %6042 = vmatpush1.msra.mxu0 %v5939
    %6043 = vmatprep.subr.mxu0 %v5944
    %6044 = vmatpush1.msra.mxu0 %v5943
    %6045 = vmatprep.subr.mxu0 %v5948
    %6046 = vmatpush1.msra.mxu0 %v5947
    %6047 = vmatprep.subr.mxu0 %v5952
    %6048 = vmatpush1.msra.mxu0 %v5951
    %6049 = vmatprep.subr.mxu0 %v5956
    %6050 = vmatpush1.msra.mxu0 %v5955
    %6051 = vmatprep.subr.mxu0 %v5960
    %6052 = vmatpush1.msra.mxu0 %v5959
    %6053 = vmatprep.subr.mxu0 %v5964
    %6054 = vmatpush1.msra.mxu0 %v5963
    %6055 = vmatprep.subr.mxu0 %v5968
    %6056 = vmatpush1.msra.mxu0 %v5967
    %6057 = vmatprep.mubr.f32.mxu0 %v5403
    %6058 = vmatmul.mubr.f32.gmra.mrb[0].mxu0 %v5842
    %v6059 = vpop.f32.mrb[0].mxu0
    %v6060 = vadd.f32 %v5976, %v6059
    %v6061 = vpop.f32.mrb[0].mxu0
    %v6062 = vadd.f32 %v5980, %v6061
    %6063 = vdwg.mxu0
    %6064 = vmatprep.subr.mxu0 %v5846
    %6065 = vmatpush1.msra.mxu0 %v5845
    %6066 = vmatprep.subr.mxu0 %v5850
    %6067 = vmatpush1.msra.mxu0 %v5849
    %6068 = vmatprep.subr.mxu0 %v5854
    %6069 = vmatpush1.msra.mxu0 %v5853
    %6070 = vmatprep.subr.mxu0 %v5858
    %6071 = vmatpush1.msra.mxu0 %v5857
    %6072 = vmatprep.subr.mxu0 %v5862
    %6073 = vmatpush1.msra.mxu0 %v5861
    %6074 = vmatprep.subr.mxu0 %v5866
    %6075 = vmatpush1.msra.mxu0 %v5865
    %6076 = vmatprep.subr.mxu0 %v5870
    %6077 = vmatpush1.msra.mxu0 %v5869
    %6078 = vmatprep.subr.mxu0 %v5874
    %6079 = vmatpush1.msra.mxu0 %v5873
    %6080 = vmatprep.subr.mxu0 %v5878
    %6081 = vmatpush1.msra.mxu0 %v5877
    %6082 = vmatprep.subr.mxu0 %v5882
    %6083 = vmatpush1.msra.mxu0 %v5881
    %6084 = vmatprep.subr.mxu0 %v5886
    %6085 = vmatpush1.msra.mxu0 %v5885
    %6086 = vmatprep.subr.mxu0 %v5890
    %6087 = vmatpush1.msra.mxu0 %v5889
    %6088 = vmatprep.subr.mxu0 %v5894
    %6089 = vmatpush1.msra.mxu0 %v5893
    %6090 = vmatprep.subr.mxu0 %v5898
    %6091 = vmatpush1.msra.mxu0 %v5897
    %6092 = vmatprep.subr.mxu0 %v5902
    %6093 = vmatpush1.msra.mxu0 %v5901
    %6094 = vmatprep.subr.mxu0 %v5906
    %6095 = vmatpush1.msra.mxu0 %v5905
    %6096 = vmatprep.subr.mxu0 %v5910
    %6097 = vmatpush1.msra.mxu0 %v5909
    %6098 = vmatprep.subr.mxu0 %v5914
    %6099 = vmatpush1.msra.mxu0 %v5913
    %6100 = vmatprep.subr.mxu0 %v5918
    %6101 = vmatpush1.msra.mxu0 %v5917
    %6102 = vmatprep.subr.mxu0 %v5922
    %6103 = vmatpush1.msra.mxu0 %v5921
    %6104 = vmatprep.subr.mxu0 %v5926
    %6105 = vmatpush1.msra.mxu0 %v5925
    %6106 = vmatprep.subr.mxu0 %v5930
    %6107 = vmatpush1.msra.mxu0 %v5929
    %6108 = vmatprep.subr.mxu0 %v5934
    %6109 = vmatpush1.msra.mxu0 %v5933
    %6110 = vmatprep.subr.mxu0 %v5938
    %6111 = vmatpush1.msra.mxu0 %v5937
    %6112 = vmatprep.subr.mxu0 %v5942
    %6113 = vmatpush1.msra.mxu0 %v5941
    %6114 = vmatprep.subr.mxu0 %v5946
    %6115 = vmatpush1.msra.mxu0 %v5945
    %6116 = vmatprep.subr.mxu0 %v5950
    %6117 = vmatpush1.msra.mxu0 %v5949
    %6118 = vmatprep.subr.mxu0 %v5954
    %6119 = vmatpush1.msra.mxu0 %v5953
    %6120 = vmatprep.subr.mxu0 %v5958
    %6121 = vmatpush1.msra.mxu0 %v5957
    %6122 = vmatprep.subr.mxu0 %v5962
    %6123 = vmatpush1.msra.mxu0 %v5961
    %6124 = vmatprep.subr.mxu0 %v5966
    %6125 = vmatpush1.msra.mxu0 %v5965
    %6126 = vmatprep.subr.mxu0 %v5970
    %6127 = vmatpush1.msra.mxu0 %v5969
    %6128 = vmatprep.mubr.f32.mxu0 %v5403
    %6129 = vmatmul.mubr.f32.gmra.mrb[0].mxu0 %v5842
    %v6130 = vpop.f32.mrb[0].mxu0
    %v6131 = vadd.f32 %v5984, %v6130
    %v6132 = vpop.f32.mrb[0].mxu0
    %v6133 = vadd.f32 %v5988, %v6132
    %6134 = vdwg.mxu0
    %v6135 = vxor.u32 %v6060, 2147483648
    %v6136 = vmul.f32 %v6135, 1.442695
    %v6137 = vpow.pop %v6136
    %v6138 = vadd.f32 %v6137, 1.0
    %v6139 = vrcp.pop %v6138
    %v6140 = vmul.f32 1.0, %v6139
    %v6141 = vxor.u32 %v6062, 2147483648
    %v6142 = vmul.f32 %v6141, 1.442695
    %v6143 = vpow.pop %v6142
    %v6144 = vadd.f32 %v6143, 1.0
    %v6145 = vrcp.pop %v6144
    %v6146 = vmul.f32 1.0, %v6145
    %v6147 = vtanh.pop %v6131
    %v6148 = vxor.u32 %v6133, 2147483648
    %v6149 = vmul.f32 %v6148, 1.442695
    %v6150 = vpow.pop %v6149
    %v6151 = vadd.f32 %v6150, 1.0
    %v6152 = vrcp.pop %v6151
    %v6153 = vmul.f32 1.0, %v6152
    %v6154 = vmul.f32 %v6146, %v5401
    %v6155 = vmul.f32 %v6140, %v6147
    %v6156 = vadd.f32 %v6154, %v6155
    %v6157 = vtanh.pop %v6156
    %v6158 = vmul.f32 %v6153, %v6157
    %6159 = vst [vmem:[#allocation4 + $0x38] sm:$0xff] %v6158
    %6160 = vst [vmem:[#allocation2] sm:$0xff] %v5842
    %6161 = vst [vmem:[#allocation3] sm:$0xff] %v5840
    %6162 = vst [vmem:[%s107] sm:$0xff] %v6158
    %6163 = vst [vmem:[%s110] sm:$0xff] %v6156
    %v6164 = vld [vmem:[#allocation4] sm:$0xff]
    %v6165 = vld [vmem:[#allocation4 + $0x8] sm:$0xff]
    %v6166 = vld [vmem:[#allocation4 + $0x10] sm:$0xff]
    %v6167 = vld [vmem:[#allocation4 + $0x18] sm:$0xff]
    %v6168 = vld [vmem:[#allocation4 + $0x20] sm:$0xff]
    %v6169 = vld [vmem:[#allocation4 + $0x28] sm:$0xff]
    %v6170 = vld [vmem:[#allocation4 + $0x30] sm:$0xff]
    %v6171 = vld [vmem:[#allocation4 + $0x38] sm:$0xff]
    %v6172 = vld [vmem:[#allocation13] sm:$0xff]
    %v6173 = vld [vmem:[#allocation13 + $0x8] sm:$0xff]
    %v6174 = vld [vmem:[#allocation13 + $0x10] sm:$0xff]
    %v6175 = vld [vmem:[#allocation13 + $0x18] sm:$0xff]
    %v6176 = vld [vmem:[#allocation13 + $0x20] sm:$0xff]
    %v6177 = vld [vmem:[#allocation13 + $0x28] sm:$0xff]
    %v6178 = vld [vmem:[#allocation13 + $0x30] sm:$0xff]
    %v6179 = vld [vmem:[#allocation13 + $0x38] sm:$0xff]
    %v6180 = vld [vmem:[#allocation13 + $0x40] sm:$0xff]
    %v6181 = vld [vmem:[#allocation13 + $0x48] sm:$0xff]
    %v6182 = vld [vmem:[#allocation13 + $0x50] sm:$0xff]
    %v6183 = vld [vmem:[#allocation13 + $0x58] sm:$0xff]
    %v6184 = vld [vmem:[#allocation13 + $0x60] sm:$0xff]
    %v6185 = vld [vmem:[#allocation13 + $0x68] sm:$0xff]
    %v6186 = vld [vmem:[#allocation13 + $0x70] sm:$0xff]
    %v6187 = vld [vmem:[#allocation13 + $0x78] sm:$0xff]
    %v6188 = vld [vmem:[%s7] sm:$0x1]
    %v6190 = vlaneseq
    %v6191 = vshrl.u32 %v6190, 7
    %v6192 = vsub.s32 0, %v6191
    %v6193 = vrot.slane %v6188, %v6192
    %6195 = vmatprep.subr.mxu0 0.0
    %6196 = vmatpush1.msra.mxu0 %v6172
    %6197 = vmatprep.subr.mxu0 0.0
    %6198 = vmatpush1.msra.mxu0 %v6173
    %6199 = vmatprep.subr.mxu0 0.0
    %6200 = vmatpush1.msra.mxu0 %v6174
    %6201 = vmatprep.subr.mxu0 0.0
    %6202 = vmatpush1.msra.mxu0 %v6175
    %6203 = vmatprep.subr.mxu0 0.0
    %6204 = vmatpush1.msra.mxu0 %v6176
    %6205 = vmatprep.subr.mxu0 0.0
    %6206 = vmatpush1.msra.mxu0 %v6177
    %6207 = vmatprep.subr.mxu0 0.0
    %6208 = vmatpush1.msra.mxu0 %v6178
    %6209 = vmatprep.subr.mxu0 0.0
    %6210 = vmatpush1.msra.mxu0 %v6179
    %6211 = vmatprep.subr.mxu0 0.0
    %6212 = vmatpush1.msra.mxu0 %v6180
    %6213 = vmatprep.subr.mxu0 0.0
    %6214 = vmatpush1.msra.mxu0 %v6181
    %6215 = vmatprep.subr.mxu0 0.0
    %6216 = vmatpush1.msra.mxu0 %v6182
    %6217 = vmatprep.subr.mxu0 0.0
    %6218 = vmatpush1.msra.mxu0 %v6183
    %6219 = vmatprep.subr.mxu0 0.0
    %6220 = vmatpush1.msra.mxu0 %v6184
    %6221 = vmatprep.subr.mxu0 0.0
    %6222 = vmatpush1.msra.mxu0 %v6185
    %6223 = vmatprep.subr.mxu0 0.0
    %6224 = vmatpush1.msra.mxu0 %v6186
    %6225 = vmatprep.subr.mxu0 0.0
    %6226 = vmatpush1.msra.mxu0 %v6187
    %6227 = vmatprep.subr.mxu0 0.0
    %6228 = vmatpush1.msra.mxu0 0.0
    %6229 = vmatprep.subr.mxu0 0.0
    %6230 = vmatpush1.msra.mxu0 0.0
    %6231 = vmatprep.subr.mxu0 0.0
    %6232 = vmatpush1.msra.mxu0 0.0
    %6233 = vmatprep.subr.mxu0 0.0
    %6234 = vmatpush1.msra.mxu0 0.0
    %6235 = vmatprep.subr.mxu0 0.0
    %6236 = vmatpush1.msra.mxu0 0.0
    %6237 = vmatprep.subr.mxu0 0.0
    %6238 = vmatpush1.msra.mxu0 0.0
    %6239 = vmatprep.subr.mxu0 0.0
    %6240 = vmatpush1.msra.mxu0 0.0
    %6241 = vmatprep.subr.mxu0 0.0
    %6242 = vmatpush1.msra.mxu0 0.0
    %6243 = vmatprep.subr.mxu0 0.0
    %6244 = vmatpush1.msra.mxu0 0.0
    %6245 = vmatprep.subr.mxu0 0.0
    %6246 = vmatpush1.msra.mxu0 0.0
    %6247 = vmatprep.subr.mxu0 0.0
    %6248 = vmatpush1.msra.mxu0 0.0
    %6249 = vmatprep.subr.mxu0 0.0
    %6250 = vmatpush1.msra.mxu0 0.0
    %6251 = vmatprep.subr.mxu0 0.0
    %6252 = vmatpush1.msra.mxu0 0.0
    %6253 = vmatprep.subr.mxu0 0.0
    %6254 = vmatpush1.msra.mxu0 0.0
    %6255 = vmatprep.subr.mxu0 0.0
    %6256 = vmatpush1.msra.mxu0 0.0
    %6257 = vmatprep.subr.mxu0 0.0
    %6258 = vmatpush1.msra.mxu0 0.0
    %6259 = vmatprep.mubr.f32.mxu0 0.0
    %6260 = vmatmul.mubr.f32.gmra.mrb[0].mxu0 %v6164
    %v6261 = vpop.f32.mrb[0].mxu0
    %v6262 = vadd.f32 %v6193, %v6261
    %v6263 = vpop.f32.mrb[0].mxu0
    %6264 = vmatprep.mubr.f32.mxu0 0.0
    %6265 = vmatmul.mubr.f32.gmra.mrb[0].mxu0 %v6165
    %v6266 = vpop.f32.mrb[0].mxu0
    %v6267 = vadd.f32 %v6193, %v6266
    %v6268 = vpop.f32.mrb[0].mxu0
    %6269 = vmatprep.mubr.f32.mxu0 0.0
    %6270 = vmatmul.mubr.f32.gmra.mrb[0].mxu0 %v6166
    %v6271 = vpop.f32.mrb[0].mxu0
    %v6272 = vadd.f32 %v6193, %v6271
    %v6273 = vpop.f32.mrb[0].mxu0
    %6274 = vmatprep.mubr.f32.mxu0 0.0
    %6275 = vmatmul.mubr.f32.gmra.mrb[0].mxu0 %v6167
    %v6276 = vpop.f32.mrb[0].mxu0
    %v6277 = vadd.f32 %v6193, %v6276
    %v6278 = vpop.f32.mrb[0].mxu0
    %6279 = vmatprep.mubr.f32.mxu0 0.0
    %6280 = vmatmul.mubr.f32.gmra.mrb[0].mxu0 %v6168
    %v6281 = vpop.f32.mrb[0].mxu0
    %v6282 = vadd.f32 %v6193, %v6281
    %v6283 = vpop.f32.mrb[0].mxu0
    %6284 = vmatprep.mubr.f32.mxu0 0.0
    %6285 = vmatmul.mubr.f32.gmra.mrb[0].mxu0 %v6169
    %v6286 = vpop.f32.mrb[0].mxu0
    %v6287 = vadd.f32 %v6193, %v6286
    %v6288 = vpop.f32.mrb[0].mxu0
    %6289 = vmatprep.mubr.f32.mxu0 0.0
    %6290 = vmatmul.mubr.f32.gmra.mrb[0].mxu0 %v6170
    %v6291 = vpop.f32.mrb[0].mxu0
    %v6292 = vadd.f32 %v6193, %v6291
    %v6293 = vpop.f32.mrb[0].mxu0
    %6294 = vmatprep.mubr.f32.mxu0 0.0
    %6295 = vmatmul.mubr.f32.gmra.mrb[0].mxu0 %v6171
    %v6296 = vpop.f32.mrb[0].mxu0
    %v6297 = vadd.f32 %v6193, %v6296
    %v6298 = vpop.f32.mrb[0].mxu0
    %6299 = vdwg.mxu0
    %v6300 = vxor.u32 %v6262, 2147483648
    %v6301 = vxor.u32 %v6267, 2147483648
    %v6302 = vxor.u32 %v6272, 2147483648
    %v6303 = vxor.u32 %v6277, 2147483648
    %v6304 = vxor.u32 %v6282, 2147483648
    %v6305 = vxor.u32 %v6287, 2147483648
    %v6306 = vxor.u32 %v6292, 2147483648
    %v6307 = vxor.u32 %v6297, 2147483648
    %v6308 = vmul.f32 %v6300, 1.442695
    %v6309 = vpow.pop %v6308
    %v6310 = vmul.f32 %v6301, 1.442695
    %v6311 = vpow.pop %v6310
    %v6312 = vmul.f32 %v6302, 1.442695
    %v6313 = vpow.pop %v6312
    %v6314 = vmul.f32 %v6303, 1.442695
    %v6315 = vpow.pop %v6314
    %v6316 = vmul.f32 %v6304, 1.442695
    %v6317 = vpow.pop %v6316
    %v6318 = vmul.f32 %v6305, 1.442695
    %v6319 = vpow.pop %v6318
    %v6320 = vmul.f32 %v6306, 1.442695
    %v6321 = vpow.pop %v6320
    %v6322 = vmul.f32 %v6307, 1.442695
    %v6323 = vpow.pop %v6322
    %v6324 = vadd.f32 %v6309, 1.0
    %v6325 = vadd.f32 %v6311, 1.0
    %v6326 = vadd.f32 %v6313, 1.0
    %v6327 = vadd.f32 %v6315, 1.0
    %v6328 = vadd.f32 %v6317, 1.0
    %v6329 = vadd.f32 %v6319, 1.0
    %v6330 = vadd.f32 %v6321, 1.0
    %v6331 = vadd.f32 %v6323, 1.0
    %v6332 = vrcp.pop %v6324
    %v6333 = vmul.f32 1.0, %v6332
    %v6334 = vrcp.pop %v6325
    %v6335 = vmul.f32 1.0, %v6334
    %v6336 = vrcp.pop %v6326
    %v6337 = vmul.f32 1.0, %v6336
    %v6338 = vrcp.pop %v6327
    %v6339 = vmul.f32 1.0, %v6338
    %v6340 = vrcp.pop %v6328
    %v6341 = vmul.f32 1.0, %v6340
    %v6342 = vrcp.pop %v6329
    %v6343 = vmul.f32 1.0, %v6342
    %v6344 = vrcp.pop %v6330
    %v6345 = vmul.f32 1.0, %v6344
    %v6346 = vrcp.pop %v6331
    %v6347 = vmul.f32 1.0, %v6346
    %6348 = vst [vmem:[#allocation14] sm:$0xff] %v6333
    %s6349 = scalar_lea.vmem [#allocation14], 8
    %6350 = vst [vmem:[%s6349] sm:$0xff] %v6335
    %s6351 = scalar_lea.vmem [#allocation14], 16
    %6352 = vst [vmem:[%s6351] sm:$0xff] %v6337
    %s6353 = scalar_lea.vmem [#allocation14], 24
    %6354 = vst [vmem:[%s6353] sm:$0xff] %v6339
    %s6355 = scalar_lea.vmem [#allocation14], 32
    %6356 = vst [vmem:[%s6355] sm:$0xff] %v6341
    %s6357 = scalar_lea.vmem [#allocation14], 40
    %6358 = vst [vmem:[%s6357] sm:$0xff] %v6343
    %s6359 = scalar_lea.vmem [#allocation14], 48
    %6360 = vst [vmem:[%s6359] sm:$0xff] %v6345
    %s6361 = scalar_lea.vmem [#allocation14], 56
    %6362 = vst [vmem:[%s6361] sm:$0xff] %v6347
    // Predicated region
    $region58: #{tpu_custom_call.1} parent=1 // pred_check
      _
    $region59: #{tpu_custom_call.1} parent=1 // pred_check_branch
      %6364 = sbr.rel (0) target = $region61
    $region60: #{tpu_custom_call.1} parent=1 // pred_region
      %s6366 = ssub.s32 1024, 1024
      %6367 = vsyncadd [#allocation7], %s6366
      %s6368 = sshll.u32 [#allocation14], 4
      %s6369 = int_to_ptr.vmem [resolvable:$true] %s6368
      %6374 = dma.vmem_to_hbm [thread:$0]  %s6369, 1024, %s8, [#allocation7], 128, 128, 8
    $region61: #{tpu_custom_call.1} parent=1 // pred_fallthru
      _
    // Predicated region
    $region62: #{tpu_custom_call.1} parent=1 // pred_check
      _
    $region63: #{tpu_custom_call.1} parent=1 // pred_check_branch
      %6376 = sbr.rel (0) target = $region65
    $region64: #{tpu_custom_call.1} parent=1 // pred_region
      %6377 = dma.done [#allocation7], 1024
    $region65: #{tpu_custom_call.1} parent=1 // pred_fallthru
      _
    %6378 = vsyncpa [#allocation6], 1
    %6379 = vsyncpa [#allocation9], 1
    %6380 = vsyncpa [#allocation12], 1
    %6381 = vsyncpa [#allocation7], 1

</llo_original>
